<compile_context>
chip_gen: v6e
topology: v6e:2x2x1
jax: 0.10.0
libtpu: 0.0.40
codegen_flags: <defaults>
</compile_context>

<pallas_src>
import math

import jax
import jax.numpy as jnp
import numpy as np
from jax.experimental import pallas as pl
from jax.experimental.pallas import tpu as pltpu

WINDOW_SIZE = 5
SIGMA = 1.5
PAD = WINDOW_SIZE // 2
C1 = 0.01 ** 2
C2 = 0.03 ** 2

_MM_PRECISION = jax.lax.Precision.HIGHEST  # full-f32 MXU passes for the smoothing matmuls


def _gaussian_1d(window_size: int, sigma: float) -> np.ndarray:
    g = np.array(
        [math.exp(-((x - window_size // 2) ** 2) / float(2 * sigma ** 2))
         for x in range(window_size)],
        dtype=np.float64,
    )
    return g / g.sum()


_G1D = _gaussian_1d(WINDOW_SIZE, SIGMA)                 # separable 1-D taps
_W2D = np.outer(_G1D, _G1D).astype(np.float32)          # 2-D window (reference only)


def _band_matrix(n: int) -> np.ndarray:
    """Band matrix M with M[y, k] = g[k - y + PAD]; M @ x == zero-padded 1-D Gaussian conv.

    g is symmetric so M is symmetric: the same matrix right-multiplies for the other axis.
    """
    m = np.zeros((n, n), dtype=np.float32)
    for y in range(n):
        for t in range(WINDOW_SIZE):
            k = y + t - PAD
            if 0 <= k < n:
                m[y, k] = np.float32(_G1D[t])
    return m


def _make_kernel(tile_bc: int, h: int, w: int):
    """Kernel body for one (tile_bc, h, w) block; emits per-block partial sums."""

    def kernel(a_ref, b_ref, x1_ref, x2_ref, out_ref):
        x1 = x1_ref[...]                       # (tile_bc, h, w), unpadded
        x2 = x2_ref[...]

        # ---- Lp partial: sum of squared differences ----
        d = x1 - x2
        lp_sq = jnp.sum(d * d)

        # ---- stack the 5 SSIM statistics into one batched operand ----
        s = jnp.concatenate([x1, x2, x1 * x1, x2 * x2, x1 * x2], axis=0)   # (5*tbc, h, w)

        # ---- separable Gaussian as banded matmuls on the MXU (zero halo baked in) ----
        b_b = jnp.broadcast_to(b_ref[...], (5 * tile_bc, w, w))
        a_b = jnp.broadcast_to(a_ref[...], (5 * tile_bc, h, h))
        sh = jnp.einsum('bhk,bkx->bhx', s, b_b,                  # horizontal pass
                        preferred_element_type=jnp.float32, precision=_MM_PRECISION)
        sm = jnp.einsum('byk,bkx->byx', a_b, sh,                 # vertical pass
                        preferred_element_type=jnp.float32, precision=_MM_PRECISION)

        mu1 = sm[0 * tile_bc:1 * tile_bc]
        mu2 = sm[1 * tile_bc:2 * tile_bc]
        e11 = sm[2 * tile_bc:3 * tile_bc]
        e22 = sm[3 * tile_bc:4 * tile_bc]
        e12 = sm[4 * tile_bc:5 * tile_bc]

        mu1mu2 = mu1 * mu2
        mu1sq = mu1 * mu1
        mu2sq = mu2 * mu2
        sigma1_sq = e11 - mu1sq
        sigma2_sq = e22 - mu2sq
        sigma12 = e12 - mu1mu2

        num = (2.0 * mu1mu2 + C1) * (2.0 * sigma12 + C2)
        den = (mu1sq + mu2sq + C1) * (sigma1_sq + sigma2_sq + C2)
        r = pl.reciprocal(den, approx=True)        # EUP vrcp slot
        r = r * (2.0 - den * r)                    # one Newton-Raphson step (~f32 accuracy)
        ssim_map = num * r
        ssim_sum = jnp.sum(ssim_map)

        # ---- per-block partial sums in a lane-dense output block (no cross-step RMW) ----
        sub = jax.lax.broadcasted_iota(jnp.int32, (1, 8, 128), 1)
        out_ref[...] = jnp.where(sub == 0, lp_sq, jnp.where(sub == 1, ssim_sum, 0.0))

    return kernel


def _vmem_capacity_bytes() -> int:
    try:
        return int(pltpu.get_tpu_info().vmem_capacity_bytes)
    except Exception:
        return 64 * 1024 * 1024   # conservative (v7x per-TC) fallback


def _pick_tile_bc(bc: int, h: int, w: int, budget_bytes: int) -> int:
    """Largest divisor of bc whose per-block working set stays within the budget."""
    per_ch = 4 * (
        4 * h * w                  # double-buffered x1/x2 input blocks
        + 15 * h * w               # stacked stats + horizontal + vertical smoothed maps
        + 5 * (h * h + w * w)      # broadcast band matrices
        + 8 * h * w                # epilogue temporaries (mu^2, sigmas, num, den, ssim map)
    )
    fixed = 4 * (2 * (h * h + w * w) + 2 * 8 * 128)   # band-matrix blocks + output blocks
    best = 1
    for ddiv in range(1, bc + 1):
        if bc % ddiv == 0 and fixed + ddiv * per_ch <= budget_bytes:
            best = ddiv
    return best


def lp_lssim_loss(image_in: jax.Array, image_out: jax.Array, tile_bc: int | None = None):
    """image_in / image_out: (B, C, H, W) float32. Returns (Lp + 1000*Lssim, Lp, 1000*Lssim)."""
    b, c, h, w = image_in.shape
    bc = b * c
    x1 = image_in.reshape(bc, h, w).astype(jnp.float32)
    x2 = image_out.reshape(bc, h, w).astype(jnp.float32)

    capacity = _vmem_capacity_bytes()
    budget = capacity // 4                                    # ~16 MiB (v7x) / ~32 MiB (v5e/v6e)
    vmem_limit = min((capacity * 3) // 4, 96 * 1024 * 1024)   # 48 MiB (v7x) / 96 MiB (v5e/v6e)

    if tile_bc is None:
        tile_bc = _pick_tile_bc(bc, h, w, budget)
    assert bc % tile_bc == 0, "tile_bc must divide B*C"
    nblocks = bc // tile_bc

    a_band = jnp.asarray(_band_matrix(h))   # (h, h), vertical taps
    b_band = jnp.asarray(_band_matrix(w))   # (w, w), horizontal taps (symmetric)

    partial = pl.pallas_call(
        _make_kernel(tile_bc, h, w),
        out_shape=jax.ShapeDtypeStruct((nblocks, 8, 128), jnp.float32),
        grid=(nblocks,),
        in_specs=[
            pl.BlockSpec((h, h), lambda i: (0, 0)),
            pl.BlockSpec((w, w), lambda i: (0, 0)),
            pl.BlockSpec((tile_bc, h, w), lambda i: (i, 0, 0)),
            pl.BlockSpec((tile_bc, h, w), lambda i: (i, 0, 0)),
        ],
        out_specs=pl.BlockSpec((1, 8, 128), lambda i: (i, 0, 0)),
        compiler_params=pltpu.CompilerParams(
            dimension_semantics=("parallel",),        # disjoint per-block outputs -> megacore-safe
            vmem_limit_bytes=int(vmem_limit),
        ),
    )(a_band, b_band, x1, x2)

    # tiny finalization in the wrapper: sum per-block partials, /N, sqrt, *1000
    total = float(bc * h * w)
    lp = jnp.sqrt(jnp.sum(partial[:, 0, 0]))
    lssim_1000 = (1.0 - jnp.sum(partial[:, 1, 0]) / total) * 1000.0
    return lp + lssim_1000, lp, lssim_1000


def _reference(image_in, image_out):
    """Pure-JAX reference (explicit zero-pad + 25-tap conv, different code path)."""
    b, c, h, w = image_in.shape
    x1 = image_in.reshape(b * c, h, w).astype(jnp.float32)
    x2 = image_out.reshape(b * c, h, w).astype(jnp.float32)
    x1p = jnp.pad(x1, ((0, 0), (PAD, PAD), (PAD, PAD)))
    x2p = jnp.pad(x2, ((0, 0), (PAD, PAD), (PAD, PAD)))

    def gconv(xp):
        acc = jnp.zeros((b * c, h, w), jnp.float32)
        for dy in range(WINDOW_SIZE):
            for dx in range(WINDOW_SIZE):
                acc = acc + float(_W2D[dy, dx]) * xp[:, dy:dy + h, dx:dx + w]
        return acc

    mu1, mu2 = gconv(x1p), gconv(x2p)
    s11 = gconv(x1p * x1p) - mu1 * mu1
    s22 = gconv(x2p * x2p) - mu2 * mu2
    s12 = gconv(x1p * x2p) - mu1 * mu2
    ssim_map = ((2 * mu1 * mu2 + C1) * (2 * s12 + C2)) / (
        (mu1 * mu1 + mu2 * mu2 + C1) * (s11 + s22 + C2)
    )
    lp = jnp.sqrt(jnp.sum((x1 - x2) ** 2))
    lssim_1000 = (1.0 - jnp.mean(ssim_map)) * 1000.0
    return lp + lssim_1000, lp, lssim_1000


if __name__ == "__main__":
    key = jax.random.PRNGKey(0)
    k1, k2 = jax.random.split(key)
    B, C, H, W = 2, 4, 16, 16
    image_in = jax.random.uniform(k1, (B, C, H, W), dtype=jnp.float32)
    image_out = jax.random.uniform(k2, (B, C, H, W), dtype=jnp.float32)

    # Force tile_bc=2 -> a 4-step grid so the multi-block / per-block-partial path is
    # exercised even at this small test size (auto-pick would use a single block here).
    total, lp, lssim1000 = lp_lssim_loss(image_in, image_out, tile_bc=2)
    jax.block_until_ready((total, lp, lssim1000))

    ref_total, ref_lp, ref_lssim1000 = _reference(image_in, image_out)
    # Tolerance covers MXU f32 pass reassociation and the approx-recip + Newton step.
    np.testing.assert_allclose(np.asarray(total), np.asarray(ref_total), rtol=2e-3, atol=2e-3)
    np.testing.assert_allclose(np.asarray(lp), np.asarray(ref_lp), rtol=2e-3, atol=2e-3)
    np.testing.assert_allclose(np.asarray(lssim1000), np.asarray(ref_lssim1000), rtol=2e-3, atol=2e-3)

    print("KERNEL_OK")
</pallas_src>

<mosaic_0001>
module attributes {stable_mosaic.version = 11 : i64} {
  func.func @kernel(%arg0: i32, %arg1: memref<16x16xf32, #tpu.memory_space<vmem>>, %arg2: memref<16x16xf32, #tpu.memory_space<vmem>>, %arg3: memref<2x16x16xf32, #tpu.memory_space<vmem>>, %arg4: memref<2x16x16xf32, #tpu.memory_space<vmem>>, %arg5: memref<1x8x128xf32, #tpu.memory_space<vmem>>) attributes {dimension_semantics = [#tpu.dimension_semantics<parallel>], iteration_bounds = array<i64: 4>, scalar_prefetch = 0 : i64, scratch_operands = 0 : i64, tpu.core_type = #tpu.core_type<tc>, window_params = [{pipeline_mode = #tpu.pipeline_mode<synchronous>, transform_indices = @transform_0, window_bounds = array<i64: 16, 16>}, {pipeline_mode = #tpu.pipeline_mode<synchronous>, transform_indices = @transform_1, window_bounds = array<i64: 16, 16>}, {transform_indices = @transform_2, window_bounds = array<i64: 2, 16, 16>}, {transform_indices = @transform_3, window_bounds = array<i64: 2, 16, 16>}, {transform_indices = @transform_4, window_bounds = array<i64: 1, 8, 128>}]} {
    %c0 = arith.constant 0 : index
    %c0_0 = arith.constant 0 : index
    %c0_1 = arith.constant 0 : index
    %0 = vector.load %arg3[%c0, %c0_0, %c0_1] : memref<2x16x16xf32, #tpu.memory_space<vmem>>, vector<2x16x16xf32>
    %c0_2 = arith.constant 0 : index
    %c0_3 = arith.constant 0 : index
    %c0_4 = arith.constant 0 : index
    %1 = vector.load %arg4[%c0_2, %c0_3, %c0_4] : memref<2x16x16xf32, #tpu.memory_space<vmem>>, vector<2x16x16xf32>
    %2 = arith.subf %0, %1 : vector<2x16x16xf32>
    %3 = arith.mulf %2, %2 : vector<2x16x16xf32>
    %4 = vector.shape_cast %3 : vector<2x16x16xf32> to vector<1x2x16x16xf32>
    %cst = arith.constant dense<0.000000e+00> : vector<1xf32>
    %5 = vector.multi_reduction <add>, %4, %cst [1, 2, 3] : vector<1x2x16x16xf32> to vector<1xf32>
    %6 = vector.shape_cast %5 : vector<1xf32> to vector<1x1x1x1xf32>
    %7 = vector.extract %6[0, 0, 0, 0] : f32 from vector<1x1x1x1xf32>
    %8 = arith.mulf %0, %0 : vector<2x16x16xf32>
    %9 = arith.mulf %1, %1 : vector<2x16x16xf32>
    %10 = arith.mulf %0, %1 : vector<2x16x16xf32>
    %11 = tpu.concatenate %0, %1, %8, %9, %10 in 0 : vector<2x16x16xf32>, vector<2x16x16xf32>, vector<2x16x16xf32>, vector<2x16x16xf32>, vector<2x16x16xf32> -> vector<10x16x16xf32>
    %c0_5 = arith.constant 0 : index
    %c0_6 = arith.constant 0 : index
    %12 = vector.load %arg2[%c0_5, %c0_6] : memref<16x16xf32, #tpu.memory_space<vmem>>, vector<16x16xf32>
    %13 = vector.shape_cast %12 : vector<16x16xf32> to vector<1x16x16xf32>
    %14 = vector.broadcast %13 : vector<1x16x16xf32> to vector<10x16x16xf32>
    %c0_7 = arith.constant 0 : index
    %c0_8 = arith.constant 0 : index
    %15 = vector.load %arg1[%c0_7, %c0_8] : memref<16x16xf32, #tpu.memory_space<vmem>>, vector<16x16xf32>
    %16 = vector.shape_cast %15 : vector<16x16xf32> to vector<1x16x16xf32>
    %17 = vector.broadcast %16 : vector<1x16x16xf32> to vector<10x16x16xf32>
    "tpu.trace_start"() <{level = 10 : i32, message = "bhk,bkx->bhx"}> : () -> ()
    %cst_9 = arith.constant dense<0.000000e+00> : vector<10x16x16xf32>
    %18 = tpu.matmul %11, %14, %cst_9 {dimension_numbers = #tpu.dot_dimension_numbers<[2], [1], [1], [2], [0, 0, 0, 1, 1, 2], [0], [0]>, precision = #tpu.contract_precision<fp32>} : vector<10x16x16xf32>, vector<10x16x16xf32>, vector<10x16x16xf32> -> vector<10x16x16xf32>
    "tpu.trace_stop"() : () -> ()
    "tpu.trace_start"() <{level = 10 : i32, message = "byk,bkx->byx"}> : () -> ()
    %cst_10 = arith.constant dense<0.000000e+00> : vector<10x16x16xf32>
    %19 = tpu.matmul %17, %18, %cst_10 {dimension_numbers = #tpu.dot_dimension_numbers<[2], [1], [1], [2], [0, 0, 0, 1, 1, 2], [0], [0]>, precision = #tpu.contract_precision<fp32>} : vector<10x16x16xf32>, vector<10x16x16xf32>, vector<10x16x16xf32> -> vector<10x16x16xf32>
    "tpu.trace_stop"() : () -> ()
    %20 = vector.extract_strided_slice %19 {offsets = [0, 0, 0], sizes = [2, 16, 16], strides = [1, 1, 1]} : vector<10x16x16xf32> to vector<2x16x16xf32>
    %21 = vector.extract_strided_slice %19 {offsets = [2, 0, 0], sizes = [2, 16, 16], strides = [1, 1, 1]} : vector<10x16x16xf32> to vector<2x16x16xf32>
    %22 = vector.extract_strided_slice %19 {offsets = [4, 0, 0], sizes = [2, 16, 16], strides = [1, 1, 1]} : vector<10x16x16xf32> to vector<2x16x16xf32>
    %23 = vector.extract_strided_slice %19 {offsets = [6, 0, 0], sizes = [2, 16, 16], strides = [1, 1, 1]} : vector<10x16x16xf32> to vector<2x16x16xf32>
    %24 = vector.extract_strided_slice %19 {offsets = [8, 0, 0], sizes = [2, 16, 16], strides = [1, 1, 1]} : vector<10x16x16xf32> to vector<2x16x16xf32>
    %25 = arith.mulf %20, %21 : vector<2x16x16xf32>
    %26 = arith.mulf %20, %20 : vector<2x16x16xf32>
    %27 = arith.mulf %21, %21 : vector<2x16x16xf32>
    %28 = arith.subf %22, %26 : vector<2x16x16xf32>
    %29 = arith.subf %23, %27 : vector<2x16x16xf32>
    %30 = arith.subf %24, %25 : vector<2x16x16xf32>
    %cst_11 = arith.constant 2.000000e+00 : f32
    %31 = vector.broadcast %cst_11 : f32 to vector<2x16x16xf32>
    %32 = arith.mulf %31, %25 : vector<2x16x16xf32>
    %cst_12 = arith.constant 9.99999974E-5 : f32
    %33 = vector.broadcast %cst_12 : f32 to vector<2x16x16xf32>
    %34 = arith.addf %32, %33 : vector<2x16x16xf32>
    %cst_13 = arith.constant 2.000000e+00 : f32
    %35 = vector.broadcast %cst_13 : f32 to vector<2x16x16xf32>
    %36 = arith.mulf %35, %30 : vector<2x16x16xf32>
    %cst_14 = arith.constant 8.99999984E-4 : f32
    %37 = vector.broadcast %cst_14 : f32 to vector<2x16x16xf32>
    %38 = arith.addf %36, %37 : vector<2x16x16xf32>
    %39 = arith.mulf %34, %38 : vector<2x16x16xf32>
    %40 = arith.addf %26, %27 : vector<2x16x16xf32>
    %cst_15 = arith.constant 9.99999974E-5 : f32
    %41 = vector.broadcast %cst_15 : f32 to vector<2x16x16xf32>
    %42 = arith.addf %40, %41 : vector<2x16x16xf32>
    %43 = arith.addf %28, %29 : vector<2x16x16xf32>
    %cst_16 = arith.constant 8.99999984E-4 : f32
    %44 = vector.broadcast %cst_16 : f32 to vector<2x16x16xf32>
    %45 = arith.addf %43, %44 : vector<2x16x16xf32>
    %46 = arith.mulf %42, %45 : vector<2x16x16xf32>
    %47 = tpu.reciprocal %46 {approx = true} : vector<2x16x16xf32> -> vector<2x16x16xf32>
    %48 = arith.mulf %46, %47 : vector<2x16x16xf32>
    %cst_17 = arith.constant 2.000000e+00 : f32
    %49 = vector.broadcast %cst_17 : f32 to vector<2x16x16xf32>
    %50 = arith.subf %49, %48 : vector<2x16x16xf32>
    %51 = arith.mulf %47, %50 : vector<2x16x16xf32>
    %52 = arith.mulf %39, %51 : vector<2x16x16xf32>
    %53 = vector.shape_cast %52 : vector<2x16x16xf32> to vector<1x2x16x16xf32>
    %cst_18 = arith.constant dense<0.000000e+00> : vector<1xf32>
    %54 = vector.multi_reduction <add>, %53, %cst_18 [1, 2, 3] : vector<1x2x16x16xf32> to vector<1xf32>
    %55 = vector.shape_cast %54 : vector<1xf32> to vector<1x1x1x1xf32>
    %56 = vector.extract %55[0, 0, 0, 0] : f32 from vector<1x1x1x1xf32>
    %57 = tpu.iota {dimensions = array<i32: 1>} : vector<1x8x128xi32>
    %c0_i32 = arith.constant 0 : i32
    %58 = vector.broadcast %c0_i32 : i32 to vector<1x8x128xi32>
    %59 = arith.cmpi eq, %57, %58 : vector<1x8x128xi32>
    %c1_i32 = arith.constant 1 : i32
    %60 = vector.broadcast %c1_i32 : i32 to vector<1x8x128xi32>
    %61 = arith.cmpi eq, %57, %60 : vector<1x8x128xi32>
    %cst_19 = arith.constant 0.000000e+00 : f32
    %62 = vector.broadcast %56 : f32 to vector<1x8x128xf32>
    %63 = vector.broadcast %cst_19 : f32 to vector<1x8x128xf32>
    %64 = arith.select %61, %62, %63 : vector<1x8x128xi1>, vector<1x8x128xf32>
    %65 = vector.broadcast %7 : f32 to vector<1x8x128xf32>
    %66 = arith.select %59, %65, %64 : vector<1x8x128xi1>, vector<1x8x128xf32>
    %c0_20 = arith.constant 0 : index
    %c0_21 = arith.constant 0 : index
    %c0_22 = arith.constant 0 : index
    %67 = vector.load %arg5[%c0_20, %c0_21, %c0_22] : memref<1x8x128xf32, #tpu.memory_space<vmem>>, vector<1x8x128xf32>
    tpu.vector_store %arg5[%c0_20, %c0_21, %c0_22], %66 {strides = array<i32>} : memref<1x8x128xf32, #tpu.memory_space<vmem>>, vector<1x8x128xf32>,
    return
  }
  func.func @transform_0(%arg0: i32) -> (i32, i32) {
    %c0_i32 = arith.constant 0 : i32
    %c0_i32_0 = arith.constant 0 : i32
    %c0_i32_1 = arith.constant 0 : i32
    return %c0_i32, %c0_i32_0 : i32, i32
  }
  func.func @transform_1(%arg0: i32) -> (i32, i32) {
    %c0_i32 = arith.constant 0 : i32
    %c0_i32_0 = arith.constant 0 : i32
    %c0_i32_1 = arith.constant 0 : i32
    return %c0_i32, %c0_i32_0 : i32, i32
  }
  func.func @transform_2(%arg0: i32) -> (i32, i32, i32) {
    %c0_i32 = arith.constant 0 : i32
    %c0_i32_0 = arith.constant 0 : i32
    %c0_i32_1 = arith.constant 0 : i32
    return %arg0, %c0_i32, %c0_i32_0 : i32, i32, i32
  }
  func.func @transform_3(%arg0: i32) -> (i32, i32, i32) {
    %c0_i32 = arith.constant 0 : i32
    %c0_i32_0 = arith.constant 0 : i32
    %c0_i32_1 = arith.constant 0 : i32
    return %arg0, %c0_i32, %c0_i32_0 : i32, i32, i32
  }
  func.func @transform_4(%arg0: i32) -> (i32, i32, i32) {
    %c0_i32 = arith.constant 0 : i32
    %c0_i32_0 = arith.constant 0 : i32
    %c0_i32_1 = arith.constant 0 : i32
    return %arg0, %c0_i32, %c0_i32_0 : i32, i32, i32
  }
}

</mosaic_0001>

<llo_original>
// kernel: tpu_custom_call.1
$region0: #{tpu_custom_call.1}
  #allocation0 [shape = 'u32[]', space=smem, size = 0x4, offset = 0x4, fixed_abs, tag = 'smem constant byte address 0x4 - core index']
  #allocation1 [shape = 'u32[144,128]{1,0:T(1,128)}', space=vmem, size = 0x12000, scoped, tag = 'internal scratch']
  %s0 = inlined_call_operand.hbm [shape: f32[16,16], index: 0, kind: input, shape index: {}]
  %s1 = inlined_call_operand.hbm [shape: f32[16,16], index: 1, kind: input, shape index: {}]
  %s2 = inlined_call_operand.hbm [shape: f32[8,16,16], index: 2, kind: input, shape index: {}]
  %s3 = inlined_call_operand.hbm [shape: f32[8,16,16], index: 3, kind: input, shape index: {}]
  %s4 = inlined_call_operand.hbm [shape: f32[4,8,128], index: 4, kind: output, shape index: {}]
  %s5 = sld [smem:[#allocation0]]
  $region65: #{tpu_custom_call.1} parent=0
    _
  %s7 = ssub.s32 1, %s5
  %s8 = scalar_select 0, %s7, %s5
  $region1: #{tpu_custom_call.1} parent=0
    #allocation2 [shape = 'u8[8192]{0}', space=vmem, size = 0x2000, scoped, tag = 'input window, operand 0, single buffered']
    #allocation3 [shape = 's32[2]{0}', space=sflag, size = 0x8, scoped, tag = 'scoped memory for tpu_custom_call.1']
    #allocation4 [shape = 's32[2]{0}', space=sflag, size = 0x8, scoped, tag = 'scoped memory for tpu_custom_call.1']
    #allocation5 [shape = 'u8[8192]{0}', space=vmem, size = 0x2000, scoped, tag = 'input window, operand 1, single buffered']
    #allocation6 [shape = 's32[1]{0}', space=sflag, size = 0x4, scoped, tag = 'scoped memory for tpu_custom_call.1']
    #allocation7 [shape = 'u8[32768]{0}', space=vmem, size = 0x8000, scoped, tag = 'input window, operand 2']
    #allocation8 [shape = 'u8[32768]{0}', space=vmem, size = 0x8000, scoped, tag = 'input window, operand 3']
    #allocation9 [shape = 'u8[8192]{0}', space=vmem, size = 0x2000, scoped, tag = 'output window, operand 0']
    %9 = vsyncpa [#allocation3], 0
    %10 = vsyncpa [#allocation6], 0
    %11 = vsyncpa [#allocation4], 0
    %s12 = scalar_lea.sflag [#allocation4], 1
    %13 = vsyncpa %s12, 0
    loop: start=0, step=1, limit=6
    $region2: #{tpu_custom_call.1} parent=1 // loop_pre_header
      _
    $region3: #{tpu_custom_call.1} parent=1 // loop_header
      %s15 = sphi 0, %s19
      %p16 = scmp.ge.s32.totalorder %s15, 6
      %s23 = sphi 0, %s23
      %s25 = sphi 0, %s23
      %s26 = sphi 0, %s25
      %s40 = sphi 0, %s26
      %s44 = sphi 0, %s44
      %s46 = sphi 0, %s44
      %s47 = sphi 0, %s46
      %s61 = sphi 0, %s47
      %s67 = sphi 0, %s69
      %s70 = sphi 0, %s67
      %s71 = sphi 0, %s70
      %s87 = sphi 0, %s71
      %s93 = sphi 0, %s95
      %s96 = sphi 0, %s93
      %s97 = sphi 0, %s96
      %s113 = sphi 0, %s97
      %s119 = sphi 0, %s121
      %s122 = sphi 0, %s119
      %s123 = sphi 0, %s122
      %s139 = sphi 0, %s123
    $region4: #{tpu_custom_call.1} parent=1 // loop_header_branch
      %18 = sbr.rel (%p16) target = $region8
    $region5: #{tpu_custom_call.1} parent=1 // loop_body
      %s20 = ssub.s32 %s15, 1
      %s21 = ssub.s32 %s15, 2
      %s22 = sadd.s32 %s15, 1
      %s24 = sadd.s32 %s23, 1
      %p27 = scmp.eq.s32.totalorder %s15, 3
      %p28 = scmp.ne.s32.totalorder %s23, %s25
      %p29 = scmp.eq.s32.totalorder %s15, 0
      %p30 = por %p28, %p29
      %p31 = scmp.ne.s32.totalorder %s23, %s25
      %p32 = scmp.eq.s32.totalorder %s20, 3
      %p33 = por %p31, %p32
      %p34 = scmp.ne.s32.totalorder %s25, %s26
      %p35 = scmp.eq.s32.totalorder %s20, 0
      %p36 = por %p34, %p35
      %p37 = scmp.ne.s32.totalorder %s25, %s26
      %p38 = scmp.eq.s32.totalorder %s21, 3
      %p39 = por %p37, %p38
      %p41 = scmp.ne.s32.totalorder %s26, %s40
      %p42 = scmp.eq.s32.totalorder %s21, 0
      %p43 = por %p41, %p42
      %s45 = sadd.s32 %s44, 1
      %p48 = scmp.eq.s32.totalorder %s15, 3
      %p49 = scmp.ne.s32.totalorder %s44, %s46
      %p50 = scmp.eq.s32.totalorder %s15, 0
      %p51 = por %p49, %p50
      %p52 = scmp.ne.s32.totalorder %s44, %s46
      %p53 = scmp.eq.s32.totalorder %s20, 3
      %p54 = por %p52, %p53
      %p55 = scmp.ne.s32.totalorder %s46, %s47
      %p56 = scmp.eq.s32.totalorder %s20, 0
      %p57 = por %p55, %p56
      %p58 = scmp.ne.s32.totalorder %s46, %s47
      %p59 = scmp.eq.s32.totalorder %s21, 3
      %p60 = por %p58, %p59
      %p62 = scmp.ne.s32.totalorder %s47, %s61
      %p63 = scmp.eq.s32.totalorder %s21, 0
      %p64 = por %p62, %p63
      %s65 = ssub.s32 %s15, %s22
      %p66 = scmp.eq.s32.totalorder %s65, 0
      %s68 = sadd.s32 %s67, 1
      %s69 = scalar_select %p66, %s67, %s68
      %p72 = pneg %p66
      %p73 = scmp.eq.s32.totalorder %s15, 3
      %p74 = por %p72, %p73
      %p75 = scmp.ne.s32.totalorder %s67, %s70
      %p76 = scmp.eq.s32.totalorder %s15, 0
      %p77 = por %p75, %p76
      %p78 = scmp.ne.s32.totalorder %s67, %s70
      %p79 = scmp.eq.s32.totalorder %s20, 3
      %p80 = por %p78, %p79
      %p81 = scmp.ne.s32.totalorder %s70, %s71
      %p82 = scmp.eq.s32.totalorder %s20, 0
      %p83 = por %p81, %p82
      %p84 = scmp.ne.s32.totalorder %s70, %s71
      %p85 = scmp.eq.s32.totalorder %s21, 3
      %p86 = por %p84, %p85
      %p88 = scmp.ne.s32.totalorder %s71, %s87
      %p89 = scmp.eq.s32.totalorder %s21, 0
      %p90 = por %p88, %p89
      %s91 = ssub.s32 %s15, %s22
      %p92 = scmp.eq.s32.totalorder %s91, 0
      %s94 = sadd.s32 %s93, 1
      %s95 = scalar_select %p92, %s93, %s94
      %p98 = pneg %p92
      %p99 = scmp.eq.s32.totalorder %s15, 3
      %p100 = por %p98, %p99
      %p101 = scmp.ne.s32.totalorder %s93, %s96
      %p102 = scmp.eq.s32.totalorder %s15, 0
      %p103 = por %p101, %p102
      %p104 = scmp.ne.s32.totalorder %s93, %s96
      %p105 = scmp.eq.s32.totalorder %s20, 3
      %p106 = por %p104, %p105
      %p107 = scmp.ne.s32.totalorder %s96, %s97
      %p108 = scmp.eq.s32.totalorder %s20, 0
      %p109 = por %p107, %p108
      %p110 = scmp.ne.s32.totalorder %s96, %s97
      %p111 = scmp.eq.s32.totalorder %s21, 3
      %p112 = por %p110, %p111
      %p114 = scmp.ne.s32.totalorder %s97, %s113
      %p115 = scmp.eq.s32.totalorder %s21, 0
      %p116 = por %p114, %p115
      %s117 = ssub.s32 %s15, %s22
      %p118 = scmp.eq.s32.totalorder %s117, 0
      %s120 = sadd.s32 %s119, 1
      %s121 = scalar_select %p118, %s119, %s120
      %p124 = pneg %p118
      %p125 = scmp.eq.s32.totalorder %s15, 3
      %p126 = por %p124, %p125
      %p127 = scmp.ne.s32.totalorder %s119, %s122
      %p128 = scmp.eq.s32.totalorder %s15, 0
      %p129 = por %p127, %p128
      %p130 = scmp.ne.s32.totalorder %s119, %s122
      %p131 = scmp.eq.s32.totalorder %s20, 3
      %p132 = por %p130, %p131
      %p133 = scmp.ne.s32.totalorder %s122, %s123
      %p134 = scmp.eq.s32.totalorder %s20, 0
      %p135 = por %p133, %p134
      %p136 = scmp.ne.s32.totalorder %s122, %s123
      %p137 = scmp.eq.s32.totalorder %s21, 3
      %p138 = por %p136, %p137
      %p140 = scmp.ne.s32.totalorder %s123, %s139
      %p141 = scmp.eq.s32.totalorder %s21, 0
      %p142 = por %p140, %p141
      %p143 = scmp.le.s32.totalorder 1, %s15
      %p144 = scmp.lt.s32.totalorder %s15, 5
      %p145 = pnand %p143, %p144
      %p146 = pneg %p145
      // Predicated region
      $region9: #{tpu_custom_call.1} parent=5 // pred_check
        _
      $region10: #{tpu_custom_call.1} parent=5 // pred_check_branch
        %148 = sbr.rel (%p145) target = $region12
      $region11: #{tpu_custom_call.1} parent=5 // pred_region
        %s149 = ssub.s32 %s15, 1
        // Predicated region
        $region13: #{tpu_custom_call.1} parent=11 // pred_check
          %p150 = pneg %p36
        $region14: #{tpu_custom_call.1} parent=11 // pred_check_branch
          %152 = sbr.rel (%p150) target = $region16
        $region15: #{tpu_custom_call.1} parent=11 // pred_region
          %s154 = ssub.s32 256, 256
          %155 = vsyncadd [#allocation3], %s154
          %s156 = sshll.u32 [#allocation2], 4
          %s157 = int_to_ptr.vmem [resolvable:$true] %s156
          %162 = dma.hbm_to_vmem [thread:$0]  %s0, 256, %s157, [#allocation3], 128, 128, 8
        $region16: #{tpu_custom_call.1} parent=11 // pred_fallthru
          _
        // Predicated region
        $region17: #{tpu_custom_call.1} parent=11 // pred_check
          %p163 = pneg %p57
        $region18: #{tpu_custom_call.1} parent=11 // pred_check_branch
          %165 = sbr.rel (%p163) target = $region20
        $region19: #{tpu_custom_call.1} parent=11 // pred_region
          %s167 = ssub.s32 256, 256
          %168 = vsyncadd [#allocation6], %s167
          %s169 = sshll.u32 [#allocation5], 4
          %s170 = int_to_ptr.vmem [resolvable:$true] %s169
          %175 = dma.hbm_to_vmem [thread:$0]  %s1, 256, %s170, [#allocation6], 128, 128, 8
        $region20: #{tpu_custom_call.1} parent=11 // pred_fallthru
          _
      $region12: #{tpu_custom_call.1} parent=5 // pred_fallthru
        _
      %p176 = scmp.lt.s32.totalorder %s15, 4
      // Predicated region
      $region21: #{tpu_custom_call.1} parent=5 // pred_check
        %p177 = pneg %p176
      $region22: #{tpu_custom_call.1} parent=5 // pred_check_branch
        %179 = sbr.rel (%p177) target = $region24
      $region23: #{tpu_custom_call.1} parent=5 // pred_region
        // Predicated region
        $region25: #{tpu_custom_call.1} parent=23 // pred_check
          %p180 = pneg %p77
        $region26: #{tpu_custom_call.1} parent=23 // pred_check_branch
          %182 = sbr.rel (%p180) target = $region28
        $region27: #{tpu_custom_call.1} parent=23 // pred_region
          %s183 = sand.u32 %s15, 1
          %s184 = scalar_lea.sflag [#allocation3], %s183
          %s185 = sand.u32 %s67, 1
          %s186 = smul.addr %s185, 32
          %s187 = scalar_lea.vmem [#allocation7], %s186
          %s188 = smul.u32 2, %s15
          %s190 = ssub.s32 512, 512
          %191 = vsyncadd %s184, %s190
          %s192 = smul.addr %s188, 2
          %s193 = smul.addr %s192, 128
          %s194 = scalar_lea.hbm %s2, %s193
          %s195 = sshll.u32 %s187, 4
          %s196 = int_to_ptr.vmem [resolvable:$true] %s195
          %201 = dma.hbm_to_vmem [thread:$0]  %s194, 512, %s196, %s184, 128, 128, 8
        $region28: #{tpu_custom_call.1} parent=23 // pred_fallthru
          _
        // Predicated region
        $region29: #{tpu_custom_call.1} parent=23 // pred_check
          %p202 = pneg %p103
        $region30: #{tpu_custom_call.1} parent=23 // pred_check_branch
          %204 = sbr.rel (%p202) target = $region32
        $region31: #{tpu_custom_call.1} parent=23 // pred_region
          %s205 = sand.u32 %s15, 1
          %s206 = scalar_lea.sflag [#allocation3], %s205
          %s207 = sand.u32 %s93, 1
          %s208 = smul.addr %s207, 32
          %s209 = scalar_lea.vmem [#allocation8], %s208
          %s210 = smul.u32 2, %s15
          %s212 = ssub.s32 512, 512
          %213 = vsyncadd %s206, %s212
          %s214 = smul.addr %s210, 2
          %s215 = smul.addr %s214, 128
          %s216 = scalar_lea.hbm %s3, %s215
          %s217 = sshll.u32 %s209, 4
          %s218 = int_to_ptr.vmem [resolvable:$true] %s217
          %223 = dma.hbm_to_vmem [thread:$0]  %s216, 512, %s218, %s206, 128, 128, 8
        $region32: #{tpu_custom_call.1} parent=23 // pred_fallthru
          _
      $region24: #{tpu_custom_call.1} parent=5 // pred_fallthru
        _
      %p224 = scmp.le.s32.totalorder 1, %s15
      %p225 = scmp.lt.s32.totalorder %s15, 5
      %p226 = pnand %p224, %p225
      %p227 = pneg %p226
      // Predicated region
      $region33: #{tpu_custom_call.1} parent=5 // pred_check
        _
      $region34: #{tpu_custom_call.1} parent=5 // pred_check_branch
        %229 = sbr.rel (%p226) target = $region36
      $region35: #{tpu_custom_call.1} parent=5 // pred_region
        %s230 = ssub.s32 %s15, 1
        // Predicated region
        $region37: #{tpu_custom_call.1} parent=35 // pred_check
          %p231 = pneg %p36
        $region38: #{tpu_custom_call.1} parent=35 // pred_check_branch
          %233 = sbr.rel (%p231) target = $region40
        $region39: #{tpu_custom_call.1} parent=35 // pred_region
          %234 = dma.done [#allocation3], 256
        $region40: #{tpu_custom_call.1} parent=35 // pred_fallthru
          _
        // Predicated region
        $region41: #{tpu_custom_call.1} parent=35 // pred_check
          %p235 = pneg %p57
        $region42: #{tpu_custom_call.1} parent=35 // pred_check_branch
          %237 = sbr.rel (%p235) target = $region44
        $region43: #{tpu_custom_call.1} parent=35 // pred_region
          %238 = dma.done [#allocation6], 256
        $region44: #{tpu_custom_call.1} parent=35 // pred_fallthru
          _
        %s239 = sand.u32 %s20, 1
        %s240 = scalar_lea.sflag [#allocation3], %s239
        %s241 = sand.u32 %s70, 1
        %s242 = smul.addr %s241, 32
        %s243 = scalar_lea.vmem [#allocation7], %s242
        // Predicated region
        $region45: #{tpu_custom_call.1} parent=35 // pred_check
          %p244 = pneg %p83
        $region46: #{tpu_custom_call.1} parent=35 // pred_check_branch
          %246 = sbr.rel (%p244) target = $region48
        $region47: #{tpu_custom_call.1} parent=35 // pred_region
          %247 = dma.done %s240, 512
        $region48: #{tpu_custom_call.1} parent=35 // pred_fallthru
          _
        %s248 = sand.u32 %s20, 1
        %s249 = scalar_lea.sflag [#allocation3], %s248
        %s250 = sand.u32 %s96, 1
        %s251 = smul.addr %s250, 32
        %s252 = scalar_lea.vmem [#allocation8], %s251
        // Predicated region
        $region49: #{tpu_custom_call.1} parent=35 // pred_check
          %p253 = pneg %p109
        $region50: #{tpu_custom_call.1} parent=35 // pred_check_branch
          %255 = sbr.rel (%p253) target = $region52
        $region51: #{tpu_custom_call.1} parent=35 // pred_region
          %256 = dma.done %s249, 512
        $region52: #{tpu_custom_call.1} parent=35 // pred_fallthru
          _
        %p257 = pneg %p36
        %p258 = pneg %p33
        %p259 = pneg %p57
        %p260 = pneg %p54
        %s261 = sand.u32 %s20, 1
        %s262 = scalar_lea.sflag [#allocation3], %s261
        %s263 = sand.u32 %s70, 1
        %s264 = smul.addr %s263, 32
        %s265 = scalar_lea.vmem [#allocation7], %s264
        %p266 = pneg %p83
        %p267 = pneg %p80
        %s268 = sand.u32 %s20, 1
        %s269 = scalar_lea.sflag [#allocation3], %s268
        %s270 = sand.u32 %s96, 1
        %s271 = smul.addr %s270, 32
        %s272 = scalar_lea.vmem [#allocation8], %s271
        %p273 = pneg %p109
        %p274 = pneg %p106
        %p275 = pneg %p135
        %p276 = pneg %p132
        %s277 = sand.u32 %s122, 1
        %s278 = scalar_lea.sflag [#allocation4], %s277
        %s279 = sand.u32 %s122, 1
        %s280 = smul.addr %s279, 8
        %s281 = scalar_lea.vmem [#allocation9], %s280
        %s282 = smul.u32 2, %s20
        %s283 = smul.u32 2, %s20
        %v284 = vld [vmem:[%s243] sm:$0xff]
        %v285 = vld [vmem:[%s243 + $0x8] sm:$0xff]
        %v286 = vld [vmem:[%s243 + $0x10] sm:$0xff]
        %v287 = vld [vmem:[%s243 + $0x18] sm:$0xff]
        %v288 = vld [vmem:[%s252] sm:$0xff]
        %v289 = vld [vmem:[%s252 + $0x8] sm:$0xff]
        %v290 = vld [vmem:[%s252 + $0x10] sm:$0xff]
        %v291 = vld [vmem:[%s252 + $0x18] sm:$0xff]
        %v292 = vsub.f32 %v284, %v288
        %v293 = vsub.f32 %v285, %v289
        %v294 = vsub.f32 %v286, %v290
        %v295 = vsub.f32 %v287, %v291
        %v296 = vmul.f32 %v292, %v292
        %v297 = vmul.f32 %v293, %v293
        %v298 = vmul.f32 %v294, %v294
        %v299 = vmul.f32 %v295, %v295
        %vm300 = vcmask 130048
        %v301 = vsel %vm300, %v296, 0.0
        %v302 = vsel %vm300, %v297, 0.0
        %v303 = vadd.f32 %v301, %v302
        %v304 = vsel %vm300, %v298, 0.0
        %v305 = vadd.f32 %v303, %v304
        %v306 = vsel %vm300, %v299, 0.0
        %v307 = vadd.f32 %v305, %v306
        %308 = vadd.xlane.f32.xlu0 %v307
        %v309 = vpop.xlane.xlu0 %308
        %v310 = vrot.slane %v309, 4
        %v311 = vadd.f32 %v309, %v310
        %v312 = vrot.slane %v311, 2
        %v313 = vadd.f32 %v311, %v312
        %v314 = vrot.slane %v313, 1
        %v315 = vadd.f32 %v313, %v314
        %s316 = vtos %v315
        %v317 = vmul.f32 %v284, %v284
        %v318 = vmul.f32 %v285, %v285
        %v319 = vmul.f32 %v286, %v286
        %v320 = vmul.f32 %v287, %v287
        %v321 = vmul.f32 %v288, %v288
        %v322 = vmul.f32 %v289, %v289
        %v323 = vmul.f32 %v290, %v290
        %v324 = vmul.f32 %v291, %v291
        %v325 = vmul.f32 %v284, %v288
        %v326 = vmul.f32 %v285, %v289
        %v327 = vmul.f32 %v286, %v290
        %v328 = vmul.f32 %v287, %v291
        %v329 = vld [vmem:[#allocation5] sm:$0xff]
        %v330 = vld [vmem:[#allocation5 + $0x8] sm:$0xff]
        %v331 = vld [vmem:[#allocation2] sm:$0xff]
        %v332 = vld [vmem:[#allocation2 + $0x8] sm:$0xff]
        %v334 = vsel %vm300, %v284, 0
        %v337 = vsel %vm300, %v285, 0
        %339 = vmatprep.subr.mxu0 0.0
        %340 = vmatpush1.msra.mxu0 0.0
        %341 = vmatprep.subr.mxu0 0.0
        %342 = vmatpush1.msra.mxu0 0.0
        %343 = vmatprep.subr.mxu0 0.0
        %344 = vmatpush1.msra.mxu0 0.0
        %345 = vmatprep.subr.mxu0 0.0
        %346 = vmatpush1.msra.mxu0 0.0
        %347 = vmatprep.subr.mxu0 0.0
        %348 = vmatpush1.msra.mxu0 0.0
        %349 = vmatprep.subr.mxu0 0.0
        %350 = vmatpush1.msra.mxu0 0.0
        %351 = vmatprep.subr.mxu0 0.0
        %352 = vmatpush1.msra.mxu0 0.0
        %353 = vmatprep.subr.mxu0 0.0
        %354 = vmatpush1.msra.mxu0 0.0
        %355 = vmatprep.subr.mxu0 0.0
        %356 = vmatpush1.msra.mxu0 0.0
        %357 = vmatprep.subr.mxu0 0.0
        %358 = vmatpush1.msra.mxu0 0.0
        %359 = vmatprep.subr.mxu0 0.0
        %360 = vmatpush1.msra.mxu0 0.0
        %361 = vmatprep.subr.mxu0 0.0
        %362 = vmatpush1.msra.mxu0 0.0
        %363 = vmatprep.subr.mxu0 0.0
        %364 = vmatpush1.msra.mxu0 0.0
        %365 = vmatprep.subr.mxu0 0.0
        %366 = vmatpush1.msra.mxu0 0.0
        %367 = vmatprep.subr.mxu0 0.0
        %v368 = vand.u32 %v330, 4294901760
        %369 = vmatpush1.msra.mxu0 %v368
        %370 = vmatprep.subr.mxu0 0.0
        %v371 = vand.u32 %v329, 4294901760
        %372 = vmatpush1.msra.mxu0 %v371
        %373 = vmatprep.subr.mxu0 0.0
        %374 = vmatpush2.msra.mxu0 0.0
        %375 = vmatprep.subr.mxu0 0.0
        %376 = vmatpush2.msra.mxu0 0.0
        %377 = vmatprep.subr.mxu0 0.0
        %378 = vmatpush2.msra.mxu0 0.0
        %379 = vmatprep.subr.mxu0 0.0
        %380 = vmatpush2.msra.mxu0 0.0
        %381 = vmatprep.subr.mxu0 0.0
        %382 = vmatpush2.msra.mxu0 0.0
        %383 = vmatprep.subr.mxu0 0.0
        %384 = vmatpush2.msra.mxu0 0.0
        %385 = vmatprep.subr.mxu0 0.0
        %386 = vmatpush2.msra.mxu0 0.0
        %387 = vmatprep.subr.mxu0 0.0
        %388 = vmatpush2.msra.mxu0 0.0
        %389 = vmatprep.subr.mxu0 0.0
        %390 = vmatpush2.msra.mxu0 0.0
        %391 = vmatprep.subr.mxu0 0.0
        %392 = vmatpush2.msra.mxu0 0.0
        %393 = vmatprep.subr.mxu0 0.0
        %394 = vmatpush2.msra.mxu0 0.0
        %395 = vmatprep.subr.mxu0 0.0
        %396 = vmatpush2.msra.mxu0 0.0
        %397 = vmatprep.subr.mxu0 0.0
        %398 = vmatpush2.msra.mxu0 0.0
        %399 = vmatprep.subr.mxu0 0.0
        %400 = vmatpush2.msra.mxu0 0.0
        %401 = vmatprep.subr.mxu0 0.0
        %402 = vmatpush2.msra.mxu0 0.0
        %403 = vmatprep.subr.mxu0 0.0
        %404 = vmatpush2.msra.mxu0 0.0
        %405 = vmatprep.mubr.f32.mxu0 0.0
        %v406 = vand.u32 %v334, 4294901760
        %v407 = vsub.f32 %v334, %v406
        %v408 = vand.u32 %v407, 4294901760
        %v409 = vsub.f32 %v407, %v408
        %v410 = vand.u32 %v409, 4294901760
        %411 = vmatmul.mubr.f32.gmra.mxu0 %v410
        %v412 = vpop.f32.mrf.mxu0
        %v413 = vadd.f32 0.0, %v412
        %v414 = vpop.f32.mrf.mxu0
        %415 = vmatprep.mubr.f32.mxu0 0.0
        %v416 = vand.u32 %v337, 4294901760
        %v417 = vsub.f32 %v337, %v416
        %v418 = vand.u32 %v417, 4294901760
        %v419 = vsub.f32 %v417, %v418
        %v420 = vand.u32 %v419, 4294901760
        %421 = vmatmul.mubr.f32.gmra.mxu0 %v420
        %v422 = vpop.f32.mrf.mxu0
        %v423 = vadd.f32 0.0, %v422
        %v424 = vpop.f32.mrf.mxu0
        %425 = vdwg.mxu0
        %426 = vmatprep.subr.mxu0 0.0
        %427 = vmatpush1.msra.mxu0 0.0
        %428 = vmatprep.subr.mxu0 0.0
        %429 = vmatpush1.msra.mxu0 0.0
        %430 = vmatprep.subr.mxu0 0.0
        %431 = vmatpush1.msra.mxu0 0.0
        %432 = vmatprep.subr.mxu0 0.0
        %433 = vmatpush1.msra.mxu0 0.0
        %434 = vmatprep.subr.mxu0 0.0
        %435 = vmatpush1.msra.mxu0 0.0
        %436 = vmatprep.subr.mxu0 0.0
        %437 = vmatpush1.msra.mxu0 0.0
        %438 = vmatprep.subr.mxu0 0.0
        %439 = vmatpush1.msra.mxu0 0.0
        %440 = vmatprep.subr.mxu0 0.0
        %441 = vmatpush1.msra.mxu0 0.0
        %442 = vmatprep.subr.mxu0 0.0
        %443 = vmatpush1.msra.mxu0 0.0
        %444 = vmatprep.subr.mxu0 0.0
        %445 = vmatpush1.msra.mxu0 0.0
        %446 = vmatprep.subr.mxu0 0.0
        %447 = vmatpush1.msra.mxu0 0.0
        %448 = vmatprep.subr.mxu0 0.0
        %449 = vmatpush1.msra.mxu0 0.0
        %450 = vmatprep.subr.mxu0 0.0
        %451 = vmatpush1.msra.mxu0 0.0
        %452 = vmatprep.subr.mxu0 0.0
        %453 = vmatpush1.msra.mxu0 0.0
        %454 = vmatprep.subr.mxu0 0.0
        %v455 = vand.u32 %v330, 4294901760
        %v456 = vsub.f32 %v330, %v455
        %v457 = vand.u32 %v456, 4294901760
        %v458 = vsub.f32 %v456, %v457
        %v459 = vand.u32 %v458, 4294901760
        %460 = vmatpush1.msra.mxu0 %v459
        %461 = vmatprep.subr.mxu0 0.0
        %v462 = vand.u32 %v329, 4294901760
        %v463 = vsub.f32 %v329, %v462
        %v464 = vand.u32 %v463, 4294901760
        %v465 = vsub.f32 %v463, %v464
        %v466 = vand.u32 %v465, 4294901760
        %467 = vmatpush1.msra.mxu0 %v466
        %468 = vmatprep.subr.mxu0 0.0
        %469 = vmatpush2.msra.mxu0 0.0
        %470 = vmatprep.subr.mxu0 0.0
        %471 = vmatpush2.msra.mxu0 0.0
        %472 = vmatprep.subr.mxu0 0.0
        %473 = vmatpush2.msra.mxu0 0.0
        %474 = vmatprep.subr.mxu0 0.0
        %475 = vmatpush2.msra.mxu0 0.0
        %476 = vmatprep.subr.mxu0 0.0
        %477 = vmatpush2.msra.mxu0 0.0
        %478 = vmatprep.subr.mxu0 0.0
        %479 = vmatpush2.msra.mxu0 0.0
        %480 = vmatprep.subr.mxu0 0.0
        %481 = vmatpush2.msra.mxu0 0.0
        %482 = vmatprep.subr.mxu0 0.0
        %483 = vmatpush2.msra.mxu0 0.0
        %484 = vmatprep.subr.mxu0 0.0
        %485 = vmatpush2.msra.mxu0 0.0
        %486 = vmatprep.subr.mxu0 0.0
        %487 = vmatpush2.msra.mxu0 0.0
        %488 = vmatprep.subr.mxu0 0.0
        %489 = vmatpush2.msra.mxu0 0.0
        %490 = vmatprep.subr.mxu0 0.0
        %491 = vmatpush2.msra.mxu0 0.0
        %492 = vmatprep.subr.mxu0 0.0
        %493 = vmatpush2.msra.mxu0 0.0
        %494 = vmatprep.subr.mxu0 0.0
        %495 = vmatpush2.msra.mxu0 0.0
        %496 = vmatprep.subr.mxu0 0.0
        %497 = vmatpush2.msra.mxu0 0.0
        %498 = vmatprep.subr.mxu0 0.0
        %499 = vmatpush2.msra.mxu0 0.0
        %500 = vmatprep.mubr.f32.mxu0 0.0
        %v501 = vand.u32 %v334, 4294901760
        %502 = vmatmul.mubr.f32.gmra.mxu0 %v501
        %v503 = vpop.f32.mrf.mxu0
        %v504 = vadd.f32 %v413, %v503
        %v505 = vpop.f32.mrf.mxu0
        %506 = vmatprep.mubr.f32.mxu0 0.0
        %v507 = vand.u32 %v337, 4294901760
        %508 = vmatmul.mubr.f32.gmra.mxu0 %v507
        %v509 = vpop.f32.mrf.mxu0
        %v510 = vadd.f32 %v423, %v509
        %v511 = vpop.f32.mrf.mxu0
        %512 = vdwg.mxu0
        %513 = vmatprep.subr.mxu0 0.0
        %514 = vmatpush1.msra.mxu0 0.0
        %515 = vmatprep.subr.mxu0 0.0
        %516 = vmatpush1.msra.mxu0 0.0
        %517 = vmatprep.subr.mxu0 0.0
        %518 = vmatpush1.msra.mxu0 0.0
        %519 = vmatprep.subr.mxu0 0.0
        %520 = vmatpush1.msra.mxu0 0.0
        %521 = vmatprep.subr.mxu0 0.0
        %522 = vmatpush1.msra.mxu0 0.0
        %523 = vmatprep.subr.mxu0 0.0
        %524 = vmatpush1.msra.mxu0 0.0
        %525 = vmatprep.subr.mxu0 0.0
        %526 = vmatpush1.msra.mxu0 0.0
        %527 = vmatprep.subr.mxu0 0.0
        %528 = vmatpush1.msra.mxu0 0.0
        %529 = vmatprep.subr.mxu0 0.0
        %530 = vmatpush1.msra.mxu0 0.0
        %531 = vmatprep.subr.mxu0 0.0
        %532 = vmatpush1.msra.mxu0 0.0
        %533 = vmatprep.subr.mxu0 0.0
        %534 = vmatpush1.msra.mxu0 0.0
        %535 = vmatprep.subr.mxu0 0.0
        %536 = vmatpush1.msra.mxu0 0.0
        %537 = vmatprep.subr.mxu0 0.0
        %538 = vmatpush1.msra.mxu0 0.0
        %539 = vmatprep.subr.mxu0 0.0
        %540 = vmatpush1.msra.mxu0 0.0
        %541 = vmatprep.subr.mxu0 0.0
        %v542 = vand.u32 %v330, 4294901760
        %v543 = vsub.f32 %v330, %v542
        %544 = vmatpush1.msra.mxu0 %v543
        %545 = vmatprep.subr.mxu0 0.0
        %v546 = vand.u32 %v329, 4294901760
        %v547 = vsub.f32 %v329, %v546
        %548 = vmatpush1.msra.mxu0 %v547
        %549 = vmatprep.subr.mxu0 0.0
        %550 = vmatpush2.msra.mxu0 0.0
        %551 = vmatprep.subr.mxu0 0.0
        %552 = vmatpush2.msra.mxu0 0.0
        %553 = vmatprep.subr.mxu0 0.0
        %554 = vmatpush2.msra.mxu0 0.0
        %555 = vmatprep.subr.mxu0 0.0
        %556 = vmatpush2.msra.mxu0 0.0
        %557 = vmatprep.subr.mxu0 0.0
        %558 = vmatpush2.msra.mxu0 0.0
        %559 = vmatprep.subr.mxu0 0.0
        %560 = vmatpush2.msra.mxu0 0.0
        %561 = vmatprep.subr.mxu0 0.0
        %562 = vmatpush2.msra.mxu0 0.0
        %563 = vmatprep.subr.mxu0 0.0
        %564 = vmatpush2.msra.mxu0 0.0
        %565 = vmatprep.subr.mxu0 0.0
        %566 = vmatpush2.msra.mxu0 0.0
        %567 = vmatprep.subr.mxu0 0.0
        %568 = vmatpush2.msra.mxu0 0.0
        %569 = vmatprep.subr.mxu0 0.0
        %570 = vmatpush2.msra.mxu0 0.0
        %571 = vmatprep.subr.mxu0 0.0
        %572 = vmatpush2.msra.mxu0 0.0
        %573 = vmatprep.subr.mxu0 0.0
        %574 = vmatpush2.msra.mxu0 0.0
        %575 = vmatprep.subr.mxu0 0.0
        %576 = vmatpush2.msra.mxu0 0.0
        %577 = vmatprep.subr.mxu0 0.0
        %578 = vmatpush2.msra.mxu0 0.0
        %579 = vmatprep.subr.mxu0 0.0
        %580 = vmatpush2.msra.mxu0 0.0
        %581 = vmatprep.mubr.f32.mxu0 0.0
        %v582 = vand.u32 %v334, 4294901760
        %v583 = vsub.f32 %v334, %v582
        %584 = vmatmul.mubr.f32.gmra.mxu0 %v583
        %v585 = vpop.f32.mrf.mxu0
        %v586 = vadd.f32 %v504, %v585
        %v587 = vpop.f32.mrf.mxu0
        %588 = vmatprep.mubr.f32.mxu0 0.0
        %v589 = vand.u32 %v337, 4294901760
        %v590 = vsub.f32 %v337, %v589
        %591 = vmatmul.mubr.f32.gmra.mxu0 %v590
        %v592 = vpop.f32.mrf.mxu0
        %v593 = vadd.f32 %v510, %v592
        %v594 = vpop.f32.mrf.mxu0
        %595 = vdwg.mxu0
        %596 = vmatprep.subr.mxu0 0.0
        %597 = vmatpush1.msra.mxu0 0.0
        %598 = vmatprep.subr.mxu0 0.0
        %599 = vmatpush1.msra.mxu0 0.0
        %600 = vmatprep.subr.mxu0 0.0
        %601 = vmatpush1.msra.mxu0 0.0
        %602 = vmatprep.subr.mxu0 0.0
        %603 = vmatpush1.msra.mxu0 0.0
        %604 = vmatprep.subr.mxu0 0.0
        %605 = vmatpush1.msra.mxu0 0.0
        %606 = vmatprep.subr.mxu0 0.0
        %607 = vmatpush1.msra.mxu0 0.0
        %608 = vmatprep.subr.mxu0 0.0
        %609 = vmatpush1.msra.mxu0 0.0
        %610 = vmatprep.subr.mxu0 0.0
        %611 = vmatpush1.msra.mxu0 0.0
        %612 = vmatprep.subr.mxu0 0.0
        %613 = vmatpush1.msra.mxu0 0.0
        %614 = vmatprep.subr.mxu0 0.0
        %615 = vmatpush1.msra.mxu0 0.0
        %616 = vmatprep.subr.mxu0 0.0
        %617 = vmatpush1.msra.mxu0 0.0
        %618 = vmatprep.subr.mxu0 0.0
        %619 = vmatpush1.msra.mxu0 0.0
        %620 = vmatprep.subr.mxu0 0.0
        %621 = vmatpush1.msra.mxu0 0.0
        %622 = vmatprep.subr.mxu0 0.0
        %623 = vmatpush1.msra.mxu0 0.0
        %624 = vmatprep.subr.mxu0 0.0
        %v625 = vand.u32 %v330, 4294901760
        %626 = vmatpush1.msra.mxu0 %v625
        %627 = vmatprep.subr.mxu0 0.0
        %v628 = vand.u32 %v329, 4294901760
        %629 = vmatpush1.msra.mxu0 %v628
        %630 = vmatprep.subr.mxu0 0.0
        %631 = vmatpush2.msra.mxu0 0.0
        %632 = vmatprep.subr.mxu0 0.0
        %633 = vmatpush2.msra.mxu0 0.0
        %634 = vmatprep.subr.mxu0 0.0
        %635 = vmatpush2.msra.mxu0 0.0
        %636 = vmatprep.subr.mxu0 0.0
        %637 = vmatpush2.msra.mxu0 0.0
        %638 = vmatprep.subr.mxu0 0.0
        %639 = vmatpush2.msra.mxu0 0.0
        %640 = vmatprep.subr.mxu0 0.0
        %641 = vmatpush2.msra.mxu0 0.0
        %642 = vmatprep.subr.mxu0 0.0
        %643 = vmatpush2.msra.mxu0 0.0
        %644 = vmatprep.subr.mxu0 0.0
        %645 = vmatpush2.msra.mxu0 0.0
        %646 = vmatprep.subr.mxu0 0.0
        %647 = vmatpush2.msra.mxu0 0.0
        %648 = vmatprep.subr.mxu0 0.0
        %649 = vmatpush2.msra.mxu0 0.0
        %650 = vmatprep.subr.mxu0 0.0
        %651 = vmatpush2.msra.mxu0 0.0
        %652 = vmatprep.subr.mxu0 0.0
        %653 = vmatpush2.msra.mxu0 0.0
        %654 = vmatprep.subr.mxu0 0.0
        %655 = vmatpush2.msra.mxu0 0.0
        %656 = vmatprep.subr.mxu0 0.0
        %657 = vmatpush2.msra.mxu0 0.0
        %658 = vmatprep.subr.mxu0 0.0
        %659 = vmatpush2.msra.mxu0 0.0
        %660 = vmatprep.subr.mxu0 0.0
        %661 = vmatpush2.msra.mxu0 0.0
        %662 = vmatprep.mubr.f32.mxu0 0.0
        %v663 = vand.u32 %v334, 4294901760
        %v664 = vsub.f32 %v334, %v663
        %v665 = vand.u32 %v664, 4294901760
        %666 = vmatmul.mubr.f32.gmra.mxu0 %v665
        %v667 = vpop.f32.mrf.mxu0
        %v668 = vadd.f32 %v586, %v667
        %v669 = vpop.f32.mrf.mxu0
        %670 = vmatprep.mubr.f32.mxu0 0.0
        %v671 = vand.u32 %v337, 4294901760
        %v672 = vsub.f32 %v337, %v671
        %v673 = vand.u32 %v672, 4294901760
        %674 = vmatmul.mubr.f32.gmra.mxu0 %v673
        %v675 = vpop.f32.mrf.mxu0
        %v676 = vadd.f32 %v593, %v675
        %v677 = vpop.f32.mrf.mxu0
        %678 = vdwg.mxu0
        %679 = vmatprep.subr.mxu0 0.0
        %680 = vmatpush1.msra.mxu0 0.0
        %681 = vmatprep.subr.mxu0 0.0
        %682 = vmatpush1.msra.mxu0 0.0
        %683 = vmatprep.subr.mxu0 0.0
        %684 = vmatpush1.msra.mxu0 0.0
        %685 = vmatprep.subr.mxu0 0.0
        %686 = vmatpush1.msra.mxu0 0.0
        %687 = vmatprep.subr.mxu0 0.0
        %688 = vmatpush1.msra.mxu0 0.0
        %689 = vmatprep.subr.mxu0 0.0
        %690 = vmatpush1.msra.mxu0 0.0
        %691 = vmatprep.subr.mxu0 0.0
        %692 = vmatpush1.msra.mxu0 0.0
        %693 = vmatprep.subr.mxu0 0.0
        %694 = vmatpush1.msra.mxu0 0.0
        %695 = vmatprep.subr.mxu0 0.0
        %696 = vmatpush1.msra.mxu0 0.0
        %697 = vmatprep.subr.mxu0 0.0
        %698 = vmatpush1.msra.mxu0 0.0
        %699 = vmatprep.subr.mxu0 0.0
        %700 = vmatpush1.msra.mxu0 0.0
        %701 = vmatprep.subr.mxu0 0.0
        %702 = vmatpush1.msra.mxu0 0.0
        %703 = vmatprep.subr.mxu0 0.0
        %704 = vmatpush1.msra.mxu0 0.0
        %705 = vmatprep.subr.mxu0 0.0
        %706 = vmatpush1.msra.mxu0 0.0
        %707 = vmatprep.subr.mxu0 0.0
        %v708 = vand.u32 %v330, 4294901760
        %v709 = vsub.f32 %v330, %v708
        %v710 = vand.u32 %v709, 4294901760
        %711 = vmatpush1.msra.mxu0 %v710
        %712 = vmatprep.subr.mxu0 0.0
        %v713 = vand.u32 %v329, 4294901760
        %v714 = vsub.f32 %v329, %v713
        %v715 = vand.u32 %v714, 4294901760
        %716 = vmatpush1.msra.mxu0 %v715
        %717 = vmatprep.subr.mxu0 0.0
        %718 = vmatpush2.msra.mxu0 0.0
        %719 = vmatprep.subr.mxu0 0.0
        %720 = vmatpush2.msra.mxu0 0.0
        %721 = vmatprep.subr.mxu0 0.0
        %722 = vmatpush2.msra.mxu0 0.0
        %723 = vmatprep.subr.mxu0 0.0
        %724 = vmatpush2.msra.mxu0 0.0
        %725 = vmatprep.subr.mxu0 0.0
        %726 = vmatpush2.msra.mxu0 0.0
        %727 = vmatprep.subr.mxu0 0.0
        %728 = vmatpush2.msra.mxu0 0.0
        %729 = vmatprep.subr.mxu0 0.0
        %730 = vmatpush2.msra.mxu0 0.0
        %731 = vmatprep.subr.mxu0 0.0
        %732 = vmatpush2.msra.mxu0 0.0
        %733 = vmatprep.subr.mxu0 0.0
        %734 = vmatpush2.msra.mxu0 0.0
        %735 = vmatprep.subr.mxu0 0.0
        %736 = vmatpush2.msra.mxu0 0.0
        %737 = vmatprep.subr.mxu0 0.0
        %738 = vmatpush2.msra.mxu0 0.0
        %739 = vmatprep.subr.mxu0 0.0
        %740 = vmatpush2.msra.mxu0 0.0
        %741 = vmatprep.subr.mxu0 0.0
        %742 = vmatpush2.msra.mxu0 0.0
        %743 = vmatprep.subr.mxu0 0.0
        %744 = vmatpush2.msra.mxu0 0.0
        %745 = vmatprep.subr.mxu0 0.0
        %746 = vmatpush2.msra.mxu0 0.0
        %747 = vmatprep.subr.mxu0 0.0
        %748 = vmatpush2.msra.mxu0 0.0
        %749 = vmatprep.mubr.f32.mxu0 0.0
        %v750 = vand.u32 %v334, 4294901760
        %751 = vmatmul.mubr.f32.gmra.mxu0 %v750
        %v752 = vpop.f32.mrf.mxu0
        %v753 = vadd.f32 %v668, %v752
        %v754 = vpop.f32.mrf.mxu0
        %755 = vmatprep.mubr.f32.mxu0 0.0
        %v756 = vand.u32 %v337, 4294901760
        %757 = vmatmul.mubr.f32.gmra.mxu0 %v756
        %v758 = vpop.f32.mrf.mxu0
        %v759 = vadd.f32 %v676, %v758
        %v760 = vpop.f32.mrf.mxu0
        %761 = vdwg.mxu0
        %762 = vmatprep.subr.mxu0 0.0
        %763 = vmatpush1.msra.mxu0 0.0
        %764 = vmatprep.subr.mxu0 0.0
        %765 = vmatpush1.msra.mxu0 0.0
        %766 = vmatprep.subr.mxu0 0.0
        %767 = vmatpush1.msra.mxu0 0.0
        %768 = vmatprep.subr.mxu0 0.0
        %769 = vmatpush1.msra.mxu0 0.0
        %770 = vmatprep.subr.mxu0 0.0
        %771 = vmatpush1.msra.mxu0 0.0
        %772 = vmatprep.subr.mxu0 0.0
        %773 = vmatpush1.msra.mxu0 0.0
        %774 = vmatprep.subr.mxu0 0.0
        %775 = vmatpush1.msra.mxu0 0.0
        %776 = vmatprep.subr.mxu0 0.0
        %777 = vmatpush1.msra.mxu0 0.0
        %778 = vmatprep.subr.mxu0 0.0
        %779 = vmatpush1.msra.mxu0 0.0
        %780 = vmatprep.subr.mxu0 0.0
        %781 = vmatpush1.msra.mxu0 0.0
        %782 = vmatprep.subr.mxu0 0.0
        %783 = vmatpush1.msra.mxu0 0.0
        %784 = vmatprep.subr.mxu0 0.0
        %785 = vmatpush1.msra.mxu0 0.0
        %786 = vmatprep.subr.mxu0 0.0
        %787 = vmatpush1.msra.mxu0 0.0
        %788 = vmatprep.subr.mxu0 0.0
        %789 = vmatpush1.msra.mxu0 0.0
        %790 = vmatprep.subr.mxu0 0.0
        %v791 = vand.u32 %v330, 4294901760
        %792 = vmatpush1.msra.mxu0 %v791
        %793 = vmatprep.subr.mxu0 0.0
        %v794 = vand.u32 %v329, 4294901760
        %795 = vmatpush1.msra.mxu0 %v794
        %796 = vmatprep.subr.mxu0 0.0
        %797 = vmatpush2.msra.mxu0 0.0
        %798 = vmatprep.subr.mxu0 0.0
        %799 = vmatpush2.msra.mxu0 0.0
        %800 = vmatprep.subr.mxu0 0.0
        %801 = vmatpush2.msra.mxu0 0.0
        %802 = vmatprep.subr.mxu0 0.0
        %803 = vmatpush2.msra.mxu0 0.0
        %804 = vmatprep.subr.mxu0 0.0
        %805 = vmatpush2.msra.mxu0 0.0
        %806 = vmatprep.subr.mxu0 0.0
        %807 = vmatpush2.msra.mxu0 0.0
        %808 = vmatprep.subr.mxu0 0.0
        %809 = vmatpush2.msra.mxu0 0.0
        %810 = vmatprep.subr.mxu0 0.0
        %811 = vmatpush2.msra.mxu0 0.0
        %812 = vmatprep.subr.mxu0 0.0
        %813 = vmatpush2.msra.mxu0 0.0
        %814 = vmatprep.subr.mxu0 0.0
        %815 = vmatpush2.msra.mxu0 0.0
        %816 = vmatprep.subr.mxu0 0.0
        %817 = vmatpush2.msra.mxu0 0.0
        %818 = vmatprep.subr.mxu0 0.0
        %819 = vmatpush2.msra.mxu0 0.0
        %820 = vmatprep.subr.mxu0 0.0
        %821 = vmatpush2.msra.mxu0 0.0
        %822 = vmatprep.subr.mxu0 0.0
        %823 = vmatpush2.msra.mxu0 0.0
        %824 = vmatprep.subr.mxu0 0.0
        %825 = vmatpush2.msra.mxu0 0.0
        %826 = vmatprep.subr.mxu0 0.0
        %827 = vmatpush2.msra.mxu0 0.0
        %828 = vmatprep.mubr.f32.mxu0 0.0
        %v829 = vand.u32 %v334, 4294901760
        %830 = vmatmul.mubr.f32.gmra.mxu0 %v829
        %v831 = vpop.f32.mrf.mxu0
        %v832 = vadd.f32 %v753, %v831
        %v833 = vpop.f32.mrf.mxu0
        %834 = vmatprep.mubr.f32.mxu0 0.0
        %v835 = vand.u32 %v337, 4294901760
        %836 = vmatmul.mubr.f32.gmra.mxu0 %v835
        %v837 = vpop.f32.mrf.mxu0
        %v838 = vadd.f32 %v759, %v837
        %v839 = vpop.f32.mrf.mxu0
        %840 = vdwg.mxu0
        %v842 = vsel %vm300, %v286, 0
        %v845 = vsel %vm300, %v287, 0
        %847 = vmatprep.subr.mxu0 0.0
        %848 = vmatpush1.msra.mxu0 0.0
        %849 = vmatprep.subr.mxu0 0.0
        %850 = vmatpush1.msra.mxu0 0.0
        %851 = vmatprep.subr.mxu0 0.0
        %852 = vmatpush1.msra.mxu0 0.0
        %853 = vmatprep.subr.mxu0 0.0
        %854 = vmatpush1.msra.mxu0 0.0
        %855 = vmatprep.subr.mxu0 0.0
        %856 = vmatpush1.msra.mxu0 0.0
        %857 = vmatprep.subr.mxu0 0.0
        %858 = vmatpush1.msra.mxu0 0.0
        %859 = vmatprep.subr.mxu0 0.0
        %860 = vmatpush1.msra.mxu0 0.0
        %861 = vmatprep.subr.mxu0 0.0
        %862 = vmatpush1.msra.mxu0 0.0
        %863 = vmatprep.subr.mxu0 0.0
        %864 = vmatpush1.msra.mxu0 0.0
        %865 = vmatprep.subr.mxu0 0.0
        %866 = vmatpush1.msra.mxu0 0.0
        %867 = vmatprep.subr.mxu0 0.0
        %868 = vmatpush1.msra.mxu0 0.0
        %869 = vmatprep.subr.mxu0 0.0
        %870 = vmatpush1.msra.mxu0 0.0
        %871 = vmatprep.subr.mxu0 0.0
        %872 = vmatpush1.msra.mxu0 0.0
        %873 = vmatprep.subr.mxu0 0.0
        %874 = vmatpush1.msra.mxu0 0.0
        %875 = vmatprep.subr.mxu0 0.0
        %v876 = vand.u32 %v330, 4294901760
        %877 = vmatpush1.msra.mxu0 %v876
        %878 = vmatprep.subr.mxu0 0.0
        %v879 = vand.u32 %v329, 4294901760
        %880 = vmatpush1.msra.mxu0 %v879
        %881 = vmatprep.subr.mxu0 0.0
        %882 = vmatpush2.msra.mxu0 0.0
        %883 = vmatprep.subr.mxu0 0.0
        %884 = vmatpush2.msra.mxu0 0.0
        %885 = vmatprep.subr.mxu0 0.0
        %886 = vmatpush2.msra.mxu0 0.0
        %887 = vmatprep.subr.mxu0 0.0
        %888 = vmatpush2.msra.mxu0 0.0
        %889 = vmatprep.subr.mxu0 0.0
        %890 = vmatpush2.msra.mxu0 0.0
        %891 = vmatprep.subr.mxu0 0.0
        %892 = vmatpush2.msra.mxu0 0.0
        %893 = vmatprep.subr.mxu0 0.0
        %894 = vmatpush2.msra.mxu0 0.0
        %895 = vmatprep.subr.mxu0 0.0
        %896 = vmatpush2.msra.mxu0 0.0
        %897 = vmatprep.subr.mxu0 0.0
        %898 = vmatpush2.msra.mxu0 0.0
        %899 = vmatprep.subr.mxu0 0.0
        %900 = vmatpush2.msra.mxu0 0.0
        %901 = vmatprep.subr.mxu0 0.0
        %902 = vmatpush2.msra.mxu0 0.0
        %903 = vmatprep.subr.mxu0 0.0
        %904 = vmatpush2.msra.mxu0 0.0
        %905 = vmatprep.subr.mxu0 0.0
        %906 = vmatpush2.msra.mxu0 0.0
        %907 = vmatprep.subr.mxu0 0.0
        %908 = vmatpush2.msra.mxu0 0.0
        %909 = vmatprep.subr.mxu0 0.0
        %910 = vmatpush2.msra.mxu0 0.0
        %911 = vmatprep.subr.mxu0 0.0
        %912 = vmatpush2.msra.mxu0 0.0
        %913 = vmatprep.mubr.f32.mxu0 0.0
        %v914 = vand.u32 %v842, 4294901760
        %v915 = vsub.f32 %v842, %v914
        %v916 = vand.u32 %v915, 4294901760
        %v917 = vsub.f32 %v915, %v916
        %v918 = vand.u32 %v917, 4294901760
        %919 = vmatmul.mubr.f32.gmra.mxu0 %v918
        %v920 = vpop.f32.mrf.mxu0
        %v921 = vadd.f32 0.0, %v920
        %v922 = vpop.f32.mrf.mxu0
        %923 = vmatprep.mubr.f32.mxu0 0.0
        %v924 = vand.u32 %v845, 4294901760
        %v925 = vsub.f32 %v845, %v924
        %v926 = vand.u32 %v925, 4294901760
        %v927 = vsub.f32 %v925, %v926
        %v928 = vand.u32 %v927, 4294901760
        %929 = vmatmul.mubr.f32.gmra.mxu0 %v928
        %v930 = vpop.f32.mrf.mxu0
        %v931 = vadd.f32 0.0, %v930
        %v932 = vpop.f32.mrf.mxu0
        %933 = vdwg.mxu0
        %934 = vmatprep.subr.mxu0 0.0
        %935 = vmatpush1.msra.mxu0 0.0
        %936 = vmatprep.subr.mxu0 0.0
        %937 = vmatpush1.msra.mxu0 0.0
        %938 = vmatprep.subr.mxu0 0.0
        %939 = vmatpush1.msra.mxu0 0.0
        %940 = vmatprep.subr.mxu0 0.0
        %941 = vmatpush1.msra.mxu0 0.0
        %942 = vmatprep.subr.mxu0 0.0
        %943 = vmatpush1.msra.mxu0 0.0
        %944 = vmatprep.subr.mxu0 0.0
        %945 = vmatpush1.msra.mxu0 0.0
        %946 = vmatprep.subr.mxu0 0.0
        %947 = vmatpush1.msra.mxu0 0.0
        %948 = vmatprep.subr.mxu0 0.0
        %949 = vmatpush1.msra.mxu0 0.0
        %950 = vmatprep.subr.mxu0 0.0
        %951 = vmatpush1.msra.mxu0 0.0
        %952 = vmatprep.subr.mxu0 0.0
        %953 = vmatpush1.msra.mxu0 0.0
        %954 = vmatprep.subr.mxu0 0.0
        %955 = vmatpush1.msra.mxu0 0.0
        %956 = vmatprep.subr.mxu0 0.0
        %957 = vmatpush1.msra.mxu0 0.0
        %958 = vmatprep.subr.mxu0 0.0
        %959 = vmatpush1.msra.mxu0 0.0
        %960 = vmatprep.subr.mxu0 0.0
        %961 = vmatpush1.msra.mxu0 0.0
        %962 = vmatprep.subr.mxu0 0.0
        %v963 = vand.u32 %v330, 4294901760
        %v964 = vsub.f32 %v330, %v963
        %v965 = vand.u32 %v964, 4294901760
        %v966 = vsub.f32 %v964, %v965
        %v967 = vand.u32 %v966, 4294901760
        %968 = vmatpush1.msra.mxu0 %v967
        %969 = vmatprep.subr.mxu0 0.0
        %v970 = vand.u32 %v329, 4294901760
        %v971 = vsub.f32 %v329, %v970
        %v972 = vand.u32 %v971, 4294901760
        %v973 = vsub.f32 %v971, %v972
        %v974 = vand.u32 %v973, 4294901760
        %975 = vmatpush1.msra.mxu0 %v974
        %976 = vmatprep.subr.mxu0 0.0
        %977 = vmatpush2.msra.mxu0 0.0
        %978 = vmatprep.subr.mxu0 0.0
        %979 = vmatpush2.msra.mxu0 0.0
        %980 = vmatprep.subr.mxu0 0.0
        %981 = vmatpush2.msra.mxu0 0.0
        %982 = vmatprep.subr.mxu0 0.0
        %983 = vmatpush2.msra.mxu0 0.0
        %984 = vmatprep.subr.mxu0 0.0
        %985 = vmatpush2.msra.mxu0 0.0
        %986 = vmatprep.subr.mxu0 0.0
        %987 = vmatpush2.msra.mxu0 0.0
        %988 = vmatprep.subr.mxu0 0.0
        %989 = vmatpush2.msra.mxu0 0.0
        %990 = vmatprep.subr.mxu0 0.0
        %991 = vmatpush2.msra.mxu0 0.0
        %992 = vmatprep.subr.mxu0 0.0
        %993 = vmatpush2.msra.mxu0 0.0
        %994 = vmatprep.subr.mxu0 0.0
        %995 = vmatpush2.msra.mxu0 0.0
        %996 = vmatprep.subr.mxu0 0.0
        %997 = vmatpush2.msra.mxu0 0.0
        %998 = vmatprep.subr.mxu0 0.0
        %999 = vmatpush2.msra.mxu0 0.0
        %1000 = vmatprep.subr.mxu0 0.0
        %1001 = vmatpush2.msra.mxu0 0.0
        %1002 = vmatprep.subr.mxu0 0.0
        %1003 = vmatpush2.msra.mxu0 0.0
        %1004 = vmatprep.subr.mxu0 0.0
        %1005 = vmatpush2.msra.mxu0 0.0
        %1006 = vmatprep.subr.mxu0 0.0
        %1007 = vmatpush2.msra.mxu0 0.0
        %1008 = vmatprep.mubr.f32.mxu0 0.0
        %v1009 = vand.u32 %v842, 4294901760
        %1010 = vmatmul.mubr.f32.gmra.mxu0 %v1009
        %v1011 = vpop.f32.mrf.mxu0
        %v1012 = vadd.f32 %v921, %v1011
        %v1013 = vpop.f32.mrf.mxu0
        %1014 = vmatprep.mubr.f32.mxu0 0.0
        %v1015 = vand.u32 %v845, 4294901760
        %1016 = vmatmul.mubr.f32.gmra.mxu0 %v1015
        %v1017 = vpop.f32.mrf.mxu0
        %v1018 = vadd.f32 %v931, %v1017
        %v1019 = vpop.f32.mrf.mxu0
        %1020 = vdwg.mxu0
        %1021 = vmatprep.subr.mxu0 0.0
        %1022 = vmatpush1.msra.mxu0 0.0
        %1023 = vmatprep.subr.mxu0 0.0
        %1024 = vmatpush1.msra.mxu0 0.0
        %1025 = vmatprep.subr.mxu0 0.0
        %1026 = vmatpush1.msra.mxu0 0.0
        %1027 = vmatprep.subr.mxu0 0.0
        %1028 = vmatpush1.msra.mxu0 0.0
        %1029 = vmatprep.subr.mxu0 0.0
        %1030 = vmatpush1.msra.mxu0 0.0
        %1031 = vmatprep.subr.mxu0 0.0
        %1032 = vmatpush1.msra.mxu0 0.0
        %1033 = vmatprep.subr.mxu0 0.0
        %1034 = vmatpush1.msra.mxu0 0.0
        %1035 = vmatprep.subr.mxu0 0.0
        %1036 = vmatpush1.msra.mxu0 0.0
        %1037 = vmatprep.subr.mxu0 0.0
        %1038 = vmatpush1.msra.mxu0 0.0
        %1039 = vmatprep.subr.mxu0 0.0
        %1040 = vmatpush1.msra.mxu0 0.0
        %1041 = vmatprep.subr.mxu0 0.0
        %1042 = vmatpush1.msra.mxu0 0.0
        %1043 = vmatprep.subr.mxu0 0.0
        %1044 = vmatpush1.msra.mxu0 0.0
        %1045 = vmatprep.subr.mxu0 0.0
        %1046 = vmatpush1.msra.mxu0 0.0
        %1047 = vmatprep.subr.mxu0 0.0
        %1048 = vmatpush1.msra.mxu0 0.0
        %1049 = vmatprep.subr.mxu0 0.0
        %v1050 = vand.u32 %v330, 4294901760
        %v1051 = vsub.f32 %v330, %v1050
        %1052 = vmatpush1.msra.mxu0 %v1051
        %1053 = vmatprep.subr.mxu0 0.0
        %v1054 = vand.u32 %v329, 4294901760
        %v1055 = vsub.f32 %v329, %v1054
        %1056 = vmatpush1.msra.mxu0 %v1055
        %1057 = vmatprep.subr.mxu0 0.0
        %1058 = vmatpush2.msra.mxu0 0.0
        %1059 = vmatprep.subr.mxu0 0.0
        %1060 = vmatpush2.msra.mxu0 0.0
        %1061 = vmatprep.subr.mxu0 0.0
        %1062 = vmatpush2.msra.mxu0 0.0
        %1063 = vmatprep.subr.mxu0 0.0
        %1064 = vmatpush2.msra.mxu0 0.0
        %1065 = vmatprep.subr.mxu0 0.0
        %1066 = vmatpush2.msra.mxu0 0.0
        %1067 = vmatprep.subr.mxu0 0.0
        %1068 = vmatpush2.msra.mxu0 0.0
        %1069 = vmatprep.subr.mxu0 0.0
        %1070 = vmatpush2.msra.mxu0 0.0
        %1071 = vmatprep.subr.mxu0 0.0
        %1072 = vmatpush2.msra.mxu0 0.0
        %1073 = vmatprep.subr.mxu0 0.0
        %1074 = vmatpush2.msra.mxu0 0.0
        %1075 = vmatprep.subr.mxu0 0.0
        %1076 = vmatpush2.msra.mxu0 0.0
        %1077 = vmatprep.subr.mxu0 0.0
        %1078 = vmatpush2.msra.mxu0 0.0
        %1079 = vmatprep.subr.mxu0 0.0
        %1080 = vmatpush2.msra.mxu0 0.0
        %1081 = vmatprep.subr.mxu0 0.0
        %1082 = vmatpush2.msra.mxu0 0.0
        %1083 = vmatprep.subr.mxu0 0.0
        %1084 = vmatpush2.msra.mxu0 0.0
        %1085 = vmatprep.subr.mxu0 0.0
        %1086 = vmatpush2.msra.mxu0 0.0
        %1087 = vmatprep.subr.mxu0 0.0
        %1088 = vmatpush2.msra.mxu0 0.0
        %1089 = vmatprep.mubr.f32.mxu0 0.0
        %v1090 = vand.u32 %v842, 4294901760
        %v1091 = vsub.f32 %v842, %v1090
        %1092 = vmatmul.mubr.f32.gmra.mxu0 %v1091
        %v1093 = vpop.f32.mrf.mxu0
        %v1094 = vadd.f32 %v1012, %v1093
        %v1095 = vpop.f32.mrf.mxu0
        %1096 = vmatprep.mubr.f32.mxu0 0.0
        %v1097 = vand.u32 %v845, 4294901760
        %v1098 = vsub.f32 %v845, %v1097
        %1099 = vmatmul.mubr.f32.gmra.mxu0 %v1098
        %v1100 = vpop.f32.mrf.mxu0
        %v1101 = vadd.f32 %v1018, %v1100
        %v1102 = vpop.f32.mrf.mxu0
        %1103 = vdwg.mxu0
        %1104 = vmatprep.subr.mxu0 0.0
        %1105 = vmatpush1.msra.mxu0 0.0
        %1106 = vmatprep.subr.mxu0 0.0
        %1107 = vmatpush1.msra.mxu0 0.0
        %1108 = vmatprep.subr.mxu0 0.0
        %1109 = vmatpush1.msra.mxu0 0.0
        %1110 = vmatprep.subr.mxu0 0.0
        %1111 = vmatpush1.msra.mxu0 0.0
        %1112 = vmatprep.subr.mxu0 0.0
        %1113 = vmatpush1.msra.mxu0 0.0
        %1114 = vmatprep.subr.mxu0 0.0
        %1115 = vmatpush1.msra.mxu0 0.0
        %1116 = vmatprep.subr.mxu0 0.0
        %1117 = vmatpush1.msra.mxu0 0.0
        %1118 = vmatprep.subr.mxu0 0.0
        %1119 = vmatpush1.msra.mxu0 0.0
        %1120 = vmatprep.subr.mxu0 0.0
        %1121 = vmatpush1.msra.mxu0 0.0
        %1122 = vmatprep.subr.mxu0 0.0
        %1123 = vmatpush1.msra.mxu0 0.0
        %1124 = vmatprep.subr.mxu0 0.0
        %1125 = vmatpush1.msra.mxu0 0.0
        %1126 = vmatprep.subr.mxu0 0.0
        %1127 = vmatpush1.msra.mxu0 0.0
        %1128 = vmatprep.subr.mxu0 0.0
        %1129 = vmatpush1.msra.mxu0 0.0
        %1130 = vmatprep.subr.mxu0 0.0
        %1131 = vmatpush1.msra.mxu0 0.0
        %1132 = vmatprep.subr.mxu0 0.0
        %v1133 = vand.u32 %v330, 4294901760
        %1134 = vmatpush1.msra.mxu0 %v1133
        %1135 = vmatprep.subr.mxu0 0.0
        %v1136 = vand.u32 %v329, 4294901760
        %1137 = vmatpush1.msra.mxu0 %v1136
        %1138 = vmatprep.subr.mxu0 0.0
        %1139 = vmatpush2.msra.mxu0 0.0
        %1140 = vmatprep.subr.mxu0 0.0
        %1141 = vmatpush2.msra.mxu0 0.0
        %1142 = vmatprep.subr.mxu0 0.0
        %1143 = vmatpush2.msra.mxu0 0.0
        %1144 = vmatprep.subr.mxu0 0.0
        %1145 = vmatpush2.msra.mxu0 0.0
        %1146 = vmatprep.subr.mxu0 0.0
        %1147 = vmatpush2.msra.mxu0 0.0
        %1148 = vmatprep.subr.mxu0 0.0
        %1149 = vmatpush2.msra.mxu0 0.0
        %1150 = vmatprep.subr.mxu0 0.0
        %1151 = vmatpush2.msra.mxu0 0.0
        %1152 = vmatprep.subr.mxu0 0.0
        %1153 = vmatpush2.msra.mxu0 0.0
        %1154 = vmatprep.subr.mxu0 0.0
        %1155 = vmatpush2.msra.mxu0 0.0
        %1156 = vmatprep.subr.mxu0 0.0
        %1157 = vmatpush2.msra.mxu0 0.0
        %1158 = vmatprep.subr.mxu0 0.0
        %1159 = vmatpush2.msra.mxu0 0.0
        %1160 = vmatprep.subr.mxu0 0.0
        %1161 = vmatpush2.msra.mxu0 0.0
        %1162 = vmatprep.subr.mxu0 0.0
        %1163 = vmatpush2.msra.mxu0 0.0
        %1164 = vmatprep.subr.mxu0 0.0
        %1165 = vmatpush2.msra.mxu0 0.0
        %1166 = vmatprep.subr.mxu0 0.0
        %1167 = vmatpush2.msra.mxu0 0.0
        %1168 = vmatprep.subr.mxu0 0.0
        %1169 = vmatpush2.msra.mxu0 0.0
        %1170 = vmatprep.mubr.f32.mxu0 0.0
        %v1171 = vand.u32 %v842, 4294901760
        %v1172 = vsub.f32 %v842, %v1171
        %v1173 = vand.u32 %v1172, 4294901760
        %1174 = vmatmul.mubr.f32.gmra.mxu0 %v1173
        %v1175 = vpop.f32.mrf.mxu0
        %v1176 = vadd.f32 %v1094, %v1175
        %v1177 = vpop.f32.mrf.mxu0
        %1178 = vmatprep.mubr.f32.mxu0 0.0
        %v1179 = vand.u32 %v845, 4294901760
        %v1180 = vsub.f32 %v845, %v1179
        %v1181 = vand.u32 %v1180, 4294901760
        %1182 = vmatmul.mubr.f32.gmra.mxu0 %v1181
        %v1183 = vpop.f32.mrf.mxu0
        %v1184 = vadd.f32 %v1101, %v1183
        %v1185 = vpop.f32.mrf.mxu0
        %1186 = vdwg.mxu0
        %1187 = vmatprep.subr.mxu0 0.0
        %1188 = vmatpush1.msra.mxu0 0.0
        %1189 = vmatprep.subr.mxu0 0.0
        %1190 = vmatpush1.msra.mxu0 0.0
        %1191 = vmatprep.subr.mxu0 0.0
        %1192 = vmatpush1.msra.mxu0 0.0
        %1193 = vmatprep.subr.mxu0 0.0
        %1194 = vmatpush1.msra.mxu0 0.0
        %1195 = vmatprep.subr.mxu0 0.0
        %1196 = vmatpush1.msra.mxu0 0.0
        %1197 = vmatprep.subr.mxu0 0.0
        %1198 = vmatpush1.msra.mxu0 0.0
        %1199 = vmatprep.subr.mxu0 0.0
        %1200 = vmatpush1.msra.mxu0 0.0
        %1201 = vmatprep.subr.mxu0 0.0
        %1202 = vmatpush1.msra.mxu0 0.0
        %1203 = vmatprep.subr.mxu0 0.0
        %1204 = vmatpush1.msra.mxu0 0.0
        %1205 = vmatprep.subr.mxu0 0.0
        %1206 = vmatpush1.msra.mxu0 0.0
        %1207 = vmatprep.subr.mxu0 0.0
        %1208 = vmatpush1.msra.mxu0 0.0
        %1209 = vmatprep.subr.mxu0 0.0
        %1210 = vmatpush1.msra.mxu0 0.0
        %1211 = vmatprep.subr.mxu0 0.0
        %1212 = vmatpush1.msra.mxu0 0.0
        %1213 = vmatprep.subr.mxu0 0.0
        %1214 = vmatpush1.msra.mxu0 0.0
        %1215 = vmatprep.subr.mxu0 0.0
        %v1216 = vand.u32 %v330, 4294901760
        %v1217 = vsub.f32 %v330, %v1216
        %v1218 = vand.u32 %v1217, 4294901760
        %1219 = vmatpush1.msra.mxu0 %v1218
        %1220 = vmatprep.subr.mxu0 0.0
        %v1221 = vand.u32 %v329, 4294901760
        %v1222 = vsub.f32 %v329, %v1221
        %v1223 = vand.u32 %v1222, 4294901760
        %1224 = vmatpush1.msra.mxu0 %v1223
        %1225 = vmatprep.subr.mxu0 0.0
        %1226 = vmatpush2.msra.mxu0 0.0
        %1227 = vmatprep.subr.mxu0 0.0
        %1228 = vmatpush2.msra.mxu0 0.0
        %1229 = vmatprep.subr.mxu0 0.0
        %1230 = vmatpush2.msra.mxu0 0.0
        %1231 = vmatprep.subr.mxu0 0.0
        %1232 = vmatpush2.msra.mxu0 0.0
        %1233 = vmatprep.subr.mxu0 0.0
        %1234 = vmatpush2.msra.mxu0 0.0
        %1235 = vmatprep.subr.mxu0 0.0
        %1236 = vmatpush2.msra.mxu0 0.0
        %1237 = vmatprep.subr.mxu0 0.0
        %1238 = vmatpush2.msra.mxu0 0.0
        %1239 = vmatprep.subr.mxu0 0.0
        %1240 = vmatpush2.msra.mxu0 0.0
        %1241 = vmatprep.subr.mxu0 0.0
        %1242 = vmatpush2.msra.mxu0 0.0
        %1243 = vmatprep.subr.mxu0 0.0
        %1244 = vmatpush2.msra.mxu0 0.0
        %1245 = vmatprep.subr.mxu0 0.0
        %1246 = vmatpush2.msra.mxu0 0.0
        %1247 = vmatprep.subr.mxu0 0.0
        %1248 = vmatpush2.msra.mxu0 0.0
        %1249 = vmatprep.subr.mxu0 0.0
        %1250 = vmatpush2.msra.mxu0 0.0
        %1251 = vmatprep.subr.mxu0 0.0
        %1252 = vmatpush2.msra.mxu0 0.0
        %1253 = vmatprep.subr.mxu0 0.0
        %1254 = vmatpush2.msra.mxu0 0.0
        %1255 = vmatprep.subr.mxu0 0.0
        %1256 = vmatpush2.msra.mxu0 0.0
        %1257 = vmatprep.mubr.f32.mxu0 0.0
        %v1258 = vand.u32 %v842, 4294901760
        %1259 = vmatmul.mubr.f32.gmra.mxu0 %v1258
        %v1260 = vpop.f32.mrf.mxu0
        %v1261 = vadd.f32 %v1176, %v1260
        %v1262 = vpop.f32.mrf.mxu0
        %1263 = vmatprep.mubr.f32.mxu0 0.0
        %v1264 = vand.u32 %v845, 4294901760
        %1265 = vmatmul.mubr.f32.gmra.mxu0 %v1264
        %v1266 = vpop.f32.mrf.mxu0
        %v1267 = vadd.f32 %v1184, %v1266
        %v1268 = vpop.f32.mrf.mxu0
        %1269 = vdwg.mxu0
        %1270 = vmatprep.subr.mxu0 0.0
        %1271 = vmatpush1.msra.mxu0 0.0
        %1272 = vmatprep.subr.mxu0 0.0
        %1273 = vmatpush1.msra.mxu0 0.0
        %1274 = vmatprep.subr.mxu0 0.0
        %1275 = vmatpush1.msra.mxu0 0.0
        %1276 = vmatprep.subr.mxu0 0.0
        %1277 = vmatpush1.msra.mxu0 0.0
        %1278 = vmatprep.subr.mxu0 0.0
        %1279 = vmatpush1.msra.mxu0 0.0
        %1280 = vmatprep.subr.mxu0 0.0
        %1281 = vmatpush1.msra.mxu0 0.0
        %1282 = vmatprep.subr.mxu0 0.0
        %1283 = vmatpush1.msra.mxu0 0.0
        %1284 = vmatprep.subr.mxu0 0.0
        %1285 = vmatpush1.msra.mxu0 0.0
        %1286 = vmatprep.subr.mxu0 0.0
        %1287 = vmatpush1.msra.mxu0 0.0
        %1288 = vmatprep.subr.mxu0 0.0
        %1289 = vmatpush1.msra.mxu0 0.0
        %1290 = vmatprep.subr.mxu0 0.0
        %1291 = vmatpush1.msra.mxu0 0.0
        %1292 = vmatprep.subr.mxu0 0.0
        %1293 = vmatpush1.msra.mxu0 0.0
        %1294 = vmatprep.subr.mxu0 0.0
        %1295 = vmatpush1.msra.mxu0 0.0
        %1296 = vmatprep.subr.mxu0 0.0
        %1297 = vmatpush1.msra.mxu0 0.0
        %1298 = vmatprep.subr.mxu0 0.0
        %v1299 = vand.u32 %v330, 4294901760
        %1300 = vmatpush1.msra.mxu0 %v1299
        %1301 = vmatprep.subr.mxu0 0.0
        %v1302 = vand.u32 %v329, 4294901760
        %1303 = vmatpush1.msra.mxu0 %v1302
        %1304 = vmatprep.subr.mxu0 0.0
        %1305 = vmatpush2.msra.mxu0 0.0
        %1306 = vmatprep.subr.mxu0 0.0
        %1307 = vmatpush2.msra.mxu0 0.0
        %1308 = vmatprep.subr.mxu0 0.0
        %1309 = vmatpush2.msra.mxu0 0.0
        %1310 = vmatprep.subr.mxu0 0.0
        %1311 = vmatpush2.msra.mxu0 0.0
        %1312 = vmatprep.subr.mxu0 0.0
        %1313 = vmatpush2.msra.mxu0 0.0
        %1314 = vmatprep.subr.mxu0 0.0
        %1315 = vmatpush2.msra.mxu0 0.0
        %1316 = vmatprep.subr.mxu0 0.0
        %1317 = vmatpush2.msra.mxu0 0.0
        %1318 = vmatprep.subr.mxu0 0.0
        %1319 = vmatpush2.msra.mxu0 0.0
        %1320 = vmatprep.subr.mxu0 0.0
        %1321 = vmatpush2.msra.mxu0 0.0
        %1322 = vmatprep.subr.mxu0 0.0
        %1323 = vmatpush2.msra.mxu0 0.0
        %1324 = vmatprep.subr.mxu0 0.0
        %1325 = vmatpush2.msra.mxu0 0.0
        %1326 = vmatprep.subr.mxu0 0.0
        %1327 = vmatpush2.msra.mxu0 0.0
        %1328 = vmatprep.subr.mxu0 0.0
        %1329 = vmatpush2.msra.mxu0 0.0
        %1330 = vmatprep.subr.mxu0 0.0
        %1331 = vmatpush2.msra.mxu0 0.0
        %1332 = vmatprep.subr.mxu0 0.0
        %1333 = vmatpush2.msra.mxu0 0.0
        %1334 = vmatprep.subr.mxu0 0.0
        %1335 = vmatpush2.msra.mxu0 0.0
        %1336 = vmatprep.mubr.f32.mxu0 0.0
        %v1337 = vand.u32 %v842, 4294901760
        %1338 = vmatmul.mubr.f32.gmra.mxu0 %v1337
        %v1339 = vpop.f32.mrf.mxu0
        %v1340 = vadd.f32 %v1261, %v1339
        %v1341 = vpop.f32.mrf.mxu0
        %1342 = vmatprep.mubr.f32.mxu0 0.0
        %v1343 = vand.u32 %v845, 4294901760
        %1344 = vmatmul.mubr.f32.gmra.mxu0 %v1343
        %v1345 = vpop.f32.mrf.mxu0
        %v1346 = vadd.f32 %v1267, %v1345
        %v1347 = vpop.f32.mrf.mxu0
        %1348 = vdwg.mxu0
        %v1350 = vsel %vm300, %v288, 0
        %v1353 = vsel %vm300, %v289, 0
        %1355 = vmatprep.subr.mxu0 0.0
        %1356 = vmatpush1.msra.mxu0 0.0
        %1357 = vmatprep.subr.mxu0 0.0
        %1358 = vmatpush1.msra.mxu0 0.0
        %1359 = vmatprep.subr.mxu0 0.0
        %1360 = vmatpush1.msra.mxu0 0.0
        %1361 = vmatprep.subr.mxu0 0.0
        %1362 = vmatpush1.msra.mxu0 0.0
        %1363 = vmatprep.subr.mxu0 0.0
        %1364 = vmatpush1.msra.mxu0 0.0
        %1365 = vmatprep.subr.mxu0 0.0
        %1366 = vmatpush1.msra.mxu0 0.0
        %1367 = vmatprep.subr.mxu0 0.0
        %1368 = vmatpush1.msra.mxu0 0.0
        %1369 = vmatprep.subr.mxu0 0.0
        %1370 = vmatpush1.msra.mxu0 0.0
        %1371 = vmatprep.subr.mxu0 0.0
        %1372 = vmatpush1.msra.mxu0 0.0
        %1373 = vmatprep.subr.mxu0 0.0
        %1374 = vmatpush1.msra.mxu0 0.0
        %1375 = vmatprep.subr.mxu0 0.0
        %1376 = vmatpush1.msra.mxu0 0.0
        %1377 = vmatprep.subr.mxu0 0.0
        %1378 = vmatpush1.msra.mxu0 0.0
        %1379 = vmatprep.subr.mxu0 0.0
        %1380 = vmatpush1.msra.mxu0 0.0
        %1381 = vmatprep.subr.mxu0 0.0
        %1382 = vmatpush1.msra.mxu0 0.0
        %1383 = vmatprep.subr.mxu0 0.0
        %v1384 = vand.u32 %v330, 4294901760
        %1385 = vmatpush1.msra.mxu0 %v1384
        %1386 = vmatprep.subr.mxu0 0.0
        %v1387 = vand.u32 %v329, 4294901760
        %1388 = vmatpush1.msra.mxu0 %v1387
        %1389 = vmatprep.subr.mxu0 0.0
        %1390 = vmatpush2.msra.mxu0 0.0
        %1391 = vmatprep.subr.mxu0 0.0
        %1392 = vmatpush2.msra.mxu0 0.0
        %1393 = vmatprep.subr.mxu0 0.0
        %1394 = vmatpush2.msra.mxu0 0.0
        %1395 = vmatprep.subr.mxu0 0.0
        %1396 = vmatpush2.msra.mxu0 0.0
        %1397 = vmatprep.subr.mxu0 0.0
        %1398 = vmatpush2.msra.mxu0 0.0
        %1399 = vmatprep.subr.mxu0 0.0
        %1400 = vmatpush2.msra.mxu0 0.0
        %1401 = vmatprep.subr.mxu0 0.0
        %1402 = vmatpush2.msra.mxu0 0.0
        %1403 = vmatprep.subr.mxu0 0.0
        %1404 = vmatpush2.msra.mxu0 0.0
        %1405 = vmatprep.subr.mxu0 0.0
        %1406 = vmatpush2.msra.mxu0 0.0
        %1407 = vmatprep.subr.mxu0 0.0
        %1408 = vmatpush2.msra.mxu0 0.0
        %1409 = vmatprep.subr.mxu0 0.0
        %1410 = vmatpush2.msra.mxu0 0.0
        %1411 = vmatprep.subr.mxu0 0.0
        %1412 = vmatpush2.msra.mxu0 0.0
        %1413 = vmatprep.subr.mxu0 0.0
        %1414 = vmatpush2.msra.mxu0 0.0
        %1415 = vmatprep.subr.mxu0 0.0
        %1416 = vmatpush2.msra.mxu0 0.0
        %1417 = vmatprep.subr.mxu0 0.0
        %1418 = vmatpush2.msra.mxu0 0.0
        %1419 = vmatprep.subr.mxu0 0.0
        %1420 = vmatpush2.msra.mxu0 0.0
        %1421 = vmatprep.mubr.f32.mxu0 0.0
        %v1422 = vand.u32 %v1350, 4294901760
        %v1423 = vsub.f32 %v1350, %v1422
        %v1424 = vand.u32 %v1423, 4294901760
        %v1425 = vsub.f32 %v1423, %v1424
        %v1426 = vand.u32 %v1425, 4294901760
        %1427 = vmatmul.mubr.f32.gmra.mxu0 %v1426
        %v1428 = vpop.f32.mrf.mxu0
        %v1429 = vadd.f32 0.0, %v1428
        %v1430 = vpop.f32.mrf.mxu0
        %1431 = vmatprep.mubr.f32.mxu0 0.0
        %v1432 = vand.u32 %v1353, 4294901760
        %v1433 = vsub.f32 %v1353, %v1432
        %v1434 = vand.u32 %v1433, 4294901760
        %v1435 = vsub.f32 %v1433, %v1434
        %v1436 = vand.u32 %v1435, 4294901760
        %1437 = vmatmul.mubr.f32.gmra.mxu0 %v1436
        %v1438 = vpop.f32.mrf.mxu0
        %v1439 = vadd.f32 0.0, %v1438
        %v1440 = vpop.f32.mrf.mxu0
        %1441 = vdwg.mxu0
        %1442 = vmatprep.subr.mxu0 0.0
        %1443 = vmatpush1.msra.mxu0 0.0
        %1444 = vmatprep.subr.mxu0 0.0
        %1445 = vmatpush1.msra.mxu0 0.0
        %1446 = vmatprep.subr.mxu0 0.0
        %1447 = vmatpush1.msra.mxu0 0.0
        %1448 = vmatprep.subr.mxu0 0.0
        %1449 = vmatpush1.msra.mxu0 0.0
        %1450 = vmatprep.subr.mxu0 0.0
        %1451 = vmatpush1.msra.mxu0 0.0
        %1452 = vmatprep.subr.mxu0 0.0
        %1453 = vmatpush1.msra.mxu0 0.0
        %1454 = vmatprep.subr.mxu0 0.0
        %1455 = vmatpush1.msra.mxu0 0.0
        %1456 = vmatprep.subr.mxu0 0.0
        %1457 = vmatpush1.msra.mxu0 0.0
        %1458 = vmatprep.subr.mxu0 0.0
        %1459 = vmatpush1.msra.mxu0 0.0
        %1460 = vmatprep.subr.mxu0 0.0
        %1461 = vmatpush1.msra.mxu0 0.0
        %1462 = vmatprep.subr.mxu0 0.0
        %1463 = vmatpush1.msra.mxu0 0.0
        %1464 = vmatprep.subr.mxu0 0.0
        %1465 = vmatpush1.msra.mxu0 0.0
        %1466 = vmatprep.subr.mxu0 0.0
        %1467 = vmatpush1.msra.mxu0 0.0
        %1468 = vmatprep.subr.mxu0 0.0
        %1469 = vmatpush1.msra.mxu0 0.0
        %1470 = vmatprep.subr.mxu0 0.0
        %v1471 = vand.u32 %v330, 4294901760
        %v1472 = vsub.f32 %v330, %v1471
        %v1473 = vand.u32 %v1472, 4294901760
        %v1474 = vsub.f32 %v1472, %v1473
        %v1475 = vand.u32 %v1474, 4294901760
        %1476 = vmatpush1.msra.mxu0 %v1475
        %1477 = vmatprep.subr.mxu0 0.0
        %v1478 = vand.u32 %v329, 4294901760
        %v1479 = vsub.f32 %v329, %v1478
        %v1480 = vand.u32 %v1479, 4294901760
        %v1481 = vsub.f32 %v1479, %v1480
        %v1482 = vand.u32 %v1481, 4294901760
        %1483 = vmatpush1.msra.mxu0 %v1482
        %1484 = vmatprep.subr.mxu0 0.0
        %1485 = vmatpush2.msra.mxu0 0.0
        %1486 = vmatprep.subr.mxu0 0.0
        %1487 = vmatpush2.msra.mxu0 0.0
        %1488 = vmatprep.subr.mxu0 0.0
        %1489 = vmatpush2.msra.mxu0 0.0
        %1490 = vmatprep.subr.mxu0 0.0
        %1491 = vmatpush2.msra.mxu0 0.0
        %1492 = vmatprep.subr.mxu0 0.0
        %1493 = vmatpush2.msra.mxu0 0.0
        %1494 = vmatprep.subr.mxu0 0.0
        %1495 = vmatpush2.msra.mxu0 0.0
        %1496 = vmatprep.subr.mxu0 0.0
        %1497 = vmatpush2.msra.mxu0 0.0
        %1498 = vmatprep.subr.mxu0 0.0
        %1499 = vmatpush2.msra.mxu0 0.0
        %1500 = vmatprep.subr.mxu0 0.0
        %1501 = vmatpush2.msra.mxu0 0.0
        %1502 = vmatprep.subr.mxu0 0.0
        %1503 = vmatpush2.msra.mxu0 0.0
        %1504 = vmatprep.subr.mxu0 0.0
        %1505 = vmatpush2.msra.mxu0 0.0
        %1506 = vmatprep.subr.mxu0 0.0
        %1507 = vmatpush2.msra.mxu0 0.0
        %1508 = vmatprep.subr.mxu0 0.0
        %1509 = vmatpush2.msra.mxu0 0.0
        %1510 = vmatprep.subr.mxu0 0.0
        %1511 = vmatpush2.msra.mxu0 0.0
        %1512 = vmatprep.subr.mxu0 0.0
        %1513 = vmatpush2.msra.mxu0 0.0
        %1514 = vmatprep.subr.mxu0 0.0
        %1515 = vmatpush2.msra.mxu0 0.0
        %1516 = vmatprep.mubr.f32.mxu0 0.0
        %v1517 = vand.u32 %v1350, 4294901760
        %1518 = vmatmul.mubr.f32.gmra.mxu0 %v1517
        %v1519 = vpop.f32.mrf.mxu0
        %v1520 = vadd.f32 %v1429, %v1519
        %v1521 = vpop.f32.mrf.mxu0
        %1522 = vmatprep.mubr.f32.mxu0 0.0
        %v1523 = vand.u32 %v1353, 4294901760
        %1524 = vmatmul.mubr.f32.gmra.mxu0 %v1523
        %v1525 = vpop.f32.mrf.mxu0
        %v1526 = vadd.f32 %v1439, %v1525
        %v1527 = vpop.f32.mrf.mxu0
        %1528 = vdwg.mxu0
        %1529 = vmatprep.subr.mxu0 0.0
        %1530 = vmatpush1.msra.mxu0 0.0
        %1531 = vmatprep.subr.mxu0 0.0
        %1532 = vmatpush1.msra.mxu0 0.0
        %1533 = vmatprep.subr.mxu0 0.0
        %1534 = vmatpush1.msra.mxu0 0.0
        %1535 = vmatprep.subr.mxu0 0.0
        %1536 = vmatpush1.msra.mxu0 0.0
        %1537 = vmatprep.subr.mxu0 0.0
        %1538 = vmatpush1.msra.mxu0 0.0
        %1539 = vmatprep.subr.mxu0 0.0
        %1540 = vmatpush1.msra.mxu0 0.0
        %1541 = vmatprep.subr.mxu0 0.0
        %1542 = vmatpush1.msra.mxu0 0.0
        %1543 = vmatprep.subr.mxu0 0.0
        %1544 = vmatpush1.msra.mxu0 0.0
        %1545 = vmatprep.subr.mxu0 0.0
        %1546 = vmatpush1.msra.mxu0 0.0
        %1547 = vmatprep.subr.mxu0 0.0
        %1548 = vmatpush1.msra.mxu0 0.0
        %1549 = vmatprep.subr.mxu0 0.0
        %1550 = vmatpush1.msra.mxu0 0.0
        %1551 = vmatprep.subr.mxu0 0.0
        %1552 = vmatpush1.msra.mxu0 0.0
        %1553 = vmatprep.subr.mxu0 0.0
        %1554 = vmatpush1.msra.mxu0 0.0
        %1555 = vmatprep.subr.mxu0 0.0
        %1556 = vmatpush1.msra.mxu0 0.0
        %1557 = vmatprep.subr.mxu0 0.0
        %v1558 = vand.u32 %v330, 4294901760
        %v1559 = vsub.f32 %v330, %v1558
        %1560 = vmatpush1.msra.mxu0 %v1559
        %1561 = vmatprep.subr.mxu0 0.0
        %v1562 = vand.u32 %v329, 4294901760
        %v1563 = vsub.f32 %v329, %v1562
        %1564 = vmatpush1.msra.mxu0 %v1563
        %1565 = vmatprep.subr.mxu0 0.0
        %1566 = vmatpush2.msra.mxu0 0.0
        %1567 = vmatprep.subr.mxu0 0.0
        %1568 = vmatpush2.msra.mxu0 0.0
        %1569 = vmatprep.subr.mxu0 0.0
        %1570 = vmatpush2.msra.mxu0 0.0
        %1571 = vmatprep.subr.mxu0 0.0
        %1572 = vmatpush2.msra.mxu0 0.0
        %1573 = vmatprep.subr.mxu0 0.0
        %1574 = vmatpush2.msra.mxu0 0.0
        %1575 = vmatprep.subr.mxu0 0.0
        %1576 = vmatpush2.msra.mxu0 0.0
        %1577 = vmatprep.subr.mxu0 0.0
        %1578 = vmatpush2.msra.mxu0 0.0
        %1579 = vmatprep.subr.mxu0 0.0
        %1580 = vmatpush2.msra.mxu0 0.0
        %1581 = vmatprep.subr.mxu0 0.0
        %1582 = vmatpush2.msra.mxu0 0.0
        %1583 = vmatprep.subr.mxu0 0.0
        %1584 = vmatpush2.msra.mxu0 0.0
        %1585 = vmatprep.subr.mxu0 0.0
        %1586 = vmatpush2.msra.mxu0 0.0
        %1587 = vmatprep.subr.mxu0 0.0
        %1588 = vmatpush2.msra.mxu0 0.0
        %1589 = vmatprep.subr.mxu0 0.0
        %1590 = vmatpush2.msra.mxu0 0.0
        %1591 = vmatprep.subr.mxu0 0.0
        %1592 = vmatpush2.msra.mxu0 0.0
        %1593 = vmatprep.subr.mxu0 0.0
        %1594 = vmatpush2.msra.mxu0 0.0
        %1595 = vmatprep.subr.mxu0 0.0
        %1596 = vmatpush2.msra.mxu0 0.0
        %1597 = vmatprep.mubr.f32.mxu0 0.0
        %v1598 = vand.u32 %v1350, 4294901760
        %v1599 = vsub.f32 %v1350, %v1598
        %1600 = vmatmul.mubr.f32.gmra.mxu0 %v1599
        %v1601 = vpop.f32.mrf.mxu0
        %v1602 = vadd.f32 %v1520, %v1601
        %v1603 = vpop.f32.mrf.mxu0
        %1604 = vmatprep.mubr.f32.mxu0 0.0
        %v1605 = vand.u32 %v1353, 4294901760
        %v1606 = vsub.f32 %v1353, %v1605
        %1607 = vmatmul.mubr.f32.gmra.mxu0 %v1606
        %v1608 = vpop.f32.mrf.mxu0
        %v1609 = vadd.f32 %v1526, %v1608
        %v1610 = vpop.f32.mrf.mxu0
        %1611 = vdwg.mxu0
        %1612 = vmatprep.subr.mxu0 0.0
        %1613 = vmatpush1.msra.mxu0 0.0
        %1614 = vmatprep.subr.mxu0 0.0
        %1615 = vmatpush1.msra.mxu0 0.0
        %1616 = vmatprep.subr.mxu0 0.0
        %1617 = vmatpush1.msra.mxu0 0.0
        %1618 = vmatprep.subr.mxu0 0.0
        %1619 = vmatpush1.msra.mxu0 0.0
        %1620 = vmatprep.subr.mxu0 0.0
        %1621 = vmatpush1.msra.mxu0 0.0
        %1622 = vmatprep.subr.mxu0 0.0
        %1623 = vmatpush1.msra.mxu0 0.0
        %1624 = vmatprep.subr.mxu0 0.0
        %1625 = vmatpush1.msra.mxu0 0.0
        %1626 = vmatprep.subr.mxu0 0.0
        %1627 = vmatpush1.msra.mxu0 0.0
        %1628 = vmatprep.subr.mxu0 0.0
        %1629 = vmatpush1.msra.mxu0 0.0
        %1630 = vmatprep.subr.mxu0 0.0
        %1631 = vmatpush1.msra.mxu0 0.0
        %1632 = vmatprep.subr.mxu0 0.0
        %1633 = vmatpush1.msra.mxu0 0.0
        %1634 = vmatprep.subr.mxu0 0.0
        %1635 = vmatpush1.msra.mxu0 0.0
        %1636 = vmatprep.subr.mxu0 0.0
        %1637 = vmatpush1.msra.mxu0 0.0
        %1638 = vmatprep.subr.mxu0 0.0
        %1639 = vmatpush1.msra.mxu0 0.0
        %1640 = vmatprep.subr.mxu0 0.0
        %v1641 = vand.u32 %v330, 4294901760
        %1642 = vmatpush1.msra.mxu0 %v1641
        %1643 = vmatprep.subr.mxu0 0.0
        %v1644 = vand.u32 %v329, 4294901760
        %1645 = vmatpush1.msra.mxu0 %v1644
        %1646 = vmatprep.subr.mxu0 0.0
        %1647 = vmatpush2.msra.mxu0 0.0
        %1648 = vmatprep.subr.mxu0 0.0
        %1649 = vmatpush2.msra.mxu0 0.0
        %1650 = vmatprep.subr.mxu0 0.0
        %1651 = vmatpush2.msra.mxu0 0.0
        %1652 = vmatprep.subr.mxu0 0.0
        %1653 = vmatpush2.msra.mxu0 0.0
        %1654 = vmatprep.subr.mxu0 0.0
        %1655 = vmatpush2.msra.mxu0 0.0
        %1656 = vmatprep.subr.mxu0 0.0
        %1657 = vmatpush2.msra.mxu0 0.0
        %1658 = vmatprep.subr.mxu0 0.0
        %1659 = vmatpush2.msra.mxu0 0.0
        %1660 = vmatprep.subr.mxu0 0.0
        %1661 = vmatpush2.msra.mxu0 0.0
        %1662 = vmatprep.subr.mxu0 0.0
        %1663 = vmatpush2.msra.mxu0 0.0
        %1664 = vmatprep.subr.mxu0 0.0
        %1665 = vmatpush2.msra.mxu0 0.0
        %1666 = vmatprep.subr.mxu0 0.0
        %1667 = vmatpush2.msra.mxu0 0.0
        %1668 = vmatprep.subr.mxu0 0.0
        %1669 = vmatpush2.msra.mxu0 0.0
        %1670 = vmatprep.subr.mxu0 0.0
        %1671 = vmatpush2.msra.mxu0 0.0
        %1672 = vmatprep.subr.mxu0 0.0
        %1673 = vmatpush2.msra.mxu0 0.0
        %1674 = vmatprep.subr.mxu0 0.0
        %1675 = vmatpush2.msra.mxu0 0.0
        %1676 = vmatprep.subr.mxu0 0.0
        %1677 = vmatpush2.msra.mxu0 0.0
        %1678 = vmatprep.mubr.f32.mxu0 0.0
        %v1679 = vand.u32 %v1350, 4294901760
        %v1680 = vsub.f32 %v1350, %v1679
        %v1681 = vand.u32 %v1680, 4294901760
        %1682 = vmatmul.mubr.f32.gmra.mxu0 %v1681
        %v1683 = vpop.f32.mrf.mxu0
        %v1684 = vadd.f32 %v1602, %v1683
        %v1685 = vpop.f32.mrf.mxu0
        %1686 = vmatprep.mubr.f32.mxu0 0.0
        %v1687 = vand.u32 %v1353, 4294901760
        %v1688 = vsub.f32 %v1353, %v1687
        %v1689 = vand.u32 %v1688, 4294901760
        %1690 = vmatmul.mubr.f32.gmra.mxu0 %v1689
        %v1691 = vpop.f32.mrf.mxu0
        %v1692 = vadd.f32 %v1609, %v1691
        %v1693 = vpop.f32.mrf.mxu0
        %1694 = vdwg.mxu0
        %1695 = vmatprep.subr.mxu0 0.0
        %1696 = vmatpush1.msra.mxu0 0.0
        %1697 = vmatprep.subr.mxu0 0.0
        %1698 = vmatpush1.msra.mxu0 0.0
        %1699 = vmatprep.subr.mxu0 0.0
        %1700 = vmatpush1.msra.mxu0 0.0
        %1701 = vmatprep.subr.mxu0 0.0
        %1702 = vmatpush1.msra.mxu0 0.0
        %1703 = vmatprep.subr.mxu0 0.0
        %1704 = vmatpush1.msra.mxu0 0.0
        %1705 = vmatprep.subr.mxu0 0.0
        %1706 = vmatpush1.msra.mxu0 0.0
        %1707 = vmatprep.subr.mxu0 0.0
        %1708 = vmatpush1.msra.mxu0 0.0
        %1709 = vmatprep.subr.mxu0 0.0
        %1710 = vmatpush1.msra.mxu0 0.0
        %1711 = vmatprep.subr.mxu0 0.0
        %1712 = vmatpush1.msra.mxu0 0.0
        %1713 = vmatprep.subr.mxu0 0.0
        %1714 = vmatpush1.msra.mxu0 0.0
        %1715 = vmatprep.subr.mxu0 0.0
        %1716 = vmatpush1.msra.mxu0 0.0
        %1717 = vmatprep.subr.mxu0 0.0
        %1718 = vmatpush1.msra.mxu0 0.0
        %1719 = vmatprep.subr.mxu0 0.0
        %1720 = vmatpush1.msra.mxu0 0.0
        %1721 = vmatprep.subr.mxu0 0.0
        %1722 = vmatpush1.msra.mxu0 0.0
        %1723 = vmatprep.subr.mxu0 0.0
        %v1724 = vand.u32 %v330, 4294901760
        %v1725 = vsub.f32 %v330, %v1724
        %v1726 = vand.u32 %v1725, 4294901760
        %1727 = vmatpush1.msra.mxu0 %v1726
        %1728 = vmatprep.subr.mxu0 0.0
        %v1729 = vand.u32 %v329, 4294901760
        %v1730 = vsub.f32 %v329, %v1729
        %v1731 = vand.u32 %v1730, 4294901760
        %1732 = vmatpush1.msra.mxu0 %v1731
        %1733 = vmatprep.subr.mxu0 0.0
        %1734 = vmatpush2.msra.mxu0 0.0
        %1735 = vmatprep.subr.mxu0 0.0
        %1736 = vmatpush2.msra.mxu0 0.0
        %1737 = vmatprep.subr.mxu0 0.0
        %1738 = vmatpush2.msra.mxu0 0.0
        %1739 = vmatprep.subr.mxu0 0.0
        %1740 = vmatpush2.msra.mxu0 0.0
        %1741 = vmatprep.subr.mxu0 0.0
        %1742 = vmatpush2.msra.mxu0 0.0
        %1743 = vmatprep.subr.mxu0 0.0
        %1744 = vmatpush2.msra.mxu0 0.0
        %1745 = vmatprep.subr.mxu0 0.0
        %1746 = vmatpush2.msra.mxu0 0.0
        %1747 = vmatprep.subr.mxu0 0.0
        %1748 = vmatpush2.msra.mxu0 0.0
        %1749 = vmatprep.subr.mxu0 0.0
        %1750 = vmatpush2.msra.mxu0 0.0
        %1751 = vmatprep.subr.mxu0 0.0
        %1752 = vmatpush2.msra.mxu0 0.0
        %1753 = vmatprep.subr.mxu0 0.0
        %1754 = vmatpush2.msra.mxu0 0.0
        %1755 = vmatprep.subr.mxu0 0.0
        %1756 = vmatpush2.msra.mxu0 0.0
        %1757 = vmatprep.subr.mxu0 0.0
        %1758 = vmatpush2.msra.mxu0 0.0
        %1759 = vmatprep.subr.mxu0 0.0
        %1760 = vmatpush2.msra.mxu0 0.0
        %1761 = vmatprep.subr.mxu0 0.0
        %1762 = vmatpush2.msra.mxu0 0.0
        %1763 = vmatprep.subr.mxu0 0.0
        %1764 = vmatpush2.msra.mxu0 0.0
        %1765 = vmatprep.mubr.f32.mxu0 0.0
        %v1766 = vand.u32 %v1350, 4294901760
        %1767 = vmatmul.mubr.f32.gmra.mxu0 %v1766
        %v1768 = vpop.f32.mrf.mxu0
        %v1769 = vadd.f32 %v1684, %v1768
        %v1770 = vpop.f32.mrf.mxu0
        %1771 = vmatprep.mubr.f32.mxu0 0.0
        %v1772 = vand.u32 %v1353, 4294901760
        %1773 = vmatmul.mubr.f32.gmra.mxu0 %v1772
        %v1774 = vpop.f32.mrf.mxu0
        %v1775 = vadd.f32 %v1692, %v1774
        %v1776 = vpop.f32.mrf.mxu0
        %1777 = vdwg.mxu0
        %1778 = vmatprep.subr.mxu0 0.0
        %1779 = vmatpush1.msra.mxu0 0.0
        %1780 = vmatprep.subr.mxu0 0.0
        %1781 = vmatpush1.msra.mxu0 0.0
        %1782 = vmatprep.subr.mxu0 0.0
        %1783 = vmatpush1.msra.mxu0 0.0
        %1784 = vmatprep.subr.mxu0 0.0
        %1785 = vmatpush1.msra.mxu0 0.0
        %1786 = vmatprep.subr.mxu0 0.0
        %1787 = vmatpush1.msra.mxu0 0.0
        %1788 = vmatprep.subr.mxu0 0.0
        %1789 = vmatpush1.msra.mxu0 0.0
        %1790 = vmatprep.subr.mxu0 0.0
        %1791 = vmatpush1.msra.mxu0 0.0
        %1792 = vmatprep.subr.mxu0 0.0
        %1793 = vmatpush1.msra.mxu0 0.0
        %1794 = vmatprep.subr.mxu0 0.0
        %1795 = vmatpush1.msra.mxu0 0.0
        %1796 = vmatprep.subr.mxu0 0.0
        %1797 = vmatpush1.msra.mxu0 0.0
        %1798 = vmatprep.subr.mxu0 0.0
        %1799 = vmatpush1.msra.mxu0 0.0
        %1800 = vmatprep.subr.mxu0 0.0
        %1801 = vmatpush1.msra.mxu0 0.0
        %1802 = vmatprep.subr.mxu0 0.0
        %1803 = vmatpush1.msra.mxu0 0.0
        %1804 = vmatprep.subr.mxu0 0.0
        %1805 = vmatpush1.msra.mxu0 0.0
        %1806 = vmatprep.subr.mxu0 0.0
        %v1807 = vand.u32 %v330, 4294901760
        %1808 = vmatpush1.msra.mxu0 %v1807
        %1809 = vmatprep.subr.mxu0 0.0
        %v1810 = vand.u32 %v329, 4294901760
        %1811 = vmatpush1.msra.mxu0 %v1810
        %1812 = vmatprep.subr.mxu0 0.0
        %1813 = vmatpush2.msra.mxu0 0.0
        %1814 = vmatprep.subr.mxu0 0.0
        %1815 = vmatpush2.msra.mxu0 0.0
        %1816 = vmatprep.subr.mxu0 0.0
        %1817 = vmatpush2.msra.mxu0 0.0
        %1818 = vmatprep.subr.mxu0 0.0
        %1819 = vmatpush2.msra.mxu0 0.0
        %1820 = vmatprep.subr.mxu0 0.0
        %1821 = vmatpush2.msra.mxu0 0.0
        %1822 = vmatprep.subr.mxu0 0.0
        %1823 = vmatpush2.msra.mxu0 0.0
        %1824 = vmatprep.subr.mxu0 0.0
        %1825 = vmatpush2.msra.mxu0 0.0
        %1826 = vmatprep.subr.mxu0 0.0
        %1827 = vmatpush2.msra.mxu0 0.0
        %1828 = vmatprep.subr.mxu0 0.0
        %1829 = vmatpush2.msra.mxu0 0.0
        %1830 = vmatprep.subr.mxu0 0.0
        %1831 = vmatpush2.msra.mxu0 0.0
        %1832 = vmatprep.subr.mxu0 0.0
        %1833 = vmatpush2.msra.mxu0 0.0
        %1834 = vmatprep.subr.mxu0 0.0
        %1835 = vmatpush2.msra.mxu0 0.0
        %1836 = vmatprep.subr.mxu0 0.0
        %1837 = vmatpush2.msra.mxu0 0.0
        %1838 = vmatprep.subr.mxu0 0.0
        %1839 = vmatpush2.msra.mxu0 0.0
        %1840 = vmatprep.subr.mxu0 0.0
        %1841 = vmatpush2.msra.mxu0 0.0
        %1842 = vmatprep.subr.mxu0 0.0
        %1843 = vmatpush2.msra.mxu0 0.0
        %1844 = vmatprep.mubr.f32.mxu0 0.0
        %v1845 = vand.u32 %v1350, 4294901760
        %1846 = vmatmul.mubr.f32.gmra.mxu0 %v1845
        %v1847 = vpop.f32.mrf.mxu0
        %v1848 = vadd.f32 %v1769, %v1847
        %v1849 = vpop.f32.mrf.mxu0
        %1850 = vmatprep.mubr.f32.mxu0 0.0
        %v1851 = vand.u32 %v1353, 4294901760
        %1852 = vmatmul.mubr.f32.gmra.mxu0 %v1851
        %v1853 = vpop.f32.mrf.mxu0
        %v1854 = vadd.f32 %v1775, %v1853
        %v1855 = vpop.f32.mrf.mxu0
        %1856 = vdwg.mxu0
        %v1858 = vsel %vm300, %v290, 0
        %v1861 = vsel %vm300, %v291, 0
        %1863 = vmatprep.subr.mxu0 0.0
        %1864 = vmatpush1.msra.mxu0 0.0
        %1865 = vmatprep.subr.mxu0 0.0
        %1866 = vmatpush1.msra.mxu0 0.0
        %1867 = vmatprep.subr.mxu0 0.0
        %1868 = vmatpush1.msra.mxu0 0.0
        %1869 = vmatprep.subr.mxu0 0.0
        %1870 = vmatpush1.msra.mxu0 0.0
        %1871 = vmatprep.subr.mxu0 0.0
        %1872 = vmatpush1.msra.mxu0 0.0
        %1873 = vmatprep.subr.mxu0 0.0
        %1874 = vmatpush1.msra.mxu0 0.0
        %1875 = vmatprep.subr.mxu0 0.0
        %1876 = vmatpush1.msra.mxu0 0.0
        %1877 = vmatprep.subr.mxu0 0.0
        %1878 = vmatpush1.msra.mxu0 0.0
        %1879 = vmatprep.subr.mxu0 0.0
        %1880 = vmatpush1.msra.mxu0 0.0
        %1881 = vmatprep.subr.mxu0 0.0
        %1882 = vmatpush1.msra.mxu0 0.0
        %1883 = vmatprep.subr.mxu0 0.0
        %1884 = vmatpush1.msra.mxu0 0.0
        %1885 = vmatprep.subr.mxu0 0.0
        %1886 = vmatpush1.msra.mxu0 0.0
        %1887 = vmatprep.subr.mxu0 0.0
        %1888 = vmatpush1.msra.mxu0 0.0
        %1889 = vmatprep.subr.mxu0 0.0
        %1890 = vmatpush1.msra.mxu0 0.0
        %1891 = vmatprep.subr.mxu0 0.0
        %v1892 = vand.u32 %v330, 4294901760
        %1893 = vmatpush1.msra.mxu0 %v1892
        %1894 = vmatprep.subr.mxu0 0.0
        %v1895 = vand.u32 %v329, 4294901760
        %1896 = vmatpush1.msra.mxu0 %v1895
        %1897 = vmatprep.subr.mxu0 0.0
        %1898 = vmatpush2.msra.mxu0 0.0
        %1899 = vmatprep.subr.mxu0 0.0
        %1900 = vmatpush2.msra.mxu0 0.0
        %1901 = vmatprep.subr.mxu0 0.0
        %1902 = vmatpush2.msra.mxu0 0.0
        %1903 = vmatprep.subr.mxu0 0.0
        %1904 = vmatpush2.msra.mxu0 0.0
        %1905 = vmatprep.subr.mxu0 0.0
        %1906 = vmatpush2.msra.mxu0 0.0
        %1907 = vmatprep.subr.mxu0 0.0
        %1908 = vmatpush2.msra.mxu0 0.0
        %1909 = vmatprep.subr.mxu0 0.0
        %1910 = vmatpush2.msra.mxu0 0.0
        %1911 = vmatprep.subr.mxu0 0.0
        %1912 = vmatpush2.msra.mxu0 0.0
        %1913 = vmatprep.subr.mxu0 0.0
        %1914 = vmatpush2.msra.mxu0 0.0
        %1915 = vmatprep.subr.mxu0 0.0
        %1916 = vmatpush2.msra.mxu0 0.0
        %1917 = vmatprep.subr.mxu0 0.0
        %1918 = vmatpush2.msra.mxu0 0.0
        %1919 = vmatprep.subr.mxu0 0.0
        %1920 = vmatpush2.msra.mxu0 0.0
        %1921 = vmatprep.subr.mxu0 0.0
        %1922 = vmatpush2.msra.mxu0 0.0
        %1923 = vmatprep.subr.mxu0 0.0
        %1924 = vmatpush2.msra.mxu0 0.0
        %1925 = vmatprep.subr.mxu0 0.0
        %1926 = vmatpush2.msra.mxu0 0.0
        %1927 = vmatprep.subr.mxu0 0.0
        %1928 = vmatpush2.msra.mxu0 0.0
        %1929 = vmatprep.mubr.f32.mxu0 0.0
        %v1930 = vand.u32 %v1858, 4294901760
        %v1931 = vsub.f32 %v1858, %v1930
        %v1932 = vand.u32 %v1931, 4294901760
        %v1933 = vsub.f32 %v1931, %v1932
        %v1934 = vand.u32 %v1933, 4294901760
        %1935 = vmatmul.mubr.f32.gmra.mxu0 %v1934
        %v1936 = vpop.f32.mrf.mxu0
        %v1937 = vadd.f32 0.0, %v1936
        %v1938 = vpop.f32.mrf.mxu0
        %1939 = vmatprep.mubr.f32.mxu0 0.0
        %v1940 = vand.u32 %v1861, 4294901760
        %v1941 = vsub.f32 %v1861, %v1940
        %v1942 = vand.u32 %v1941, 4294901760
        %v1943 = vsub.f32 %v1941, %v1942
        %v1944 = vand.u32 %v1943, 4294901760
        %1945 = vmatmul.mubr.f32.gmra.mxu0 %v1944
        %v1946 = vpop.f32.mrf.mxu0
        %v1947 = vadd.f32 0.0, %v1946
        %v1948 = vpop.f32.mrf.mxu0
        %1949 = vdwg.mxu0
        %1950 = vmatprep.subr.mxu0 0.0
        %1951 = vmatpush1.msra.mxu0 0.0
        %1952 = vmatprep.subr.mxu0 0.0
        %1953 = vmatpush1.msra.mxu0 0.0
        %1954 = vmatprep.subr.mxu0 0.0
        %1955 = vmatpush1.msra.mxu0 0.0
        %1956 = vmatprep.subr.mxu0 0.0
        %1957 = vmatpush1.msra.mxu0 0.0
        %1958 = vmatprep.subr.mxu0 0.0
        %1959 = vmatpush1.msra.mxu0 0.0
        %1960 = vmatprep.subr.mxu0 0.0
        %1961 = vmatpush1.msra.mxu0 0.0
        %1962 = vmatprep.subr.mxu0 0.0
        %1963 = vmatpush1.msra.mxu0 0.0
        %1964 = vmatprep.subr.mxu0 0.0
        %1965 = vmatpush1.msra.mxu0 0.0
        %1966 = vmatprep.subr.mxu0 0.0
        %1967 = vmatpush1.msra.mxu0 0.0
        %1968 = vmatprep.subr.mxu0 0.0
        %1969 = vmatpush1.msra.mxu0 0.0
        %1970 = vmatprep.subr.mxu0 0.0
        %1971 = vmatpush1.msra.mxu0 0.0
        %1972 = vmatprep.subr.mxu0 0.0
        %1973 = vmatpush1.msra.mxu0 0.0
        %1974 = vmatprep.subr.mxu0 0.0
        %1975 = vmatpush1.msra.mxu0 0.0
        %1976 = vmatprep.subr.mxu0 0.0
        %1977 = vmatpush1.msra.mxu0 0.0
        %1978 = vmatprep.subr.mxu0 0.0
        %v1979 = vand.u32 %v330, 4294901760
        %v1980 = vsub.f32 %v330, %v1979
        %v1981 = vand.u32 %v1980, 4294901760
        %v1982 = vsub.f32 %v1980, %v1981
        %v1983 = vand.u32 %v1982, 4294901760
        %1984 = vmatpush1.msra.mxu0 %v1983
        %1985 = vmatprep.subr.mxu0 0.0
        %v1986 = vand.u32 %v329, 4294901760
        %v1987 = vsub.f32 %v329, %v1986
        %v1988 = vand.u32 %v1987, 4294901760
        %v1989 = vsub.f32 %v1987, %v1988
        %v1990 = vand.u32 %v1989, 4294901760
        %1991 = vmatpush1.msra.mxu0 %v1990
        %1992 = vmatprep.subr.mxu0 0.0
        %1993 = vmatpush2.msra.mxu0 0.0
        %1994 = vmatprep.subr.mxu0 0.0
        %1995 = vmatpush2.msra.mxu0 0.0
        %1996 = vmatprep.subr.mxu0 0.0
        %1997 = vmatpush2.msra.mxu0 0.0
        %1998 = vmatprep.subr.mxu0 0.0
        %1999 = vmatpush2.msra.mxu0 0.0
        %2000 = vmatprep.subr.mxu0 0.0
        %2001 = vmatpush2.msra.mxu0 0.0
        %2002 = vmatprep.subr.mxu0 0.0
        %2003 = vmatpush2.msra.mxu0 0.0
        %2004 = vmatprep.subr.mxu0 0.0
        %2005 = vmatpush2.msra.mxu0 0.0
        %2006 = vmatprep.subr.mxu0 0.0
        %2007 = vmatpush2.msra.mxu0 0.0
        %2008 = vmatprep.subr.mxu0 0.0
        %2009 = vmatpush2.msra.mxu0 0.0
        %2010 = vmatprep.subr.mxu0 0.0
        %2011 = vmatpush2.msra.mxu0 0.0
        %2012 = vmatprep.subr.mxu0 0.0
        %2013 = vmatpush2.msra.mxu0 0.0
        %2014 = vmatprep.subr.mxu0 0.0
        %2015 = vmatpush2.msra.mxu0 0.0
        %2016 = vmatprep.subr.mxu0 0.0
        %2017 = vmatpush2.msra.mxu0 0.0
        %2018 = vmatprep.subr.mxu0 0.0
        %2019 = vmatpush2.msra.mxu0 0.0
        %2020 = vmatprep.subr.mxu0 0.0
        %2021 = vmatpush2.msra.mxu0 0.0
        %2022 = vmatprep.subr.mxu0 0.0
        %2023 = vmatpush2.msra.mxu0 0.0
        %2024 = vmatprep.mubr.f32.mxu0 0.0
        %v2025 = vand.u32 %v1858, 4294901760
        %2026 = vmatmul.mubr.f32.gmra.mxu0 %v2025
        %v2027 = vpop.f32.mrf.mxu0
        %v2028 = vadd.f32 %v1937, %v2027
        %v2029 = vpop.f32.mrf.mxu0
        %2030 = vmatprep.mubr.f32.mxu0 0.0
        %v2031 = vand.u32 %v1861, 4294901760
        %2032 = vmatmul.mubr.f32.gmra.mxu0 %v2031
        %v2033 = vpop.f32.mrf.mxu0
        %v2034 = vadd.f32 %v1947, %v2033
        %v2035 = vpop.f32.mrf.mxu0
        %2036 = vdwg.mxu0
        %2037 = vmatprep.subr.mxu0 0.0
        %2038 = vmatpush1.msra.mxu0 0.0
        %2039 = vmatprep.subr.mxu0 0.0
        %2040 = vmatpush1.msra.mxu0 0.0
        %2041 = vmatprep.subr.mxu0 0.0
        %2042 = vmatpush1.msra.mxu0 0.0
        %2043 = vmatprep.subr.mxu0 0.0
        %2044 = vmatpush1.msra.mxu0 0.0
        %2045 = vmatprep.subr.mxu0 0.0
        %2046 = vmatpush1.msra.mxu0 0.0
        %2047 = vmatprep.subr.mxu0 0.0
        %2048 = vmatpush1.msra.mxu0 0.0
        %2049 = vmatprep.subr.mxu0 0.0
        %2050 = vmatpush1.msra.mxu0 0.0
        %2051 = vmatprep.subr.mxu0 0.0
        %2052 = vmatpush1.msra.mxu0 0.0
        %2053 = vmatprep.subr.mxu0 0.0
        %2054 = vmatpush1.msra.mxu0 0.0
        %2055 = vmatprep.subr.mxu0 0.0
        %2056 = vmatpush1.msra.mxu0 0.0
        %2057 = vmatprep.subr.mxu0 0.0
        %2058 = vmatpush1.msra.mxu0 0.0
        %2059 = vmatprep.subr.mxu0 0.0
        %2060 = vmatpush1.msra.mxu0 0.0
        %2061 = vmatprep.subr.mxu0 0.0
        %2062 = vmatpush1.msra.mxu0 0.0
        %2063 = vmatprep.subr.mxu0 0.0
        %2064 = vmatpush1.msra.mxu0 0.0
        %2065 = vmatprep.subr.mxu0 0.0
        %v2066 = vand.u32 %v330, 4294901760
        %v2067 = vsub.f32 %v330, %v2066
        %2068 = vmatpush1.msra.mxu0 %v2067
        %2069 = vmatprep.subr.mxu0 0.0
        %v2070 = vand.u32 %v329, 4294901760
        %v2071 = vsub.f32 %v329, %v2070
        %2072 = vmatpush1.msra.mxu0 %v2071
        %2073 = vmatprep.subr.mxu0 0.0
        %2074 = vmatpush2.msra.mxu0 0.0
        %2075 = vmatprep.subr.mxu0 0.0
        %2076 = vmatpush2.msra.mxu0 0.0
        %2077 = vmatprep.subr.mxu0 0.0
        %2078 = vmatpush2.msra.mxu0 0.0
        %2079 = vmatprep.subr.mxu0 0.0
        %2080 = vmatpush2.msra.mxu0 0.0
        %2081 = vmatprep.subr.mxu0 0.0
        %2082 = vmatpush2.msra.mxu0 0.0
        %2083 = vmatprep.subr.mxu0 0.0
        %2084 = vmatpush2.msra.mxu0 0.0
        %2085 = vmatprep.subr.mxu0 0.0
        %2086 = vmatpush2.msra.mxu0 0.0
        %2087 = vmatprep.subr.mxu0 0.0
        %2088 = vmatpush2.msra.mxu0 0.0
        %2089 = vmatprep.subr.mxu0 0.0
        %2090 = vmatpush2.msra.mxu0 0.0
        %2091 = vmatprep.subr.mxu0 0.0
        %2092 = vmatpush2.msra.mxu0 0.0
        %2093 = vmatprep.subr.mxu0 0.0
        %2094 = vmatpush2.msra.mxu0 0.0
        %2095 = vmatprep.subr.mxu0 0.0
        %2096 = vmatpush2.msra.mxu0 0.0
        %2097 = vmatprep.subr.mxu0 0.0
        %2098 = vmatpush2.msra.mxu0 0.0
        %2099 = vmatprep.subr.mxu0 0.0
        %2100 = vmatpush2.msra.mxu0 0.0
        %2101 = vmatprep.subr.mxu0 0.0
        %2102 = vmatpush2.msra.mxu0 0.0
        %2103 = vmatprep.subr.mxu0 0.0
        %2104 = vmatpush2.msra.mxu0 0.0
        %2105 = vmatprep.mubr.f32.mxu0 0.0
        %v2106 = vand.u32 %v1858, 4294901760
        %v2107 = vsub.f32 %v1858, %v2106
        %2108 = vmatmul.mubr.f32.gmra.mxu0 %v2107
        %v2109 = vpop.f32.mrf.mxu0
        %v2110 = vadd.f32 %v2028, %v2109
        %v2111 = vpop.f32.mrf.mxu0
        %2112 = vmatprep.mubr.f32.mxu0 0.0
        %v2113 = vand.u32 %v1861, 4294901760
        %v2114 = vsub.f32 %v1861, %v2113
        %2115 = vmatmul.mubr.f32.gmra.mxu0 %v2114
        %v2116 = vpop.f32.mrf.mxu0
        %v2117 = vadd.f32 %v2034, %v2116
        %v2118 = vpop.f32.mrf.mxu0
        %2119 = vdwg.mxu0
        %2120 = vmatprep.subr.mxu0 0.0
        %2121 = vmatpush1.msra.mxu0 0.0
        %2122 = vmatprep.subr.mxu0 0.0
        %2123 = vmatpush1.msra.mxu0 0.0
        %2124 = vmatprep.subr.mxu0 0.0
        %2125 = vmatpush1.msra.mxu0 0.0
        %2126 = vmatprep.subr.mxu0 0.0
        %2127 = vmatpush1.msra.mxu0 0.0
        %2128 = vmatprep.subr.mxu0 0.0
        %2129 = vmatpush1.msra.mxu0 0.0
        %2130 = vmatprep.subr.mxu0 0.0
        %2131 = vmatpush1.msra.mxu0 0.0
        %2132 = vmatprep.subr.mxu0 0.0
        %2133 = vmatpush1.msra.mxu0 0.0
        %2134 = vmatprep.subr.mxu0 0.0
        %2135 = vmatpush1.msra.mxu0 0.0
        %2136 = vmatprep.subr.mxu0 0.0
        %2137 = vmatpush1.msra.mxu0 0.0
        %2138 = vmatprep.subr.mxu0 0.0
        %2139 = vmatpush1.msra.mxu0 0.0
        %2140 = vmatprep.subr.mxu0 0.0
        %2141 = vmatpush1.msra.mxu0 0.0
        %2142 = vmatprep.subr.mxu0 0.0
        %2143 = vmatpush1.msra.mxu0 0.0
        %2144 = vmatprep.subr.mxu0 0.0
        %2145 = vmatpush1.msra.mxu0 0.0
        %2146 = vmatprep.subr.mxu0 0.0
        %2147 = vmatpush1.msra.mxu0 0.0
        %2148 = vmatprep.subr.mxu0 0.0
        %v2149 = vand.u32 %v330, 4294901760
        %2150 = vmatpush1.msra.mxu0 %v2149
        %2151 = vmatprep.subr.mxu0 0.0
        %v2152 = vand.u32 %v329, 4294901760
        %2153 = vmatpush1.msra.mxu0 %v2152
        %2154 = vmatprep.subr.mxu0 0.0
        %2155 = vmatpush2.msra.mxu0 0.0
        %2156 = vmatprep.subr.mxu0 0.0
        %2157 = vmatpush2.msra.mxu0 0.0
        %2158 = vmatprep.subr.mxu0 0.0
        %2159 = vmatpush2.msra.mxu0 0.0
        %2160 = vmatprep.subr.mxu0 0.0
        %2161 = vmatpush2.msra.mxu0 0.0
        %2162 = vmatprep.subr.mxu0 0.0
        %2163 = vmatpush2.msra.mxu0 0.0
        %2164 = vmatprep.subr.mxu0 0.0
        %2165 = vmatpush2.msra.mxu0 0.0
        %2166 = vmatprep.subr.mxu0 0.0
        %2167 = vmatpush2.msra.mxu0 0.0
        %2168 = vmatprep.subr.mxu0 0.0
        %2169 = vmatpush2.msra.mxu0 0.0
        %2170 = vmatprep.subr.mxu0 0.0
        %2171 = vmatpush2.msra.mxu0 0.0
        %2172 = vmatprep.subr.mxu0 0.0
        %2173 = vmatpush2.msra.mxu0 0.0
        %2174 = vmatprep.subr.mxu0 0.0
        %2175 = vmatpush2.msra.mxu0 0.0
        %2176 = vmatprep.subr.mxu0 0.0
        %2177 = vmatpush2.msra.mxu0 0.0
        %2178 = vmatprep.subr.mxu0 0.0
        %2179 = vmatpush2.msra.mxu0 0.0
        %2180 = vmatprep.subr.mxu0 0.0
        %2181 = vmatpush2.msra.mxu0 0.0
        %2182 = vmatprep.subr.mxu0 0.0
        %2183 = vmatpush2.msra.mxu0 0.0
        %2184 = vmatprep.subr.mxu0 0.0
        %2185 = vmatpush2.msra.mxu0 0.0
        %2186 = vmatprep.mubr.f32.mxu0 0.0
        %v2187 = vand.u32 %v1858, 4294901760
        %v2188 = vsub.f32 %v1858, %v2187
        %v2189 = vand.u32 %v2188, 4294901760
        %2190 = vmatmul.mubr.f32.gmra.mxu0 %v2189
        %v2191 = vpop.f32.mrf.mxu0
        %v2192 = vadd.f32 %v2110, %v2191
        %v2193 = vpop.f32.mrf.mxu0
        %2194 = vmatprep.mubr.f32.mxu0 0.0
        %v2195 = vand.u32 %v1861, 4294901760
        %v2196 = vsub.f32 %v1861, %v2195
        %v2197 = vand.u32 %v2196, 4294901760
        %2198 = vmatmul.mubr.f32.gmra.mxu0 %v2197
        %v2199 = vpop.f32.mrf.mxu0
        %v2200 = vadd.f32 %v2117, %v2199
        %v2201 = vpop.f32.mrf.mxu0
        %2202 = vdwg.mxu0
        %2203 = vmatprep.subr.mxu0 0.0
        %2204 = vmatpush1.msra.mxu0 0.0
        %2205 = vmatprep.subr.mxu0 0.0
        %2206 = vmatpush1.msra.mxu0 0.0
        %2207 = vmatprep.subr.mxu0 0.0
        %2208 = vmatpush1.msra.mxu0 0.0
        %2209 = vmatprep.subr.mxu0 0.0
        %2210 = vmatpush1.msra.mxu0 0.0
        %2211 = vmatprep.subr.mxu0 0.0
        %2212 = vmatpush1.msra.mxu0 0.0
        %2213 = vmatprep.subr.mxu0 0.0
        %2214 = vmatpush1.msra.mxu0 0.0
        %2215 = vmatprep.subr.mxu0 0.0
        %2216 = vmatpush1.msra.mxu0 0.0
        %2217 = vmatprep.subr.mxu0 0.0
        %2218 = vmatpush1.msra.mxu0 0.0
        %2219 = vmatprep.subr.mxu0 0.0
        %2220 = vmatpush1.msra.mxu0 0.0
        %2221 = vmatprep.subr.mxu0 0.0
        %2222 = vmatpush1.msra.mxu0 0.0
        %2223 = vmatprep.subr.mxu0 0.0
        %2224 = vmatpush1.msra.mxu0 0.0
        %2225 = vmatprep.subr.mxu0 0.0
        %2226 = vmatpush1.msra.mxu0 0.0
        %2227 = vmatprep.subr.mxu0 0.0
        %2228 = vmatpush1.msra.mxu0 0.0
        %2229 = vmatprep.subr.mxu0 0.0
        %2230 = vmatpush1.msra.mxu0 0.0
        %2231 = vmatprep.subr.mxu0 0.0
        %v2232 = vand.u32 %v330, 4294901760
        %v2233 = vsub.f32 %v330, %v2232
        %v2234 = vand.u32 %v2233, 4294901760
        %2235 = vmatpush1.msra.mxu0 %v2234
        %2236 = vmatprep.subr.mxu0 0.0
        %v2237 = vand.u32 %v329, 4294901760
        %v2238 = vsub.f32 %v329, %v2237
        %v2239 = vand.u32 %v2238, 4294901760
        %2240 = vmatpush1.msra.mxu0 %v2239
        %2241 = vmatprep.subr.mxu0 0.0
        %2242 = vmatpush2.msra.mxu0 0.0
        %2243 = vmatprep.subr.mxu0 0.0
        %2244 = vmatpush2.msra.mxu0 0.0
        %2245 = vmatprep.subr.mxu0 0.0
        %2246 = vmatpush2.msra.mxu0 0.0
        %2247 = vmatprep.subr.mxu0 0.0
        %2248 = vmatpush2.msra.mxu0 0.0
        %2249 = vmatprep.subr.mxu0 0.0
        %2250 = vmatpush2.msra.mxu0 0.0
        %2251 = vmatprep.subr.mxu0 0.0
        %2252 = vmatpush2.msra.mxu0 0.0
        %2253 = vmatprep.subr.mxu0 0.0
        %2254 = vmatpush2.msra.mxu0 0.0
        %2255 = vmatprep.subr.mxu0 0.0
        %2256 = vmatpush2.msra.mxu0 0.0
        %2257 = vmatprep.subr.mxu0 0.0
        %2258 = vmatpush2.msra.mxu0 0.0
        %2259 = vmatprep.subr.mxu0 0.0
        %2260 = vmatpush2.msra.mxu0 0.0
        %2261 = vmatprep.subr.mxu0 0.0
        %2262 = vmatpush2.msra.mxu0 0.0
        %2263 = vmatprep.subr.mxu0 0.0
        %2264 = vmatpush2.msra.mxu0 0.0
        %2265 = vmatprep.subr.mxu0 0.0
        %2266 = vmatpush2.msra.mxu0 0.0
        %2267 = vmatprep.subr.mxu0 0.0
        %2268 = vmatpush2.msra.mxu0 0.0
        %2269 = vmatprep.subr.mxu0 0.0
        %2270 = vmatpush2.msra.mxu0 0.0
        %2271 = vmatprep.subr.mxu0 0.0
        %2272 = vmatpush2.msra.mxu0 0.0
        %2273 = vmatprep.mubr.f32.mxu0 0.0
        %v2274 = vand.u32 %v1858, 4294901760
        %2275 = vmatmul.mubr.f32.gmra.mxu0 %v2274
        %v2276 = vpop.f32.mrf.mxu0
        %v2277 = vadd.f32 %v2192, %v2276
        %v2278 = vpop.f32.mrf.mxu0
        %2279 = vmatprep.mubr.f32.mxu0 0.0
        %v2280 = vand.u32 %v1861, 4294901760
        %2281 = vmatmul.mubr.f32.gmra.mxu0 %v2280
        %v2282 = vpop.f32.mrf.mxu0
        %v2283 = vadd.f32 %v2200, %v2282
        %v2284 = vpop.f32.mrf.mxu0
        %2285 = vdwg.mxu0
        %2286 = vmatprep.subr.mxu0 0.0
        %2287 = vmatpush1.msra.mxu0 0.0
        %2288 = vmatprep.subr.mxu0 0.0
        %2289 = vmatpush1.msra.mxu0 0.0
        %2290 = vmatprep.subr.mxu0 0.0
        %2291 = vmatpush1.msra.mxu0 0.0
        %2292 = vmatprep.subr.mxu0 0.0
        %2293 = vmatpush1.msra.mxu0 0.0
        %2294 = vmatprep.subr.mxu0 0.0
        %2295 = vmatpush1.msra.mxu0 0.0
        %2296 = vmatprep.subr.mxu0 0.0
        %2297 = vmatpush1.msra.mxu0 0.0
        %2298 = vmatprep.subr.mxu0 0.0
        %2299 = vmatpush1.msra.mxu0 0.0
        %2300 = vmatprep.subr.mxu0 0.0
        %2301 = vmatpush1.msra.mxu0 0.0
        %2302 = vmatprep.subr.mxu0 0.0
        %2303 = vmatpush1.msra.mxu0 0.0
        %2304 = vmatprep.subr.mxu0 0.0
        %2305 = vmatpush1.msra.mxu0 0.0
        %2306 = vmatprep.subr.mxu0 0.0
        %2307 = vmatpush1.msra.mxu0 0.0
        %2308 = vmatprep.subr.mxu0 0.0
        %2309 = vmatpush1.msra.mxu0 0.0
        %2310 = vmatprep.subr.mxu0 0.0
        %2311 = vmatpush1.msra.mxu0 0.0
        %2312 = vmatprep.subr.mxu0 0.0
        %2313 = vmatpush1.msra.mxu0 0.0
        %2314 = vmatprep.subr.mxu0 0.0
        %v2315 = vand.u32 %v330, 4294901760
        %2316 = vmatpush1.msra.mxu0 %v2315
        %2317 = vmatprep.subr.mxu0 0.0
        %v2318 = vand.u32 %v329, 4294901760
        %2319 = vmatpush1.msra.mxu0 %v2318
        %2320 = vmatprep.subr.mxu0 0.0
        %2321 = vmatpush2.msra.mxu0 0.0
        %2322 = vmatprep.subr.mxu0 0.0
        %2323 = vmatpush2.msra.mxu0 0.0
        %2324 = vmatprep.subr.mxu0 0.0
        %2325 = vmatpush2.msra.mxu0 0.0
        %2326 = vmatprep.subr.mxu0 0.0
        %2327 = vmatpush2.msra.mxu0 0.0
        %2328 = vmatprep.subr.mxu0 0.0
        %2329 = vmatpush2.msra.mxu0 0.0
        %2330 = vmatprep.subr.mxu0 0.0
        %2331 = vmatpush2.msra.mxu0 0.0
        %2332 = vmatprep.subr.mxu0 0.0
        %2333 = vmatpush2.msra.mxu0 0.0
        %2334 = vmatprep.subr.mxu0 0.0
        %2335 = vmatpush2.msra.mxu0 0.0
        %2336 = vmatprep.subr.mxu0 0.0
        %2337 = vmatpush2.msra.mxu0 0.0
        %2338 = vmatprep.subr.mxu0 0.0
        %2339 = vmatpush2.msra.mxu0 0.0
        %2340 = vmatprep.subr.mxu0 0.0
        %2341 = vmatpush2.msra.mxu0 0.0
        %2342 = vmatprep.subr.mxu0 0.0
        %2343 = vmatpush2.msra.mxu0 0.0
        %2344 = vmatprep.subr.mxu0 0.0
        %2345 = vmatpush2.msra.mxu0 0.0
        %2346 = vmatprep.subr.mxu0 0.0
        %2347 = vmatpush2.msra.mxu0 0.0
        %2348 = vmatprep.subr.mxu0 0.0
        %2349 = vmatpush2.msra.mxu0 0.0
        %2350 = vmatprep.subr.mxu0 0.0
        %2351 = vmatpush2.msra.mxu0 0.0
        %2352 = vmatprep.mubr.f32.mxu0 0.0
        %v2353 = vand.u32 %v1858, 4294901760
        %2354 = vmatmul.mubr.f32.gmra.mxu0 %v2353
        %v2355 = vpop.f32.mrf.mxu0
        %v2356 = vadd.f32 %v2277, %v2355
        %v2357 = vpop.f32.mrf.mxu0
        %2358 = vmatprep.mubr.f32.mxu0 0.0
        %v2359 = vand.u32 %v1861, 4294901760
        %2360 = vmatmul.mubr.f32.gmra.mxu0 %v2359
        %v2361 = vpop.f32.mrf.mxu0
        %v2362 = vadd.f32 %v2283, %v2361
        %v2363 = vpop.f32.mrf.mxu0
        %2364 = vdwg.mxu0
        %v2366 = vsel %vm300, %v317, 0
        %v2369 = vsel %vm300, %v318, 0
        %2371 = vmatprep.subr.mxu0 0.0
        %2372 = vmatpush1.msra.mxu0 0.0
        %2373 = vmatprep.subr.mxu0 0.0
        %2374 = vmatpush1.msra.mxu0 0.0
        %2375 = vmatprep.subr.mxu0 0.0
        %2376 = vmatpush1.msra.mxu0 0.0
        %2377 = vmatprep.subr.mxu0 0.0
        %2378 = vmatpush1.msra.mxu0 0.0
        %2379 = vmatprep.subr.mxu0 0.0
        %2380 = vmatpush1.msra.mxu0 0.0
        %2381 = vmatprep.subr.mxu0 0.0
        %2382 = vmatpush1.msra.mxu0 0.0
        %2383 = vmatprep.subr.mxu0 0.0
        %2384 = vmatpush1.msra.mxu0 0.0
        %2385 = vmatprep.subr.mxu0 0.0
        %2386 = vmatpush1.msra.mxu0 0.0
        %2387 = vmatprep.subr.mxu0 0.0
        %2388 = vmatpush1.msra.mxu0 0.0
        %2389 = vmatprep.subr.mxu0 0.0
        %2390 = vmatpush1.msra.mxu0 0.0
        %2391 = vmatprep.subr.mxu0 0.0
        %2392 = vmatpush1.msra.mxu0 0.0
        %2393 = vmatprep.subr.mxu0 0.0
        %2394 = vmatpush1.msra.mxu0 0.0
        %2395 = vmatprep.subr.mxu0 0.0
        %2396 = vmatpush1.msra.mxu0 0.0
        %2397 = vmatprep.subr.mxu0 0.0
        %2398 = vmatpush1.msra.mxu0 0.0
        %2399 = vmatprep.subr.mxu0 0.0
        %v2400 = vand.u32 %v330, 4294901760
        %2401 = vmatpush1.msra.mxu0 %v2400
        %2402 = vmatprep.subr.mxu0 0.0
        %v2403 = vand.u32 %v329, 4294901760
        %2404 = vmatpush1.msra.mxu0 %v2403
        %2405 = vmatprep.subr.mxu0 0.0
        %2406 = vmatpush2.msra.mxu0 0.0
        %2407 = vmatprep.subr.mxu0 0.0
        %2408 = vmatpush2.msra.mxu0 0.0
        %2409 = vmatprep.subr.mxu0 0.0
        %2410 = vmatpush2.msra.mxu0 0.0
        %2411 = vmatprep.subr.mxu0 0.0
        %2412 = vmatpush2.msra.mxu0 0.0
        %2413 = vmatprep.subr.mxu0 0.0
        %2414 = vmatpush2.msra.mxu0 0.0
        %2415 = vmatprep.subr.mxu0 0.0
        %2416 = vmatpush2.msra.mxu0 0.0
        %2417 = vmatprep.subr.mxu0 0.0
        %2418 = vmatpush2.msra.mxu0 0.0
        %2419 = vmatprep.subr.mxu0 0.0
        %2420 = vmatpush2.msra.mxu0 0.0
        %2421 = vmatprep.subr.mxu0 0.0
        %2422 = vmatpush2.msra.mxu0 0.0
        %2423 = vmatprep.subr.mxu0 0.0
        %2424 = vmatpush2.msra.mxu0 0.0
        %2425 = vmatprep.subr.mxu0 0.0
        %2426 = vmatpush2.msra.mxu0 0.0
        %2427 = vmatprep.subr.mxu0 0.0
        %2428 = vmatpush2.msra.mxu0 0.0
        %2429 = vmatprep.subr.mxu0 0.0
        %2430 = vmatpush2.msra.mxu0 0.0
        %2431 = vmatprep.subr.mxu0 0.0
        %2432 = vmatpush2.msra.mxu0 0.0
        %2433 = vmatprep.subr.mxu0 0.0
        %2434 = vmatpush2.msra.mxu0 0.0
        %2435 = vmatprep.subr.mxu0 0.0
        %2436 = vmatpush2.msra.mxu0 0.0
        %2437 = vmatprep.mubr.f32.mxu0 0.0
        %v2438 = vand.u32 %v2366, 4294901760
        %v2439 = vsub.f32 %v2366, %v2438
        %v2440 = vand.u32 %v2439, 4294901760
        %v2441 = vsub.f32 %v2439, %v2440
        %v2442 = vand.u32 %v2441, 4294901760
        %2443 = vmatmul.mubr.f32.gmra.mxu0 %v2442
        %v2444 = vpop.f32.mrf.mxu0
        %v2445 = vadd.f32 0.0, %v2444
        %v2446 = vpop.f32.mrf.mxu0
        %2447 = vmatprep.mubr.f32.mxu0 0.0
        %v2448 = vand.u32 %v2369, 4294901760
        %v2449 = vsub.f32 %v2369, %v2448
        %v2450 = vand.u32 %v2449, 4294901760
        %v2451 = vsub.f32 %v2449, %v2450
        %v2452 = vand.u32 %v2451, 4294901760
        %2453 = vmatmul.mubr.f32.gmra.mxu0 %v2452
        %v2454 = vpop.f32.mrf.mxu0
        %v2455 = vadd.f32 0.0, %v2454
        %v2456 = vpop.f32.mrf.mxu0
        %2457 = vdwg.mxu0
        %2458 = vmatprep.subr.mxu0 0.0
        %2459 = vmatpush1.msra.mxu0 0.0
        %2460 = vmatprep.subr.mxu0 0.0
        %2461 = vmatpush1.msra.mxu0 0.0
        %2462 = vmatprep.subr.mxu0 0.0
        %2463 = vmatpush1.msra.mxu0 0.0
        %2464 = vmatprep.subr.mxu0 0.0
        %2465 = vmatpush1.msra.mxu0 0.0
        %2466 = vmatprep.subr.mxu0 0.0
        %2467 = vmatpush1.msra.mxu0 0.0
        %2468 = vmatprep.subr.mxu0 0.0
        %2469 = vmatpush1.msra.mxu0 0.0
        %2470 = vmatprep.subr.mxu0 0.0
        %2471 = vmatpush1.msra.mxu0 0.0
        %2472 = vmatprep.subr.mxu0 0.0
        %2473 = vmatpush1.msra.mxu0 0.0
        %2474 = vmatprep.subr.mxu0 0.0
        %2475 = vmatpush1.msra.mxu0 0.0
        %2476 = vmatprep.subr.mxu0 0.0
        %2477 = vmatpush1.msra.mxu0 0.0
        %2478 = vmatprep.subr.mxu0 0.0
        %2479 = vmatpush1.msra.mxu0 0.0
        %2480 = vmatprep.subr.mxu0 0.0
        %2481 = vmatpush1.msra.mxu0 0.0
        %2482 = vmatprep.subr.mxu0 0.0
        %2483 = vmatpush1.msra.mxu0 0.0
        %2484 = vmatprep.subr.mxu0 0.0
        %2485 = vmatpush1.msra.mxu0 0.0
        %2486 = vmatprep.subr.mxu0 0.0
        %v2487 = vand.u32 %v330, 4294901760
        %v2488 = vsub.f32 %v330, %v2487
        %v2489 = vand.u32 %v2488, 4294901760
        %v2490 = vsub.f32 %v2488, %v2489
        %v2491 = vand.u32 %v2490, 4294901760
        %2492 = vmatpush1.msra.mxu0 %v2491
        %2493 = vmatprep.subr.mxu0 0.0
        %v2494 = vand.u32 %v329, 4294901760
        %v2495 = vsub.f32 %v329, %v2494
        %v2496 = vand.u32 %v2495, 4294901760
        %v2497 = vsub.f32 %v2495, %v2496
        %v2498 = vand.u32 %v2497, 4294901760
        %2499 = vmatpush1.msra.mxu0 %v2498
        %2500 = vmatprep.subr.mxu0 0.0
        %2501 = vmatpush2.msra.mxu0 0.0
        %2502 = vmatprep.subr.mxu0 0.0
        %2503 = vmatpush2.msra.mxu0 0.0
        %2504 = vmatprep.subr.mxu0 0.0
        %2505 = vmatpush2.msra.mxu0 0.0
        %2506 = vmatprep.subr.mxu0 0.0
        %2507 = vmatpush2.msra.mxu0 0.0
        %2508 = vmatprep.subr.mxu0 0.0
        %2509 = vmatpush2.msra.mxu0 0.0
        %2510 = vmatprep.subr.mxu0 0.0
        %2511 = vmatpush2.msra.mxu0 0.0
        %2512 = vmatprep.subr.mxu0 0.0
        %2513 = vmatpush2.msra.mxu0 0.0
        %2514 = vmatprep.subr.mxu0 0.0
        %2515 = vmatpush2.msra.mxu0 0.0
        %2516 = vmatprep.subr.mxu0 0.0
        %2517 = vmatpush2.msra.mxu0 0.0
        %2518 = vmatprep.subr.mxu0 0.0
        %2519 = vmatpush2.msra.mxu0 0.0
        %2520 = vmatprep.subr.mxu0 0.0
        %2521 = vmatpush2.msra.mxu0 0.0
        %2522 = vmatprep.subr.mxu0 0.0
        %2523 = vmatpush2.msra.mxu0 0.0
        %2524 = vmatprep.subr.mxu0 0.0
        %2525 = vmatpush2.msra.mxu0 0.0
        %2526 = vmatprep.subr.mxu0 0.0
        %2527 = vmatpush2.msra.mxu0 0.0
        %2528 = vmatprep.subr.mxu0 0.0
        %2529 = vmatpush2.msra.mxu0 0.0
        %2530 = vmatprep.subr.mxu0 0.0
        %2531 = vmatpush2.msra.mxu0 0.0
        %2532 = vmatprep.mubr.f32.mxu0 0.0
        %v2533 = vand.u32 %v2366, 4294901760
        %2534 = vmatmul.mubr.f32.gmra.mxu0 %v2533
        %v2535 = vpop.f32.mrf.mxu0
        %v2536 = vadd.f32 %v2445, %v2535
        %v2537 = vpop.f32.mrf.mxu0
        %2538 = vmatprep.mubr.f32.mxu0 0.0
        %v2539 = vand.u32 %v2369, 4294901760
        %2540 = vmatmul.mubr.f32.gmra.mxu0 %v2539
        %v2541 = vpop.f32.mrf.mxu0
        %v2542 = vadd.f32 %v2455, %v2541
        %v2543 = vpop.f32.mrf.mxu0
        %2544 = vdwg.mxu0
        %2545 = vmatprep.subr.mxu0 0.0
        %2546 = vmatpush1.msra.mxu0 0.0
        %2547 = vmatprep.subr.mxu0 0.0
        %2548 = vmatpush1.msra.mxu0 0.0
        %2549 = vmatprep.subr.mxu0 0.0
        %2550 = vmatpush1.msra.mxu0 0.0
        %2551 = vmatprep.subr.mxu0 0.0
        %2552 = vmatpush1.msra.mxu0 0.0
        %2553 = vmatprep.subr.mxu0 0.0
        %2554 = vmatpush1.msra.mxu0 0.0
        %2555 = vmatprep.subr.mxu0 0.0
        %2556 = vmatpush1.msra.mxu0 0.0
        %2557 = vmatprep.subr.mxu0 0.0
        %2558 = vmatpush1.msra.mxu0 0.0
        %2559 = vmatprep.subr.mxu0 0.0
        %2560 = vmatpush1.msra.mxu0 0.0
        %2561 = vmatprep.subr.mxu0 0.0
        %2562 = vmatpush1.msra.mxu0 0.0
        %2563 = vmatprep.subr.mxu0 0.0
        %2564 = vmatpush1.msra.mxu0 0.0
        %2565 = vmatprep.subr.mxu0 0.0
        %2566 = vmatpush1.msra.mxu0 0.0
        %2567 = vmatprep.subr.mxu0 0.0
        %2568 = vmatpush1.msra.mxu0 0.0
        %2569 = vmatprep.subr.mxu0 0.0
        %2570 = vmatpush1.msra.mxu0 0.0
        %2571 = vmatprep.subr.mxu0 0.0
        %2572 = vmatpush1.msra.mxu0 0.0
        %2573 = vmatprep.subr.mxu0 0.0
        %v2574 = vand.u32 %v330, 4294901760
        %v2575 = vsub.f32 %v330, %v2574
        %2576 = vmatpush1.msra.mxu0 %v2575
        %2577 = vmatprep.subr.mxu0 0.0
        %v2578 = vand.u32 %v329, 4294901760
        %v2579 = vsub.f32 %v329, %v2578
        %2580 = vmatpush1.msra.mxu0 %v2579
        %2581 = vmatprep.subr.mxu0 0.0
        %2582 = vmatpush2.msra.mxu0 0.0
        %2583 = vmatprep.subr.mxu0 0.0
        %2584 = vmatpush2.msra.mxu0 0.0
        %2585 = vmatprep.subr.mxu0 0.0
        %2586 = vmatpush2.msra.mxu0 0.0
        %2587 = vmatprep.subr.mxu0 0.0
        %2588 = vmatpush2.msra.mxu0 0.0
        %2589 = vmatprep.subr.mxu0 0.0
        %2590 = vmatpush2.msra.mxu0 0.0
        %2591 = vmatprep.subr.mxu0 0.0
        %2592 = vmatpush2.msra.mxu0 0.0
        %2593 = vmatprep.subr.mxu0 0.0
        %2594 = vmatpush2.msra.mxu0 0.0
        %2595 = vmatprep.subr.mxu0 0.0
        %2596 = vmatpush2.msra.mxu0 0.0
        %2597 = vmatprep.subr.mxu0 0.0
        %2598 = vmatpush2.msra.mxu0 0.0
        %2599 = vmatprep.subr.mxu0 0.0
        %2600 = vmatpush2.msra.mxu0 0.0
        %2601 = vmatprep.subr.mxu0 0.0
        %2602 = vmatpush2.msra.mxu0 0.0
        %2603 = vmatprep.subr.mxu0 0.0
        %2604 = vmatpush2.msra.mxu0 0.0
        %2605 = vmatprep.subr.mxu0 0.0
        %2606 = vmatpush2.msra.mxu0 0.0
        %2607 = vmatprep.subr.mxu0 0.0
        %2608 = vmatpush2.msra.mxu0 0.0
        %2609 = vmatprep.subr.mxu0 0.0
        %2610 = vmatpush2.msra.mxu0 0.0
        %2611 = vmatprep.subr.mxu0 0.0
        %2612 = vmatpush2.msra.mxu0 0.0
        %2613 = vmatprep.mubr.f32.mxu0 0.0
        %v2614 = vand.u32 %v2366, 4294901760
        %v2615 = vsub.f32 %v2366, %v2614
        %2616 = vmatmul.mubr.f32.gmra.mxu0 %v2615
        %v2617 = vpop.f32.mrf.mxu0
        %v2618 = vadd.f32 %v2536, %v2617
        %v2619 = vpop.f32.mrf.mxu0
        %2620 = vmatprep.mubr.f32.mxu0 0.0
        %v2621 = vand.u32 %v2369, 4294901760
        %v2622 = vsub.f32 %v2369, %v2621
        %2623 = vmatmul.mubr.f32.gmra.mxu0 %v2622
        %v2624 = vpop.f32.mrf.mxu0
        %v2625 = vadd.f32 %v2542, %v2624
        %v2626 = vpop.f32.mrf.mxu0
        %2627 = vdwg.mxu0
        %2628 = vmatprep.subr.mxu0 0.0
        %2629 = vmatpush1.msra.mxu0 0.0
        %2630 = vmatprep.subr.mxu0 0.0
        %2631 = vmatpush1.msra.mxu0 0.0
        %2632 = vmatprep.subr.mxu0 0.0
        %2633 = vmatpush1.msra.mxu0 0.0
        %2634 = vmatprep.subr.mxu0 0.0
        %2635 = vmatpush1.msra.mxu0 0.0
        %2636 = vmatprep.subr.mxu0 0.0
        %2637 = vmatpush1.msra.mxu0 0.0
        %2638 = vmatprep.subr.mxu0 0.0
        %2639 = vmatpush1.msra.mxu0 0.0
        %2640 = vmatprep.subr.mxu0 0.0
        %2641 = vmatpush1.msra.mxu0 0.0
        %2642 = vmatprep.subr.mxu0 0.0
        %2643 = vmatpush1.msra.mxu0 0.0
        %2644 = vmatprep.subr.mxu0 0.0
        %2645 = vmatpush1.msra.mxu0 0.0
        %2646 = vmatprep.subr.mxu0 0.0
        %2647 = vmatpush1.msra.mxu0 0.0
        %2648 = vmatprep.subr.mxu0 0.0
        %2649 = vmatpush1.msra.mxu0 0.0
        %2650 = vmatprep.subr.mxu0 0.0
        %2651 = vmatpush1.msra.mxu0 0.0
        %2652 = vmatprep.subr.mxu0 0.0
        %2653 = vmatpush1.msra.mxu0 0.0
        %2654 = vmatprep.subr.mxu0 0.0
        %2655 = vmatpush1.msra.mxu0 0.0
        %2656 = vmatprep.subr.mxu0 0.0
        %v2657 = vand.u32 %v330, 4294901760
        %2658 = vmatpush1.msra.mxu0 %v2657
        %2659 = vmatprep.subr.mxu0 0.0
        %v2660 = vand.u32 %v329, 4294901760
        %2661 = vmatpush1.msra.mxu0 %v2660
        %2662 = vmatprep.subr.mxu0 0.0
        %2663 = vmatpush2.msra.mxu0 0.0
        %2664 = vmatprep.subr.mxu0 0.0
        %2665 = vmatpush2.msra.mxu0 0.0
        %2666 = vmatprep.subr.mxu0 0.0
        %2667 = vmatpush2.msra.mxu0 0.0
        %2668 = vmatprep.subr.mxu0 0.0
        %2669 = vmatpush2.msra.mxu0 0.0
        %2670 = vmatprep.subr.mxu0 0.0
        %2671 = vmatpush2.msra.mxu0 0.0
        %2672 = vmatprep.subr.mxu0 0.0
        %2673 = vmatpush2.msra.mxu0 0.0
        %2674 = vmatprep.subr.mxu0 0.0
        %2675 = vmatpush2.msra.mxu0 0.0
        %2676 = vmatprep.subr.mxu0 0.0
        %2677 = vmatpush2.msra.mxu0 0.0
        %2678 = vmatprep.subr.mxu0 0.0
        %2679 = vmatpush2.msra.mxu0 0.0
        %2680 = vmatprep.subr.mxu0 0.0
        %2681 = vmatpush2.msra.mxu0 0.0
        %2682 = vmatprep.subr.mxu0 0.0
        %2683 = vmatpush2.msra.mxu0 0.0
        %2684 = vmatprep.subr.mxu0 0.0
        %2685 = vmatpush2.msra.mxu0 0.0
        %2686 = vmatprep.subr.mxu0 0.0
        %2687 = vmatpush2.msra.mxu0 0.0
        %2688 = vmatprep.subr.mxu0 0.0
        %2689 = vmatpush2.msra.mxu0 0.0
        %2690 = vmatprep.subr.mxu0 0.0
        %2691 = vmatpush2.msra.mxu0 0.0
        %2692 = vmatprep.subr.mxu0 0.0
        %2693 = vmatpush2.msra.mxu0 0.0
        %2694 = vmatprep.mubr.f32.mxu0 0.0
        %v2695 = vand.u32 %v2366, 4294901760
        %v2696 = vsub.f32 %v2366, %v2695
        %v2697 = vand.u32 %v2696, 4294901760
        %2698 = vmatmul.mubr.f32.gmra.mxu0 %v2697
        %v2699 = vpop.f32.mrf.mxu0
        %v2700 = vadd.f32 %v2618, %v2699
        %v2701 = vpop.f32.mrf.mxu0
        %2702 = vmatprep.mubr.f32.mxu0 0.0
        %v2703 = vand.u32 %v2369, 4294901760
        %v2704 = vsub.f32 %v2369, %v2703
        %v2705 = vand.u32 %v2704, 4294901760
        %2706 = vmatmul.mubr.f32.gmra.mxu0 %v2705
        %v2707 = vpop.f32.mrf.mxu0
        %v2708 = vadd.f32 %v2625, %v2707
        %v2709 = vpop.f32.mrf.mxu0
        %2710 = vdwg.mxu0
        %2711 = vmatprep.subr.mxu0 0.0
        %2712 = vmatpush1.msra.mxu0 0.0
        %2713 = vmatprep.subr.mxu0 0.0
        %2714 = vmatpush1.msra.mxu0 0.0
        %2715 = vmatprep.subr.mxu0 0.0
        %2716 = vmatpush1.msra.mxu0 0.0
        %2717 = vmatprep.subr.mxu0 0.0
        %2718 = vmatpush1.msra.mxu0 0.0
        %2719 = vmatprep.subr.mxu0 0.0
        %2720 = vmatpush1.msra.mxu0 0.0
        %2721 = vmatprep.subr.mxu0 0.0
        %2722 = vmatpush1.msra.mxu0 0.0
        %2723 = vmatprep.subr.mxu0 0.0
        %2724 = vmatpush1.msra.mxu0 0.0
        %2725 = vmatprep.subr.mxu0 0.0
        %2726 = vmatpush1.msra.mxu0 0.0
        %2727 = vmatprep.subr.mxu0 0.0
        %2728 = vmatpush1.msra.mxu0 0.0
        %2729 = vmatprep.subr.mxu0 0.0
        %2730 = vmatpush1.msra.mxu0 0.0
        %2731 = vmatprep.subr.mxu0 0.0
        %2732 = vmatpush1.msra.mxu0 0.0
        %2733 = vmatprep.subr.mxu0 0.0
        %2734 = vmatpush1.msra.mxu0 0.0
        %2735 = vmatprep.subr.mxu0 0.0
        %2736 = vmatpush1.msra.mxu0 0.0
        %2737 = vmatprep.subr.mxu0 0.0
        %2738 = vmatpush1.msra.mxu0 0.0
        %2739 = vmatprep.subr.mxu0 0.0
        %v2740 = vand.u32 %v330, 4294901760
        %v2741 = vsub.f32 %v330, %v2740
        %v2742 = vand.u32 %v2741, 4294901760
        %2743 = vmatpush1.msra.mxu0 %v2742
        %2744 = vmatprep.subr.mxu0 0.0
        %v2745 = vand.u32 %v329, 4294901760
        %v2746 = vsub.f32 %v329, %v2745
        %v2747 = vand.u32 %v2746, 4294901760
        %2748 = vmatpush1.msra.mxu0 %v2747
        %2749 = vmatprep.subr.mxu0 0.0
        %2750 = vmatpush2.msra.mxu0 0.0
        %2751 = vmatprep.subr.mxu0 0.0
        %2752 = vmatpush2.msra.mxu0 0.0
        %2753 = vmatprep.subr.mxu0 0.0
        %2754 = vmatpush2.msra.mxu0 0.0
        %2755 = vmatprep.subr.mxu0 0.0
        %2756 = vmatpush2.msra.mxu0 0.0
        %2757 = vmatprep.subr.mxu0 0.0
        %2758 = vmatpush2.msra.mxu0 0.0
        %2759 = vmatprep.subr.mxu0 0.0
        %2760 = vmatpush2.msra.mxu0 0.0
        %2761 = vmatprep.subr.mxu0 0.0
        %2762 = vmatpush2.msra.mxu0 0.0
        %2763 = vmatprep.subr.mxu0 0.0
        %2764 = vmatpush2.msra.mxu0 0.0
        %2765 = vmatprep.subr.mxu0 0.0
        %2766 = vmatpush2.msra.mxu0 0.0
        %2767 = vmatprep.subr.mxu0 0.0
        %2768 = vmatpush2.msra.mxu0 0.0
        %2769 = vmatprep.subr.mxu0 0.0
        %2770 = vmatpush2.msra.mxu0 0.0
        %2771 = vmatprep.subr.mxu0 0.0
        %2772 = vmatpush2.msra.mxu0 0.0
        %2773 = vmatprep.subr.mxu0 0.0
        %2774 = vmatpush2.msra.mxu0 0.0
        %2775 = vmatprep.subr.mxu0 0.0
        %2776 = vmatpush2.msra.mxu0 0.0
        %2777 = vmatprep.subr.mxu0 0.0
        %2778 = vmatpush2.msra.mxu0 0.0
        %2779 = vmatprep.subr.mxu0 0.0
        %2780 = vmatpush2.msra.mxu0 0.0
        %2781 = vmatprep.mubr.f32.mxu0 0.0
        %v2782 = vand.u32 %v2366, 4294901760
        %2783 = vmatmul.mubr.f32.gmra.mxu0 %v2782
        %v2784 = vpop.f32.mrf.mxu0
        %v2785 = vadd.f32 %v2700, %v2784
        %v2786 = vpop.f32.mrf.mxu0
        %2787 = vmatprep.mubr.f32.mxu0 0.0
        %v2788 = vand.u32 %v2369, 4294901760
        %2789 = vmatmul.mubr.f32.gmra.mxu0 %v2788
        %v2790 = vpop.f32.mrf.mxu0
        %v2791 = vadd.f32 %v2708, %v2790
        %v2792 = vpop.f32.mrf.mxu0
        %2793 = vdwg.mxu0
        %2794 = vmatprep.subr.mxu0 0.0
        %2795 = vmatpush1.msra.mxu0 0.0
        %2796 = vmatprep.subr.mxu0 0.0
        %2797 = vmatpush1.msra.mxu0 0.0
        %2798 = vmatprep.subr.mxu0 0.0
        %2799 = vmatpush1.msra.mxu0 0.0
        %2800 = vmatprep.subr.mxu0 0.0
        %2801 = vmatpush1.msra.mxu0 0.0
        %2802 = vmatprep.subr.mxu0 0.0
        %2803 = vmatpush1.msra.mxu0 0.0
        %2804 = vmatprep.subr.mxu0 0.0
        %2805 = vmatpush1.msra.mxu0 0.0
        %2806 = vmatprep.subr.mxu0 0.0
        %2807 = vmatpush1.msra.mxu0 0.0
        %2808 = vmatprep.subr.mxu0 0.0
        %2809 = vmatpush1.msra.mxu0 0.0
        %2810 = vmatprep.subr.mxu0 0.0
        %2811 = vmatpush1.msra.mxu0 0.0
        %2812 = vmatprep.subr.mxu0 0.0
        %2813 = vmatpush1.msra.mxu0 0.0
        %2814 = vmatprep.subr.mxu0 0.0
        %2815 = vmatpush1.msra.mxu0 0.0
        %2816 = vmatprep.subr.mxu0 0.0
        %2817 = vmatpush1.msra.mxu0 0.0
        %2818 = vmatprep.subr.mxu0 0.0
        %2819 = vmatpush1.msra.mxu0 0.0
        %2820 = vmatprep.subr.mxu0 0.0
        %2821 = vmatpush1.msra.mxu0 0.0
        %2822 = vmatprep.subr.mxu0 0.0
        %v2823 = vand.u32 %v330, 4294901760
        %2824 = vmatpush1.msra.mxu0 %v2823
        %2825 = vmatprep.subr.mxu0 0.0
        %v2826 = vand.u32 %v329, 4294901760
        %2827 = vmatpush1.msra.mxu0 %v2826
        %2828 = vmatprep.subr.mxu0 0.0
        %2829 = vmatpush2.msra.mxu0 0.0
        %2830 = vmatprep.subr.mxu0 0.0
        %2831 = vmatpush2.msra.mxu0 0.0
        %2832 = vmatprep.subr.mxu0 0.0
        %2833 = vmatpush2.msra.mxu0 0.0
        %2834 = vmatprep.subr.mxu0 0.0
        %2835 = vmatpush2.msra.mxu0 0.0
        %2836 = vmatprep.subr.mxu0 0.0
        %2837 = vmatpush2.msra.mxu0 0.0
        %2838 = vmatprep.subr.mxu0 0.0
        %2839 = vmatpush2.msra.mxu0 0.0
        %2840 = vmatprep.subr.mxu0 0.0
        %2841 = vmatpush2.msra.mxu0 0.0
        %2842 = vmatprep.subr.mxu0 0.0
        %2843 = vmatpush2.msra.mxu0 0.0
        %2844 = vmatprep.subr.mxu0 0.0
        %2845 = vmatpush2.msra.mxu0 0.0
        %2846 = vmatprep.subr.mxu0 0.0
        %2847 = vmatpush2.msra.mxu0 0.0
        %2848 = vmatprep.subr.mxu0 0.0
        %2849 = vmatpush2.msra.mxu0 0.0
        %2850 = vmatprep.subr.mxu0 0.0
        %2851 = vmatpush2.msra.mxu0 0.0
        %2852 = vmatprep.subr.mxu0 0.0
        %2853 = vmatpush2.msra.mxu0 0.0
        %2854 = vmatprep.subr.mxu0 0.0
        %2855 = vmatpush2.msra.mxu0 0.0
        %2856 = vmatprep.subr.mxu0 0.0
        %2857 = vmatpush2.msra.mxu0 0.0
        %2858 = vmatprep.subr.mxu0 0.0
        %2859 = vmatpush2.msra.mxu0 0.0
        %2860 = vmatprep.mubr.f32.mxu0 0.0
        %v2861 = vand.u32 %v2366, 4294901760
        %2862 = vmatmul.mubr.f32.gmra.mxu0 %v2861
        %v2863 = vpop.f32.mrf.mxu0
        %v2864 = vadd.f32 %v2785, %v2863
        %v2865 = vpop.f32.mrf.mxu0
        %2866 = vmatprep.mubr.f32.mxu0 0.0
        %v2867 = vand.u32 %v2369, 4294901760
        %2868 = vmatmul.mubr.f32.gmra.mxu0 %v2867
        %v2869 = vpop.f32.mrf.mxu0
        %v2870 = vadd.f32 %v2791, %v2869
        %v2871 = vpop.f32.mrf.mxu0
        %2872 = vdwg.mxu0
        %v2874 = vsel %vm300, %v319, 0
        %v2877 = vsel %vm300, %v320, 0
        %2879 = vmatprep.subr.mxu0 0.0
        %2880 = vmatpush1.msra.mxu0 0.0
        %2881 = vmatprep.subr.mxu0 0.0
        %2882 = vmatpush1.msra.mxu0 0.0
        %2883 = vmatprep.subr.mxu0 0.0
        %2884 = vmatpush1.msra.mxu0 0.0
        %2885 = vmatprep.subr.mxu0 0.0
        %2886 = vmatpush1.msra.mxu0 0.0
        %2887 = vmatprep.subr.mxu0 0.0
        %2888 = vmatpush1.msra.mxu0 0.0
        %2889 = vmatprep.subr.mxu0 0.0
        %2890 = vmatpush1.msra.mxu0 0.0
        %2891 = vmatprep.subr.mxu0 0.0
        %2892 = vmatpush1.msra.mxu0 0.0
        %2893 = vmatprep.subr.mxu0 0.0
        %2894 = vmatpush1.msra.mxu0 0.0
        %2895 = vmatprep.subr.mxu0 0.0
        %2896 = vmatpush1.msra.mxu0 0.0
        %2897 = vmatprep.subr.mxu0 0.0
        %2898 = vmatpush1.msra.mxu0 0.0
        %2899 = vmatprep.subr.mxu0 0.0
        %2900 = vmatpush1.msra.mxu0 0.0
        %2901 = vmatprep.subr.mxu0 0.0
        %2902 = vmatpush1.msra.mxu0 0.0
        %2903 = vmatprep.subr.mxu0 0.0
        %2904 = vmatpush1.msra.mxu0 0.0
        %2905 = vmatprep.subr.mxu0 0.0
        %2906 = vmatpush1.msra.mxu0 0.0
        %2907 = vmatprep.subr.mxu0 0.0
        %v2908 = vand.u32 %v330, 4294901760
        %2909 = vmatpush1.msra.mxu0 %v2908
        %2910 = vmatprep.subr.mxu0 0.0
        %v2911 = vand.u32 %v329, 4294901760
        %2912 = vmatpush1.msra.mxu0 %v2911
        %2913 = vmatprep.subr.mxu0 0.0
        %2914 = vmatpush2.msra.mxu0 0.0
        %2915 = vmatprep.subr.mxu0 0.0
        %2916 = vmatpush2.msra.mxu0 0.0
        %2917 = vmatprep.subr.mxu0 0.0
        %2918 = vmatpush2.msra.mxu0 0.0
        %2919 = vmatprep.subr.mxu0 0.0
        %2920 = vmatpush2.msra.mxu0 0.0
        %2921 = vmatprep.subr.mxu0 0.0
        %2922 = vmatpush2.msra.mxu0 0.0
        %2923 = vmatprep.subr.mxu0 0.0
        %2924 = vmatpush2.msra.mxu0 0.0
        %2925 = vmatprep.subr.mxu0 0.0
        %2926 = vmatpush2.msra.mxu0 0.0
        %2927 = vmatprep.subr.mxu0 0.0
        %2928 = vmatpush2.msra.mxu0 0.0
        %2929 = vmatprep.subr.mxu0 0.0
        %2930 = vmatpush2.msra.mxu0 0.0
        %2931 = vmatprep.subr.mxu0 0.0
        %2932 = vmatpush2.msra.mxu0 0.0
        %2933 = vmatprep.subr.mxu0 0.0
        %2934 = vmatpush2.msra.mxu0 0.0
        %2935 = vmatprep.subr.mxu0 0.0
        %2936 = vmatpush2.msra.mxu0 0.0
        %2937 = vmatprep.subr.mxu0 0.0
        %2938 = vmatpush2.msra.mxu0 0.0
        %2939 = vmatprep.subr.mxu0 0.0
        %2940 = vmatpush2.msra.mxu0 0.0
        %2941 = vmatprep.subr.mxu0 0.0
        %2942 = vmatpush2.msra.mxu0 0.0
        %2943 = vmatprep.subr.mxu0 0.0
        %2944 = vmatpush2.msra.mxu0 0.0
        %2945 = vmatprep.mubr.f32.mxu0 0.0
        %v2946 = vand.u32 %v2874, 4294901760
        %v2947 = vsub.f32 %v2874, %v2946
        %v2948 = vand.u32 %v2947, 4294901760
        %v2949 = vsub.f32 %v2947, %v2948
        %v2950 = vand.u32 %v2949, 4294901760
        %2951 = vmatmul.mubr.f32.gmra.mxu0 %v2950
        %v2952 = vpop.f32.mrf.mxu0
        %v2953 = vadd.f32 0.0, %v2952
        %v2954 = vpop.f32.mrf.mxu0
        %2955 = vmatprep.mubr.f32.mxu0 0.0
        %v2956 = vand.u32 %v2877, 4294901760
        %v2957 = vsub.f32 %v2877, %v2956
        %v2958 = vand.u32 %v2957, 4294901760
        %v2959 = vsub.f32 %v2957, %v2958
        %v2960 = vand.u32 %v2959, 4294901760
        %2961 = vmatmul.mubr.f32.gmra.mxu0 %v2960
        %v2962 = vpop.f32.mrf.mxu0
        %v2963 = vadd.f32 0.0, %v2962
        %v2964 = vpop.f32.mrf.mxu0
        %2965 = vdwg.mxu0
        %2966 = vmatprep.subr.mxu0 0.0
        %2967 = vmatpush1.msra.mxu0 0.0
        %2968 = vmatprep.subr.mxu0 0.0
        %2969 = vmatpush1.msra.mxu0 0.0
        %2970 = vmatprep.subr.mxu0 0.0
        %2971 = vmatpush1.msra.mxu0 0.0
        %2972 = vmatprep.subr.mxu0 0.0
        %2973 = vmatpush1.msra.mxu0 0.0
        %2974 = vmatprep.subr.mxu0 0.0
        %2975 = vmatpush1.msra.mxu0 0.0
        %2976 = vmatprep.subr.mxu0 0.0
        %2977 = vmatpush1.msra.mxu0 0.0
        %2978 = vmatprep.subr.mxu0 0.0
        %2979 = vmatpush1.msra.mxu0 0.0
        %2980 = vmatprep.subr.mxu0 0.0
        %2981 = vmatpush1.msra.mxu0 0.0
        %2982 = vmatprep.subr.mxu0 0.0
        %2983 = vmatpush1.msra.mxu0 0.0
        %2984 = vmatprep.subr.mxu0 0.0
        %2985 = vmatpush1.msra.mxu0 0.0
        %2986 = vmatprep.subr.mxu0 0.0
        %2987 = vmatpush1.msra.mxu0 0.0
        %2988 = vmatprep.subr.mxu0 0.0
        %2989 = vmatpush1.msra.mxu0 0.0
        %2990 = vmatprep.subr.mxu0 0.0
        %2991 = vmatpush1.msra.mxu0 0.0
        %2992 = vmatprep.subr.mxu0 0.0
        %2993 = vmatpush1.msra.mxu0 0.0
        %2994 = vmatprep.subr.mxu0 0.0
        %v2995 = vand.u32 %v330, 4294901760
        %v2996 = vsub.f32 %v330, %v2995
        %v2997 = vand.u32 %v2996, 4294901760
        %v2998 = vsub.f32 %v2996, %v2997
        %v2999 = vand.u32 %v2998, 4294901760
        %3000 = vmatpush1.msra.mxu0 %v2999
        %3001 = vmatprep.subr.mxu0 0.0
        %v3002 = vand.u32 %v329, 4294901760
        %v3003 = vsub.f32 %v329, %v3002
        %v3004 = vand.u32 %v3003, 4294901760
        %v3005 = vsub.f32 %v3003, %v3004
        %v3006 = vand.u32 %v3005, 4294901760
        %3007 = vmatpush1.msra.mxu0 %v3006
        %3008 = vmatprep.subr.mxu0 0.0
        %3009 = vmatpush2.msra.mxu0 0.0
        %3010 = vmatprep.subr.mxu0 0.0
        %3011 = vmatpush2.msra.mxu0 0.0
        %3012 = vmatprep.subr.mxu0 0.0
        %3013 = vmatpush2.msra.mxu0 0.0
        %3014 = vmatprep.subr.mxu0 0.0
        %3015 = vmatpush2.msra.mxu0 0.0
        %3016 = vmatprep.subr.mxu0 0.0
        %3017 = vmatpush2.msra.mxu0 0.0
        %3018 = vmatprep.subr.mxu0 0.0
        %3019 = vmatpush2.msra.mxu0 0.0
        %3020 = vmatprep.subr.mxu0 0.0
        %3021 = vmatpush2.msra.mxu0 0.0
        %3022 = vmatprep.subr.mxu0 0.0
        %3023 = vmatpush2.msra.mxu0 0.0
        %3024 = vmatprep.subr.mxu0 0.0
        %3025 = vmatpush2.msra.mxu0 0.0
        %3026 = vmatprep.subr.mxu0 0.0
        %3027 = vmatpush2.msra.mxu0 0.0
        %3028 = vmatprep.subr.mxu0 0.0
        %3029 = vmatpush2.msra.mxu0 0.0
        %3030 = vmatprep.subr.mxu0 0.0
        %3031 = vmatpush2.msra.mxu0 0.0
        %3032 = vmatprep.subr.mxu0 0.0
        %3033 = vmatpush2.msra.mxu0 0.0
        %3034 = vmatprep.subr.mxu0 0.0
        %3035 = vmatpush2.msra.mxu0 0.0
        %3036 = vmatprep.subr.mxu0 0.0
        %3037 = vmatpush2.msra.mxu0 0.0
        %3038 = vmatprep.subr.mxu0 0.0
        %3039 = vmatpush2.msra.mxu0 0.0
        %3040 = vmatprep.mubr.f32.mxu0 0.0
        %v3041 = vand.u32 %v2874, 4294901760
        %3042 = vmatmul.mubr.f32.gmra.mxu0 %v3041
        %v3043 = vpop.f32.mrf.mxu0
        %v3044 = vadd.f32 %v2953, %v3043
        %v3045 = vpop.f32.mrf.mxu0
        %3046 = vmatprep.mubr.f32.mxu0 0.0
        %v3047 = vand.u32 %v2877, 4294901760
        %3048 = vmatmul.mubr.f32.gmra.mxu0 %v3047
        %v3049 = vpop.f32.mrf.mxu0
        %v3050 = vadd.f32 %v2963, %v3049
        %v3051 = vpop.f32.mrf.mxu0
        %3052 = vdwg.mxu0
        %3053 = vmatprep.subr.mxu0 0.0
        %3054 = vmatpush1.msra.mxu0 0.0
        %3055 = vmatprep.subr.mxu0 0.0
        %3056 = vmatpush1.msra.mxu0 0.0
        %3057 = vmatprep.subr.mxu0 0.0
        %3058 = vmatpush1.msra.mxu0 0.0
        %3059 = vmatprep.subr.mxu0 0.0
        %3060 = vmatpush1.msra.mxu0 0.0
        %3061 = vmatprep.subr.mxu0 0.0
        %3062 = vmatpush1.msra.mxu0 0.0
        %3063 = vmatprep.subr.mxu0 0.0
        %3064 = vmatpush1.msra.mxu0 0.0
        %3065 = vmatprep.subr.mxu0 0.0
        %3066 = vmatpush1.msra.mxu0 0.0
        %3067 = vmatprep.subr.mxu0 0.0
        %3068 = vmatpush1.msra.mxu0 0.0
        %3069 = vmatprep.subr.mxu0 0.0
        %3070 = vmatpush1.msra.mxu0 0.0
        %3071 = vmatprep.subr.mxu0 0.0
        %3072 = vmatpush1.msra.mxu0 0.0
        %3073 = vmatprep.subr.mxu0 0.0
        %3074 = vmatpush1.msra.mxu0 0.0
        %3075 = vmatprep.subr.mxu0 0.0
        %3076 = vmatpush1.msra.mxu0 0.0
        %3077 = vmatprep.subr.mxu0 0.0
        %3078 = vmatpush1.msra.mxu0 0.0
        %3079 = vmatprep.subr.mxu0 0.0
        %3080 = vmatpush1.msra.mxu0 0.0
        %3081 = vmatprep.subr.mxu0 0.0
        %v3082 = vand.u32 %v330, 4294901760
        %v3083 = vsub.f32 %v330, %v3082
        %3084 = vmatpush1.msra.mxu0 %v3083
        %3085 = vmatprep.subr.mxu0 0.0
        %v3086 = vand.u32 %v329, 4294901760
        %v3087 = vsub.f32 %v329, %v3086
        %3088 = vmatpush1.msra.mxu0 %v3087
        %3089 = vmatprep.subr.mxu0 0.0
        %3090 = vmatpush2.msra.mxu0 0.0
        %3091 = vmatprep.subr.mxu0 0.0
        %3092 = vmatpush2.msra.mxu0 0.0
        %3093 = vmatprep.subr.mxu0 0.0
        %3094 = vmatpush2.msra.mxu0 0.0
        %3095 = vmatprep.subr.mxu0 0.0
        %3096 = vmatpush2.msra.mxu0 0.0
        %3097 = vmatprep.subr.mxu0 0.0
        %3098 = vmatpush2.msra.mxu0 0.0
        %3099 = vmatprep.subr.mxu0 0.0
        %3100 = vmatpush2.msra.mxu0 0.0
        %3101 = vmatprep.subr.mxu0 0.0
        %3102 = vmatpush2.msra.mxu0 0.0
        %3103 = vmatprep.subr.mxu0 0.0
        %3104 = vmatpush2.msra.mxu0 0.0
        %3105 = vmatprep.subr.mxu0 0.0
        %3106 = vmatpush2.msra.mxu0 0.0
        %3107 = vmatprep.subr.mxu0 0.0
        %3108 = vmatpush2.msra.mxu0 0.0
        %3109 = vmatprep.subr.mxu0 0.0
        %3110 = vmatpush2.msra.mxu0 0.0
        %3111 = vmatprep.subr.mxu0 0.0
        %3112 = vmatpush2.msra.mxu0 0.0
        %3113 = vmatprep.subr.mxu0 0.0
        %3114 = vmatpush2.msra.mxu0 0.0
        %3115 = vmatprep.subr.mxu0 0.0
        %3116 = vmatpush2.msra.mxu0 0.0
        %3117 = vmatprep.subr.mxu0 0.0
        %3118 = vmatpush2.msra.mxu0 0.0
        %3119 = vmatprep.subr.mxu0 0.0
        %3120 = vmatpush2.msra.mxu0 0.0
        %3121 = vmatprep.mubr.f32.mxu0 0.0
        %v3122 = vand.u32 %v2874, 4294901760
        %v3123 = vsub.f32 %v2874, %v3122
        %3124 = vmatmul.mubr.f32.gmra.mxu0 %v3123
        %v3125 = vpop.f32.mrf.mxu0
        %v3126 = vadd.f32 %v3044, %v3125
        %v3127 = vpop.f32.mrf.mxu0
        %3128 = vmatprep.mubr.f32.mxu0 0.0
        %v3129 = vand.u32 %v2877, 4294901760
        %v3130 = vsub.f32 %v2877, %v3129
        %3131 = vmatmul.mubr.f32.gmra.mxu0 %v3130
        %v3132 = vpop.f32.mrf.mxu0
        %v3133 = vadd.f32 %v3050, %v3132
        %v3134 = vpop.f32.mrf.mxu0
        %3135 = vdwg.mxu0
        %3136 = vmatprep.subr.mxu0 0.0
        %3137 = vmatpush1.msra.mxu0 0.0
        %3138 = vmatprep.subr.mxu0 0.0
        %3139 = vmatpush1.msra.mxu0 0.0
        %3140 = vmatprep.subr.mxu0 0.0
        %3141 = vmatpush1.msra.mxu0 0.0
        %3142 = vmatprep.subr.mxu0 0.0
        %3143 = vmatpush1.msra.mxu0 0.0
        %3144 = vmatprep.subr.mxu0 0.0
        %3145 = vmatpush1.msra.mxu0 0.0
        %3146 = vmatprep.subr.mxu0 0.0
        %3147 = vmatpush1.msra.mxu0 0.0
        %3148 = vmatprep.subr.mxu0 0.0
        %3149 = vmatpush1.msra.mxu0 0.0
        %3150 = vmatprep.subr.mxu0 0.0
        %3151 = vmatpush1.msra.mxu0 0.0
        %3152 = vmatprep.subr.mxu0 0.0
        %3153 = vmatpush1.msra.mxu0 0.0
        %3154 = vmatprep.subr.mxu0 0.0
        %3155 = vmatpush1.msra.mxu0 0.0
        %3156 = vmatprep.subr.mxu0 0.0
        %3157 = vmatpush1.msra.mxu0 0.0
        %3158 = vmatprep.subr.mxu0 0.0
        %3159 = vmatpush1.msra.mxu0 0.0
        %3160 = vmatprep.subr.mxu0 0.0
        %3161 = vmatpush1.msra.mxu0 0.0
        %3162 = vmatprep.subr.mxu0 0.0
        %3163 = vmatpush1.msra.mxu0 0.0
        %3164 = vmatprep.subr.mxu0 0.0
        %v3165 = vand.u32 %v330, 4294901760
        %3166 = vmatpush1.msra.mxu0 %v3165
        %3167 = vmatprep.subr.mxu0 0.0
        %v3168 = vand.u32 %v329, 4294901760
        %3169 = vmatpush1.msra.mxu0 %v3168
        %3170 = vmatprep.subr.mxu0 0.0
        %3171 = vmatpush2.msra.mxu0 0.0
        %3172 = vmatprep.subr.mxu0 0.0
        %3173 = vmatpush2.msra.mxu0 0.0
        %3174 = vmatprep.subr.mxu0 0.0
        %3175 = vmatpush2.msra.mxu0 0.0
        %3176 = vmatprep.subr.mxu0 0.0
        %3177 = vmatpush2.msra.mxu0 0.0
        %3178 = vmatprep.subr.mxu0 0.0
        %3179 = vmatpush2.msra.mxu0 0.0
        %3180 = vmatprep.subr.mxu0 0.0
        %3181 = vmatpush2.msra.mxu0 0.0
        %3182 = vmatprep.subr.mxu0 0.0
        %3183 = vmatpush2.msra.mxu0 0.0
        %3184 = vmatprep.subr.mxu0 0.0
        %3185 = vmatpush2.msra.mxu0 0.0
        %3186 = vmatprep.subr.mxu0 0.0
        %3187 = vmatpush2.msra.mxu0 0.0
        %3188 = vmatprep.subr.mxu0 0.0
        %3189 = vmatpush2.msra.mxu0 0.0
        %3190 = vmatprep.subr.mxu0 0.0
        %3191 = vmatpush2.msra.mxu0 0.0
        %3192 = vmatprep.subr.mxu0 0.0
        %3193 = vmatpush2.msra.mxu0 0.0
        %3194 = vmatprep.subr.mxu0 0.0
        %3195 = vmatpush2.msra.mxu0 0.0
        %3196 = vmatprep.subr.mxu0 0.0
        %3197 = vmatpush2.msra.mxu0 0.0
        %3198 = vmatprep.subr.mxu0 0.0
        %3199 = vmatpush2.msra.mxu0 0.0
        %3200 = vmatprep.subr.mxu0 0.0
        %3201 = vmatpush2.msra.mxu0 0.0
        %3202 = vmatprep.mubr.f32.mxu0 0.0
        %v3203 = vand.u32 %v2874, 4294901760
        %v3204 = vsub.f32 %v2874, %v3203
        %v3205 = vand.u32 %v3204, 4294901760
        %3206 = vmatmul.mubr.f32.gmra.mxu0 %v3205
        %v3207 = vpop.f32.mrf.mxu0
        %v3208 = vadd.f32 %v3126, %v3207
        %v3209 = vpop.f32.mrf.mxu0
        %3210 = vmatprep.mubr.f32.mxu0 0.0
        %v3211 = vand.u32 %v2877, 4294901760
        %v3212 = vsub.f32 %v2877, %v3211
        %v3213 = vand.u32 %v3212, 4294901760
        %3214 = vmatmul.mubr.f32.gmra.mxu0 %v3213
        %v3215 = vpop.f32.mrf.mxu0
        %v3216 = vadd.f32 %v3133, %v3215
        %v3217 = vpop.f32.mrf.mxu0
        %3218 = vdwg.mxu0
        %3219 = vmatprep.subr.mxu0 0.0
        %3220 = vmatpush1.msra.mxu0 0.0
        %3221 = vmatprep.subr.mxu0 0.0
        %3222 = vmatpush1.msra.mxu0 0.0
        %3223 = vmatprep.subr.mxu0 0.0
        %3224 = vmatpush1.msra.mxu0 0.0
        %3225 = vmatprep.subr.mxu0 0.0
        %3226 = vmatpush1.msra.mxu0 0.0
        %3227 = vmatprep.subr.mxu0 0.0
        %3228 = vmatpush1.msra.mxu0 0.0
        %3229 = vmatprep.subr.mxu0 0.0
        %3230 = vmatpush1.msra.mxu0 0.0
        %3231 = vmatprep.subr.mxu0 0.0
        %3232 = vmatpush1.msra.mxu0 0.0
        %3233 = vmatprep.subr.mxu0 0.0
        %3234 = vmatpush1.msra.mxu0 0.0
        %3235 = vmatprep.subr.mxu0 0.0
        %3236 = vmatpush1.msra.mxu0 0.0
        %3237 = vmatprep.subr.mxu0 0.0
        %3238 = vmatpush1.msra.mxu0 0.0
        %3239 = vmatprep.subr.mxu0 0.0
        %3240 = vmatpush1.msra.mxu0 0.0
        %3241 = vmatprep.subr.mxu0 0.0
        %3242 = vmatpush1.msra.mxu0 0.0
        %3243 = vmatprep.subr.mxu0 0.0
        %3244 = vmatpush1.msra.mxu0 0.0
        %3245 = vmatprep.subr.mxu0 0.0
        %3246 = vmatpush1.msra.mxu0 0.0
        %3247 = vmatprep.subr.mxu0 0.0
        %v3248 = vand.u32 %v330, 4294901760
        %v3249 = vsub.f32 %v330, %v3248
        %v3250 = vand.u32 %v3249, 4294901760
        %3251 = vmatpush1.msra.mxu0 %v3250
        %3252 = vmatprep.subr.mxu0 0.0
        %v3253 = vand.u32 %v329, 4294901760
        %v3254 = vsub.f32 %v329, %v3253
        %v3255 = vand.u32 %v3254, 4294901760
        %3256 = vmatpush1.msra.mxu0 %v3255
        %3257 = vmatprep.subr.mxu0 0.0
        %3258 = vmatpush2.msra.mxu0 0.0
        %3259 = vmatprep.subr.mxu0 0.0
        %3260 = vmatpush2.msra.mxu0 0.0
        %3261 = vmatprep.subr.mxu0 0.0
        %3262 = vmatpush2.msra.mxu0 0.0
        %3263 = vmatprep.subr.mxu0 0.0
        %3264 = vmatpush2.msra.mxu0 0.0
        %3265 = vmatprep.subr.mxu0 0.0
        %3266 = vmatpush2.msra.mxu0 0.0
        %3267 = vmatprep.subr.mxu0 0.0
        %3268 = vmatpush2.msra.mxu0 0.0
        %3269 = vmatprep.subr.mxu0 0.0
        %3270 = vmatpush2.msra.mxu0 0.0
        %3271 = vmatprep.subr.mxu0 0.0
        %3272 = vmatpush2.msra.mxu0 0.0
        %3273 = vmatprep.subr.mxu0 0.0
        %3274 = vmatpush2.msra.mxu0 0.0
        %3275 = vmatprep.subr.mxu0 0.0
        %3276 = vmatpush2.msra.mxu0 0.0
        %3277 = vmatprep.subr.mxu0 0.0
        %3278 = vmatpush2.msra.mxu0 0.0
        %3279 = vmatprep.subr.mxu0 0.0
        %3280 = vmatpush2.msra.mxu0 0.0
        %3281 = vmatprep.subr.mxu0 0.0
        %3282 = vmatpush2.msra.mxu0 0.0
        %3283 = vmatprep.subr.mxu0 0.0
        %3284 = vmatpush2.msra.mxu0 0.0
        %3285 = vmatprep.subr.mxu0 0.0
        %3286 = vmatpush2.msra.mxu0 0.0
        %3287 = vmatprep.subr.mxu0 0.0
        %3288 = vmatpush2.msra.mxu0 0.0
        %3289 = vmatprep.mubr.f32.mxu0 0.0
        %v3290 = vand.u32 %v2874, 4294901760
        %3291 = vmatmul.mubr.f32.gmra.mxu0 %v3290
        %v3292 = vpop.f32.mrf.mxu0
        %v3293 = vadd.f32 %v3208, %v3292
        %v3294 = vpop.f32.mrf.mxu0
        %3295 = vmatprep.mubr.f32.mxu0 0.0
        %v3296 = vand.u32 %v2877, 4294901760
        %3297 = vmatmul.mubr.f32.gmra.mxu0 %v3296
        %v3298 = vpop.f32.mrf.mxu0
        %v3299 = vadd.f32 %v3216, %v3298
        %v3300 = vpop.f32.mrf.mxu0
        %3301 = vdwg.mxu0
        %3302 = vmatprep.subr.mxu0 0.0
        %3303 = vmatpush1.msra.mxu0 0.0
        %3304 = vmatprep.subr.mxu0 0.0
        %3305 = vmatpush1.msra.mxu0 0.0
        %3306 = vmatprep.subr.mxu0 0.0
        %3307 = vmatpush1.msra.mxu0 0.0
        %3308 = vmatprep.subr.mxu0 0.0
        %3309 = vmatpush1.msra.mxu0 0.0
        %3310 = vmatprep.subr.mxu0 0.0
        %3311 = vmatpush1.msra.mxu0 0.0
        %3312 = vmatprep.subr.mxu0 0.0
        %3313 = vmatpush1.msra.mxu0 0.0
        %3314 = vmatprep.subr.mxu0 0.0
        %3315 = vmatpush1.msra.mxu0 0.0
        %3316 = vmatprep.subr.mxu0 0.0
        %3317 = vmatpush1.msra.mxu0 0.0
        %3318 = vmatprep.subr.mxu0 0.0
        %3319 = vmatpush1.msra.mxu0 0.0
        %3320 = vmatprep.subr.mxu0 0.0
        %3321 = vmatpush1.msra.mxu0 0.0
        %3322 = vmatprep.subr.mxu0 0.0
        %3323 = vmatpush1.msra.mxu0 0.0
        %3324 = vmatprep.subr.mxu0 0.0
        %3325 = vmatpush1.msra.mxu0 0.0
        %3326 = vmatprep.subr.mxu0 0.0
        %3327 = vmatpush1.msra.mxu0 0.0
        %3328 = vmatprep.subr.mxu0 0.0
        %3329 = vmatpush1.msra.mxu0 0.0
        %3330 = vmatprep.subr.mxu0 0.0
        %v3331 = vand.u32 %v330, 4294901760
        %3332 = vmatpush1.msra.mxu0 %v3331
        %3333 = vmatprep.subr.mxu0 0.0
        %v3334 = vand.u32 %v329, 4294901760
        %3335 = vmatpush1.msra.mxu0 %v3334
        %3336 = vmatprep.subr.mxu0 0.0
        %3337 = vmatpush2.msra.mxu0 0.0
        %3338 = vmatprep.subr.mxu0 0.0
        %3339 = vmatpush2.msra.mxu0 0.0
        %3340 = vmatprep.subr.mxu0 0.0
        %3341 = vmatpush2.msra.mxu0 0.0
        %3342 = vmatprep.subr.mxu0 0.0
        %3343 = vmatpush2.msra.mxu0 0.0
        %3344 = vmatprep.subr.mxu0 0.0
        %3345 = vmatpush2.msra.mxu0 0.0
        %3346 = vmatprep.subr.mxu0 0.0
        %3347 = vmatpush2.msra.mxu0 0.0
        %3348 = vmatprep.subr.mxu0 0.0
        %3349 = vmatpush2.msra.mxu0 0.0
        %3350 = vmatprep.subr.mxu0 0.0
        %3351 = vmatpush2.msra.mxu0 0.0
        %3352 = vmatprep.subr.mxu0 0.0
        %3353 = vmatpush2.msra.mxu0 0.0
        %3354 = vmatprep.subr.mxu0 0.0
        %3355 = vmatpush2.msra.mxu0 0.0
        %3356 = vmatprep.subr.mxu0 0.0
        %3357 = vmatpush2.msra.mxu0 0.0
        %3358 = vmatprep.subr.mxu0 0.0
        %3359 = vmatpush2.msra.mxu0 0.0
        %3360 = vmatprep.subr.mxu0 0.0
        %3361 = vmatpush2.msra.mxu0 0.0
        %3362 = vmatprep.subr.mxu0 0.0
        %3363 = vmatpush2.msra.mxu0 0.0
        %3364 = vmatprep.subr.mxu0 0.0
        %3365 = vmatpush2.msra.mxu0 0.0
        %3366 = vmatprep.subr.mxu0 0.0
        %3367 = vmatpush2.msra.mxu0 0.0
        %3368 = vmatprep.mubr.f32.mxu0 0.0
        %v3369 = vand.u32 %v2874, 4294901760
        %3370 = vmatmul.mubr.f32.gmra.mxu0 %v3369
        %v3371 = vpop.f32.mrf.mxu0
        %v3372 = vadd.f32 %v3293, %v3371
        %v3373 = vpop.f32.mrf.mxu0
        %3374 = vmatprep.mubr.f32.mxu0 0.0
        %v3375 = vand.u32 %v2877, 4294901760
        %3376 = vmatmul.mubr.f32.gmra.mxu0 %v3375
        %v3377 = vpop.f32.mrf.mxu0
        %v3378 = vadd.f32 %v3299, %v3377
        %v3379 = vpop.f32.mrf.mxu0
        %3380 = vdwg.mxu0
        %v3382 = vsel %vm300, %v321, 0
        %v3385 = vsel %vm300, %v322, 0
        %3387 = vmatprep.subr.mxu0 0.0
        %3388 = vmatpush1.msra.mxu0 0.0
        %3389 = vmatprep.subr.mxu0 0.0
        %3390 = vmatpush1.msra.mxu0 0.0
        %3391 = vmatprep.subr.mxu0 0.0
        %3392 = vmatpush1.msra.mxu0 0.0
        %3393 = vmatprep.subr.mxu0 0.0
        %3394 = vmatpush1.msra.mxu0 0.0
        %3395 = vmatprep.subr.mxu0 0.0
        %3396 = vmatpush1.msra.mxu0 0.0
        %3397 = vmatprep.subr.mxu0 0.0
        %3398 = vmatpush1.msra.mxu0 0.0
        %3399 = vmatprep.subr.mxu0 0.0
        %3400 = vmatpush1.msra.mxu0 0.0
        %3401 = vmatprep.subr.mxu0 0.0
        %3402 = vmatpush1.msra.mxu0 0.0
        %3403 = vmatprep.subr.mxu0 0.0
        %3404 = vmatpush1.msra.mxu0 0.0
        %3405 = vmatprep.subr.mxu0 0.0
        %3406 = vmatpush1.msra.mxu0 0.0
        %3407 = vmatprep.subr.mxu0 0.0
        %3408 = vmatpush1.msra.mxu0 0.0
        %3409 = vmatprep.subr.mxu0 0.0
        %3410 = vmatpush1.msra.mxu0 0.0
        %3411 = vmatprep.subr.mxu0 0.0
        %3412 = vmatpush1.msra.mxu0 0.0
        %3413 = vmatprep.subr.mxu0 0.0
        %3414 = vmatpush1.msra.mxu0 0.0
        %3415 = vmatprep.subr.mxu0 0.0
        %v3416 = vand.u32 %v330, 4294901760
        %3417 = vmatpush1.msra.mxu0 %v3416
        %3418 = vmatprep.subr.mxu0 0.0
        %v3419 = vand.u32 %v329, 4294901760
        %3420 = vmatpush1.msra.mxu0 %v3419
        %3421 = vmatprep.subr.mxu0 0.0
        %3422 = vmatpush2.msra.mxu0 0.0
        %3423 = vmatprep.subr.mxu0 0.0
        %3424 = vmatpush2.msra.mxu0 0.0
        %3425 = vmatprep.subr.mxu0 0.0
        %3426 = vmatpush2.msra.mxu0 0.0
        %3427 = vmatprep.subr.mxu0 0.0
        %3428 = vmatpush2.msra.mxu0 0.0
        %3429 = vmatprep.subr.mxu0 0.0
        %3430 = vmatpush2.msra.mxu0 0.0
        %3431 = vmatprep.subr.mxu0 0.0
        %3432 = vmatpush2.msra.mxu0 0.0
        %3433 = vmatprep.subr.mxu0 0.0
        %3434 = vmatpush2.msra.mxu0 0.0
        %3435 = vmatprep.subr.mxu0 0.0
        %3436 = vmatpush2.msra.mxu0 0.0
        %3437 = vmatprep.subr.mxu0 0.0
        %3438 = vmatpush2.msra.mxu0 0.0
        %3439 = vmatprep.subr.mxu0 0.0
        %3440 = vmatpush2.msra.mxu0 0.0
        %3441 = vmatprep.subr.mxu0 0.0
        %3442 = vmatpush2.msra.mxu0 0.0
        %3443 = vmatprep.subr.mxu0 0.0
        %3444 = vmatpush2.msra.mxu0 0.0
        %3445 = vmatprep.subr.mxu0 0.0
        %3446 = vmatpush2.msra.mxu0 0.0
        %3447 = vmatprep.subr.mxu0 0.0
        %3448 = vmatpush2.msra.mxu0 0.0
        %3449 = vmatprep.subr.mxu0 0.0
        %3450 = vmatpush2.msra.mxu0 0.0
        %3451 = vmatprep.subr.mxu0 0.0
        %3452 = vmatpush2.msra.mxu0 0.0
        %3453 = vmatprep.mubr.f32.mxu0 0.0
        %v3454 = vand.u32 %v3382, 4294901760
        %v3455 = vsub.f32 %v3382, %v3454
        %v3456 = vand.u32 %v3455, 4294901760
        %v3457 = vsub.f32 %v3455, %v3456
        %v3458 = vand.u32 %v3457, 4294901760
        %3459 = vmatmul.mubr.f32.gmra.mxu0 %v3458
        %v3460 = vpop.f32.mrf.mxu0
        %v3461 = vadd.f32 0.0, %v3460
        %v3462 = vpop.f32.mrf.mxu0
        %3463 = vmatprep.mubr.f32.mxu0 0.0
        %v3464 = vand.u32 %v3385, 4294901760
        %v3465 = vsub.f32 %v3385, %v3464
        %v3466 = vand.u32 %v3465, 4294901760
        %v3467 = vsub.f32 %v3465, %v3466
        %v3468 = vand.u32 %v3467, 4294901760
        %3469 = vmatmul.mubr.f32.gmra.mxu0 %v3468
        %v3470 = vpop.f32.mrf.mxu0
        %v3471 = vadd.f32 0.0, %v3470
        %v3472 = vpop.f32.mrf.mxu0
        %3473 = vdwg.mxu0
        %3474 = vmatprep.subr.mxu0 0.0
        %3475 = vmatpush1.msra.mxu0 0.0
        %3476 = vmatprep.subr.mxu0 0.0
        %3477 = vmatpush1.msra.mxu0 0.0
        %3478 = vmatprep.subr.mxu0 0.0
        %3479 = vmatpush1.msra.mxu0 0.0
        %3480 = vmatprep.subr.mxu0 0.0
        %3481 = vmatpush1.msra.mxu0 0.0
        %3482 = vmatprep.subr.mxu0 0.0
        %3483 = vmatpush1.msra.mxu0 0.0
        %3484 = vmatprep.subr.mxu0 0.0
        %3485 = vmatpush1.msra.mxu0 0.0
        %3486 = vmatprep.subr.mxu0 0.0
        %3487 = vmatpush1.msra.mxu0 0.0
        %3488 = vmatprep.subr.mxu0 0.0
        %3489 = vmatpush1.msra.mxu0 0.0
        %3490 = vmatprep.subr.mxu0 0.0
        %3491 = vmatpush1.msra.mxu0 0.0
        %3492 = vmatprep.subr.mxu0 0.0
        %3493 = vmatpush1.msra.mxu0 0.0
        %3494 = vmatprep.subr.mxu0 0.0
        %3495 = vmatpush1.msra.mxu0 0.0
        %3496 = vmatprep.subr.mxu0 0.0
        %3497 = vmatpush1.msra.mxu0 0.0
        %3498 = vmatprep.subr.mxu0 0.0
        %3499 = vmatpush1.msra.mxu0 0.0
        %3500 = vmatprep.subr.mxu0 0.0
        %3501 = vmatpush1.msra.mxu0 0.0
        %3502 = vmatprep.subr.mxu0 0.0
        %v3503 = vand.u32 %v330, 4294901760
        %v3504 = vsub.f32 %v330, %v3503
        %v3505 = vand.u32 %v3504, 4294901760
        %v3506 = vsub.f32 %v3504, %v3505
        %v3507 = vand.u32 %v3506, 4294901760
        %3508 = vmatpush1.msra.mxu0 %v3507
        %3509 = vmatprep.subr.mxu0 0.0
        %v3510 = vand.u32 %v329, 4294901760
        %v3511 = vsub.f32 %v329, %v3510
        %v3512 = vand.u32 %v3511, 4294901760
        %v3513 = vsub.f32 %v3511, %v3512
        %v3514 = vand.u32 %v3513, 4294901760
        %3515 = vmatpush1.msra.mxu0 %v3514
        %3516 = vmatprep.subr.mxu0 0.0
        %3517 = vmatpush2.msra.mxu0 0.0
        %3518 = vmatprep.subr.mxu0 0.0
        %3519 = vmatpush2.msra.mxu0 0.0
        %3520 = vmatprep.subr.mxu0 0.0
        %3521 = vmatpush2.msra.mxu0 0.0
        %3522 = vmatprep.subr.mxu0 0.0
        %3523 = vmatpush2.msra.mxu0 0.0
        %3524 = vmatprep.subr.mxu0 0.0
        %3525 = vmatpush2.msra.mxu0 0.0
        %3526 = vmatprep.subr.mxu0 0.0
        %3527 = vmatpush2.msra.mxu0 0.0
        %3528 = vmatprep.subr.mxu0 0.0
        %3529 = vmatpush2.msra.mxu0 0.0
        %3530 = vmatprep.subr.mxu0 0.0
        %3531 = vmatpush2.msra.mxu0 0.0
        %3532 = vmatprep.subr.mxu0 0.0
        %3533 = vmatpush2.msra.mxu0 0.0
        %3534 = vmatprep.subr.mxu0 0.0
        %3535 = vmatpush2.msra.mxu0 0.0
        %3536 = vmatprep.subr.mxu0 0.0
        %3537 = vmatpush2.msra.mxu0 0.0
        %3538 = vmatprep.subr.mxu0 0.0
        %3539 = vmatpush2.msra.mxu0 0.0
        %3540 = vmatprep.subr.mxu0 0.0
        %3541 = vmatpush2.msra.mxu0 0.0
        %3542 = vmatprep.subr.mxu0 0.0
        %3543 = vmatpush2.msra.mxu0 0.0
        %3544 = vmatprep.subr.mxu0 0.0
        %3545 = vmatpush2.msra.mxu0 0.0
        %3546 = vmatprep.subr.mxu0 0.0
        %3547 = vmatpush2.msra.mxu0 0.0
        %3548 = vmatprep.mubr.f32.mxu0 0.0
        %v3549 = vand.u32 %v3382, 4294901760
        %3550 = vmatmul.mubr.f32.gmra.mxu0 %v3549
        %v3551 = vpop.f32.mrf.mxu0
        %v3552 = vadd.f32 %v3461, %v3551
        %v3553 = vpop.f32.mrf.mxu0
        %3554 = vmatprep.mubr.f32.mxu0 0.0
        %v3555 = vand.u32 %v3385, 4294901760
        %3556 = vmatmul.mubr.f32.gmra.mxu0 %v3555
        %v3557 = vpop.f32.mrf.mxu0
        %v3558 = vadd.f32 %v3471, %v3557
        %v3559 = vpop.f32.mrf.mxu0
        %3560 = vdwg.mxu0
        %3561 = vmatprep.subr.mxu0 0.0
        %3562 = vmatpush1.msra.mxu0 0.0
        %3563 = vmatprep.subr.mxu0 0.0
        %3564 = vmatpush1.msra.mxu0 0.0
        %3565 = vmatprep.subr.mxu0 0.0
        %3566 = vmatpush1.msra.mxu0 0.0
        %3567 = vmatprep.subr.mxu0 0.0
        %3568 = vmatpush1.msra.mxu0 0.0
        %3569 = vmatprep.subr.mxu0 0.0
        %3570 = vmatpush1.msra.mxu0 0.0
        %3571 = vmatprep.subr.mxu0 0.0
        %3572 = vmatpush1.msra.mxu0 0.0
        %3573 = vmatprep.subr.mxu0 0.0
        %3574 = vmatpush1.msra.mxu0 0.0
        %3575 = vmatprep.subr.mxu0 0.0
        %3576 = vmatpush1.msra.mxu0 0.0
        %3577 = vmatprep.subr.mxu0 0.0
        %3578 = vmatpush1.msra.mxu0 0.0
        %3579 = vmatprep.subr.mxu0 0.0
        %3580 = vmatpush1.msra.mxu0 0.0
        %3581 = vmatprep.subr.mxu0 0.0
        %3582 = vmatpush1.msra.mxu0 0.0
        %3583 = vmatprep.subr.mxu0 0.0
        %3584 = vmatpush1.msra.mxu0 0.0
        %3585 = vmatprep.subr.mxu0 0.0
        %3586 = vmatpush1.msra.mxu0 0.0
        %3587 = vmatprep.subr.mxu0 0.0
        %3588 = vmatpush1.msra.mxu0 0.0
        %3589 = vmatprep.subr.mxu0 0.0
        %v3590 = vand.u32 %v330, 4294901760
        %v3591 = vsub.f32 %v330, %v3590
        %3592 = vmatpush1.msra.mxu0 %v3591
        %3593 = vmatprep.subr.mxu0 0.0
        %v3594 = vand.u32 %v329, 4294901760
        %v3595 = vsub.f32 %v329, %v3594
        %3596 = vmatpush1.msra.mxu0 %v3595
        %3597 = vmatprep.subr.mxu0 0.0
        %3598 = vmatpush2.msra.mxu0 0.0
        %3599 = vmatprep.subr.mxu0 0.0
        %3600 = vmatpush2.msra.mxu0 0.0
        %3601 = vmatprep.subr.mxu0 0.0
        %3602 = vmatpush2.msra.mxu0 0.0
        %3603 = vmatprep.subr.mxu0 0.0
        %3604 = vmatpush2.msra.mxu0 0.0
        %3605 = vmatprep.subr.mxu0 0.0
        %3606 = vmatpush2.msra.mxu0 0.0
        %3607 = vmatprep.subr.mxu0 0.0
        %3608 = vmatpush2.msra.mxu0 0.0
        %3609 = vmatprep.subr.mxu0 0.0
        %3610 = vmatpush2.msra.mxu0 0.0
        %3611 = vmatprep.subr.mxu0 0.0
        %3612 = vmatpush2.msra.mxu0 0.0
        %3613 = vmatprep.subr.mxu0 0.0
        %3614 = vmatpush2.msra.mxu0 0.0
        %3615 = vmatprep.subr.mxu0 0.0
        %3616 = vmatpush2.msra.mxu0 0.0
        %3617 = vmatprep.subr.mxu0 0.0
        %3618 = vmatpush2.msra.mxu0 0.0
        %3619 = vmatprep.subr.mxu0 0.0
        %3620 = vmatpush2.msra.mxu0 0.0
        %3621 = vmatprep.subr.mxu0 0.0
        %3622 = vmatpush2.msra.mxu0 0.0
        %3623 = vmatprep.subr.mxu0 0.0
        %3624 = vmatpush2.msra.mxu0 0.0
        %3625 = vmatprep.subr.mxu0 0.0
        %3626 = vmatpush2.msra.mxu0 0.0
        %3627 = vmatprep.subr.mxu0 0.0
        %3628 = vmatpush2.msra.mxu0 0.0
        %3629 = vmatprep.mubr.f32.mxu0 0.0
        %v3630 = vand.u32 %v3382, 4294901760
        %v3631 = vsub.f32 %v3382, %v3630
        %3632 = vmatmul.mubr.f32.gmra.mxu0 %v3631
        %v3633 = vpop.f32.mrf.mxu0
        %v3634 = vadd.f32 %v3552, %v3633
        %v3635 = vpop.f32.mrf.mxu0
        %3636 = vmatprep.mubr.f32.mxu0 0.0
        %v3637 = vand.u32 %v3385, 4294901760
        %v3638 = vsub.f32 %v3385, %v3637
        %3639 = vmatmul.mubr.f32.gmra.mxu0 %v3638
        %v3640 = vpop.f32.mrf.mxu0
        %v3641 = vadd.f32 %v3558, %v3640
        %v3642 = vpop.f32.mrf.mxu0
        %3643 = vdwg.mxu0
        %3644 = vmatprep.subr.mxu0 0.0
        %3645 = vmatpush1.msra.mxu0 0.0
        %3646 = vmatprep.subr.mxu0 0.0
        %3647 = vmatpush1.msra.mxu0 0.0
        %3648 = vmatprep.subr.mxu0 0.0
        %3649 = vmatpush1.msra.mxu0 0.0
        %3650 = vmatprep.subr.mxu0 0.0
        %3651 = vmatpush1.msra.mxu0 0.0
        %3652 = vmatprep.subr.mxu0 0.0
        %3653 = vmatpush1.msra.mxu0 0.0
        %3654 = vmatprep.subr.mxu0 0.0
        %3655 = vmatpush1.msra.mxu0 0.0
        %3656 = vmatprep.subr.mxu0 0.0
        %3657 = vmatpush1.msra.mxu0 0.0
        %3658 = vmatprep.subr.mxu0 0.0
        %3659 = vmatpush1.msra.mxu0 0.0
        %3660 = vmatprep.subr.mxu0 0.0
        %3661 = vmatpush1.msra.mxu0 0.0
        %3662 = vmatprep.subr.mxu0 0.0
        %3663 = vmatpush1.msra.mxu0 0.0
        %3664 = vmatprep.subr.mxu0 0.0
        %3665 = vmatpush1.msra.mxu0 0.0
        %3666 = vmatprep.subr.mxu0 0.0
        %3667 = vmatpush1.msra.mxu0 0.0
        %3668 = vmatprep.subr.mxu0 0.0
        %3669 = vmatpush1.msra.mxu0 0.0
        %3670 = vmatprep.subr.mxu0 0.0
        %3671 = vmatpush1.msra.mxu0 0.0
        %3672 = vmatprep.subr.mxu0 0.0
        %v3673 = vand.u32 %v330, 4294901760
        %3674 = vmatpush1.msra.mxu0 %v3673
        %3675 = vmatprep.subr.mxu0 0.0
        %v3676 = vand.u32 %v329, 4294901760
        %3677 = vmatpush1.msra.mxu0 %v3676
        %3678 = vmatprep.subr.mxu0 0.0
        %3679 = vmatpush2.msra.mxu0 0.0
        %3680 = vmatprep.subr.mxu0 0.0
        %3681 = vmatpush2.msra.mxu0 0.0
        %3682 = vmatprep.subr.mxu0 0.0
        %3683 = vmatpush2.msra.mxu0 0.0
        %3684 = vmatprep.subr.mxu0 0.0
        %3685 = vmatpush2.msra.mxu0 0.0
        %3686 = vmatprep.subr.mxu0 0.0
        %3687 = vmatpush2.msra.mxu0 0.0
        %3688 = vmatprep.subr.mxu0 0.0
        %3689 = vmatpush2.msra.mxu0 0.0
        %3690 = vmatprep.subr.mxu0 0.0
        %3691 = vmatpush2.msra.mxu0 0.0
        %3692 = vmatprep.subr.mxu0 0.0
        %3693 = vmatpush2.msra.mxu0 0.0
        %3694 = vmatprep.subr.mxu0 0.0
        %3695 = vmatpush2.msra.mxu0 0.0
        %3696 = vmatprep.subr.mxu0 0.0
        %3697 = vmatpush2.msra.mxu0 0.0
        %3698 = vmatprep.subr.mxu0 0.0
        %3699 = vmatpush2.msra.mxu0 0.0
        %3700 = vmatprep.subr.mxu0 0.0
        %3701 = vmatpush2.msra.mxu0 0.0
        %3702 = vmatprep.subr.mxu0 0.0
        %3703 = vmatpush2.msra.mxu0 0.0
        %3704 = vmatprep.subr.mxu0 0.0
        %3705 = vmatpush2.msra.mxu0 0.0
        %3706 = vmatprep.subr.mxu0 0.0
        %3707 = vmatpush2.msra.mxu0 0.0
        %3708 = vmatprep.subr.mxu0 0.0
        %3709 = vmatpush2.msra.mxu0 0.0
        %3710 = vmatprep.mubr.f32.mxu0 0.0
        %v3711 = vand.u32 %v3382, 4294901760
        %v3712 = vsub.f32 %v3382, %v3711
        %v3713 = vand.u32 %v3712, 4294901760
        %3714 = vmatmul.mubr.f32.gmra.mxu0 %v3713
        %v3715 = vpop.f32.mrf.mxu0
        %v3716 = vadd.f32 %v3634, %v3715
        %v3717 = vpop.f32.mrf.mxu0
        %3718 = vmatprep.mubr.f32.mxu0 0.0
        %v3719 = vand.u32 %v3385, 4294901760
        %v3720 = vsub.f32 %v3385, %v3719
        %v3721 = vand.u32 %v3720, 4294901760
        %3722 = vmatmul.mubr.f32.gmra.mxu0 %v3721
        %v3723 = vpop.f32.mrf.mxu0
        %v3724 = vadd.f32 %v3641, %v3723
        %v3725 = vpop.f32.mrf.mxu0
        %3726 = vdwg.mxu0
        %3727 = vmatprep.subr.mxu0 0.0
        %3728 = vmatpush1.msra.mxu0 0.0
        %3729 = vmatprep.subr.mxu0 0.0
        %3730 = vmatpush1.msra.mxu0 0.0
        %3731 = vmatprep.subr.mxu0 0.0
        %3732 = vmatpush1.msra.mxu0 0.0
        %3733 = vmatprep.subr.mxu0 0.0
        %3734 = vmatpush1.msra.mxu0 0.0
        %3735 = vmatprep.subr.mxu0 0.0
        %3736 = vmatpush1.msra.mxu0 0.0
        %3737 = vmatprep.subr.mxu0 0.0
        %3738 = vmatpush1.msra.mxu0 0.0
        %3739 = vmatprep.subr.mxu0 0.0
        %3740 = vmatpush1.msra.mxu0 0.0
        %3741 = vmatprep.subr.mxu0 0.0
        %3742 = vmatpush1.msra.mxu0 0.0
        %3743 = vmatprep.subr.mxu0 0.0
        %3744 = vmatpush1.msra.mxu0 0.0
        %3745 = vmatprep.subr.mxu0 0.0
        %3746 = vmatpush1.msra.mxu0 0.0
        %3747 = vmatprep.subr.mxu0 0.0
        %3748 = vmatpush1.msra.mxu0 0.0
        %3749 = vmatprep.subr.mxu0 0.0
        %3750 = vmatpush1.msra.mxu0 0.0
        %3751 = vmatprep.subr.mxu0 0.0
        %3752 = vmatpush1.msra.mxu0 0.0
        %3753 = vmatprep.subr.mxu0 0.0
        %3754 = vmatpush1.msra.mxu0 0.0
        %3755 = vmatprep.subr.mxu0 0.0
        %v3756 = vand.u32 %v330, 4294901760
        %v3757 = vsub.f32 %v330, %v3756
        %v3758 = vand.u32 %v3757, 4294901760
        %3759 = vmatpush1.msra.mxu0 %v3758
        %3760 = vmatprep.subr.mxu0 0.0
        %v3761 = vand.u32 %v329, 4294901760
        %v3762 = vsub.f32 %v329, %v3761
        %v3763 = vand.u32 %v3762, 4294901760
        %3764 = vmatpush1.msra.mxu0 %v3763
        %3765 = vmatprep.subr.mxu0 0.0
        %3766 = vmatpush2.msra.mxu0 0.0
        %3767 = vmatprep.subr.mxu0 0.0
        %3768 = vmatpush2.msra.mxu0 0.0
        %3769 = vmatprep.subr.mxu0 0.0
        %3770 = vmatpush2.msra.mxu0 0.0
        %3771 = vmatprep.subr.mxu0 0.0
        %3772 = vmatpush2.msra.mxu0 0.0
        %3773 = vmatprep.subr.mxu0 0.0
        %3774 = vmatpush2.msra.mxu0 0.0
        %3775 = vmatprep.subr.mxu0 0.0
        %3776 = vmatpush2.msra.mxu0 0.0
        %3777 = vmatprep.subr.mxu0 0.0
        %3778 = vmatpush2.msra.mxu0 0.0
        %3779 = vmatprep.subr.mxu0 0.0
        %3780 = vmatpush2.msra.mxu0 0.0
        %3781 = vmatprep.subr.mxu0 0.0
        %3782 = vmatpush2.msra.mxu0 0.0
        %3783 = vmatprep.subr.mxu0 0.0
        %3784 = vmatpush2.msra.mxu0 0.0
        %3785 = vmatprep.subr.mxu0 0.0
        %3786 = vmatpush2.msra.mxu0 0.0
        %3787 = vmatprep.subr.mxu0 0.0
        %3788 = vmatpush2.msra.mxu0 0.0
        %3789 = vmatprep.subr.mxu0 0.0
        %3790 = vmatpush2.msra.mxu0 0.0
        %3791 = vmatprep.subr.mxu0 0.0
        %3792 = vmatpush2.msra.mxu0 0.0
        %3793 = vmatprep.subr.mxu0 0.0
        %3794 = vmatpush2.msra.mxu0 0.0
        %3795 = vmatprep.subr.mxu0 0.0
        %3796 = vmatpush2.msra.mxu0 0.0
        %3797 = vmatprep.mubr.f32.mxu0 0.0
        %v3798 = vand.u32 %v3382, 4294901760
        %3799 = vmatmul.mubr.f32.gmra.mxu0 %v3798
        %v3800 = vpop.f32.mrf.mxu0
        %v3801 = vadd.f32 %v3716, %v3800
        %v3802 = vpop.f32.mrf.mxu0
        %3803 = vmatprep.mubr.f32.mxu0 0.0
        %v3804 = vand.u32 %v3385, 4294901760
        %3805 = vmatmul.mubr.f32.gmra.mxu0 %v3804
        %v3806 = vpop.f32.mrf.mxu0
        %v3807 = vadd.f32 %v3724, %v3806
        %v3808 = vpop.f32.mrf.mxu0
        %3809 = vdwg.mxu0
        %3810 = vmatprep.subr.mxu0 0.0
        %3811 = vmatpush1.msra.mxu0 0.0
        %3812 = vmatprep.subr.mxu0 0.0
        %3813 = vmatpush1.msra.mxu0 0.0
        %3814 = vmatprep.subr.mxu0 0.0
        %3815 = vmatpush1.msra.mxu0 0.0
        %3816 = vmatprep.subr.mxu0 0.0
        %3817 = vmatpush1.msra.mxu0 0.0
        %3818 = vmatprep.subr.mxu0 0.0
        %3819 = vmatpush1.msra.mxu0 0.0
        %3820 = vmatprep.subr.mxu0 0.0
        %3821 = vmatpush1.msra.mxu0 0.0
        %3822 = vmatprep.subr.mxu0 0.0
        %3823 = vmatpush1.msra.mxu0 0.0
        %3824 = vmatprep.subr.mxu0 0.0
        %3825 = vmatpush1.msra.mxu0 0.0
        %3826 = vmatprep.subr.mxu0 0.0
        %3827 = vmatpush1.msra.mxu0 0.0
        %3828 = vmatprep.subr.mxu0 0.0
        %3829 = vmatpush1.msra.mxu0 0.0
        %3830 = vmatprep.subr.mxu0 0.0
        %3831 = vmatpush1.msra.mxu0 0.0
        %3832 = vmatprep.subr.mxu0 0.0
        %3833 = vmatpush1.msra.mxu0 0.0
        %3834 = vmatprep.subr.mxu0 0.0
        %3835 = vmatpush1.msra.mxu0 0.0
        %3836 = vmatprep.subr.mxu0 0.0
        %3837 = vmatpush1.msra.mxu0 0.0
        %3838 = vmatprep.subr.mxu0 0.0
        %v3839 = vand.u32 %v330, 4294901760
        %3840 = vmatpush1.msra.mxu0 %v3839
        %3841 = vmatprep.subr.mxu0 0.0
        %v3842 = vand.u32 %v329, 4294901760
        %3843 = vmatpush1.msra.mxu0 %v3842
        %3844 = vmatprep.subr.mxu0 0.0
        %3845 = vmatpush2.msra.mxu0 0.0
        %3846 = vmatprep.subr.mxu0 0.0
        %3847 = vmatpush2.msra.mxu0 0.0
        %3848 = vmatprep.subr.mxu0 0.0
        %3849 = vmatpush2.msra.mxu0 0.0
        %3850 = vmatprep.subr.mxu0 0.0
        %3851 = vmatpush2.msra.mxu0 0.0
        %3852 = vmatprep.subr.mxu0 0.0
        %3853 = vmatpush2.msra.mxu0 0.0
        %3854 = vmatprep.subr.mxu0 0.0
        %3855 = vmatpush2.msra.mxu0 0.0
        %3856 = vmatprep.subr.mxu0 0.0
        %3857 = vmatpush2.msra.mxu0 0.0
        %3858 = vmatprep.subr.mxu0 0.0
        %3859 = vmatpush2.msra.mxu0 0.0
        %3860 = vmatprep.subr.mxu0 0.0
        %3861 = vmatpush2.msra.mxu0 0.0
        %3862 = vmatprep.subr.mxu0 0.0
        %3863 = vmatpush2.msra.mxu0 0.0
        %3864 = vmatprep.subr.mxu0 0.0
        %3865 = vmatpush2.msra.mxu0 0.0
        %3866 = vmatprep.subr.mxu0 0.0
        %3867 = vmatpush2.msra.mxu0 0.0
        %3868 = vmatprep.subr.mxu0 0.0
        %3869 = vmatpush2.msra.mxu0 0.0
        %3870 = vmatprep.subr.mxu0 0.0
        %3871 = vmatpush2.msra.mxu0 0.0
        %3872 = vmatprep.subr.mxu0 0.0
        %3873 = vmatpush2.msra.mxu0 0.0
        %3874 = vmatprep.subr.mxu0 0.0
        %3875 = vmatpush2.msra.mxu0 0.0
        %3876 = vmatprep.mubr.f32.mxu0 0.0
        %v3877 = vand.u32 %v3382, 4294901760
        %3878 = vmatmul.mubr.f32.gmra.mxu0 %v3877
        %v3879 = vpop.f32.mrf.mxu0
        %v3880 = vadd.f32 %v3801, %v3879
        %v3881 = vpop.f32.mrf.mxu0
        %3882 = vmatprep.mubr.f32.mxu0 0.0
        %v3883 = vand.u32 %v3385, 4294901760
        %3884 = vmatmul.mubr.f32.gmra.mxu0 %v3883
        %v3885 = vpop.f32.mrf.mxu0
        %v3886 = vadd.f32 %v3807, %v3885
        %v3887 = vpop.f32.mrf.mxu0
        %3888 = vdwg.mxu0
        %v3890 = vsel %vm300, %v323, 0
        %v3893 = vsel %vm300, %v324, 0
        %3895 = vmatprep.subr.mxu0 0.0
        %3896 = vmatpush1.msra.mxu0 0.0
        %3897 = vmatprep.subr.mxu0 0.0
        %3898 = vmatpush1.msra.mxu0 0.0
        %3899 = vmatprep.subr.mxu0 0.0
        %3900 = vmatpush1.msra.mxu0 0.0
        %3901 = vmatprep.subr.mxu0 0.0
        %3902 = vmatpush1.msra.mxu0 0.0
        %3903 = vmatprep.subr.mxu0 0.0
        %3904 = vmatpush1.msra.mxu0 0.0
        %3905 = vmatprep.subr.mxu0 0.0
        %3906 = vmatpush1.msra.mxu0 0.0
        %3907 = vmatprep.subr.mxu0 0.0
        %3908 = vmatpush1.msra.mxu0 0.0
        %3909 = vmatprep.subr.mxu0 0.0
        %3910 = vmatpush1.msra.mxu0 0.0
        %3911 = vmatprep.subr.mxu0 0.0
        %3912 = vmatpush1.msra.mxu0 0.0
        %3913 = vmatprep.subr.mxu0 0.0
        %3914 = vmatpush1.msra.mxu0 0.0
        %3915 = vmatprep.subr.mxu0 0.0
        %3916 = vmatpush1.msra.mxu0 0.0
        %3917 = vmatprep.subr.mxu0 0.0
        %3918 = vmatpush1.msra.mxu0 0.0
        %3919 = vmatprep.subr.mxu0 0.0
        %3920 = vmatpush1.msra.mxu0 0.0
        %3921 = vmatprep.subr.mxu0 0.0
        %3922 = vmatpush1.msra.mxu0 0.0
        %3923 = vmatprep.subr.mxu0 0.0
        %v3924 = vand.u32 %v330, 4294901760
        %3925 = vmatpush1.msra.mxu0 %v3924
        %3926 = vmatprep.subr.mxu0 0.0
        %v3927 = vand.u32 %v329, 4294901760
        %3928 = vmatpush1.msra.mxu0 %v3927
        %3929 = vmatprep.subr.mxu0 0.0
        %3930 = vmatpush2.msra.mxu0 0.0
        %3931 = vmatprep.subr.mxu0 0.0
        %3932 = vmatpush2.msra.mxu0 0.0
        %3933 = vmatprep.subr.mxu0 0.0
        %3934 = vmatpush2.msra.mxu0 0.0
        %3935 = vmatprep.subr.mxu0 0.0
        %3936 = vmatpush2.msra.mxu0 0.0
        %3937 = vmatprep.subr.mxu0 0.0
        %3938 = vmatpush2.msra.mxu0 0.0
        %3939 = vmatprep.subr.mxu0 0.0
        %3940 = vmatpush2.msra.mxu0 0.0
        %3941 = vmatprep.subr.mxu0 0.0
        %3942 = vmatpush2.msra.mxu0 0.0
        %3943 = vmatprep.subr.mxu0 0.0
        %3944 = vmatpush2.msra.mxu0 0.0
        %3945 = vmatprep.subr.mxu0 0.0
        %3946 = vmatpush2.msra.mxu0 0.0
        %3947 = vmatprep.subr.mxu0 0.0
        %3948 = vmatpush2.msra.mxu0 0.0
        %3949 = vmatprep.subr.mxu0 0.0
        %3950 = vmatpush2.msra.mxu0 0.0
        %3951 = vmatprep.subr.mxu0 0.0
        %3952 = vmatpush2.msra.mxu0 0.0
        %3953 = vmatprep.subr.mxu0 0.0
        %3954 = vmatpush2.msra.mxu0 0.0
        %3955 = vmatprep.subr.mxu0 0.0
        %3956 = vmatpush2.msra.mxu0 0.0
        %3957 = vmatprep.subr.mxu0 0.0
        %3958 = vmatpush2.msra.mxu0 0.0
        %3959 = vmatprep.subr.mxu0 0.0
        %3960 = vmatpush2.msra.mxu0 0.0
        %3961 = vmatprep.mubr.f32.mxu0 0.0
        %v3962 = vand.u32 %v3890, 4294901760
        %v3963 = vsub.f32 %v3890, %v3962
        %v3964 = vand.u32 %v3963, 4294901760
        %v3965 = vsub.f32 %v3963, %v3964
        %v3966 = vand.u32 %v3965, 4294901760
        %3967 = vmatmul.mubr.f32.gmra.mxu0 %v3966
        %v3968 = vpop.f32.mrf.mxu0
        %v3969 = vadd.f32 0.0, %v3968
        %v3970 = vpop.f32.mrf.mxu0
        %3971 = vmatprep.mubr.f32.mxu0 0.0
        %v3972 = vand.u32 %v3893, 4294901760
        %v3973 = vsub.f32 %v3893, %v3972
        %v3974 = vand.u32 %v3973, 4294901760
        %v3975 = vsub.f32 %v3973, %v3974
        %v3976 = vand.u32 %v3975, 4294901760
        %3977 = vmatmul.mubr.f32.gmra.mxu0 %v3976
        %v3978 = vpop.f32.mrf.mxu0
        %v3979 = vadd.f32 0.0, %v3978
        %v3980 = vpop.f32.mrf.mxu0
        %3981 = vdwg.mxu0
        %3982 = vmatprep.subr.mxu0 0.0
        %3983 = vmatpush1.msra.mxu0 0.0
        %3984 = vmatprep.subr.mxu0 0.0
        %3985 = vmatpush1.msra.mxu0 0.0
        %3986 = vmatprep.subr.mxu0 0.0
        %3987 = vmatpush1.msra.mxu0 0.0
        %3988 = vmatprep.subr.mxu0 0.0
        %3989 = vmatpush1.msra.mxu0 0.0
        %3990 = vmatprep.subr.mxu0 0.0
        %3991 = vmatpush1.msra.mxu0 0.0
        %3992 = vmatprep.subr.mxu0 0.0
        %3993 = vmatpush1.msra.mxu0 0.0
        %3994 = vmatprep.subr.mxu0 0.0
        %3995 = vmatpush1.msra.mxu0 0.0
        %3996 = vmatprep.subr.mxu0 0.0
        %3997 = vmatpush1.msra.mxu0 0.0
        %3998 = vmatprep.subr.mxu0 0.0
        %3999 = vmatpush1.msra.mxu0 0.0
        %4000 = vmatprep.subr.mxu0 0.0
        %4001 = vmatpush1.msra.mxu0 0.0
        %4002 = vmatprep.subr.mxu0 0.0
        %4003 = vmatpush1.msra.mxu0 0.0
        %4004 = vmatprep.subr.mxu0 0.0
        %4005 = vmatpush1.msra.mxu0 0.0
        %4006 = vmatprep.subr.mxu0 0.0
        %4007 = vmatpush1.msra.mxu0 0.0
        %4008 = vmatprep.subr.mxu0 0.0
        %4009 = vmatpush1.msra.mxu0 0.0
        %4010 = vmatprep.subr.mxu0 0.0
        %v4011 = vand.u32 %v330, 4294901760
        %v4012 = vsub.f32 %v330, %v4011
        %v4013 = vand.u32 %v4012, 4294901760
        %v4014 = vsub.f32 %v4012, %v4013
        %v4015 = vand.u32 %v4014, 4294901760
        %4016 = vmatpush1.msra.mxu0 %v4015
        %4017 = vmatprep.subr.mxu0 0.0
        %v4018 = vand.u32 %v329, 4294901760
        %v4019 = vsub.f32 %v329, %v4018
        %v4020 = vand.u32 %v4019, 4294901760
        %v4021 = vsub.f32 %v4019, %v4020
        %v4022 = vand.u32 %v4021, 4294901760
        %4023 = vmatpush1.msra.mxu0 %v4022
        %4024 = vmatprep.subr.mxu0 0.0
        %4025 = vmatpush2.msra.mxu0 0.0
        %4026 = vmatprep.subr.mxu0 0.0
        %4027 = vmatpush2.msra.mxu0 0.0
        %4028 = vmatprep.subr.mxu0 0.0
        %4029 = vmatpush2.msra.mxu0 0.0
        %4030 = vmatprep.subr.mxu0 0.0
        %4031 = vmatpush2.msra.mxu0 0.0
        %4032 = vmatprep.subr.mxu0 0.0
        %4033 = vmatpush2.msra.mxu0 0.0
        %4034 = vmatprep.subr.mxu0 0.0
        %4035 = vmatpush2.msra.mxu0 0.0
        %4036 = vmatprep.subr.mxu0 0.0
        %4037 = vmatpush2.msra.mxu0 0.0
        %4038 = vmatprep.subr.mxu0 0.0
        %4039 = vmatpush2.msra.mxu0 0.0
        %4040 = vmatprep.subr.mxu0 0.0
        %4041 = vmatpush2.msra.mxu0 0.0
        %4042 = vmatprep.subr.mxu0 0.0
        %4043 = vmatpush2.msra.mxu0 0.0
        %4044 = vmatprep.subr.mxu0 0.0
        %4045 = vmatpush2.msra.mxu0 0.0
        %4046 = vmatprep.subr.mxu0 0.0
        %4047 = vmatpush2.msra.mxu0 0.0
        %4048 = vmatprep.subr.mxu0 0.0
        %4049 = vmatpush2.msra.mxu0 0.0
        %4050 = vmatprep.subr.mxu0 0.0
        %4051 = vmatpush2.msra.mxu0 0.0
        %4052 = vmatprep.subr.mxu0 0.0
        %4053 = vmatpush2.msra.mxu0 0.0
        %4054 = vmatprep.subr.mxu0 0.0
        %4055 = vmatpush2.msra.mxu0 0.0
        %4056 = vmatprep.mubr.f32.mxu0 0.0
        %v4057 = vand.u32 %v3890, 4294901760
        %4058 = vmatmul.mubr.f32.gmra.mxu0 %v4057
        %v4059 = vpop.f32.mrf.mxu0
        %v4060 = vadd.f32 %v3969, %v4059
        %v4061 = vpop.f32.mrf.mxu0
        %4062 = vmatprep.mubr.f32.mxu0 0.0
        %v4063 = vand.u32 %v3893, 4294901760
        %4064 = vmatmul.mubr.f32.gmra.mxu0 %v4063
        %v4065 = vpop.f32.mrf.mxu0
        %v4066 = vadd.f32 %v3979, %v4065
        %v4067 = vpop.f32.mrf.mxu0
        %4068 = vdwg.mxu0
        %4069 = vmatprep.subr.mxu0 0.0
        %4070 = vmatpush1.msra.mxu0 0.0
        %4071 = vmatprep.subr.mxu0 0.0
        %4072 = vmatpush1.msra.mxu0 0.0
        %4073 = vmatprep.subr.mxu0 0.0
        %4074 = vmatpush1.msra.mxu0 0.0
        %4075 = vmatprep.subr.mxu0 0.0
        %4076 = vmatpush1.msra.mxu0 0.0
        %4077 = vmatprep.subr.mxu0 0.0
        %4078 = vmatpush1.msra.mxu0 0.0
        %4079 = vmatprep.subr.mxu0 0.0
        %4080 = vmatpush1.msra.mxu0 0.0
        %4081 = vmatprep.subr.mxu0 0.0
        %4082 = vmatpush1.msra.mxu0 0.0
        %4083 = vmatprep.subr.mxu0 0.0
        %4084 = vmatpush1.msra.mxu0 0.0
        %4085 = vmatprep.subr.mxu0 0.0
        %4086 = vmatpush1.msra.mxu0 0.0
        %4087 = vmatprep.subr.mxu0 0.0
        %4088 = vmatpush1.msra.mxu0 0.0
        %4089 = vmatprep.subr.mxu0 0.0
        %4090 = vmatpush1.msra.mxu0 0.0
        %4091 = vmatprep.subr.mxu0 0.0
        %4092 = vmatpush1.msra.mxu0 0.0
        %4093 = vmatprep.subr.mxu0 0.0
        %4094 = vmatpush1.msra.mxu0 0.0
        %4095 = vmatprep.subr.mxu0 0.0
        %4096 = vmatpush1.msra.mxu0 0.0
        %4097 = vmatprep.subr.mxu0 0.0
        %v4098 = vand.u32 %v330, 4294901760
        %v4099 = vsub.f32 %v330, %v4098
        %4100 = vmatpush1.msra.mxu0 %v4099
        %4101 = vmatprep.subr.mxu0 0.0
        %v4102 = vand.u32 %v329, 4294901760
        %v4103 = vsub.f32 %v329, %v4102
        %4104 = vmatpush1.msra.mxu0 %v4103
        %4105 = vmatprep.subr.mxu0 0.0
        %4106 = vmatpush2.msra.mxu0 0.0
        %4107 = vmatprep.subr.mxu0 0.0
        %4108 = vmatpush2.msra.mxu0 0.0
        %4109 = vmatprep.subr.mxu0 0.0
        %4110 = vmatpush2.msra.mxu0 0.0
        %4111 = vmatprep.subr.mxu0 0.0
        %4112 = vmatpush2.msra.mxu0 0.0
        %4113 = vmatprep.subr.mxu0 0.0
        %4114 = vmatpush2.msra.mxu0 0.0
        %4115 = vmatprep.subr.mxu0 0.0
        %4116 = vmatpush2.msra.mxu0 0.0
        %4117 = vmatprep.subr.mxu0 0.0
        %4118 = vmatpush2.msra.mxu0 0.0
        %4119 = vmatprep.subr.mxu0 0.0
        %4120 = vmatpush2.msra.mxu0 0.0
        %4121 = vmatprep.subr.mxu0 0.0
        %4122 = vmatpush2.msra.mxu0 0.0
        %4123 = vmatprep.subr.mxu0 0.0
        %4124 = vmatpush2.msra.mxu0 0.0
        %4125 = vmatprep.subr.mxu0 0.0
        %4126 = vmatpush2.msra.mxu0 0.0
        %4127 = vmatprep.subr.mxu0 0.0
        %4128 = vmatpush2.msra.mxu0 0.0
        %4129 = vmatprep.subr.mxu0 0.0
        %4130 = vmatpush2.msra.mxu0 0.0
        %4131 = vmatprep.subr.mxu0 0.0
        %4132 = vmatpush2.msra.mxu0 0.0
        %4133 = vmatprep.subr.mxu0 0.0
        %4134 = vmatpush2.msra.mxu0 0.0
        %4135 = vmatprep.subr.mxu0 0.0
        %4136 = vmatpush2.msra.mxu0 0.0
        %4137 = vmatprep.mubr.f32.mxu0 0.0
        %v4138 = vand.u32 %v3890, 4294901760
        %v4139 = vsub.f32 %v3890, %v4138
        %4140 = vmatmul.mubr.f32.gmra.mxu0 %v4139
        %v4141 = vpop.f32.mrf.mxu0
        %v4142 = vadd.f32 %v4060, %v4141
        %v4143 = vpop.f32.mrf.mxu0
        %4144 = vmatprep.mubr.f32.mxu0 0.0
        %v4145 = vand.u32 %v3893, 4294901760
        %v4146 = vsub.f32 %v3893, %v4145
        %4147 = vmatmul.mubr.f32.gmra.mxu0 %v4146
        %v4148 = vpop.f32.mrf.mxu0
        %v4149 = vadd.f32 %v4066, %v4148
        %v4150 = vpop.f32.mrf.mxu0
        %4151 = vdwg.mxu0
        %4152 = vmatprep.subr.mxu0 0.0
        %4153 = vmatpush1.msra.mxu0 0.0
        %4154 = vmatprep.subr.mxu0 0.0
        %4155 = vmatpush1.msra.mxu0 0.0
        %4156 = vmatprep.subr.mxu0 0.0
        %4157 = vmatpush1.msra.mxu0 0.0
        %4158 = vmatprep.subr.mxu0 0.0
        %4159 = vmatpush1.msra.mxu0 0.0
        %4160 = vmatprep.subr.mxu0 0.0
        %4161 = vmatpush1.msra.mxu0 0.0
        %4162 = vmatprep.subr.mxu0 0.0
        %4163 = vmatpush1.msra.mxu0 0.0
        %4164 = vmatprep.subr.mxu0 0.0
        %4165 = vmatpush1.msra.mxu0 0.0
        %4166 = vmatprep.subr.mxu0 0.0
        %4167 = vmatpush1.msra.mxu0 0.0
        %4168 = vmatprep.subr.mxu0 0.0
        %4169 = vmatpush1.msra.mxu0 0.0
        %4170 = vmatprep.subr.mxu0 0.0
        %4171 = vmatpush1.msra.mxu0 0.0
        %4172 = vmatprep.subr.mxu0 0.0
        %4173 = vmatpush1.msra.mxu0 0.0
        %4174 = vmatprep.subr.mxu0 0.0
        %4175 = vmatpush1.msra.mxu0 0.0
        %4176 = vmatprep.subr.mxu0 0.0
        %4177 = vmatpush1.msra.mxu0 0.0
        %4178 = vmatprep.subr.mxu0 0.0
        %4179 = vmatpush1.msra.mxu0 0.0
        %4180 = vmatprep.subr.mxu0 0.0
        %v4181 = vand.u32 %v330, 4294901760
        %4182 = vmatpush1.msra.mxu0 %v4181
        %4183 = vmatprep.subr.mxu0 0.0
        %v4184 = vand.u32 %v329, 4294901760
        %4185 = vmatpush1.msra.mxu0 %v4184
        %4186 = vmatprep.subr.mxu0 0.0
        %4187 = vmatpush2.msra.mxu0 0.0
        %4188 = vmatprep.subr.mxu0 0.0
        %4189 = vmatpush2.msra.mxu0 0.0
        %4190 = vmatprep.subr.mxu0 0.0
        %4191 = vmatpush2.msra.mxu0 0.0
        %4192 = vmatprep.subr.mxu0 0.0
        %4193 = vmatpush2.msra.mxu0 0.0
        %4194 = vmatprep.subr.mxu0 0.0
        %4195 = vmatpush2.msra.mxu0 0.0
        %4196 = vmatprep.subr.mxu0 0.0
        %4197 = vmatpush2.msra.mxu0 0.0
        %4198 = vmatprep.subr.mxu0 0.0
        %4199 = vmatpush2.msra.mxu0 0.0
        %4200 = vmatprep.subr.mxu0 0.0
        %4201 = vmatpush2.msra.mxu0 0.0
        %4202 = vmatprep.subr.mxu0 0.0
        %4203 = vmatpush2.msra.mxu0 0.0
        %4204 = vmatprep.subr.mxu0 0.0
        %4205 = vmatpush2.msra.mxu0 0.0
        %4206 = vmatprep.subr.mxu0 0.0
        %4207 = vmatpush2.msra.mxu0 0.0
        %4208 = vmatprep.subr.mxu0 0.0
        %4209 = vmatpush2.msra.mxu0 0.0
        %4210 = vmatprep.subr.mxu0 0.0
        %4211 = vmatpush2.msra.mxu0 0.0
        %4212 = vmatprep.subr.mxu0 0.0
        %4213 = vmatpush2.msra.mxu0 0.0
        %4214 = vmatprep.subr.mxu0 0.0
        %4215 = vmatpush2.msra.mxu0 0.0
        %4216 = vmatprep.subr.mxu0 0.0
        %4217 = vmatpush2.msra.mxu0 0.0
        %4218 = vmatprep.mubr.f32.mxu0 0.0
        %v4219 = vand.u32 %v3890, 4294901760
        %v4220 = vsub.f32 %v3890, %v4219
        %v4221 = vand.u32 %v4220, 4294901760
        %4222 = vmatmul.mubr.f32.gmra.mxu0 %v4221
        %v4223 = vpop.f32.mrf.mxu0
        %v4224 = vadd.f32 %v4142, %v4223
        %v4225 = vpop.f32.mrf.mxu0
        %4226 = vmatprep.mubr.f32.mxu0 0.0
        %v4227 = vand.u32 %v3893, 4294901760
        %v4228 = vsub.f32 %v3893, %v4227
        %v4229 = vand.u32 %v4228, 4294901760
        %4230 = vmatmul.mubr.f32.gmra.mxu0 %v4229
        %v4231 = vpop.f32.mrf.mxu0
        %v4232 = vadd.f32 %v4149, %v4231
        %v4233 = vpop.f32.mrf.mxu0
        %4234 = vdwg.mxu0
        %4235 = vmatprep.subr.mxu0 0.0
        %4236 = vmatpush1.msra.mxu0 0.0
        %4237 = vmatprep.subr.mxu0 0.0
        %4238 = vmatpush1.msra.mxu0 0.0
        %4239 = vmatprep.subr.mxu0 0.0
        %4240 = vmatpush1.msra.mxu0 0.0
        %4241 = vmatprep.subr.mxu0 0.0
        %4242 = vmatpush1.msra.mxu0 0.0
        %4243 = vmatprep.subr.mxu0 0.0
        %4244 = vmatpush1.msra.mxu0 0.0
        %4245 = vmatprep.subr.mxu0 0.0
        %4246 = vmatpush1.msra.mxu0 0.0
        %4247 = vmatprep.subr.mxu0 0.0
        %4248 = vmatpush1.msra.mxu0 0.0
        %4249 = vmatprep.subr.mxu0 0.0
        %4250 = vmatpush1.msra.mxu0 0.0
        %4251 = vmatprep.subr.mxu0 0.0
        %4252 = vmatpush1.msra.mxu0 0.0
        %4253 = vmatprep.subr.mxu0 0.0
        %4254 = vmatpush1.msra.mxu0 0.0
        %4255 = vmatprep.subr.mxu0 0.0
        %4256 = vmatpush1.msra.mxu0 0.0
        %4257 = vmatprep.subr.mxu0 0.0
        %4258 = vmatpush1.msra.mxu0 0.0
        %4259 = vmatprep.subr.mxu0 0.0
        %4260 = vmatpush1.msra.mxu0 0.0
        %4261 = vmatprep.subr.mxu0 0.0
        %4262 = vmatpush1.msra.mxu0 0.0
        %4263 = vmatprep.subr.mxu0 0.0
        %v4264 = vand.u32 %v330, 4294901760
        %v4265 = vsub.f32 %v330, %v4264
        %v4266 = vand.u32 %v4265, 4294901760
        %4267 = vmatpush1.msra.mxu0 %v4266
        %4268 = vmatprep.subr.mxu0 0.0
        %v4269 = vand.u32 %v329, 4294901760
        %v4270 = vsub.f32 %v329, %v4269
        %v4271 = vand.u32 %v4270, 4294901760
        %4272 = vmatpush1.msra.mxu0 %v4271
        %4273 = vmatprep.subr.mxu0 0.0
        %4274 = vmatpush2.msra.mxu0 0.0
        %4275 = vmatprep.subr.mxu0 0.0
        %4276 = vmatpush2.msra.mxu0 0.0
        %4277 = vmatprep.subr.mxu0 0.0
        %4278 = vmatpush2.msra.mxu0 0.0
        %4279 = vmatprep.subr.mxu0 0.0
        %4280 = vmatpush2.msra.mxu0 0.0
        %4281 = vmatprep.subr.mxu0 0.0
        %4282 = vmatpush2.msra.mxu0 0.0
        %4283 = vmatprep.subr.mxu0 0.0
        %4284 = vmatpush2.msra.mxu0 0.0
        %4285 = vmatprep.subr.mxu0 0.0
        %4286 = vmatpush2.msra.mxu0 0.0
        %4287 = vmatprep.subr.mxu0 0.0
        %4288 = vmatpush2.msra.mxu0 0.0
        %4289 = vmatprep.subr.mxu0 0.0
        %4290 = vmatpush2.msra.mxu0 0.0
        %4291 = vmatprep.subr.mxu0 0.0
        %4292 = vmatpush2.msra.mxu0 0.0
        %4293 = vmatprep.subr.mxu0 0.0
        %4294 = vmatpush2.msra.mxu0 0.0
        %4295 = vmatprep.subr.mxu0 0.0
        %4296 = vmatpush2.msra.mxu0 0.0
        %4297 = vmatprep.subr.mxu0 0.0
        %4298 = vmatpush2.msra.mxu0 0.0
        %4299 = vmatprep.subr.mxu0 0.0
        %4300 = vmatpush2.msra.mxu0 0.0
        %4301 = vmatprep.subr.mxu0 0.0
        %4302 = vmatpush2.msra.mxu0 0.0
        %4303 = vmatprep.subr.mxu0 0.0
        %4304 = vmatpush2.msra.mxu0 0.0
        %4305 = vmatprep.mubr.f32.mxu0 0.0
        %v4306 = vand.u32 %v3890, 4294901760
        %4307 = vmatmul.mubr.f32.gmra.mxu0 %v4306
        %v4308 = vpop.f32.mrf.mxu0
        %v4309 = vadd.f32 %v4224, %v4308
        %v4310 = vpop.f32.mrf.mxu0
        %4311 = vmatprep.mubr.f32.mxu0 0.0
        %v4312 = vand.u32 %v3893, 4294901760
        %4313 = vmatmul.mubr.f32.gmra.mxu0 %v4312
        %v4314 = vpop.f32.mrf.mxu0
        %v4315 = vadd.f32 %v4232, %v4314
        %v4316 = vpop.f32.mrf.mxu0
        %4317 = vdwg.mxu0
        %4318 = vmatprep.subr.mxu0 0.0
        %4319 = vmatpush1.msra.mxu0 0.0
        %4320 = vmatprep.subr.mxu0 0.0
        %4321 = vmatpush1.msra.mxu0 0.0
        %4322 = vmatprep.subr.mxu0 0.0
        %4323 = vmatpush1.msra.mxu0 0.0
        %4324 = vmatprep.subr.mxu0 0.0
        %4325 = vmatpush1.msra.mxu0 0.0
        %4326 = vmatprep.subr.mxu0 0.0
        %4327 = vmatpush1.msra.mxu0 0.0
        %4328 = vmatprep.subr.mxu0 0.0
        %4329 = vmatpush1.msra.mxu0 0.0
        %4330 = vmatprep.subr.mxu0 0.0
        %4331 = vmatpush1.msra.mxu0 0.0
        %4332 = vmatprep.subr.mxu0 0.0
        %4333 = vmatpush1.msra.mxu0 0.0
        %4334 = vmatprep.subr.mxu0 0.0
        %4335 = vmatpush1.msra.mxu0 0.0
        %4336 = vmatprep.subr.mxu0 0.0
        %4337 = vmatpush1.msra.mxu0 0.0
        %4338 = vmatprep.subr.mxu0 0.0
        %4339 = vmatpush1.msra.mxu0 0.0
        %4340 = vmatprep.subr.mxu0 0.0
        %4341 = vmatpush1.msra.mxu0 0.0
        %4342 = vmatprep.subr.mxu0 0.0
        %4343 = vmatpush1.msra.mxu0 0.0
        %4344 = vmatprep.subr.mxu0 0.0
        %4345 = vmatpush1.msra.mxu0 0.0
        %4346 = vmatprep.subr.mxu0 0.0
        %v4347 = vand.u32 %v330, 4294901760
        %4348 = vmatpush1.msra.mxu0 %v4347
        %4349 = vmatprep.subr.mxu0 0.0
        %v4350 = vand.u32 %v329, 4294901760
        %4351 = vmatpush1.msra.mxu0 %v4350
        %4352 = vmatprep.subr.mxu0 0.0
        %4353 = vmatpush2.msra.mxu0 0.0
        %4354 = vmatprep.subr.mxu0 0.0
        %4355 = vmatpush2.msra.mxu0 0.0
        %4356 = vmatprep.subr.mxu0 0.0
        %4357 = vmatpush2.msra.mxu0 0.0
        %4358 = vmatprep.subr.mxu0 0.0
        %4359 = vmatpush2.msra.mxu0 0.0
        %4360 = vmatprep.subr.mxu0 0.0
        %4361 = vmatpush2.msra.mxu0 0.0
        %4362 = vmatprep.subr.mxu0 0.0
        %4363 = vmatpush2.msra.mxu0 0.0
        %4364 = vmatprep.subr.mxu0 0.0
        %4365 = vmatpush2.msra.mxu0 0.0
        %4366 = vmatprep.subr.mxu0 0.0
        %4367 = vmatpush2.msra.mxu0 0.0
        %4368 = vmatprep.subr.mxu0 0.0
        %4369 = vmatpush2.msra.mxu0 0.0
        %4370 = vmatprep.subr.mxu0 0.0
        %4371 = vmatpush2.msra.mxu0 0.0
        %4372 = vmatprep.subr.mxu0 0.0
        %4373 = vmatpush2.msra.mxu0 0.0
        %4374 = vmatprep.subr.mxu0 0.0
        %4375 = vmatpush2.msra.mxu0 0.0
        %4376 = vmatprep.subr.mxu0 0.0
        %4377 = vmatpush2.msra.mxu0 0.0
        %4378 = vmatprep.subr.mxu0 0.0
        %4379 = vmatpush2.msra.mxu0 0.0
        %4380 = vmatprep.subr.mxu0 0.0
        %4381 = vmatpush2.msra.mxu0 0.0
        %4382 = vmatprep.subr.mxu0 0.0
        %4383 = vmatpush2.msra.mxu0 0.0
        %4384 = vmatprep.mubr.f32.mxu0 0.0
        %v4385 = vand.u32 %v3890, 4294901760
        %4386 = vmatmul.mubr.f32.gmra.mxu0 %v4385
        %v4387 = vpop.f32.mrf.mxu0
        %v4388 = vadd.f32 %v4309, %v4387
        %v4389 = vpop.f32.mrf.mxu0
        %4390 = vmatprep.mubr.f32.mxu0 0.0
        %v4391 = vand.u32 %v3893, 4294901760
        %4392 = vmatmul.mubr.f32.gmra.mxu0 %v4391
        %v4393 = vpop.f32.mrf.mxu0
        %v4394 = vadd.f32 %v4315, %v4393
        %v4395 = vpop.f32.mrf.mxu0
        %4396 = vdwg.mxu0
        %v4398 = vsel %vm300, %v325, 0
        %v4401 = vsel %vm300, %v326, 0
        %4403 = vmatprep.subr.mxu0 0.0
        %4404 = vmatpush1.msra.mxu0 0.0
        %4405 = vmatprep.subr.mxu0 0.0
        %4406 = vmatpush1.msra.mxu0 0.0
        %4407 = vmatprep.subr.mxu0 0.0
        %4408 = vmatpush1.msra.mxu0 0.0
        %4409 = vmatprep.subr.mxu0 0.0
        %4410 = vmatpush1.msra.mxu0 0.0
        %4411 = vmatprep.subr.mxu0 0.0
        %4412 = vmatpush1.msra.mxu0 0.0
        %4413 = vmatprep.subr.mxu0 0.0
        %4414 = vmatpush1.msra.mxu0 0.0
        %4415 = vmatprep.subr.mxu0 0.0
        %4416 = vmatpush1.msra.mxu0 0.0
        %4417 = vmatprep.subr.mxu0 0.0
        %4418 = vmatpush1.msra.mxu0 0.0
        %4419 = vmatprep.subr.mxu0 0.0
        %4420 = vmatpush1.msra.mxu0 0.0
        %4421 = vmatprep.subr.mxu0 0.0
        %4422 = vmatpush1.msra.mxu0 0.0
        %4423 = vmatprep.subr.mxu0 0.0
        %4424 = vmatpush1.msra.mxu0 0.0
        %4425 = vmatprep.subr.mxu0 0.0
        %4426 = vmatpush1.msra.mxu0 0.0
        %4427 = vmatprep.subr.mxu0 0.0
        %4428 = vmatpush1.msra.mxu0 0.0
        %4429 = vmatprep.subr.mxu0 0.0
        %4430 = vmatpush1.msra.mxu0 0.0
        %4431 = vmatprep.subr.mxu0 0.0
        %v4432 = vand.u32 %v330, 4294901760
        %4433 = vmatpush1.msra.mxu0 %v4432
        %4434 = vmatprep.subr.mxu0 0.0
        %v4435 = vand.u32 %v329, 4294901760
        %4436 = vmatpush1.msra.mxu0 %v4435
        %4437 = vmatprep.subr.mxu0 0.0
        %4438 = vmatpush2.msra.mxu0 0.0
        %4439 = vmatprep.subr.mxu0 0.0
        %4440 = vmatpush2.msra.mxu0 0.0
        %4441 = vmatprep.subr.mxu0 0.0
        %4442 = vmatpush2.msra.mxu0 0.0
        %4443 = vmatprep.subr.mxu0 0.0
        %4444 = vmatpush2.msra.mxu0 0.0
        %4445 = vmatprep.subr.mxu0 0.0
        %4446 = vmatpush2.msra.mxu0 0.0
        %4447 = vmatprep.subr.mxu0 0.0
        %4448 = vmatpush2.msra.mxu0 0.0
        %4449 = vmatprep.subr.mxu0 0.0
        %4450 = vmatpush2.msra.mxu0 0.0
        %4451 = vmatprep.subr.mxu0 0.0
        %4452 = vmatpush2.msra.mxu0 0.0
        %4453 = vmatprep.subr.mxu0 0.0
        %4454 = vmatpush2.msra.mxu0 0.0
        %4455 = vmatprep.subr.mxu0 0.0
        %4456 = vmatpush2.msra.mxu0 0.0
        %4457 = vmatprep.subr.mxu0 0.0
        %4458 = vmatpush2.msra.mxu0 0.0
        %4459 = vmatprep.subr.mxu0 0.0
        %4460 = vmatpush2.msra.mxu0 0.0
        %4461 = vmatprep.subr.mxu0 0.0
        %4462 = vmatpush2.msra.mxu0 0.0
        %4463 = vmatprep.subr.mxu0 0.0
        %4464 = vmatpush2.msra.mxu0 0.0
        %4465 = vmatprep.subr.mxu0 0.0
        %4466 = vmatpush2.msra.mxu0 0.0
        %4467 = vmatprep.subr.mxu0 0.0
        %4468 = vmatpush2.msra.mxu0 0.0
        %4469 = vmatprep.mubr.f32.mxu0 0.0
        %v4470 = vand.u32 %v4398, 4294901760
        %v4471 = vsub.f32 %v4398, %v4470
        %v4472 = vand.u32 %v4471, 4294901760
        %v4473 = vsub.f32 %v4471, %v4472
        %v4474 = vand.u32 %v4473, 4294901760
        %4475 = vmatmul.mubr.f32.gmra.mxu0 %v4474
        %v4476 = vpop.f32.mrf.mxu0
        %v4477 = vadd.f32 0.0, %v4476
        %v4478 = vpop.f32.mrf.mxu0
        %4479 = vmatprep.mubr.f32.mxu0 0.0
        %v4480 = vand.u32 %v4401, 4294901760
        %v4481 = vsub.f32 %v4401, %v4480
        %v4482 = vand.u32 %v4481, 4294901760
        %v4483 = vsub.f32 %v4481, %v4482
        %v4484 = vand.u32 %v4483, 4294901760
        %4485 = vmatmul.mubr.f32.gmra.mxu0 %v4484
        %v4486 = vpop.f32.mrf.mxu0
        %v4487 = vadd.f32 0.0, %v4486
        %v4488 = vpop.f32.mrf.mxu0
        %4489 = vdwg.mxu0
        %4490 = vmatprep.subr.mxu0 0.0
        %4491 = vmatpush1.msra.mxu0 0.0
        %4492 = vmatprep.subr.mxu0 0.0
        %4493 = vmatpush1.msra.mxu0 0.0
        %4494 = vmatprep.subr.mxu0 0.0
        %4495 = vmatpush1.msra.mxu0 0.0
        %4496 = vmatprep.subr.mxu0 0.0
        %4497 = vmatpush1.msra.mxu0 0.0
        %4498 = vmatprep.subr.mxu0 0.0
        %4499 = vmatpush1.msra.mxu0 0.0
        %4500 = vmatprep.subr.mxu0 0.0
        %4501 = vmatpush1.msra.mxu0 0.0
        %4502 = vmatprep.subr.mxu0 0.0
        %4503 = vmatpush1.msra.mxu0 0.0
        %4504 = vmatprep.subr.mxu0 0.0
        %4505 = vmatpush1.msra.mxu0 0.0
        %4506 = vmatprep.subr.mxu0 0.0
        %4507 = vmatpush1.msra.mxu0 0.0
        %4508 = vmatprep.subr.mxu0 0.0
        %4509 = vmatpush1.msra.mxu0 0.0
        %4510 = vmatprep.subr.mxu0 0.0
        %4511 = vmatpush1.msra.mxu0 0.0
        %4512 = vmatprep.subr.mxu0 0.0
        %4513 = vmatpush1.msra.mxu0 0.0
        %4514 = vmatprep.subr.mxu0 0.0
        %4515 = vmatpush1.msra.mxu0 0.0
        %4516 = vmatprep.subr.mxu0 0.0
        %4517 = vmatpush1.msra.mxu0 0.0
        %4518 = vmatprep.subr.mxu0 0.0
        %v4519 = vand.u32 %v330, 4294901760
        %v4520 = vsub.f32 %v330, %v4519
        %v4521 = vand.u32 %v4520, 4294901760
        %v4522 = vsub.f32 %v4520, %v4521
        %v4523 = vand.u32 %v4522, 4294901760
        %4524 = vmatpush1.msra.mxu0 %v4523
        %4525 = vmatprep.subr.mxu0 0.0
        %v4526 = vand.u32 %v329, 4294901760
        %v4527 = vsub.f32 %v329, %v4526
        %v4528 = vand.u32 %v4527, 4294901760
        %v4529 = vsub.f32 %v4527, %v4528
        %v4530 = vand.u32 %v4529, 4294901760
        %4531 = vmatpush1.msra.mxu0 %v4530
        %4532 = vmatprep.subr.mxu0 0.0
        %4533 = vmatpush2.msra.mxu0 0.0
        %4534 = vmatprep.subr.mxu0 0.0
        %4535 = vmatpush2.msra.mxu0 0.0
        %4536 = vmatprep.subr.mxu0 0.0
        %4537 = vmatpush2.msra.mxu0 0.0
        %4538 = vmatprep.subr.mxu0 0.0
        %4539 = vmatpush2.msra.mxu0 0.0
        %4540 = vmatprep.subr.mxu0 0.0
        %4541 = vmatpush2.msra.mxu0 0.0
        %4542 = vmatprep.subr.mxu0 0.0
        %4543 = vmatpush2.msra.mxu0 0.0
        %4544 = vmatprep.subr.mxu0 0.0
        %4545 = vmatpush2.msra.mxu0 0.0
        %4546 = vmatprep.subr.mxu0 0.0
        %4547 = vmatpush2.msra.mxu0 0.0
        %4548 = vmatprep.subr.mxu0 0.0
        %4549 = vmatpush2.msra.mxu0 0.0
        %4550 = vmatprep.subr.mxu0 0.0
        %4551 = vmatpush2.msra.mxu0 0.0
        %4552 = vmatprep.subr.mxu0 0.0
        %4553 = vmatpush2.msra.mxu0 0.0
        %4554 = vmatprep.subr.mxu0 0.0
        %4555 = vmatpush2.msra.mxu0 0.0
        %4556 = vmatprep.subr.mxu0 0.0
        %4557 = vmatpush2.msra.mxu0 0.0
        %4558 = vmatprep.subr.mxu0 0.0
        %4559 = vmatpush2.msra.mxu0 0.0
        %4560 = vmatprep.subr.mxu0 0.0
        %4561 = vmatpush2.msra.mxu0 0.0
        %4562 = vmatprep.subr.mxu0 0.0
        %4563 = vmatpush2.msra.mxu0 0.0
        %4564 = vmatprep.mubr.f32.mxu0 0.0
        %v4565 = vand.u32 %v4398, 4294901760
        %4566 = vmatmul.mubr.f32.gmra.mxu0 %v4565
        %v4567 = vpop.f32.mrf.mxu0
        %v4568 = vadd.f32 %v4477, %v4567
        %v4569 = vpop.f32.mrf.mxu0
        %4570 = vmatprep.mubr.f32.mxu0 0.0
        %v4571 = vand.u32 %v4401, 4294901760
        %4572 = vmatmul.mubr.f32.gmra.mxu0 %v4571
        %v4573 = vpop.f32.mrf.mxu0
        %v4574 = vadd.f32 %v4487, %v4573
        %v4575 = vpop.f32.mrf.mxu0
        %4576 = vdwg.mxu0
        %4577 = vmatprep.subr.mxu0 0.0
        %4578 = vmatpush1.msra.mxu0 0.0
        %4579 = vmatprep.subr.mxu0 0.0
        %4580 = vmatpush1.msra.mxu0 0.0
        %4581 = vmatprep.subr.mxu0 0.0
        %4582 = vmatpush1.msra.mxu0 0.0
        %4583 = vmatprep.subr.mxu0 0.0
        %4584 = vmatpush1.msra.mxu0 0.0
        %4585 = vmatprep.subr.mxu0 0.0
        %4586 = vmatpush1.msra.mxu0 0.0
        %4587 = vmatprep.subr.mxu0 0.0
        %4588 = vmatpush1.msra.mxu0 0.0
        %4589 = vmatprep.subr.mxu0 0.0
        %4590 = vmatpush1.msra.mxu0 0.0
        %4591 = vmatprep.subr.mxu0 0.0
        %4592 = vmatpush1.msra.mxu0 0.0
        %4593 = vmatprep.subr.mxu0 0.0
        %4594 = vmatpush1.msra.mxu0 0.0
        %4595 = vmatprep.subr.mxu0 0.0
        %4596 = vmatpush1.msra.mxu0 0.0
        %4597 = vmatprep.subr.mxu0 0.0
        %4598 = vmatpush1.msra.mxu0 0.0
        %4599 = vmatprep.subr.mxu0 0.0
        %4600 = vmatpush1.msra.mxu0 0.0
        %4601 = vmatprep.subr.mxu0 0.0
        %4602 = vmatpush1.msra.mxu0 0.0
        %4603 = vmatprep.subr.mxu0 0.0
        %4604 = vmatpush1.msra.mxu0 0.0
        %4605 = vmatprep.subr.mxu0 0.0
        %v4606 = vand.u32 %v330, 4294901760
        %v4607 = vsub.f32 %v330, %v4606
        %4608 = vmatpush1.msra.mxu0 %v4607
        %4609 = vmatprep.subr.mxu0 0.0
        %v4610 = vand.u32 %v329, 4294901760
        %v4611 = vsub.f32 %v329, %v4610
        %4612 = vmatpush1.msra.mxu0 %v4611
        %4613 = vmatprep.subr.mxu0 0.0
        %4614 = vmatpush2.msra.mxu0 0.0
        %4615 = vmatprep.subr.mxu0 0.0
        %4616 = vmatpush2.msra.mxu0 0.0
        %4617 = vmatprep.subr.mxu0 0.0
        %4618 = vmatpush2.msra.mxu0 0.0
        %4619 = vmatprep.subr.mxu0 0.0
        %4620 = vmatpush2.msra.mxu0 0.0
        %4621 = vmatprep.subr.mxu0 0.0
        %4622 = vmatpush2.msra.mxu0 0.0
        %4623 = vmatprep.subr.mxu0 0.0
        %4624 = vmatpush2.msra.mxu0 0.0
        %4625 = vmatprep.subr.mxu0 0.0
        %4626 = vmatpush2.msra.mxu0 0.0
        %4627 = vmatprep.subr.mxu0 0.0
        %4628 = vmatpush2.msra.mxu0 0.0
        %4629 = vmatprep.subr.mxu0 0.0
        %4630 = vmatpush2.msra.mxu0 0.0
        %4631 = vmatprep.subr.mxu0 0.0
        %4632 = vmatpush2.msra.mxu0 0.0
        %4633 = vmatprep.subr.mxu0 0.0
        %4634 = vmatpush2.msra.mxu0 0.0
        %4635 = vmatprep.subr.mxu0 0.0
        %4636 = vmatpush2.msra.mxu0 0.0
        %4637 = vmatprep.subr.mxu0 0.0
        %4638 = vmatpush2.msra.mxu0 0.0
        %4639 = vmatprep.subr.mxu0 0.0
        %4640 = vmatpush2.msra.mxu0 0.0
        %4641 = vmatprep.subr.mxu0 0.0
        %4642 = vmatpush2.msra.mxu0 0.0
        %4643 = vmatprep.subr.mxu0 0.0
        %4644 = vmatpush2.msra.mxu0 0.0
        %4645 = vmatprep.mubr.f32.mxu0 0.0
        %v4646 = vand.u32 %v4398, 4294901760
        %v4647 = vsub.f32 %v4398, %v4646
        %4648 = vmatmul.mubr.f32.gmra.mxu0 %v4647
        %v4649 = vpop.f32.mrf.mxu0
        %v4650 = vadd.f32 %v4568, %v4649
        %v4651 = vpop.f32.mrf.mxu0
        %4652 = vmatprep.mubr.f32.mxu0 0.0
        %v4653 = vand.u32 %v4401, 4294901760
        %v4654 = vsub.f32 %v4401, %v4653
        %4655 = vmatmul.mubr.f32.gmra.mxu0 %v4654
        %v4656 = vpop.f32.mrf.mxu0
        %v4657 = vadd.f32 %v4574, %v4656
        %v4658 = vpop.f32.mrf.mxu0
        %4659 = vdwg.mxu0
        %4660 = vmatprep.subr.mxu0 0.0
        %4661 = vmatpush1.msra.mxu0 0.0
        %4662 = vmatprep.subr.mxu0 0.0
        %4663 = vmatpush1.msra.mxu0 0.0
        %4664 = vmatprep.subr.mxu0 0.0
        %4665 = vmatpush1.msra.mxu0 0.0
        %4666 = vmatprep.subr.mxu0 0.0
        %4667 = vmatpush1.msra.mxu0 0.0
        %4668 = vmatprep.subr.mxu0 0.0
        %4669 = vmatpush1.msra.mxu0 0.0
        %4670 = vmatprep.subr.mxu0 0.0
        %4671 = vmatpush1.msra.mxu0 0.0
        %4672 = vmatprep.subr.mxu0 0.0
        %4673 = vmatpush1.msra.mxu0 0.0
        %4674 = vmatprep.subr.mxu0 0.0
        %4675 = vmatpush1.msra.mxu0 0.0
        %4676 = vmatprep.subr.mxu0 0.0
        %4677 = vmatpush1.msra.mxu0 0.0
        %4678 = vmatprep.subr.mxu0 0.0
        %4679 = vmatpush1.msra.mxu0 0.0
        %4680 = vmatprep.subr.mxu0 0.0
        %4681 = vmatpush1.msra.mxu0 0.0
        %4682 = vmatprep.subr.mxu0 0.0
        %4683 = vmatpush1.msra.mxu0 0.0
        %4684 = vmatprep.subr.mxu0 0.0
        %4685 = vmatpush1.msra.mxu0 0.0
        %4686 = vmatprep.subr.mxu0 0.0
        %4687 = vmatpush1.msra.mxu0 0.0
        %4688 = vmatprep.subr.mxu0 0.0
        %v4689 = vand.u32 %v330, 4294901760
        %4690 = vmatpush1.msra.mxu0 %v4689
        %4691 = vmatprep.subr.mxu0 0.0
        %v4692 = vand.u32 %v329, 4294901760
        %4693 = vmatpush1.msra.mxu0 %v4692
        %4694 = vmatprep.subr.mxu0 0.0
        %4695 = vmatpush2.msra.mxu0 0.0
        %4696 = vmatprep.subr.mxu0 0.0
        %4697 = vmatpush2.msra.mxu0 0.0
        %4698 = vmatprep.subr.mxu0 0.0
        %4699 = vmatpush2.msra.mxu0 0.0
        %4700 = vmatprep.subr.mxu0 0.0
        %4701 = vmatpush2.msra.mxu0 0.0
        %4702 = vmatprep.subr.mxu0 0.0
        %4703 = vmatpush2.msra.mxu0 0.0
        %4704 = vmatprep.subr.mxu0 0.0
        %4705 = vmatpush2.msra.mxu0 0.0
        %4706 = vmatprep.subr.mxu0 0.0
        %4707 = vmatpush2.msra.mxu0 0.0
        %4708 = vmatprep.subr.mxu0 0.0
        %4709 = vmatpush2.msra.mxu0 0.0
        %4710 = vmatprep.subr.mxu0 0.0
        %4711 = vmatpush2.msra.mxu0 0.0
        %4712 = vmatprep.subr.mxu0 0.0
        %4713 = vmatpush2.msra.mxu0 0.0
        %4714 = vmatprep.subr.mxu0 0.0
        %4715 = vmatpush2.msra.mxu0 0.0
        %4716 = vmatprep.subr.mxu0 0.0
        %4717 = vmatpush2.msra.mxu0 0.0
        %4718 = vmatprep.subr.mxu0 0.0
        %4719 = vmatpush2.msra.mxu0 0.0
        %4720 = vmatprep.subr.mxu0 0.0
        %4721 = vmatpush2.msra.mxu0 0.0
        %4722 = vmatprep.subr.mxu0 0.0
        %4723 = vmatpush2.msra.mxu0 0.0
        %4724 = vmatprep.subr.mxu0 0.0
        %4725 = vmatpush2.msra.mxu0 0.0
        %4726 = vmatprep.mubr.f32.mxu0 0.0
        %v4727 = vand.u32 %v4398, 4294901760
        %v4728 = vsub.f32 %v4398, %v4727
        %v4729 = vand.u32 %v4728, 4294901760
        %4730 = vmatmul.mubr.f32.gmra.mxu0 %v4729
        %v4731 = vpop.f32.mrf.mxu0
        %v4732 = vadd.f32 %v4650, %v4731
        %v4733 = vpop.f32.mrf.mxu0
        %4734 = vmatprep.mubr.f32.mxu0 0.0
        %v4735 = vand.u32 %v4401, 4294901760
        %v4736 = vsub.f32 %v4401, %v4735
        %v4737 = vand.u32 %v4736, 4294901760
        %4738 = vmatmul.mubr.f32.gmra.mxu0 %v4737
        %v4739 = vpop.f32.mrf.mxu0
        %v4740 = vadd.f32 %v4657, %v4739
        %v4741 = vpop.f32.mrf.mxu0
        %4742 = vdwg.mxu0
        %4743 = vmatprep.subr.mxu0 0.0
        %4744 = vmatpush1.msra.mxu0 0.0
        %4745 = vmatprep.subr.mxu0 0.0
        %4746 = vmatpush1.msra.mxu0 0.0
        %4747 = vmatprep.subr.mxu0 0.0
        %4748 = vmatpush1.msra.mxu0 0.0
        %4749 = vmatprep.subr.mxu0 0.0
        %4750 = vmatpush1.msra.mxu0 0.0
        %4751 = vmatprep.subr.mxu0 0.0
        %4752 = vmatpush1.msra.mxu0 0.0
        %4753 = vmatprep.subr.mxu0 0.0
        %4754 = vmatpush1.msra.mxu0 0.0
        %4755 = vmatprep.subr.mxu0 0.0
        %4756 = vmatpush1.msra.mxu0 0.0
        %4757 = vmatprep.subr.mxu0 0.0
        %4758 = vmatpush1.msra.mxu0 0.0
        %4759 = vmatprep.subr.mxu0 0.0
        %4760 = vmatpush1.msra.mxu0 0.0
        %4761 = vmatprep.subr.mxu0 0.0
        %4762 = vmatpush1.msra.mxu0 0.0
        %4763 = vmatprep.subr.mxu0 0.0
        %4764 = vmatpush1.msra.mxu0 0.0
        %4765 = vmatprep.subr.mxu0 0.0
        %4766 = vmatpush1.msra.mxu0 0.0
        %4767 = vmatprep.subr.mxu0 0.0
        %4768 = vmatpush1.msra.mxu0 0.0
        %4769 = vmatprep.subr.mxu0 0.0
        %4770 = vmatpush1.msra.mxu0 0.0
        %4771 = vmatprep.subr.mxu0 0.0
        %v4772 = vand.u32 %v330, 4294901760
        %v4773 = vsub.f32 %v330, %v4772
        %v4774 = vand.u32 %v4773, 4294901760
        %4775 = vmatpush1.msra.mxu0 %v4774
        %4776 = vmatprep.subr.mxu0 0.0
        %v4777 = vand.u32 %v329, 4294901760
        %v4778 = vsub.f32 %v329, %v4777
        %v4779 = vand.u32 %v4778, 4294901760
        %4780 = vmatpush1.msra.mxu0 %v4779
        %4781 = vmatprep.subr.mxu0 0.0
        %4782 = vmatpush2.msra.mxu0 0.0
        %4783 = vmatprep.subr.mxu0 0.0
        %4784 = vmatpush2.msra.mxu0 0.0
        %4785 = vmatprep.subr.mxu0 0.0
        %4786 = vmatpush2.msra.mxu0 0.0
        %4787 = vmatprep.subr.mxu0 0.0
        %4788 = vmatpush2.msra.mxu0 0.0
        %4789 = vmatprep.subr.mxu0 0.0
        %4790 = vmatpush2.msra.mxu0 0.0
        %4791 = vmatprep.subr.mxu0 0.0
        %4792 = vmatpush2.msra.mxu0 0.0
        %4793 = vmatprep.subr.mxu0 0.0
        %4794 = vmatpush2.msra.mxu0 0.0
        %4795 = vmatprep.subr.mxu0 0.0
        %4796 = vmatpush2.msra.mxu0 0.0
        %4797 = vmatprep.subr.mxu0 0.0
        %4798 = vmatpush2.msra.mxu0 0.0
        %4799 = vmatprep.subr.mxu0 0.0
        %4800 = vmatpush2.msra.mxu0 0.0
        %4801 = vmatprep.subr.mxu0 0.0
        %4802 = vmatpush2.msra.mxu0 0.0
        %4803 = vmatprep.subr.mxu0 0.0
        %4804 = vmatpush2.msra.mxu0 0.0
        %4805 = vmatprep.subr.mxu0 0.0
        %4806 = vmatpush2.msra.mxu0 0.0
        %4807 = vmatprep.subr.mxu0 0.0
        %4808 = vmatpush2.msra.mxu0 0.0
        %4809 = vmatprep.subr.mxu0 0.0
        %4810 = vmatpush2.msra.mxu0 0.0
        %4811 = vmatprep.subr.mxu0 0.0
        %4812 = vmatpush2.msra.mxu0 0.0
        %4813 = vmatprep.mubr.f32.mxu0 0.0
        %v4814 = vand.u32 %v4398, 4294901760
        %4815 = vmatmul.mubr.f32.gmra.mxu0 %v4814
        %v4816 = vpop.f32.mrf.mxu0
        %v4817 = vadd.f32 %v4732, %v4816
        %v4818 = vpop.f32.mrf.mxu0
        %4819 = vmatprep.mubr.f32.mxu0 0.0
        %v4820 = vand.u32 %v4401, 4294901760
        %4821 = vmatmul.mubr.f32.gmra.mxu0 %v4820
        %v4822 = vpop.f32.mrf.mxu0
        %v4823 = vadd.f32 %v4740, %v4822
        %v4824 = vpop.f32.mrf.mxu0
        %4825 = vdwg.mxu0
        %4826 = vmatprep.subr.mxu0 0.0
        %4827 = vmatpush1.msra.mxu0 0.0
        %4828 = vmatprep.subr.mxu0 0.0
        %4829 = vmatpush1.msra.mxu0 0.0
        %4830 = vmatprep.subr.mxu0 0.0
        %4831 = vmatpush1.msra.mxu0 0.0
        %4832 = vmatprep.subr.mxu0 0.0
        %4833 = vmatpush1.msra.mxu0 0.0
        %4834 = vmatprep.subr.mxu0 0.0
        %4835 = vmatpush1.msra.mxu0 0.0
        %4836 = vmatprep.subr.mxu0 0.0
        %4837 = vmatpush1.msra.mxu0 0.0
        %4838 = vmatprep.subr.mxu0 0.0
        %4839 = vmatpush1.msra.mxu0 0.0
        %4840 = vmatprep.subr.mxu0 0.0
        %4841 = vmatpush1.msra.mxu0 0.0
        %4842 = vmatprep.subr.mxu0 0.0
        %4843 = vmatpush1.msra.mxu0 0.0
        %4844 = vmatprep.subr.mxu0 0.0
        %4845 = vmatpush1.msra.mxu0 0.0
        %4846 = vmatprep.subr.mxu0 0.0
        %4847 = vmatpush1.msra.mxu0 0.0
        %4848 = vmatprep.subr.mxu0 0.0
        %4849 = vmatpush1.msra.mxu0 0.0
        %4850 = vmatprep.subr.mxu0 0.0
        %4851 = vmatpush1.msra.mxu0 0.0
        %4852 = vmatprep.subr.mxu0 0.0
        %4853 = vmatpush1.msra.mxu0 0.0
        %4854 = vmatprep.subr.mxu0 0.0
        %v4855 = vand.u32 %v330, 4294901760
        %4856 = vmatpush1.msra.mxu0 %v4855
        %4857 = vmatprep.subr.mxu0 0.0
        %v4858 = vand.u32 %v329, 4294901760
        %4859 = vmatpush1.msra.mxu0 %v4858
        %4860 = vmatprep.subr.mxu0 0.0
        %4861 = vmatpush2.msra.mxu0 0.0
        %4862 = vmatprep.subr.mxu0 0.0
        %4863 = vmatpush2.msra.mxu0 0.0
        %4864 = vmatprep.subr.mxu0 0.0
        %4865 = vmatpush2.msra.mxu0 0.0
        %4866 = vmatprep.subr.mxu0 0.0
        %4867 = vmatpush2.msra.mxu0 0.0
        %4868 = vmatprep.subr.mxu0 0.0
        %4869 = vmatpush2.msra.mxu0 0.0
        %4870 = vmatprep.subr.mxu0 0.0
        %4871 = vmatpush2.msra.mxu0 0.0
        %4872 = vmatprep.subr.mxu0 0.0
        %4873 = vmatpush2.msra.mxu0 0.0
        %4874 = vmatprep.subr.mxu0 0.0
        %4875 = vmatpush2.msra.mxu0 0.0
        %4876 = vmatprep.subr.mxu0 0.0
        %4877 = vmatpush2.msra.mxu0 0.0
        %4878 = vmatprep.subr.mxu0 0.0
        %4879 = vmatpush2.msra.mxu0 0.0
        %4880 = vmatprep.subr.mxu0 0.0
        %4881 = vmatpush2.msra.mxu0 0.0
        %4882 = vmatprep.subr.mxu0 0.0
        %4883 = vmatpush2.msra.mxu0 0.0
        %4884 = vmatprep.subr.mxu0 0.0
        %4885 = vmatpush2.msra.mxu0 0.0
        %4886 = vmatprep.subr.mxu0 0.0
        %4887 = vmatpush2.msra.mxu0 0.0
        %4888 = vmatprep.subr.mxu0 0.0
        %4889 = vmatpush2.msra.mxu0 0.0
        %4890 = vmatprep.subr.mxu0 0.0
        %4891 = vmatpush2.msra.mxu0 0.0
        %4892 = vmatprep.mubr.f32.mxu0 0.0
        %v4893 = vand.u32 %v4398, 4294901760
        %4894 = vmatmul.mubr.f32.gmra.mxu0 %v4893
        %v4895 = vpop.f32.mrf.mxu0
        %v4896 = vadd.f32 %v4817, %v4895
        %v4897 = vpop.f32.mrf.mxu0
        %4898 = vmatprep.mubr.f32.mxu0 0.0
        %v4899 = vand.u32 %v4401, 4294901760
        %4900 = vmatmul.mubr.f32.gmra.mxu0 %v4899
        %v4901 = vpop.f32.mrf.mxu0
        %v4902 = vadd.f32 %v4823, %v4901
        %v4903 = vpop.f32.mrf.mxu0
        %4904 = vdwg.mxu0
        %v4906 = vsel %vm300, %v327, 0
        %v4909 = vsel %vm300, %v328, 0
        %4911 = vmatprep.subr.mxu0 0.0
        %4912 = vmatpush1.msra.mxu0 0.0
        %4913 = vmatprep.subr.mxu0 0.0
        %4914 = vmatpush1.msra.mxu0 0.0
        %4915 = vmatprep.subr.mxu0 0.0
        %4916 = vmatpush1.msra.mxu0 0.0
        %4917 = vmatprep.subr.mxu0 0.0
        %4918 = vmatpush1.msra.mxu0 0.0
        %4919 = vmatprep.subr.mxu0 0.0
        %4920 = vmatpush1.msra.mxu0 0.0
        %4921 = vmatprep.subr.mxu0 0.0
        %4922 = vmatpush1.msra.mxu0 0.0
        %4923 = vmatprep.subr.mxu0 0.0
        %4924 = vmatpush1.msra.mxu0 0.0
        %4925 = vmatprep.subr.mxu0 0.0
        %4926 = vmatpush1.msra.mxu0 0.0
        %4927 = vmatprep.subr.mxu0 0.0
        %4928 = vmatpush1.msra.mxu0 0.0
        %4929 = vmatprep.subr.mxu0 0.0
        %4930 = vmatpush1.msra.mxu0 0.0
        %4931 = vmatprep.subr.mxu0 0.0
        %4932 = vmatpush1.msra.mxu0 0.0
        %4933 = vmatprep.subr.mxu0 0.0
        %4934 = vmatpush1.msra.mxu0 0.0
        %4935 = vmatprep.subr.mxu0 0.0
        %4936 = vmatpush1.msra.mxu0 0.0
        %4937 = vmatprep.subr.mxu0 0.0
        %4938 = vmatpush1.msra.mxu0 0.0
        %4939 = vmatprep.subr.mxu0 0.0
        %v4940 = vand.u32 %v330, 4294901760
        %4941 = vmatpush1.msra.mxu0 %v4940
        %4942 = vmatprep.subr.mxu0 0.0
        %v4943 = vand.u32 %v329, 4294901760
        %4944 = vmatpush1.msra.mxu0 %v4943
        %4945 = vmatprep.subr.mxu0 0.0
        %4946 = vmatpush2.msra.mxu0 0.0
        %4947 = vmatprep.subr.mxu0 0.0
        %4948 = vmatpush2.msra.mxu0 0.0
        %4949 = vmatprep.subr.mxu0 0.0
        %4950 = vmatpush2.msra.mxu0 0.0
        %4951 = vmatprep.subr.mxu0 0.0
        %4952 = vmatpush2.msra.mxu0 0.0
        %4953 = vmatprep.subr.mxu0 0.0
        %4954 = vmatpush2.msra.mxu0 0.0
        %4955 = vmatprep.subr.mxu0 0.0
        %4956 = vmatpush2.msra.mxu0 0.0
        %4957 = vmatprep.subr.mxu0 0.0
        %4958 = vmatpush2.msra.mxu0 0.0
        %4959 = vmatprep.subr.mxu0 0.0
        %4960 = vmatpush2.msra.mxu0 0.0
        %4961 = vmatprep.subr.mxu0 0.0
        %4962 = vmatpush2.msra.mxu0 0.0
        %4963 = vmatprep.subr.mxu0 0.0
        %4964 = vmatpush2.msra.mxu0 0.0
        %4965 = vmatprep.subr.mxu0 0.0
        %4966 = vmatpush2.msra.mxu0 0.0
        %4967 = vmatprep.subr.mxu0 0.0
        %4968 = vmatpush2.msra.mxu0 0.0
        %4969 = vmatprep.subr.mxu0 0.0
        %4970 = vmatpush2.msra.mxu0 0.0
        %4971 = vmatprep.subr.mxu0 0.0
        %4972 = vmatpush2.msra.mxu0 0.0
        %4973 = vmatprep.subr.mxu0 0.0
        %4974 = vmatpush2.msra.mxu0 0.0
        %4975 = vmatprep.subr.mxu0 0.0
        %4976 = vmatpush2.msra.mxu0 0.0
        %4977 = vmatprep.mubr.f32.mxu0 0.0
        %v4978 = vand.u32 %v4906, 4294901760
        %v4979 = vsub.f32 %v4906, %v4978
        %v4980 = vand.u32 %v4979, 4294901760
        %v4981 = vsub.f32 %v4979, %v4980
        %v4982 = vand.u32 %v4981, 4294901760
        %4983 = vmatmul.mubr.f32.gmra.mxu0 %v4982
        %v4984 = vpop.f32.mrf.mxu0
        %v4985 = vadd.f32 0.0, %v4984
        %v4986 = vpop.f32.mrf.mxu0
        %4987 = vmatprep.mubr.f32.mxu0 0.0
        %v4988 = vand.u32 %v4909, 4294901760
        %v4989 = vsub.f32 %v4909, %v4988
        %v4990 = vand.u32 %v4989, 4294901760
        %v4991 = vsub.f32 %v4989, %v4990
        %v4992 = vand.u32 %v4991, 4294901760
        %4993 = vmatmul.mubr.f32.gmra.mxu0 %v4992
        %v4994 = vpop.f32.mrf.mxu0
        %v4995 = vadd.f32 0.0, %v4994
        %v4996 = vpop.f32.mrf.mxu0
        %4997 = vdwg.mxu0
        %4998 = vmatprep.subr.mxu0 0.0
        %4999 = vmatpush1.msra.mxu0 0.0
        %5000 = vmatprep.subr.mxu0 0.0
        %5001 = vmatpush1.msra.mxu0 0.0
        %5002 = vmatprep.subr.mxu0 0.0
        %5003 = vmatpush1.msra.mxu0 0.0
        %5004 = vmatprep.subr.mxu0 0.0
        %5005 = vmatpush1.msra.mxu0 0.0
        %5006 = vmatprep.subr.mxu0 0.0
        %5007 = vmatpush1.msra.mxu0 0.0
        %5008 = vmatprep.subr.mxu0 0.0
        %5009 = vmatpush1.msra.mxu0 0.0
        %5010 = vmatprep.subr.mxu0 0.0
        %5011 = vmatpush1.msra.mxu0 0.0
        %5012 = vmatprep.subr.mxu0 0.0
        %5013 = vmatpush1.msra.mxu0 0.0
        %5014 = vmatprep.subr.mxu0 0.0
        %5015 = vmatpush1.msra.mxu0 0.0
        %5016 = vmatprep.subr.mxu0 0.0
        %5017 = vmatpush1.msra.mxu0 0.0
        %5018 = vmatprep.subr.mxu0 0.0
        %5019 = vmatpush1.msra.mxu0 0.0
        %5020 = vmatprep.subr.mxu0 0.0
        %5021 = vmatpush1.msra.mxu0 0.0
        %5022 = vmatprep.subr.mxu0 0.0
        %5023 = vmatpush1.msra.mxu0 0.0
        %5024 = vmatprep.subr.mxu0 0.0
        %5025 = vmatpush1.msra.mxu0 0.0
        %5026 = vmatprep.subr.mxu0 0.0
        %v5027 = vand.u32 %v330, 4294901760
        %v5028 = vsub.f32 %v330, %v5027
        %v5029 = vand.u32 %v5028, 4294901760
        %v5030 = vsub.f32 %v5028, %v5029
        %v5031 = vand.u32 %v5030, 4294901760
        %5032 = vmatpush1.msra.mxu0 %v5031
        %5033 = vmatprep.subr.mxu0 0.0
        %v5034 = vand.u32 %v329, 4294901760
        %v5035 = vsub.f32 %v329, %v5034
        %v5036 = vand.u32 %v5035, 4294901760
        %v5037 = vsub.f32 %v5035, %v5036
        %v5038 = vand.u32 %v5037, 4294901760
        %5039 = vmatpush1.msra.mxu0 %v5038
        %5040 = vmatprep.subr.mxu0 0.0
        %5041 = vmatpush2.msra.mxu0 0.0
        %5042 = vmatprep.subr.mxu0 0.0
        %5043 = vmatpush2.msra.mxu0 0.0
        %5044 = vmatprep.subr.mxu0 0.0
        %5045 = vmatpush2.msra.mxu0 0.0
        %5046 = vmatprep.subr.mxu0 0.0
        %5047 = vmatpush2.msra.mxu0 0.0
        %5048 = vmatprep.subr.mxu0 0.0
        %5049 = vmatpush2.msra.mxu0 0.0
        %5050 = vmatprep.subr.mxu0 0.0
        %5051 = vmatpush2.msra.mxu0 0.0
        %5052 = vmatprep.subr.mxu0 0.0
        %5053 = vmatpush2.msra.mxu0 0.0
        %5054 = vmatprep.subr.mxu0 0.0
        %5055 = vmatpush2.msra.mxu0 0.0
        %5056 = vmatprep.subr.mxu0 0.0
        %5057 = vmatpush2.msra.mxu0 0.0
        %5058 = vmatprep.subr.mxu0 0.0
        %5059 = vmatpush2.msra.mxu0 0.0
        %5060 = vmatprep.subr.mxu0 0.0
        %5061 = vmatpush2.msra.mxu0 0.0
        %5062 = vmatprep.subr.mxu0 0.0
        %5063 = vmatpush2.msra.mxu0 0.0
        %5064 = vmatprep.subr.mxu0 0.0
        %5065 = vmatpush2.msra.mxu0 0.0
        %5066 = vmatprep.subr.mxu0 0.0
        %5067 = vmatpush2.msra.mxu0 0.0
        %5068 = vmatprep.subr.mxu0 0.0
        %5069 = vmatpush2.msra.mxu0 0.0
        %5070 = vmatprep.subr.mxu0 0.0
        %5071 = vmatpush2.msra.mxu0 0.0
        %5072 = vmatprep.mubr.f32.mxu0 0.0
        %v5073 = vand.u32 %v4906, 4294901760
        %5074 = vmatmul.mubr.f32.gmra.mxu0 %v5073
        %v5075 = vpop.f32.mrf.mxu0
        %v5076 = vadd.f32 %v4985, %v5075
        %v5077 = vpop.f32.mrf.mxu0
        %5078 = vmatprep.mubr.f32.mxu0 0.0
        %v5079 = vand.u32 %v4909, 4294901760
        %5080 = vmatmul.mubr.f32.gmra.mxu0 %v5079
        %v5081 = vpop.f32.mrf.mxu0
        %v5082 = vadd.f32 %v4995, %v5081
        %v5083 = vpop.f32.mrf.mxu0
        %5084 = vdwg.mxu0
        %5085 = vmatprep.subr.mxu0 0.0
        %5086 = vmatpush1.msra.mxu0 0.0
        %5087 = vmatprep.subr.mxu0 0.0
        %5088 = vmatpush1.msra.mxu0 0.0
        %5089 = vmatprep.subr.mxu0 0.0
        %5090 = vmatpush1.msra.mxu0 0.0
        %5091 = vmatprep.subr.mxu0 0.0
        %5092 = vmatpush1.msra.mxu0 0.0
        %5093 = vmatprep.subr.mxu0 0.0
        %5094 = vmatpush1.msra.mxu0 0.0
        %5095 = vmatprep.subr.mxu0 0.0
        %5096 = vmatpush1.msra.mxu0 0.0
        %5097 = vmatprep.subr.mxu0 0.0
        %5098 = vmatpush1.msra.mxu0 0.0
        %5099 = vmatprep.subr.mxu0 0.0
        %5100 = vmatpush1.msra.mxu0 0.0
        %5101 = vmatprep.subr.mxu0 0.0
        %5102 = vmatpush1.msra.mxu0 0.0
        %5103 = vmatprep.subr.mxu0 0.0
        %5104 = vmatpush1.msra.mxu0 0.0
        %5105 = vmatprep.subr.mxu0 0.0
        %5106 = vmatpush1.msra.mxu0 0.0
        %5107 = vmatprep.subr.mxu0 0.0
        %5108 = vmatpush1.msra.mxu0 0.0
        %5109 = vmatprep.subr.mxu0 0.0
        %5110 = vmatpush1.msra.mxu0 0.0
        %5111 = vmatprep.subr.mxu0 0.0
        %5112 = vmatpush1.msra.mxu0 0.0
        %5113 = vmatprep.subr.mxu0 0.0
        %v5114 = vand.u32 %v330, 4294901760
        %v5115 = vsub.f32 %v330, %v5114
        %5116 = vmatpush1.msra.mxu0 %v5115
        %5117 = vmatprep.subr.mxu0 0.0
        %v5118 = vand.u32 %v329, 4294901760
        %v5119 = vsub.f32 %v329, %v5118
        %5120 = vmatpush1.msra.mxu0 %v5119
        %5121 = vmatprep.subr.mxu0 0.0
        %5122 = vmatpush2.msra.mxu0 0.0
        %5123 = vmatprep.subr.mxu0 0.0
        %5124 = vmatpush2.msra.mxu0 0.0
        %5125 = vmatprep.subr.mxu0 0.0
        %5126 = vmatpush2.msra.mxu0 0.0
        %5127 = vmatprep.subr.mxu0 0.0
        %5128 = vmatpush2.msra.mxu0 0.0
        %5129 = vmatprep.subr.mxu0 0.0
        %5130 = vmatpush2.msra.mxu0 0.0
        %5131 = vmatprep.subr.mxu0 0.0
        %5132 = vmatpush2.msra.mxu0 0.0
        %5133 = vmatprep.subr.mxu0 0.0
        %5134 = vmatpush2.msra.mxu0 0.0
        %5135 = vmatprep.subr.mxu0 0.0
        %5136 = vmatpush2.msra.mxu0 0.0
        %5137 = vmatprep.subr.mxu0 0.0
        %5138 = vmatpush2.msra.mxu0 0.0
        %5139 = vmatprep.subr.mxu0 0.0
        %5140 = vmatpush2.msra.mxu0 0.0
        %5141 = vmatprep.subr.mxu0 0.0
        %5142 = vmatpush2.msra.mxu0 0.0
        %5143 = vmatprep.subr.mxu0 0.0
        %5144 = vmatpush2.msra.mxu0 0.0
        %5145 = vmatprep.subr.mxu0 0.0
        %5146 = vmatpush2.msra.mxu0 0.0
        %5147 = vmatprep.subr.mxu0 0.0
        %5148 = vmatpush2.msra.mxu0 0.0
        %5149 = vmatprep.subr.mxu0 0.0
        %5150 = vmatpush2.msra.mxu0 0.0
        %5151 = vmatprep.subr.mxu0 0.0
        %5152 = vmatpush2.msra.mxu0 0.0
        %5153 = vmatprep.mubr.f32.mxu0 0.0
        %v5154 = vand.u32 %v4906, 4294901760
        %v5155 = vsub.f32 %v4906, %v5154
        %5156 = vmatmul.mubr.f32.gmra.mxu0 %v5155
        %v5157 = vpop.f32.mrf.mxu0
        %v5158 = vadd.f32 %v5076, %v5157
        %v5159 = vpop.f32.mrf.mxu0
        %5160 = vmatprep.mubr.f32.mxu0 0.0
        %v5161 = vand.u32 %v4909, 4294901760
        %v5162 = vsub.f32 %v4909, %v5161
        %5163 = vmatmul.mubr.f32.gmra.mxu0 %v5162
        %v5164 = vpop.f32.mrf.mxu0
        %v5165 = vadd.f32 %v5082, %v5164
        %v5166 = vpop.f32.mrf.mxu0
        %5167 = vdwg.mxu0
        %5168 = vmatprep.subr.mxu0 0.0
        %5169 = vmatpush1.msra.mxu0 0.0
        %5170 = vmatprep.subr.mxu0 0.0
        %5171 = vmatpush1.msra.mxu0 0.0
        %5172 = vmatprep.subr.mxu0 0.0
        %5173 = vmatpush1.msra.mxu0 0.0
        %5174 = vmatprep.subr.mxu0 0.0
        %5175 = vmatpush1.msra.mxu0 0.0
        %5176 = vmatprep.subr.mxu0 0.0
        %5177 = vmatpush1.msra.mxu0 0.0
        %5178 = vmatprep.subr.mxu0 0.0
        %5179 = vmatpush1.msra.mxu0 0.0
        %5180 = vmatprep.subr.mxu0 0.0
        %5181 = vmatpush1.msra.mxu0 0.0
        %5182 = vmatprep.subr.mxu0 0.0
        %5183 = vmatpush1.msra.mxu0 0.0
        %5184 = vmatprep.subr.mxu0 0.0
        %5185 = vmatpush1.msra.mxu0 0.0
        %5186 = vmatprep.subr.mxu0 0.0
        %5187 = vmatpush1.msra.mxu0 0.0
        %5188 = vmatprep.subr.mxu0 0.0
        %5189 = vmatpush1.msra.mxu0 0.0
        %5190 = vmatprep.subr.mxu0 0.0
        %5191 = vmatpush1.msra.mxu0 0.0
        %5192 = vmatprep.subr.mxu0 0.0
        %5193 = vmatpush1.msra.mxu0 0.0
        %5194 = vmatprep.subr.mxu0 0.0
        %5195 = vmatpush1.msra.mxu0 0.0
        %5196 = vmatprep.subr.mxu0 0.0
        %v5197 = vand.u32 %v330, 4294901760
        %5198 = vmatpush1.msra.mxu0 %v5197
        %5199 = vmatprep.subr.mxu0 0.0
        %v5200 = vand.u32 %v329, 4294901760
        %5201 = vmatpush1.msra.mxu0 %v5200
        %5202 = vmatprep.subr.mxu0 0.0
        %5203 = vmatpush2.msra.mxu0 0.0
        %5204 = vmatprep.subr.mxu0 0.0
        %5205 = vmatpush2.msra.mxu0 0.0
        %5206 = vmatprep.subr.mxu0 0.0
        %5207 = vmatpush2.msra.mxu0 0.0
        %5208 = vmatprep.subr.mxu0 0.0
        %5209 = vmatpush2.msra.mxu0 0.0
        %5210 = vmatprep.subr.mxu0 0.0
        %5211 = vmatpush2.msra.mxu0 0.0
        %5212 = vmatprep.subr.mxu0 0.0
        %5213 = vmatpush2.msra.mxu0 0.0
        %5214 = vmatprep.subr.mxu0 0.0
        %5215 = vmatpush2.msra.mxu0 0.0
        %5216 = vmatprep.subr.mxu0 0.0
        %5217 = vmatpush2.msra.mxu0 0.0
        %5218 = vmatprep.subr.mxu0 0.0
        %5219 = vmatpush2.msra.mxu0 0.0
        %5220 = vmatprep.subr.mxu0 0.0
        %5221 = vmatpush2.msra.mxu0 0.0
        %5222 = vmatprep.subr.mxu0 0.0
        %5223 = vmatpush2.msra.mxu0 0.0
        %5224 = vmatprep.subr.mxu0 0.0
        %5225 = vmatpush2.msra.mxu0 0.0
        %5226 = vmatprep.subr.mxu0 0.0
        %5227 = vmatpush2.msra.mxu0 0.0
        %5228 = vmatprep.subr.mxu0 0.0
        %5229 = vmatpush2.msra.mxu0 0.0
        %5230 = vmatprep.subr.mxu0 0.0
        %5231 = vmatpush2.msra.mxu0 0.0
        %5232 = vmatprep.subr.mxu0 0.0
        %5233 = vmatpush2.msra.mxu0 0.0
        %5234 = vmatprep.mubr.f32.mxu0 0.0
        %v5235 = vand.u32 %v4906, 4294901760
        %v5236 = vsub.f32 %v4906, %v5235
        %v5237 = vand.u32 %v5236, 4294901760
        %5238 = vmatmul.mubr.f32.gmra.mxu0 %v5237
        %v5239 = vpop.f32.mrf.mxu0
        %v5240 = vadd.f32 %v5158, %v5239
        %v5241 = vpop.f32.mrf.mxu0
        %5242 = vmatprep.mubr.f32.mxu0 0.0
        %v5243 = vand.u32 %v4909, 4294901760
        %v5244 = vsub.f32 %v4909, %v5243
        %v5245 = vand.u32 %v5244, 4294901760
        %5246 = vmatmul.mubr.f32.gmra.mxu0 %v5245
        %v5247 = vpop.f32.mrf.mxu0
        %v5248 = vadd.f32 %v5165, %v5247
        %v5249 = vpop.f32.mrf.mxu0
        %5250 = vdwg.mxu0
        %5251 = vmatprep.subr.mxu0 0.0
        %5252 = vmatpush1.msra.mxu0 0.0
        %5253 = vmatprep.subr.mxu0 0.0
        %5254 = vmatpush1.msra.mxu0 0.0
        %5255 = vmatprep.subr.mxu0 0.0
        %5256 = vmatpush1.msra.mxu0 0.0
        %5257 = vmatprep.subr.mxu0 0.0
        %5258 = vmatpush1.msra.mxu0 0.0
        %5259 = vmatprep.subr.mxu0 0.0
        %5260 = vmatpush1.msra.mxu0 0.0
        %5261 = vmatprep.subr.mxu0 0.0
        %5262 = vmatpush1.msra.mxu0 0.0
        %5263 = vmatprep.subr.mxu0 0.0
        %5264 = vmatpush1.msra.mxu0 0.0
        %5265 = vmatprep.subr.mxu0 0.0
        %5266 = vmatpush1.msra.mxu0 0.0
        %5267 = vmatprep.subr.mxu0 0.0
        %5268 = vmatpush1.msra.mxu0 0.0
        %5269 = vmatprep.subr.mxu0 0.0
        %5270 = vmatpush1.msra.mxu0 0.0
        %5271 = vmatprep.subr.mxu0 0.0
        %5272 = vmatpush1.msra.mxu0 0.0
        %5273 = vmatprep.subr.mxu0 0.0
        %5274 = vmatpush1.msra.mxu0 0.0
        %5275 = vmatprep.subr.mxu0 0.0
        %5276 = vmatpush1.msra.mxu0 0.0
        %5277 = vmatprep.subr.mxu0 0.0
        %5278 = vmatpush1.msra.mxu0 0.0
        %5279 = vmatprep.subr.mxu0 0.0
        %v5280 = vand.u32 %v330, 4294901760
        %v5281 = vsub.f32 %v330, %v5280
        %v5282 = vand.u32 %v5281, 4294901760
        %5283 = vmatpush1.msra.mxu0 %v5282
        %5284 = vmatprep.subr.mxu0 0.0
        %v5285 = vand.u32 %v329, 4294901760
        %v5286 = vsub.f32 %v329, %v5285
        %v5287 = vand.u32 %v5286, 4294901760
        %5288 = vmatpush1.msra.mxu0 %v5287
        %5289 = vmatprep.subr.mxu0 0.0
        %5290 = vmatpush2.msra.mxu0 0.0
        %5291 = vmatprep.subr.mxu0 0.0
        %5292 = vmatpush2.msra.mxu0 0.0
        %5293 = vmatprep.subr.mxu0 0.0
        %5294 = vmatpush2.msra.mxu0 0.0
        %5295 = vmatprep.subr.mxu0 0.0
        %5296 = vmatpush2.msra.mxu0 0.0
        %5297 = vmatprep.subr.mxu0 0.0
        %5298 = vmatpush2.msra.mxu0 0.0
        %5299 = vmatprep.subr.mxu0 0.0
        %5300 = vmatpush2.msra.mxu0 0.0
        %5301 = vmatprep.subr.mxu0 0.0
        %5302 = vmatpush2.msra.mxu0 0.0
        %5303 = vmatprep.subr.mxu0 0.0
        %5304 = vmatpush2.msra.mxu0 0.0
        %5305 = vmatprep.subr.mxu0 0.0
        %5306 = vmatpush2.msra.mxu0 0.0
        %5307 = vmatprep.subr.mxu0 0.0
        %5308 = vmatpush2.msra.mxu0 0.0
        %5309 = vmatprep.subr.mxu0 0.0
        %5310 = vmatpush2.msra.mxu0 0.0
        %5311 = vmatprep.subr.mxu0 0.0
        %5312 = vmatpush2.msra.mxu0 0.0
        %5313 = vmatprep.subr.mxu0 0.0
        %5314 = vmatpush2.msra.mxu0 0.0
        %5315 = vmatprep.subr.mxu0 0.0
        %5316 = vmatpush2.msra.mxu0 0.0
        %5317 = vmatprep.subr.mxu0 0.0
        %5318 = vmatpush2.msra.mxu0 0.0
        %5319 = vmatprep.subr.mxu0 0.0
        %5320 = vmatpush2.msra.mxu0 0.0
        %5321 = vmatprep.mubr.f32.mxu0 0.0
        %v5322 = vand.u32 %v4906, 4294901760
        %5323 = vmatmul.mubr.f32.gmra.mxu0 %v5322
        %v5324 = vpop.f32.mrf.mxu0
        %v5325 = vadd.f32 %v5240, %v5324
        %v5326 = vpop.f32.mrf.mxu0
        %5327 = vmatprep.mubr.f32.mxu0 0.0
        %v5328 = vand.u32 %v4909, 4294901760
        %5329 = vmatmul.mubr.f32.gmra.mxu0 %v5328
        %v5330 = vpop.f32.mrf.mxu0
        %v5331 = vadd.f32 %v5248, %v5330
        %v5332 = vpop.f32.mrf.mxu0
        %5333 = vdwg.mxu0
        %5334 = vmatprep.subr.mxu0 0.0
        %5335 = vmatpush1.msra.mxu0 0.0
        %5336 = vmatprep.subr.mxu0 0.0
        %5337 = vmatpush1.msra.mxu0 0.0
        %5338 = vmatprep.subr.mxu0 0.0
        %5339 = vmatpush1.msra.mxu0 0.0
        %5340 = vmatprep.subr.mxu0 0.0
        %5341 = vmatpush1.msra.mxu0 0.0
        %5342 = vmatprep.subr.mxu0 0.0
        %5343 = vmatpush1.msra.mxu0 0.0
        %5344 = vmatprep.subr.mxu0 0.0
        %5345 = vmatpush1.msra.mxu0 0.0
        %5346 = vmatprep.subr.mxu0 0.0
        %5347 = vmatpush1.msra.mxu0 0.0
        %5348 = vmatprep.subr.mxu0 0.0
        %5349 = vmatpush1.msra.mxu0 0.0
        %5350 = vmatprep.subr.mxu0 0.0
        %5351 = vmatpush1.msra.mxu0 0.0
        %5352 = vmatprep.subr.mxu0 0.0
        %5353 = vmatpush1.msra.mxu0 0.0
        %5354 = vmatprep.subr.mxu0 0.0
        %5355 = vmatpush1.msra.mxu0 0.0
        %5356 = vmatprep.subr.mxu0 0.0
        %5357 = vmatpush1.msra.mxu0 0.0
        %5358 = vmatprep.subr.mxu0 0.0
        %5359 = vmatpush1.msra.mxu0 0.0
        %5360 = vmatprep.subr.mxu0 0.0
        %5361 = vmatpush1.msra.mxu0 0.0
        %5362 = vmatprep.subr.mxu0 0.0
        %v5363 = vand.u32 %v330, 4294901760
        %5364 = vmatpush1.msra.mxu0 %v5363
        %5365 = vmatprep.subr.mxu0 0.0
        %v5366 = vand.u32 %v329, 4294901760
        %5367 = vmatpush1.msra.mxu0 %v5366
        %5368 = vmatprep.subr.mxu0 0.0
        %5369 = vmatpush2.msra.mxu0 0.0
        %5370 = vmatprep.subr.mxu0 0.0
        %5371 = vmatpush2.msra.mxu0 0.0
        %5372 = vmatprep.subr.mxu0 0.0
        %5373 = vmatpush2.msra.mxu0 0.0
        %5374 = vmatprep.subr.mxu0 0.0
        %5375 = vmatpush2.msra.mxu0 0.0
        %5376 = vmatprep.subr.mxu0 0.0
        %5377 = vmatpush2.msra.mxu0 0.0
        %5378 = vmatprep.subr.mxu0 0.0
        %5379 = vmatpush2.msra.mxu0 0.0
        %5380 = vmatprep.subr.mxu0 0.0
        %5381 = vmatpush2.msra.mxu0 0.0
        %5382 = vmatprep.subr.mxu0 0.0
        %5383 = vmatpush2.msra.mxu0 0.0
        %5384 = vmatprep.subr.mxu0 0.0
        %5385 = vmatpush2.msra.mxu0 0.0
        %5386 = vmatprep.subr.mxu0 0.0
        %5387 = vmatpush2.msra.mxu0 0.0
        %5388 = vmatprep.subr.mxu0 0.0
        %5389 = vmatpush2.msra.mxu0 0.0
        %5390 = vmatprep.subr.mxu0 0.0
        %5391 = vmatpush2.msra.mxu0 0.0
        %5392 = vmatprep.subr.mxu0 0.0
        %5393 = vmatpush2.msra.mxu0 0.0
        %5394 = vmatprep.subr.mxu0 0.0
        %5395 = vmatpush2.msra.mxu0 0.0
        %5396 = vmatprep.subr.mxu0 0.0
        %5397 = vmatpush2.msra.mxu0 0.0
        %5398 = vmatprep.subr.mxu0 0.0
        %5399 = vmatpush2.msra.mxu0 0.0
        %5400 = vmatprep.mubr.f32.mxu0 0.0
        %v5401 = vand.u32 %v4906, 4294901760
        %5402 = vmatmul.mubr.f32.gmra.mxu0 %v5401
        %v5403 = vpop.f32.mrf.mxu0
        %v5404 = vadd.f32 %v5325, %v5403
        %v5405 = vpop.f32.mrf.mxu0
        %5406 = vmatprep.mubr.f32.mxu0 0.0
        %v5407 = vand.u32 %v4909, 4294901760
        %5408 = vmatmul.mubr.f32.gmra.mxu0 %v5407
        %v5409 = vpop.f32.mrf.mxu0
        %v5410 = vadd.f32 %v5331, %v5409
        %v5411 = vpop.f32.mrf.mxu0
        %5412 = vdwg.mxu0
        %v5414 = vsel %vm300, %v331, 0
        %v5417 = vsel %vm300, %v332, 0
        %5419 = vmatprep.subr.mxu0 0.0
        %5420 = vmatpush1.msra.mxu0 0.0
        %5421 = vmatprep.subr.mxu0 0.0
        %5422 = vmatpush1.msra.mxu0 0.0
        %5423 = vmatprep.subr.mxu0 0.0
        %5424 = vmatpush1.msra.mxu0 0.0
        %5425 = vmatprep.subr.mxu0 0.0
        %5426 = vmatpush1.msra.mxu0 0.0
        %5427 = vmatprep.subr.mxu0 0.0
        %5428 = vmatpush1.msra.mxu0 0.0
        %5429 = vmatprep.subr.mxu0 0.0
        %5430 = vmatpush1.msra.mxu0 0.0
        %5431 = vmatprep.subr.mxu0 0.0
        %5432 = vmatpush1.msra.mxu0 0.0
        %5433 = vmatprep.subr.mxu0 0.0
        %5434 = vmatpush1.msra.mxu0 0.0
        %5435 = vmatprep.subr.mxu0 0.0
        %5436 = vmatpush1.msra.mxu0 0.0
        %5437 = vmatprep.subr.mxu0 0.0
        %5438 = vmatpush1.msra.mxu0 0.0
        %5439 = vmatprep.subr.mxu0 0.0
        %5440 = vmatpush1.msra.mxu0 0.0
        %5441 = vmatprep.subr.mxu0 0.0
        %5442 = vmatpush1.msra.mxu0 0.0
        %5443 = vmatprep.subr.mxu0 0.0
        %5444 = vmatpush1.msra.mxu0 0.0
        %5445 = vmatprep.subr.mxu0 0.0
        %5446 = vmatpush1.msra.mxu0 0.0
        %5447 = vmatprep.subr.mxu0 0.0
        %v5448 = vand.u32 %v838, 4294901760
        %5449 = vmatpush1.msra.mxu0 %v5448
        %5450 = vmatprep.subr.mxu0 0.0
        %v5451 = vand.u32 %v832, 4294901760
        %5452 = vmatpush1.msra.mxu0 %v5451
        %5453 = vmatprep.subr.mxu0 0.0
        %5454 = vmatpush2.msra.mxu0 0.0
        %5455 = vmatprep.subr.mxu0 0.0
        %5456 = vmatpush2.msra.mxu0 0.0
        %5457 = vmatprep.subr.mxu0 0.0
        %5458 = vmatpush2.msra.mxu0 0.0
        %5459 = vmatprep.subr.mxu0 0.0
        %5460 = vmatpush2.msra.mxu0 0.0
        %5461 = vmatprep.subr.mxu0 0.0
        %5462 = vmatpush2.msra.mxu0 0.0
        %5463 = vmatprep.subr.mxu0 0.0
        %5464 = vmatpush2.msra.mxu0 0.0
        %5465 = vmatprep.subr.mxu0 0.0
        %5466 = vmatpush2.msra.mxu0 0.0
        %5467 = vmatprep.subr.mxu0 0.0
        %5468 = vmatpush2.msra.mxu0 0.0
        %5469 = vmatprep.subr.mxu0 0.0
        %5470 = vmatpush2.msra.mxu0 0.0
        %5471 = vmatprep.subr.mxu0 0.0
        %5472 = vmatpush2.msra.mxu0 0.0
        %5473 = vmatprep.subr.mxu0 0.0
        %5474 = vmatpush2.msra.mxu0 0.0
        %5475 = vmatprep.subr.mxu0 0.0
        %5476 = vmatpush2.msra.mxu0 0.0
        %5477 = vmatprep.subr.mxu0 0.0
        %5478 = vmatpush2.msra.mxu0 0.0
        %5479 = vmatprep.subr.mxu0 0.0
        %5480 = vmatpush2.msra.mxu0 0.0
        %5481 = vmatprep.subr.mxu0 0.0
        %5482 = vmatpush2.msra.mxu0 0.0
        %5483 = vmatprep.subr.mxu0 0.0
        %5484 = vmatpush2.msra.mxu0 0.0
        %5485 = vmatprep.mubr.f32.mxu0 0.0
        %v5486 = vand.u32 %v5414, 4294901760
        %v5487 = vsub.f32 %v5414, %v5486
        %v5488 = vand.u32 %v5487, 4294901760
        %v5489 = vsub.f32 %v5487, %v5488
        %v5490 = vand.u32 %v5489, 4294901760
        %5491 = vmatmul.mubr.f32.gmra.mxu0 %v5490
        %v5492 = vpop.f32.mrf.mxu0
        %v5493 = vadd.f32 0.0, %v5492
        %v5494 = vpop.f32.mrf.mxu0
        %5495 = vmatprep.mubr.f32.mxu0 0.0
        %v5496 = vand.u32 %v5417, 4294901760
        %v5497 = vsub.f32 %v5417, %v5496
        %v5498 = vand.u32 %v5497, 4294901760
        %v5499 = vsub.f32 %v5497, %v5498
        %v5500 = vand.u32 %v5499, 4294901760
        %5501 = vmatmul.mubr.f32.gmra.mxu0 %v5500
        %v5502 = vpop.f32.mrf.mxu0
        %v5503 = vadd.f32 0.0, %v5502
        %v5504 = vpop.f32.mrf.mxu0
        %5505 = vdwg.mxu0
        %5506 = vmatprep.subr.mxu0 0.0
        %5507 = vmatpush1.msra.mxu0 0.0
        %5508 = vmatprep.subr.mxu0 0.0
        %5509 = vmatpush1.msra.mxu0 0.0
        %5510 = vmatprep.subr.mxu0 0.0
        %5511 = vmatpush1.msra.mxu0 0.0
        %5512 = vmatprep.subr.mxu0 0.0
        %5513 = vmatpush1.msra.mxu0 0.0
        %5514 = vmatprep.subr.mxu0 0.0
        %5515 = vmatpush1.msra.mxu0 0.0
        %5516 = vmatprep.subr.mxu0 0.0
        %5517 = vmatpush1.msra.mxu0 0.0
        %5518 = vmatprep.subr.mxu0 0.0
        %5519 = vmatpush1.msra.mxu0 0.0
        %5520 = vmatprep.subr.mxu0 0.0
        %5521 = vmatpush1.msra.mxu0 0.0
        %5522 = vmatprep.subr.mxu0 0.0
        %5523 = vmatpush1.msra.mxu0 0.0
        %5524 = vmatprep.subr.mxu0 0.0
        %5525 = vmatpush1.msra.mxu0 0.0
        %5526 = vmatprep.subr.mxu0 0.0
        %5527 = vmatpush1.msra.mxu0 0.0
        %5528 = vmatprep.subr.mxu0 0.0
        %5529 = vmatpush1.msra.mxu0 0.0
        %5530 = vmatprep.subr.mxu0 0.0
        %5531 = vmatpush1.msra.mxu0 0.0
        %5532 = vmatprep.subr.mxu0 0.0
        %5533 = vmatpush1.msra.mxu0 0.0
        %5534 = vmatprep.subr.mxu0 0.0
        %v5535 = vand.u32 %v838, 4294901760
        %v5536 = vsub.f32 %v838, %v5535
        %v5537 = vand.u32 %v5536, 4294901760
        %v5538 = vsub.f32 %v5536, %v5537
        %v5539 = vand.u32 %v5538, 4294901760
        %5540 = vmatpush1.msra.mxu0 %v5539
        %5541 = vmatprep.subr.mxu0 0.0
        %v5542 = vand.u32 %v832, 4294901760
        %v5543 = vsub.f32 %v832, %v5542
        %v5544 = vand.u32 %v5543, 4294901760
        %v5545 = vsub.f32 %v5543, %v5544
        %v5546 = vand.u32 %v5545, 4294901760
        %5547 = vmatpush1.msra.mxu0 %v5546
        %5548 = vmatprep.subr.mxu0 0.0
        %5549 = vmatpush2.msra.mxu0 0.0
        %5550 = vmatprep.subr.mxu0 0.0
        %5551 = vmatpush2.msra.mxu0 0.0
        %5552 = vmatprep.subr.mxu0 0.0
        %5553 = vmatpush2.msra.mxu0 0.0
        %5554 = vmatprep.subr.mxu0 0.0
        %5555 = vmatpush2.msra.mxu0 0.0
        %5556 = vmatprep.subr.mxu0 0.0
        %5557 = vmatpush2.msra.mxu0 0.0
        %5558 = vmatprep.subr.mxu0 0.0
        %5559 = vmatpush2.msra.mxu0 0.0
        %5560 = vmatprep.subr.mxu0 0.0
        %5561 = vmatpush2.msra.mxu0 0.0
        %5562 = vmatprep.subr.mxu0 0.0
        %5563 = vmatpush2.msra.mxu0 0.0
        %5564 = vmatprep.subr.mxu0 0.0
        %5565 = vmatpush2.msra.mxu0 0.0
        %5566 = vmatprep.subr.mxu0 0.0
        %5567 = vmatpush2.msra.mxu0 0.0
        %5568 = vmatprep.subr.mxu0 0.0
        %5569 = vmatpush2.msra.mxu0 0.0
        %5570 = vmatprep.subr.mxu0 0.0
        %5571 = vmatpush2.msra.mxu0 0.0
        %5572 = vmatprep.subr.mxu0 0.0
        %5573 = vmatpush2.msra.mxu0 0.0
        %5574 = vmatprep.subr.mxu0 0.0
        %5575 = vmatpush2.msra.mxu0 0.0
        %5576 = vmatprep.subr.mxu0 0.0
        %5577 = vmatpush2.msra.mxu0 0.0
        %5578 = vmatprep.subr.mxu0 0.0
        %5579 = vmatpush2.msra.mxu0 0.0
        %5580 = vmatprep.mubr.f32.mxu0 0.0
        %v5581 = vand.u32 %v5414, 4294901760
        %5582 = vmatmul.mubr.f32.gmra.mxu0 %v5581
        %v5583 = vpop.f32.mrf.mxu0
        %v5584 = vadd.f32 %v5493, %v5583
        %v5585 = vpop.f32.mrf.mxu0
        %5586 = vmatprep.mubr.f32.mxu0 0.0
        %v5587 = vand.u32 %v5417, 4294901760
        %5588 = vmatmul.mubr.f32.gmra.mxu0 %v5587
        %v5589 = vpop.f32.mrf.mxu0
        %v5590 = vadd.f32 %v5503, %v5589
        %v5591 = vpop.f32.mrf.mxu0
        %5592 = vdwg.mxu0
        %5593 = vmatprep.subr.mxu0 0.0
        %5594 = vmatpush1.msra.mxu0 0.0
        %5595 = vmatprep.subr.mxu0 0.0
        %5596 = vmatpush1.msra.mxu0 0.0
        %5597 = vmatprep.subr.mxu0 0.0
        %5598 = vmatpush1.msra.mxu0 0.0
        %5599 = vmatprep.subr.mxu0 0.0
        %5600 = vmatpush1.msra.mxu0 0.0
        %5601 = vmatprep.subr.mxu0 0.0
        %5602 = vmatpush1.msra.mxu0 0.0
        %5603 = vmatprep.subr.mxu0 0.0
        %5604 = vmatpush1.msra.mxu0 0.0
        %5605 = vmatprep.subr.mxu0 0.0
        %5606 = vmatpush1.msra.mxu0 0.0
        %5607 = vmatprep.subr.mxu0 0.0
        %5608 = vmatpush1.msra.mxu0 0.0
        %5609 = vmatprep.subr.mxu0 0.0
        %5610 = vmatpush1.msra.mxu0 0.0
        %5611 = vmatprep.subr.mxu0 0.0
        %5612 = vmatpush1.msra.mxu0 0.0
        %5613 = vmatprep.subr.mxu0 0.0
        %5614 = vmatpush1.msra.mxu0 0.0
        %5615 = vmatprep.subr.mxu0 0.0
        %5616 = vmatpush1.msra.mxu0 0.0
        %5617 = vmatprep.subr.mxu0 0.0
        %5618 = vmatpush1.msra.mxu0 0.0
        %5619 = vmatprep.subr.mxu0 0.0
        %5620 = vmatpush1.msra.mxu0 0.0
        %5621 = vmatprep.subr.mxu0 0.0
        %v5622 = vand.u32 %v838, 4294901760
        %v5623 = vsub.f32 %v838, %v5622
        %5624 = vmatpush1.msra.mxu0 %v5623
        %5625 = vmatprep.subr.mxu0 0.0
        %v5626 = vand.u32 %v832, 4294901760
        %v5627 = vsub.f32 %v832, %v5626
        %5628 = vmatpush1.msra.mxu0 %v5627
        %5629 = vmatprep.subr.mxu0 0.0
        %5630 = vmatpush2.msra.mxu0 0.0
        %5631 = vmatprep.subr.mxu0 0.0
        %5632 = vmatpush2.msra.mxu0 0.0
        %5633 = vmatprep.subr.mxu0 0.0
        %5634 = vmatpush2.msra.mxu0 0.0
        %5635 = vmatprep.subr.mxu0 0.0
        %5636 = vmatpush2.msra.mxu0 0.0
        %5637 = vmatprep.subr.mxu0 0.0
        %5638 = vmatpush2.msra.mxu0 0.0
        %5639 = vmatprep.subr.mxu0 0.0
        %5640 = vmatpush2.msra.mxu0 0.0
        %5641 = vmatprep.subr.mxu0 0.0
        %5642 = vmatpush2.msra.mxu0 0.0
        %5643 = vmatprep.subr.mxu0 0.0
        %5644 = vmatpush2.msra.mxu0 0.0
        %5645 = vmatprep.subr.mxu0 0.0
        %5646 = vmatpush2.msra.mxu0 0.0
        %5647 = vmatprep.subr.mxu0 0.0
        %5648 = vmatpush2.msra.mxu0 0.0
        %5649 = vmatprep.subr.mxu0 0.0
        %5650 = vmatpush2.msra.mxu0 0.0
        %5651 = vmatprep.subr.mxu0 0.0
        %5652 = vmatpush2.msra.mxu0 0.0
        %5653 = vmatprep.subr.mxu0 0.0
        %5654 = vmatpush2.msra.mxu0 0.0
        %5655 = vmatprep.subr.mxu0 0.0
        %5656 = vmatpush2.msra.mxu0 0.0
        %5657 = vmatprep.subr.mxu0 0.0
        %5658 = vmatpush2.msra.mxu0 0.0
        %5659 = vmatprep.subr.mxu0 0.0
        %5660 = vmatpush2.msra.mxu0 0.0
        %5661 = vmatprep.mubr.f32.mxu0 0.0
        %v5662 = vand.u32 %v5414, 4294901760
        %v5663 = vsub.f32 %v5414, %v5662
        %5664 = vmatmul.mubr.f32.gmra.mxu0 %v5663
        %v5665 = vpop.f32.mrf.mxu0
        %v5666 = vadd.f32 %v5584, %v5665
        %v5667 = vpop.f32.mrf.mxu0
        %5668 = vmatprep.mubr.f32.mxu0 0.0
        %v5669 = vand.u32 %v5417, 4294901760
        %v5670 = vsub.f32 %v5417, %v5669
        %5671 = vmatmul.mubr.f32.gmra.mxu0 %v5670
        %v5672 = vpop.f32.mrf.mxu0
        %v5673 = vadd.f32 %v5590, %v5672
        %v5674 = vpop.f32.mrf.mxu0
        %5675 = vdwg.mxu0
        %5676 = vmatprep.subr.mxu0 0.0
        %5677 = vmatpush1.msra.mxu0 0.0
        %5678 = vmatprep.subr.mxu0 0.0
        %5679 = vmatpush1.msra.mxu0 0.0
        %5680 = vmatprep.subr.mxu0 0.0
        %5681 = vmatpush1.msra.mxu0 0.0
        %5682 = vmatprep.subr.mxu0 0.0
        %5683 = vmatpush1.msra.mxu0 0.0
        %5684 = vmatprep.subr.mxu0 0.0
        %5685 = vmatpush1.msra.mxu0 0.0
        %5686 = vmatprep.subr.mxu0 0.0
        %5687 = vmatpush1.msra.mxu0 0.0
        %5688 = vmatprep.subr.mxu0 0.0
        %5689 = vmatpush1.msra.mxu0 0.0
        %5690 = vmatprep.subr.mxu0 0.0
        %5691 = vmatpush1.msra.mxu0 0.0
        %5692 = vmatprep.subr.mxu0 0.0
        %5693 = vmatpush1.msra.mxu0 0.0
        %5694 = vmatprep.subr.mxu0 0.0
        %5695 = vmatpush1.msra.mxu0 0.0
        %5696 = vmatprep.subr.mxu0 0.0
        %5697 = vmatpush1.msra.mxu0 0.0
        %5698 = vmatprep.subr.mxu0 0.0
        %5699 = vmatpush1.msra.mxu0 0.0
        %5700 = vmatprep.subr.mxu0 0.0
        %5701 = vmatpush1.msra.mxu0 0.0
        %5702 = vmatprep.subr.mxu0 0.0
        %5703 = vmatpush1.msra.mxu0 0.0
        %5704 = vmatprep.subr.mxu0 0.0
        %v5705 = vand.u32 %v838, 4294901760
        %5706 = vmatpush1.msra.mxu0 %v5705
        %5707 = vmatprep.subr.mxu0 0.0
        %v5708 = vand.u32 %v832, 4294901760
        %5709 = vmatpush1.msra.mxu0 %v5708
        %5710 = vmatprep.subr.mxu0 0.0
        %5711 = vmatpush2.msra.mxu0 0.0
        %5712 = vmatprep.subr.mxu0 0.0
        %5713 = vmatpush2.msra.mxu0 0.0
        %5714 = vmatprep.subr.mxu0 0.0
        %5715 = vmatpush2.msra.mxu0 0.0
        %5716 = vmatprep.subr.mxu0 0.0
        %5717 = vmatpush2.msra.mxu0 0.0
        %5718 = vmatprep.subr.mxu0 0.0
        %5719 = vmatpush2.msra.mxu0 0.0
        %5720 = vmatprep.subr.mxu0 0.0
        %5721 = vmatpush2.msra.mxu0 0.0
        %5722 = vmatprep.subr.mxu0 0.0
        %5723 = vmatpush2.msra.mxu0 0.0
        %5724 = vmatprep.subr.mxu0 0.0
        %5725 = vmatpush2.msra.mxu0 0.0
        %5726 = vmatprep.subr.mxu0 0.0
        %5727 = vmatpush2.msra.mxu0 0.0
        %5728 = vmatprep.subr.mxu0 0.0
        %5729 = vmatpush2.msra.mxu0 0.0
        %5730 = vmatprep.subr.mxu0 0.0
        %5731 = vmatpush2.msra.mxu0 0.0
        %5732 = vmatprep.subr.mxu0 0.0
        %5733 = vmatpush2.msra.mxu0 0.0
        %5734 = vmatprep.subr.mxu0 0.0
        %5735 = vmatpush2.msra.mxu0 0.0
        %5736 = vmatprep.subr.mxu0 0.0
        %5737 = vmatpush2.msra.mxu0 0.0
        %5738 = vmatprep.subr.mxu0 0.0
        %5739 = vmatpush2.msra.mxu0 0.0
        %5740 = vmatprep.subr.mxu0 0.0
        %5741 = vmatpush2.msra.mxu0 0.0
        %5742 = vmatprep.mubr.f32.mxu0 0.0
        %v5743 = vand.u32 %v5414, 4294901760
        %v5744 = vsub.f32 %v5414, %v5743
        %v5745 = vand.u32 %v5744, 4294901760
        %5746 = vmatmul.mubr.f32.gmra.mxu0 %v5745
        %v5747 = vpop.f32.mrf.mxu0
        %v5748 = vadd.f32 %v5666, %v5747
        %v5749 = vpop.f32.mrf.mxu0
        %5750 = vmatprep.mubr.f32.mxu0 0.0
        %v5751 = vand.u32 %v5417, 4294901760
        %v5752 = vsub.f32 %v5417, %v5751
        %v5753 = vand.u32 %v5752, 4294901760
        %5754 = vmatmul.mubr.f32.gmra.mxu0 %v5753
        %v5755 = vpop.f32.mrf.mxu0
        %v5756 = vadd.f32 %v5673, %v5755
        %v5757 = vpop.f32.mrf.mxu0
        %5758 = vdwg.mxu0
        %5759 = vmatprep.subr.mxu0 0.0
        %5760 = vmatpush1.msra.mxu0 0.0
        %5761 = vmatprep.subr.mxu0 0.0
        %5762 = vmatpush1.msra.mxu0 0.0
        %5763 = vmatprep.subr.mxu0 0.0
        %5764 = vmatpush1.msra.mxu0 0.0
        %5765 = vmatprep.subr.mxu0 0.0
        %5766 = vmatpush1.msra.mxu0 0.0
        %5767 = vmatprep.subr.mxu0 0.0
        %5768 = vmatpush1.msra.mxu0 0.0
        %5769 = vmatprep.subr.mxu0 0.0
        %5770 = vmatpush1.msra.mxu0 0.0
        %5771 = vmatprep.subr.mxu0 0.0
        %5772 = vmatpush1.msra.mxu0 0.0
        %5773 = vmatprep.subr.mxu0 0.0
        %5774 = vmatpush1.msra.mxu0 0.0
        %5775 = vmatprep.subr.mxu0 0.0
        %5776 = vmatpush1.msra.mxu0 0.0
        %5777 = vmatprep.subr.mxu0 0.0
        %5778 = vmatpush1.msra.mxu0 0.0
        %5779 = vmatprep.subr.mxu0 0.0
        %5780 = vmatpush1.msra.mxu0 0.0
        %5781 = vmatprep.subr.mxu0 0.0
        %5782 = vmatpush1.msra.mxu0 0.0
        %5783 = vmatprep.subr.mxu0 0.0
        %5784 = vmatpush1.msra.mxu0 0.0
        %5785 = vmatprep.subr.mxu0 0.0
        %5786 = vmatpush1.msra.mxu0 0.0
        %5787 = vmatprep.subr.mxu0 0.0
        %v5788 = vand.u32 %v838, 4294901760
        %v5789 = vsub.f32 %v838, %v5788
        %v5790 = vand.u32 %v5789, 4294901760
        %5791 = vmatpush1.msra.mxu0 %v5790
        %5792 = vmatprep.subr.mxu0 0.0
        %v5793 = vand.u32 %v832, 4294901760
        %v5794 = vsub.f32 %v832, %v5793
        %v5795 = vand.u32 %v5794, 4294901760
        %5796 = vmatpush1.msra.mxu0 %v5795
        %5797 = vmatprep.subr.mxu0 0.0
        %5798 = vmatpush2.msra.mxu0 0.0
        %5799 = vmatprep.subr.mxu0 0.0
        %5800 = vmatpush2.msra.mxu0 0.0
        %5801 = vmatprep.subr.mxu0 0.0
        %5802 = vmatpush2.msra.mxu0 0.0
        %5803 = vmatprep.subr.mxu0 0.0
        %5804 = vmatpush2.msra.mxu0 0.0
        %5805 = vmatprep.subr.mxu0 0.0
        %5806 = vmatpush2.msra.mxu0 0.0
        %5807 = vmatprep.subr.mxu0 0.0
        %5808 = vmatpush2.msra.mxu0 0.0
        %5809 = vmatprep.subr.mxu0 0.0
        %5810 = vmatpush2.msra.mxu0 0.0
        %5811 = vmatprep.subr.mxu0 0.0
        %5812 = vmatpush2.msra.mxu0 0.0
        %5813 = vmatprep.subr.mxu0 0.0
        %5814 = vmatpush2.msra.mxu0 0.0
        %5815 = vmatprep.subr.mxu0 0.0
        %5816 = vmatpush2.msra.mxu0 0.0
        %5817 = vmatprep.subr.mxu0 0.0
        %5818 = vmatpush2.msra.mxu0 0.0
        %5819 = vmatprep.subr.mxu0 0.0
        %5820 = vmatpush2.msra.mxu0 0.0
        %5821 = vmatprep.subr.mxu0 0.0
        %5822 = vmatpush2.msra.mxu0 0.0
        %5823 = vmatprep.subr.mxu0 0.0
        %5824 = vmatpush2.msra.mxu0 0.0
        %5825 = vmatprep.subr.mxu0 0.0
        %5826 = vmatpush2.msra.mxu0 0.0
        %5827 = vmatprep.subr.mxu0 0.0
        %5828 = vmatpush2.msra.mxu0 0.0
        %5829 = vmatprep.mubr.f32.mxu0 0.0
        %v5830 = vand.u32 %v5414, 4294901760
        %5831 = vmatmul.mubr.f32.gmra.mxu0 %v5830
        %v5832 = vpop.f32.mrf.mxu0
        %v5833 = vadd.f32 %v5748, %v5832
        %v5834 = vpop.f32.mrf.mxu0
        %5835 = vmatprep.mubr.f32.mxu0 0.0
        %v5836 = vand.u32 %v5417, 4294901760
        %5837 = vmatmul.mubr.f32.gmra.mxu0 %v5836
        %v5838 = vpop.f32.mrf.mxu0
        %v5839 = vadd.f32 %v5756, %v5838
        %v5840 = vpop.f32.mrf.mxu0
        %5841 = vdwg.mxu0
        %5842 = vmatprep.subr.mxu0 0.0
        %5843 = vmatpush1.msra.mxu0 0.0
        %5844 = vmatprep.subr.mxu0 0.0
        %5845 = vmatpush1.msra.mxu0 0.0
        %5846 = vmatprep.subr.mxu0 0.0
        %5847 = vmatpush1.msra.mxu0 0.0
        %5848 = vmatprep.subr.mxu0 0.0
        %5849 = vmatpush1.msra.mxu0 0.0
        %5850 = vmatprep.subr.mxu0 0.0
        %5851 = vmatpush1.msra.mxu0 0.0
        %5852 = vmatprep.subr.mxu0 0.0
        %5853 = vmatpush1.msra.mxu0 0.0
        %5854 = vmatprep.subr.mxu0 0.0
        %5855 = vmatpush1.msra.mxu0 0.0
        %5856 = vmatprep.subr.mxu0 0.0
        %5857 = vmatpush1.msra.mxu0 0.0
        %5858 = vmatprep.subr.mxu0 0.0
        %5859 = vmatpush1.msra.mxu0 0.0
        %5860 = vmatprep.subr.mxu0 0.0
        %5861 = vmatpush1.msra.mxu0 0.0
        %5862 = vmatprep.subr.mxu0 0.0
        %5863 = vmatpush1.msra.mxu0 0.0
        %5864 = vmatprep.subr.mxu0 0.0
        %5865 = vmatpush1.msra.mxu0 0.0
        %5866 = vmatprep.subr.mxu0 0.0
        %5867 = vmatpush1.msra.mxu0 0.0
        %5868 = vmatprep.subr.mxu0 0.0
        %5869 = vmatpush1.msra.mxu0 0.0
        %5870 = vmatprep.subr.mxu0 0.0
        %v5871 = vand.u32 %v838, 4294901760
        %5872 = vmatpush1.msra.mxu0 %v5871
        %5873 = vmatprep.subr.mxu0 0.0
        %v5874 = vand.u32 %v832, 4294901760
        %5875 = vmatpush1.msra.mxu0 %v5874
        %5876 = vmatprep.subr.mxu0 0.0
        %5877 = vmatpush2.msra.mxu0 0.0
        %5878 = vmatprep.subr.mxu0 0.0
        %5879 = vmatpush2.msra.mxu0 0.0
        %5880 = vmatprep.subr.mxu0 0.0
        %5881 = vmatpush2.msra.mxu0 0.0
        %5882 = vmatprep.subr.mxu0 0.0
        %5883 = vmatpush2.msra.mxu0 0.0
        %5884 = vmatprep.subr.mxu0 0.0
        %5885 = vmatpush2.msra.mxu0 0.0
        %5886 = vmatprep.subr.mxu0 0.0
        %5887 = vmatpush2.msra.mxu0 0.0
        %5888 = vmatprep.subr.mxu0 0.0
        %5889 = vmatpush2.msra.mxu0 0.0
        %5890 = vmatprep.subr.mxu0 0.0
        %5891 = vmatpush2.msra.mxu0 0.0
        %5892 = vmatprep.subr.mxu0 0.0
        %5893 = vmatpush2.msra.mxu0 0.0
        %5894 = vmatprep.subr.mxu0 0.0
        %5895 = vmatpush2.msra.mxu0 0.0
        %5896 = vmatprep.subr.mxu0 0.0
        %5897 = vmatpush2.msra.mxu0 0.0
        %5898 = vmatprep.subr.mxu0 0.0
        %5899 = vmatpush2.msra.mxu0 0.0
        %5900 = vmatprep.subr.mxu0 0.0
        %5901 = vmatpush2.msra.mxu0 0.0
        %5902 = vmatprep.subr.mxu0 0.0
        %5903 = vmatpush2.msra.mxu0 0.0
        %5904 = vmatprep.subr.mxu0 0.0
        %5905 = vmatpush2.msra.mxu0 0.0
        %5906 = vmatprep.subr.mxu0 0.0
        %5907 = vmatpush2.msra.mxu0 0.0
        %5908 = vmatprep.mubr.f32.mxu0 0.0
        %v5909 = vand.u32 %v5414, 4294901760
        %5910 = vmatmul.mubr.f32.gmra.mxu0 %v5909
        %v5911 = vpop.f32.mrf.mxu0
        %v5912 = vadd.f32 %v5833, %v5911
        %v5913 = vpop.f32.mrf.mxu0
        %5914 = vmatprep.mubr.f32.mxu0 0.0
        %v5915 = vand.u32 %v5417, 4294901760
        %5916 = vmatmul.mubr.f32.gmra.mxu0 %v5915
        %v5917 = vpop.f32.mrf.mxu0
        %v5918 = vadd.f32 %v5839, %v5917
        %v5919 = vpop.f32.mrf.mxu0
        %5920 = vdwg.mxu0
        %5921 = vmatprep.subr.mxu0 0.0
        %5922 = vmatpush1.msra.mxu0 0.0
        %5923 = vmatprep.subr.mxu0 0.0
        %5924 = vmatpush1.msra.mxu0 0.0
        %5925 = vmatprep.subr.mxu0 0.0
        %5926 = vmatpush1.msra.mxu0 0.0
        %5927 = vmatprep.subr.mxu0 0.0
        %5928 = vmatpush1.msra.mxu0 0.0
        %5929 = vmatprep.subr.mxu0 0.0
        %5930 = vmatpush1.msra.mxu0 0.0
        %5931 = vmatprep.subr.mxu0 0.0
        %5932 = vmatpush1.msra.mxu0 0.0
        %5933 = vmatprep.subr.mxu0 0.0
        %5934 = vmatpush1.msra.mxu0 0.0
        %5935 = vmatprep.subr.mxu0 0.0
        %5936 = vmatpush1.msra.mxu0 0.0
        %5937 = vmatprep.subr.mxu0 0.0
        %5938 = vmatpush1.msra.mxu0 0.0
        %5939 = vmatprep.subr.mxu0 0.0
        %5940 = vmatpush1.msra.mxu0 0.0
        %5941 = vmatprep.subr.mxu0 0.0
        %5942 = vmatpush1.msra.mxu0 0.0
        %5943 = vmatprep.subr.mxu0 0.0
        %5944 = vmatpush1.msra.mxu0 0.0
        %5945 = vmatprep.subr.mxu0 0.0
        %5946 = vmatpush1.msra.mxu0 0.0
        %5947 = vmatprep.subr.mxu0 0.0
        %5948 = vmatpush1.msra.mxu0 0.0
        %5949 = vmatprep.subr.mxu0 0.0
        %v5950 = vand.u32 %v1346, 4294901760
        %5951 = vmatpush1.msra.mxu0 %v5950
        %5952 = vmatprep.subr.mxu0 0.0
        %v5953 = vand.u32 %v1340, 4294901760
        %5954 = vmatpush1.msra.mxu0 %v5953
        %5955 = vmatprep.subr.mxu0 0.0
        %5956 = vmatpush2.msra.mxu0 0.0
        %5957 = vmatprep.subr.mxu0 0.0
        %5958 = vmatpush2.msra.mxu0 0.0
        %5959 = vmatprep.subr.mxu0 0.0
        %5960 = vmatpush2.msra.mxu0 0.0
        %5961 = vmatprep.subr.mxu0 0.0
        %5962 = vmatpush2.msra.mxu0 0.0
        %5963 = vmatprep.subr.mxu0 0.0
        %5964 = vmatpush2.msra.mxu0 0.0
        %5965 = vmatprep.subr.mxu0 0.0
        %5966 = vmatpush2.msra.mxu0 0.0
        %5967 = vmatprep.subr.mxu0 0.0
        %5968 = vmatpush2.msra.mxu0 0.0
        %5969 = vmatprep.subr.mxu0 0.0
        %5970 = vmatpush2.msra.mxu0 0.0
        %5971 = vmatprep.subr.mxu0 0.0
        %5972 = vmatpush2.msra.mxu0 0.0
        %5973 = vmatprep.subr.mxu0 0.0
        %5974 = vmatpush2.msra.mxu0 0.0
        %5975 = vmatprep.subr.mxu0 0.0
        %5976 = vmatpush2.msra.mxu0 0.0
        %5977 = vmatprep.subr.mxu0 0.0
        %5978 = vmatpush2.msra.mxu0 0.0
        %5979 = vmatprep.subr.mxu0 0.0
        %5980 = vmatpush2.msra.mxu0 0.0
        %5981 = vmatprep.subr.mxu0 0.0
        %5982 = vmatpush2.msra.mxu0 0.0
        %5983 = vmatprep.subr.mxu0 0.0
        %5984 = vmatpush2.msra.mxu0 0.0
        %5985 = vmatprep.subr.mxu0 0.0
        %5986 = vmatpush2.msra.mxu0 0.0
        %5987 = vmatprep.mubr.f32.mxu0 0.0
        %v5988 = vand.u32 %v5414, 4294901760
        %v5989 = vsub.f32 %v5414, %v5988
        %v5990 = vand.u32 %v5989, 4294901760
        %v5991 = vsub.f32 %v5989, %v5990
        %v5992 = vand.u32 %v5991, 4294901760
        %5993 = vmatmul.mubr.f32.gmra.mxu0 %v5992
        %v5994 = vpop.f32.mrf.mxu0
        %v5995 = vadd.f32 0.0, %v5994
        %v5996 = vpop.f32.mrf.mxu0
        %5997 = vmatprep.mubr.f32.mxu0 0.0
        %v5998 = vand.u32 %v5417, 4294901760
        %v5999 = vsub.f32 %v5417, %v5998
        %v6000 = vand.u32 %v5999, 4294901760
        %v6001 = vsub.f32 %v5999, %v6000
        %v6002 = vand.u32 %v6001, 4294901760
        %6003 = vmatmul.mubr.f32.gmra.mxu0 %v6002
        %v6004 = vpop.f32.mrf.mxu0
        %v6005 = vadd.f32 0.0, %v6004
        %v6006 = vpop.f32.mrf.mxu0
        %6007 = vdwg.mxu0
        %6008 = vmatprep.subr.mxu0 0.0
        %6009 = vmatpush1.msra.mxu0 0.0
        %6010 = vmatprep.subr.mxu0 0.0
        %6011 = vmatpush1.msra.mxu0 0.0
        %6012 = vmatprep.subr.mxu0 0.0
        %6013 = vmatpush1.msra.mxu0 0.0
        %6014 = vmatprep.subr.mxu0 0.0
        %6015 = vmatpush1.msra.mxu0 0.0
        %6016 = vmatprep.subr.mxu0 0.0
        %6017 = vmatpush1.msra.mxu0 0.0
        %6018 = vmatprep.subr.mxu0 0.0
        %6019 = vmatpush1.msra.mxu0 0.0
        %6020 = vmatprep.subr.mxu0 0.0
        %6021 = vmatpush1.msra.mxu0 0.0
        %6022 = vmatprep.subr.mxu0 0.0
        %6023 = vmatpush1.msra.mxu0 0.0
        %6024 = vmatprep.subr.mxu0 0.0
        %6025 = vmatpush1.msra.mxu0 0.0
        %6026 = vmatprep.subr.mxu0 0.0
        %6027 = vmatpush1.msra.mxu0 0.0
        %6028 = vmatprep.subr.mxu0 0.0
        %6029 = vmatpush1.msra.mxu0 0.0
        %6030 = vmatprep.subr.mxu0 0.0
        %6031 = vmatpush1.msra.mxu0 0.0
        %6032 = vmatprep.subr.mxu0 0.0
        %6033 = vmatpush1.msra.mxu0 0.0
        %6034 = vmatprep.subr.mxu0 0.0
        %6035 = vmatpush1.msra.mxu0 0.0
        %6036 = vmatprep.subr.mxu0 0.0
        %v6037 = vand.u32 %v1346, 4294901760
        %v6038 = vsub.f32 %v1346, %v6037
        %v6039 = vand.u32 %v6038, 4294901760
        %v6040 = vsub.f32 %v6038, %v6039
        %v6041 = vand.u32 %v6040, 4294901760
        %6042 = vmatpush1.msra.mxu0 %v6041
        %6043 = vmatprep.subr.mxu0 0.0
        %v6044 = vand.u32 %v1340, 4294901760
        %v6045 = vsub.f32 %v1340, %v6044
        %v6046 = vand.u32 %v6045, 4294901760
        %v6047 = vsub.f32 %v6045, %v6046
        %v6048 = vand.u32 %v6047, 4294901760
        %6049 = vmatpush1.msra.mxu0 %v6048
        %6050 = vmatprep.subr.mxu0 0.0
        %6051 = vmatpush2.msra.mxu0 0.0
        %6052 = vmatprep.subr.mxu0 0.0
        %6053 = vmatpush2.msra.mxu0 0.0
        %6054 = vmatprep.subr.mxu0 0.0
        %6055 = vmatpush2.msra.mxu0 0.0
        %6056 = vmatprep.subr.mxu0 0.0
        %6057 = vmatpush2.msra.mxu0 0.0
        %6058 = vmatprep.subr.mxu0 0.0
        %6059 = vmatpush2.msra.mxu0 0.0
        %6060 = vmatprep.subr.mxu0 0.0
        %6061 = vmatpush2.msra.mxu0 0.0
        %6062 = vmatprep.subr.mxu0 0.0
        %6063 = vmatpush2.msra.mxu0 0.0
        %6064 = vmatprep.subr.mxu0 0.0
        %6065 = vmatpush2.msra.mxu0 0.0
        %6066 = vmatprep.subr.mxu0 0.0
        %6067 = vmatpush2.msra.mxu0 0.0
        %6068 = vmatprep.subr.mxu0 0.0
        %6069 = vmatpush2.msra.mxu0 0.0
        %6070 = vmatprep.subr.mxu0 0.0
        %6071 = vmatpush2.msra.mxu0 0.0
        %6072 = vmatprep.subr.mxu0 0.0
        %6073 = vmatpush2.msra.mxu0 0.0
        %6074 = vmatprep.subr.mxu0 0.0
        %6075 = vmatpush2.msra.mxu0 0.0
        %6076 = vmatprep.subr.mxu0 0.0
        %6077 = vmatpush2.msra.mxu0 0.0
        %6078 = vmatprep.subr.mxu0 0.0
        %6079 = vmatpush2.msra.mxu0 0.0
        %6080 = vmatprep.subr.mxu0 0.0
        %6081 = vmatpush2.msra.mxu0 0.0
        %6082 = vmatprep.mubr.f32.mxu0 0.0
        %v6083 = vand.u32 %v5414, 4294901760
        %6084 = vmatmul.mubr.f32.gmra.mxu0 %v6083
        %v6085 = vpop.f32.mrf.mxu0
        %v6086 = vadd.f32 %v5995, %v6085
        %v6087 = vpop.f32.mrf.mxu0
        %6088 = vmatprep.mubr.f32.mxu0 0.0
        %v6089 = vand.u32 %v5417, 4294901760
        %6090 = vmatmul.mubr.f32.gmra.mxu0 %v6089
        %v6091 = vpop.f32.mrf.mxu0
        %v6092 = vadd.f32 %v6005, %v6091
        %v6093 = vpop.f32.mrf.mxu0
        %6094 = vdwg.mxu0
        %6095 = vmatprep.subr.mxu0 0.0
        %6096 = vmatpush1.msra.mxu0 0.0
        %6097 = vmatprep.subr.mxu0 0.0
        %6098 = vmatpush1.msra.mxu0 0.0
        %6099 = vmatprep.subr.mxu0 0.0
        %6100 = vmatpush1.msra.mxu0 0.0
        %6101 = vmatprep.subr.mxu0 0.0
        %6102 = vmatpush1.msra.mxu0 0.0
        %6103 = vmatprep.subr.mxu0 0.0
        %6104 = vmatpush1.msra.mxu0 0.0
        %6105 = vmatprep.subr.mxu0 0.0
        %6106 = vmatpush1.msra.mxu0 0.0
        %6107 = vmatprep.subr.mxu0 0.0
        %6108 = vmatpush1.msra.mxu0 0.0
        %6109 = vmatprep.subr.mxu0 0.0
        %6110 = vmatpush1.msra.mxu0 0.0
        %6111 = vmatprep.subr.mxu0 0.0
        %6112 = vmatpush1.msra.mxu0 0.0
        %6113 = vmatprep.subr.mxu0 0.0
        %6114 = vmatpush1.msra.mxu0 0.0
        %6115 = vmatprep.subr.mxu0 0.0
        %6116 = vmatpush1.msra.mxu0 0.0
        %6117 = vmatprep.subr.mxu0 0.0
        %6118 = vmatpush1.msra.mxu0 0.0
        %6119 = vmatprep.subr.mxu0 0.0
        %6120 = vmatpush1.msra.mxu0 0.0
        %6121 = vmatprep.subr.mxu0 0.0
        %6122 = vmatpush1.msra.mxu0 0.0
        %6123 = vmatprep.subr.mxu0 0.0
        %v6124 = vand.u32 %v1346, 4294901760
        %v6125 = vsub.f32 %v1346, %v6124
        %6126 = vmatpush1.msra.mxu0 %v6125
        %6127 = vmatprep.subr.mxu0 0.0
        %v6128 = vand.u32 %v1340, 4294901760
        %v6129 = vsub.f32 %v1340, %v6128
        %6130 = vmatpush1.msra.mxu0 %v6129
        %6131 = vmatprep.subr.mxu0 0.0
        %6132 = vmatpush2.msra.mxu0 0.0
        %6133 = vmatprep.subr.mxu0 0.0
        %6134 = vmatpush2.msra.mxu0 0.0
        %6135 = vmatprep.subr.mxu0 0.0
        %6136 = vmatpush2.msra.mxu0 0.0
        %6137 = vmatprep.subr.mxu0 0.0
        %6138 = vmatpush2.msra.mxu0 0.0
        %6139 = vmatprep.subr.mxu0 0.0
        %6140 = vmatpush2.msra.mxu0 0.0
        %6141 = vmatprep.subr.mxu0 0.0
        %6142 = vmatpush2.msra.mxu0 0.0
        %6143 = vmatprep.subr.mxu0 0.0
        %6144 = vmatpush2.msra.mxu0 0.0
        %6145 = vmatprep.subr.mxu0 0.0
        %6146 = vmatpush2.msra.mxu0 0.0
        %6147 = vmatprep.subr.mxu0 0.0
        %6148 = vmatpush2.msra.mxu0 0.0
        %6149 = vmatprep.subr.mxu0 0.0
        %6150 = vmatpush2.msra.mxu0 0.0
        %6151 = vmatprep.subr.mxu0 0.0
        %6152 = vmatpush2.msra.mxu0 0.0
        %6153 = vmatprep.subr.mxu0 0.0
        %6154 = vmatpush2.msra.mxu0 0.0
        %6155 = vmatprep.subr.mxu0 0.0
        %6156 = vmatpush2.msra.mxu0 0.0
        %6157 = vmatprep.subr.mxu0 0.0
        %6158 = vmatpush2.msra.mxu0 0.0
        %6159 = vmatprep.subr.mxu0 0.0
        %6160 = vmatpush2.msra.mxu0 0.0
        %6161 = vmatprep.subr.mxu0 0.0
        %6162 = vmatpush2.msra.mxu0 0.0
        %6163 = vmatprep.mubr.f32.mxu0 0.0
        %v6164 = vand.u32 %v5414, 4294901760
        %v6165 = vsub.f32 %v5414, %v6164
        %6166 = vmatmul.mubr.f32.gmra.mxu0 %v6165
        %v6167 = vpop.f32.mrf.mxu0
        %v6168 = vadd.f32 %v6086, %v6167
        %v6169 = vpop.f32.mrf.mxu0
        %6170 = vmatprep.mubr.f32.mxu0 0.0
        %v6171 = vand.u32 %v5417, 4294901760
        %v6172 = vsub.f32 %v5417, %v6171
        %6173 = vmatmul.mubr.f32.gmra.mxu0 %v6172
        %v6174 = vpop.f32.mrf.mxu0
        %v6175 = vadd.f32 %v6092, %v6174
        %v6176 = vpop.f32.mrf.mxu0
        %6177 = vdwg.mxu0
        %6178 = vmatprep.subr.mxu0 0.0
        %6179 = vmatpush1.msra.mxu0 0.0
        %6180 = vmatprep.subr.mxu0 0.0
        %6181 = vmatpush1.msra.mxu0 0.0
        %6182 = vmatprep.subr.mxu0 0.0
        %6183 = vmatpush1.msra.mxu0 0.0
        %6184 = vmatprep.subr.mxu0 0.0
        %6185 = vmatpush1.msra.mxu0 0.0
        %6186 = vmatprep.subr.mxu0 0.0
        %6187 = vmatpush1.msra.mxu0 0.0
        %6188 = vmatprep.subr.mxu0 0.0
        %6189 = vmatpush1.msra.mxu0 0.0
        %6190 = vmatprep.subr.mxu0 0.0
        %6191 = vmatpush1.msra.mxu0 0.0
        %6192 = vmatprep.subr.mxu0 0.0
        %6193 = vmatpush1.msra.mxu0 0.0
        %6194 = vmatprep.subr.mxu0 0.0
        %6195 = vmatpush1.msra.mxu0 0.0
        %6196 = vmatprep.subr.mxu0 0.0
        %6197 = vmatpush1.msra.mxu0 0.0
        %6198 = vmatprep.subr.mxu0 0.0
        %6199 = vmatpush1.msra.mxu0 0.0
        %6200 = vmatprep.subr.mxu0 0.0
        %6201 = vmatpush1.msra.mxu0 0.0
        %6202 = vmatprep.subr.mxu0 0.0
        %6203 = vmatpush1.msra.mxu0 0.0
        %6204 = vmatprep.subr.mxu0 0.0
        %6205 = vmatpush1.msra.mxu0 0.0
        %6206 = vmatprep.subr.mxu0 0.0
        %v6207 = vand.u32 %v1346, 4294901760
        %6208 = vmatpush1.msra.mxu0 %v6207
        %6209 = vmatprep.subr.mxu0 0.0
        %v6210 = vand.u32 %v1340, 4294901760
        %6211 = vmatpush1.msra.mxu0 %v6210
        %6212 = vmatprep.subr.mxu0 0.0
        %6213 = vmatpush2.msra.mxu0 0.0
        %6214 = vmatprep.subr.mxu0 0.0
        %6215 = vmatpush2.msra.mxu0 0.0
        %6216 = vmatprep.subr.mxu0 0.0
        %6217 = vmatpush2.msra.mxu0 0.0
        %6218 = vmatprep.subr.mxu0 0.0
        %6219 = vmatpush2.msra.mxu0 0.0
        %6220 = vmatprep.subr.mxu0 0.0
        %6221 = vmatpush2.msra.mxu0 0.0
        %6222 = vmatprep.subr.mxu0 0.0
        %6223 = vmatpush2.msra.mxu0 0.0
        %6224 = vmatprep.subr.mxu0 0.0
        %6225 = vmatpush2.msra.mxu0 0.0
        %6226 = vmatprep.subr.mxu0 0.0
        %6227 = vmatpush2.msra.mxu0 0.0
        %6228 = vmatprep.subr.mxu0 0.0
        %6229 = vmatpush2.msra.mxu0 0.0
        %6230 = vmatprep.subr.mxu0 0.0
        %6231 = vmatpush2.msra.mxu0 0.0
        %6232 = vmatprep.subr.mxu0 0.0
        %6233 = vmatpush2.msra.mxu0 0.0
        %6234 = vmatprep.subr.mxu0 0.0
        %6235 = vmatpush2.msra.mxu0 0.0
        %6236 = vmatprep.subr.mxu0 0.0
        %6237 = vmatpush2.msra.mxu0 0.0
        %6238 = vmatprep.subr.mxu0 0.0
        %6239 = vmatpush2.msra.mxu0 0.0
        %6240 = vmatprep.subr.mxu0 0.0
        %6241 = vmatpush2.msra.mxu0 0.0
        %6242 = vmatprep.subr.mxu0 0.0
        %6243 = vmatpush2.msra.mxu0 0.0
        %6244 = vmatprep.mubr.f32.mxu0 0.0
        %v6245 = vand.u32 %v5414, 4294901760
        %v6246 = vsub.f32 %v5414, %v6245
        %v6247 = vand.u32 %v6246, 4294901760
        %6248 = vmatmul.mubr.f32.gmra.mxu0 %v6247
        %v6249 = vpop.f32.mrf.mxu0
        %v6250 = vadd.f32 %v6168, %v6249
        %v6251 = vpop.f32.mrf.mxu0
        %6252 = vmatprep.mubr.f32.mxu0 0.0
        %v6253 = vand.u32 %v5417, 4294901760
        %v6254 = vsub.f32 %v5417, %v6253
        %v6255 = vand.u32 %v6254, 4294901760
        %6256 = vmatmul.mubr.f32.gmra.mxu0 %v6255
        %v6257 = vpop.f32.mrf.mxu0
        %v6258 = vadd.f32 %v6175, %v6257
        %v6259 = vpop.f32.mrf.mxu0
        %6260 = vdwg.mxu0
        %6261 = vmatprep.subr.mxu0 0.0
        %6262 = vmatpush1.msra.mxu0 0.0
        %6263 = vmatprep.subr.mxu0 0.0
        %6264 = vmatpush1.msra.mxu0 0.0
        %6265 = vmatprep.subr.mxu0 0.0
        %6266 = vmatpush1.msra.mxu0 0.0
        %6267 = vmatprep.subr.mxu0 0.0
        %6268 = vmatpush1.msra.mxu0 0.0
        %6269 = vmatprep.subr.mxu0 0.0
        %6270 = vmatpush1.msra.mxu0 0.0
        %6271 = vmatprep.subr.mxu0 0.0
        %6272 = vmatpush1.msra.mxu0 0.0
        %6273 = vmatprep.subr.mxu0 0.0
        %6274 = vmatpush1.msra.mxu0 0.0
        %6275 = vmatprep.subr.mxu0 0.0
        %6276 = vmatpush1.msra.mxu0 0.0
        %6277 = vmatprep.subr.mxu0 0.0
        %6278 = vmatpush1.msra.mxu0 0.0
        %6279 = vmatprep.subr.mxu0 0.0
        %6280 = vmatpush1.msra.mxu0 0.0
        %6281 = vmatprep.subr.mxu0 0.0
        %6282 = vmatpush1.msra.mxu0 0.0
        %6283 = vmatprep.subr.mxu0 0.0
        %6284 = vmatpush1.msra.mxu0 0.0
        %6285 = vmatprep.subr.mxu0 0.0
        %6286 = vmatpush1.msra.mxu0 0.0
        %6287 = vmatprep.subr.mxu0 0.0
        %6288 = vmatpush1.msra.mxu0 0.0
        %6289 = vmatprep.subr.mxu0 0.0
        %v6290 = vand.u32 %v1346, 4294901760
        %v6291 = vsub.f32 %v1346, %v6290
        %v6292 = vand.u32 %v6291, 4294901760
        %6293 = vmatpush1.msra.mxu0 %v6292
        %6294 = vmatprep.subr.mxu0 0.0
        %v6295 = vand.u32 %v1340, 4294901760
        %v6296 = vsub.f32 %v1340, %v6295
        %v6297 = vand.u32 %v6296, 4294901760
        %6298 = vmatpush1.msra.mxu0 %v6297
        %6299 = vmatprep.subr.mxu0 0.0
        %6300 = vmatpush2.msra.mxu0 0.0
        %6301 = vmatprep.subr.mxu0 0.0
        %6302 = vmatpush2.msra.mxu0 0.0
        %6303 = vmatprep.subr.mxu0 0.0
        %6304 = vmatpush2.msra.mxu0 0.0
        %6305 = vmatprep.subr.mxu0 0.0
        %6306 = vmatpush2.msra.mxu0 0.0
        %6307 = vmatprep.subr.mxu0 0.0
        %6308 = vmatpush2.msra.mxu0 0.0
        %6309 = vmatprep.subr.mxu0 0.0
        %6310 = vmatpush2.msra.mxu0 0.0
        %6311 = vmatprep.subr.mxu0 0.0
        %6312 = vmatpush2.msra.mxu0 0.0
        %6313 = vmatprep.subr.mxu0 0.0
        %6314 = vmatpush2.msra.mxu0 0.0
        %6315 = vmatprep.subr.mxu0 0.0
        %6316 = vmatpush2.msra.mxu0 0.0
        %6317 = vmatprep.subr.mxu0 0.0
        %6318 = vmatpush2.msra.mxu0 0.0
        %6319 = vmatprep.subr.mxu0 0.0
        %6320 = vmatpush2.msra.mxu0 0.0
        %6321 = vmatprep.subr.mxu0 0.0
        %6322 = vmatpush2.msra.mxu0 0.0
        %6323 = vmatprep.subr.mxu0 0.0
        %6324 = vmatpush2.msra.mxu0 0.0
        %6325 = vmatprep.subr.mxu0 0.0
        %6326 = vmatpush2.msra.mxu0 0.0
        %6327 = vmatprep.subr.mxu0 0.0
        %6328 = vmatpush2.msra.mxu0 0.0
        %6329 = vmatprep.subr.mxu0 0.0
        %6330 = vmatpush2.msra.mxu0 0.0
        %6331 = vmatprep.mubr.f32.mxu0 0.0
        %v6332 = vand.u32 %v5414, 4294901760
        %6333 = vmatmul.mubr.f32.gmra.mxu0 %v6332
        %v6334 = vpop.f32.mrf.mxu0
        %v6335 = vadd.f32 %v6250, %v6334
        %v6336 = vpop.f32.mrf.mxu0
        %6337 = vmatprep.mubr.f32.mxu0 0.0
        %v6338 = vand.u32 %v5417, 4294901760
        %6339 = vmatmul.mubr.f32.gmra.mxu0 %v6338
        %v6340 = vpop.f32.mrf.mxu0
        %v6341 = vadd.f32 %v6258, %v6340
        %v6342 = vpop.f32.mrf.mxu0
        %6343 = vdwg.mxu0
        %6344 = vmatprep.subr.mxu0 0.0
        %6345 = vmatpush1.msra.mxu0 0.0
        %6346 = vmatprep.subr.mxu0 0.0
        %6347 = vmatpush1.msra.mxu0 0.0
        %6348 = vmatprep.subr.mxu0 0.0
        %6349 = vmatpush1.msra.mxu0 0.0
        %6350 = vmatprep.subr.mxu0 0.0
        %6351 = vmatpush1.msra.mxu0 0.0
        %6352 = vmatprep.subr.mxu0 0.0
        %6353 = vmatpush1.msra.mxu0 0.0
        %6354 = vmatprep.subr.mxu0 0.0
        %6355 = vmatpush1.msra.mxu0 0.0
        %6356 = vmatprep.subr.mxu0 0.0
        %6357 = vmatpush1.msra.mxu0 0.0
        %6358 = vmatprep.subr.mxu0 0.0
        %6359 = vmatpush1.msra.mxu0 0.0
        %6360 = vmatprep.subr.mxu0 0.0
        %6361 = vmatpush1.msra.mxu0 0.0
        %6362 = vmatprep.subr.mxu0 0.0
        %6363 = vmatpush1.msra.mxu0 0.0
        %6364 = vmatprep.subr.mxu0 0.0
        %6365 = vmatpush1.msra.mxu0 0.0
        %6366 = vmatprep.subr.mxu0 0.0
        %6367 = vmatpush1.msra.mxu0 0.0
        %6368 = vmatprep.subr.mxu0 0.0
        %6369 = vmatpush1.msra.mxu0 0.0
        %6370 = vmatprep.subr.mxu0 0.0
        %6371 = vmatpush1.msra.mxu0 0.0
        %6372 = vmatprep.subr.mxu0 0.0
        %v6373 = vand.u32 %v1346, 4294901760
        %6374 = vmatpush1.msra.mxu0 %v6373
        %6375 = vmatprep.subr.mxu0 0.0
        %v6376 = vand.u32 %v1340, 4294901760
        %6377 = vmatpush1.msra.mxu0 %v6376
        %6378 = vmatprep.subr.mxu0 0.0
        %6379 = vmatpush2.msra.mxu0 0.0
        %6380 = vmatprep.subr.mxu0 0.0
        %6381 = vmatpush2.msra.mxu0 0.0
        %6382 = vmatprep.subr.mxu0 0.0
        %6383 = vmatpush2.msra.mxu0 0.0
        %6384 = vmatprep.subr.mxu0 0.0
        %6385 = vmatpush2.msra.mxu0 0.0
        %6386 = vmatprep.subr.mxu0 0.0
        %6387 = vmatpush2.msra.mxu0 0.0
        %6388 = vmatprep.subr.mxu0 0.0
        %6389 = vmatpush2.msra.mxu0 0.0
        %6390 = vmatprep.subr.mxu0 0.0
        %6391 = vmatpush2.msra.mxu0 0.0
        %6392 = vmatprep.subr.mxu0 0.0
        %6393 = vmatpush2.msra.mxu0 0.0
        %6394 = vmatprep.subr.mxu0 0.0
        %6395 = vmatpush2.msra.mxu0 0.0
        %6396 = vmatprep.subr.mxu0 0.0
        %6397 = vmatpush2.msra.mxu0 0.0
        %6398 = vmatprep.subr.mxu0 0.0
        %6399 = vmatpush2.msra.mxu0 0.0
        %6400 = vmatprep.subr.mxu0 0.0
        %6401 = vmatpush2.msra.mxu0 0.0
        %6402 = vmatprep.subr.mxu0 0.0
        %6403 = vmatpush2.msra.mxu0 0.0
        %6404 = vmatprep.subr.mxu0 0.0
        %6405 = vmatpush2.msra.mxu0 0.0
        %6406 = vmatprep.subr.mxu0 0.0
        %6407 = vmatpush2.msra.mxu0 0.0
        %6408 = vmatprep.subr.mxu0 0.0
        %6409 = vmatpush2.msra.mxu0 0.0
        %6410 = vmatprep.mubr.f32.mxu0 0.0
        %v6411 = vand.u32 %v5414, 4294901760
        %6412 = vmatmul.mubr.f32.gmra.mxu0 %v6411
        %v6413 = vpop.f32.mrf.mxu0
        %v6414 = vadd.f32 %v6335, %v6413
        %v6415 = vpop.f32.mrf.mxu0
        %6416 = vmatprep.mubr.f32.mxu0 0.0
        %v6417 = vand.u32 %v5417, 4294901760
        %6418 = vmatmul.mubr.f32.gmra.mxu0 %v6417
        %v6419 = vpop.f32.mrf.mxu0
        %v6420 = vadd.f32 %v6341, %v6419
        %v6421 = vpop.f32.mrf.mxu0
        %6422 = vdwg.mxu0
        %6423 = vmatprep.subr.mxu0 0.0
        %6424 = vmatpush1.msra.mxu0 0.0
        %6425 = vmatprep.subr.mxu0 0.0
        %6426 = vmatpush1.msra.mxu0 0.0
        %6427 = vmatprep.subr.mxu0 0.0
        %6428 = vmatpush1.msra.mxu0 0.0
        %6429 = vmatprep.subr.mxu0 0.0
        %6430 = vmatpush1.msra.mxu0 0.0
        %6431 = vmatprep.subr.mxu0 0.0
        %6432 = vmatpush1.msra.mxu0 0.0
        %6433 = vmatprep.subr.mxu0 0.0
        %6434 = vmatpush1.msra.mxu0 0.0
        %6435 = vmatprep.subr.mxu0 0.0
        %6436 = vmatpush1.msra.mxu0 0.0
        %6437 = vmatprep.subr.mxu0 0.0
        %6438 = vmatpush1.msra.mxu0 0.0
        %6439 = vmatprep.subr.mxu0 0.0
        %6440 = vmatpush1.msra.mxu0 0.0
        %6441 = vmatprep.subr.mxu0 0.0
        %6442 = vmatpush1.msra.mxu0 0.0
        %6443 = vmatprep.subr.mxu0 0.0
        %6444 = vmatpush1.msra.mxu0 0.0
        %6445 = vmatprep.subr.mxu0 0.0
        %6446 = vmatpush1.msra.mxu0 0.0
        %6447 = vmatprep.subr.mxu0 0.0
        %6448 = vmatpush1.msra.mxu0 0.0
        %6449 = vmatprep.subr.mxu0 0.0
        %6450 = vmatpush1.msra.mxu0 0.0
        %6451 = vmatprep.subr.mxu0 0.0
        %v6452 = vand.u32 %v1854, 4294901760
        %6453 = vmatpush1.msra.mxu0 %v6452
        %6454 = vmatprep.subr.mxu0 0.0
        %v6455 = vand.u32 %v1848, 4294901760
        %6456 = vmatpush1.msra.mxu0 %v6455
        %6457 = vmatprep.subr.mxu0 0.0
        %6458 = vmatpush2.msra.mxu0 0.0
        %6459 = vmatprep.subr.mxu0 0.0
        %6460 = vmatpush2.msra.mxu0 0.0
        %6461 = vmatprep.subr.mxu0 0.0
        %6462 = vmatpush2.msra.mxu0 0.0
        %6463 = vmatprep.subr.mxu0 0.0
        %6464 = vmatpush2.msra.mxu0 0.0
        %6465 = vmatprep.subr.mxu0 0.0
        %6466 = vmatpush2.msra.mxu0 0.0
        %6467 = vmatprep.subr.mxu0 0.0
        %6468 = vmatpush2.msra.mxu0 0.0
        %6469 = vmatprep.subr.mxu0 0.0
        %6470 = vmatpush2.msra.mxu0 0.0
        %6471 = vmatprep.subr.mxu0 0.0
        %6472 = vmatpush2.msra.mxu0 0.0
        %6473 = vmatprep.subr.mxu0 0.0
        %6474 = vmatpush2.msra.mxu0 0.0
        %6475 = vmatprep.subr.mxu0 0.0
        %6476 = vmatpush2.msra.mxu0 0.0
        %6477 = vmatprep.subr.mxu0 0.0
        %6478 = vmatpush2.msra.mxu0 0.0
        %6479 = vmatprep.subr.mxu0 0.0
        %6480 = vmatpush2.msra.mxu0 0.0
        %6481 = vmatprep.subr.mxu0 0.0
        %6482 = vmatpush2.msra.mxu0 0.0
        %6483 = vmatprep.subr.mxu0 0.0
        %6484 = vmatpush2.msra.mxu0 0.0
        %6485 = vmatprep.subr.mxu0 0.0
        %6486 = vmatpush2.msra.mxu0 0.0
        %6487 = vmatprep.subr.mxu0 0.0
        %6488 = vmatpush2.msra.mxu0 0.0
        %6489 = vmatprep.mubr.f32.mxu0 0.0
        %v6490 = vand.u32 %v5414, 4294901760
        %v6491 = vsub.f32 %v5414, %v6490
        %v6492 = vand.u32 %v6491, 4294901760
        %v6493 = vsub.f32 %v6491, %v6492
        %v6494 = vand.u32 %v6493, 4294901760
        %6495 = vmatmul.mubr.f32.gmra.mxu0 %v6494
        %v6496 = vpop.f32.mrf.mxu0
        %v6497 = vadd.f32 0.0, %v6496
        %v6498 = vpop.f32.mrf.mxu0
        %6499 = vmatprep.mubr.f32.mxu0 0.0
        %v6500 = vand.u32 %v5417, 4294901760
        %v6501 = vsub.f32 %v5417, %v6500
        %v6502 = vand.u32 %v6501, 4294901760
        %v6503 = vsub.f32 %v6501, %v6502
        %v6504 = vand.u32 %v6503, 4294901760
        %6505 = vmatmul.mubr.f32.gmra.mxu0 %v6504
        %v6506 = vpop.f32.mrf.mxu0
        %v6507 = vadd.f32 0.0, %v6506
        %v6508 = vpop.f32.mrf.mxu0
        %6509 = vdwg.mxu0
        %6510 = vmatprep.subr.mxu0 0.0
        %6511 = vmatpush1.msra.mxu0 0.0
        %6512 = vmatprep.subr.mxu0 0.0
        %6513 = vmatpush1.msra.mxu0 0.0
        %6514 = vmatprep.subr.mxu0 0.0
        %6515 = vmatpush1.msra.mxu0 0.0
        %6516 = vmatprep.subr.mxu0 0.0
        %6517 = vmatpush1.msra.mxu0 0.0
        %6518 = vmatprep.subr.mxu0 0.0
        %6519 = vmatpush1.msra.mxu0 0.0
        %6520 = vmatprep.subr.mxu0 0.0
        %6521 = vmatpush1.msra.mxu0 0.0
        %6522 = vmatprep.subr.mxu0 0.0
        %6523 = vmatpush1.msra.mxu0 0.0
        %6524 = vmatprep.subr.mxu0 0.0
        %6525 = vmatpush1.msra.mxu0 0.0
        %6526 = vmatprep.subr.mxu0 0.0
        %6527 = vmatpush1.msra.mxu0 0.0
        %6528 = vmatprep.subr.mxu0 0.0
        %6529 = vmatpush1.msra.mxu0 0.0
        %6530 = vmatprep.subr.mxu0 0.0
        %6531 = vmatpush1.msra.mxu0 0.0
        %6532 = vmatprep.subr.mxu0 0.0
        %6533 = vmatpush1.msra.mxu0 0.0
        %6534 = vmatprep.subr.mxu0 0.0
        %6535 = vmatpush1.msra.mxu0 0.0
        %6536 = vmatprep.subr.mxu0 0.0
        %6537 = vmatpush1.msra.mxu0 0.0
        %6538 = vmatprep.subr.mxu0 0.0
        %v6539 = vand.u32 %v1854, 4294901760
        %v6540 = vsub.f32 %v1854, %v6539
        %v6541 = vand.u32 %v6540, 4294901760
        %v6542 = vsub.f32 %v6540, %v6541
        %v6543 = vand.u32 %v6542, 4294901760
        %6544 = vmatpush1.msra.mxu0 %v6543
        %6545 = vmatprep.subr.mxu0 0.0
        %v6546 = vand.u32 %v1848, 4294901760
        %v6547 = vsub.f32 %v1848, %v6546
        %v6548 = vand.u32 %v6547, 4294901760
        %v6549 = vsub.f32 %v6547, %v6548
        %v6550 = vand.u32 %v6549, 4294901760
        %6551 = vmatpush1.msra.mxu0 %v6550
        %6552 = vmatprep.subr.mxu0 0.0
        %6553 = vmatpush2.msra.mxu0 0.0
        %6554 = vmatprep.subr.mxu0 0.0
        %6555 = vmatpush2.msra.mxu0 0.0
        %6556 = vmatprep.subr.mxu0 0.0
        %6557 = vmatpush2.msra.mxu0 0.0
        %6558 = vmatprep.subr.mxu0 0.0
        %6559 = vmatpush2.msra.mxu0 0.0
        %6560 = vmatprep.subr.mxu0 0.0
        %6561 = vmatpush2.msra.mxu0 0.0
        %6562 = vmatprep.subr.mxu0 0.0
        %6563 = vmatpush2.msra.mxu0 0.0
        %6564 = vmatprep.subr.mxu0 0.0
        %6565 = vmatpush2.msra.mxu0 0.0
        %6566 = vmatprep.subr.mxu0 0.0
        %6567 = vmatpush2.msra.mxu0 0.0
        %6568 = vmatprep.subr.mxu0 0.0
        %6569 = vmatpush2.msra.mxu0 0.0
        %6570 = vmatprep.subr.mxu0 0.0
        %6571 = vmatpush2.msra.mxu0 0.0
        %6572 = vmatprep.subr.mxu0 0.0
        %6573 = vmatpush2.msra.mxu0 0.0
        %6574 = vmatprep.subr.mxu0 0.0
        %6575 = vmatpush2.msra.mxu0 0.0
        %6576 = vmatprep.subr.mxu0 0.0
        %6577 = vmatpush2.msra.mxu0 0.0
        %6578 = vmatprep.subr.mxu0 0.0
        %6579 = vmatpush2.msra.mxu0 0.0
        %6580 = vmatprep.subr.mxu0 0.0
        %6581 = vmatpush2.msra.mxu0 0.0
        %6582 = vmatprep.subr.mxu0 0.0
        %6583 = vmatpush2.msra.mxu0 0.0
        %6584 = vmatprep.mubr.f32.mxu0 0.0
        %v6585 = vand.u32 %v5414, 4294901760
        %6586 = vmatmul.mubr.f32.gmra.mxu0 %v6585
        %v6587 = vpop.f32.mrf.mxu0
        %v6588 = vadd.f32 %v6497, %v6587
        %v6589 = vpop.f32.mrf.mxu0
        %6590 = vmatprep.mubr.f32.mxu0 0.0
        %v6591 = vand.u32 %v5417, 4294901760
        %6592 = vmatmul.mubr.f32.gmra.mxu0 %v6591
        %v6593 = vpop.f32.mrf.mxu0
        %v6594 = vadd.f32 %v6507, %v6593
        %v6595 = vpop.f32.mrf.mxu0
        %6596 = vdwg.mxu0
        %6597 = vmatprep.subr.mxu0 0.0
        %6598 = vmatpush1.msra.mxu0 0.0
        %6599 = vmatprep.subr.mxu0 0.0
        %6600 = vmatpush1.msra.mxu0 0.0
        %6601 = vmatprep.subr.mxu0 0.0
        %6602 = vmatpush1.msra.mxu0 0.0
        %6603 = vmatprep.subr.mxu0 0.0
        %6604 = vmatpush1.msra.mxu0 0.0
        %6605 = vmatprep.subr.mxu0 0.0
        %6606 = vmatpush1.msra.mxu0 0.0
        %6607 = vmatprep.subr.mxu0 0.0
        %6608 = vmatpush1.msra.mxu0 0.0
        %6609 = vmatprep.subr.mxu0 0.0
        %6610 = vmatpush1.msra.mxu0 0.0
        %6611 = vmatprep.subr.mxu0 0.0
        %6612 = vmatpush1.msra.mxu0 0.0
        %6613 = vmatprep.subr.mxu0 0.0
        %6614 = vmatpush1.msra.mxu0 0.0
        %6615 = vmatprep.subr.mxu0 0.0
        %6616 = vmatpush1.msra.mxu0 0.0
        %6617 = vmatprep.subr.mxu0 0.0
        %6618 = vmatpush1.msra.mxu0 0.0
        %6619 = vmatprep.subr.mxu0 0.0
        %6620 = vmatpush1.msra.mxu0 0.0
        %6621 = vmatprep.subr.mxu0 0.0
        %6622 = vmatpush1.msra.mxu0 0.0
        %6623 = vmatprep.subr.mxu0 0.0
        %6624 = vmatpush1.msra.mxu0 0.0
        %6625 = vmatprep.subr.mxu0 0.0
        %v6626 = vand.u32 %v1854, 4294901760
        %v6627 = vsub.f32 %v1854, %v6626
        %6628 = vmatpush1.msra.mxu0 %v6627
        %6629 = vmatprep.subr.mxu0 0.0
        %v6630 = vand.u32 %v1848, 4294901760
        %v6631 = vsub.f32 %v1848, %v6630
        %6632 = vmatpush1.msra.mxu0 %v6631
        %6633 = vmatprep.subr.mxu0 0.0
        %6634 = vmatpush2.msra.mxu0 0.0
        %6635 = vmatprep.subr.mxu0 0.0
        %6636 = vmatpush2.msra.mxu0 0.0
        %6637 = vmatprep.subr.mxu0 0.0
        %6638 = vmatpush2.msra.mxu0 0.0
        %6639 = vmatprep.subr.mxu0 0.0
        %6640 = vmatpush2.msra.mxu0 0.0
        %6641 = vmatprep.subr.mxu0 0.0
        %6642 = vmatpush2.msra.mxu0 0.0
        %6643 = vmatprep.subr.mxu0 0.0
        %6644 = vmatpush2.msra.mxu0 0.0
        %6645 = vmatprep.subr.mxu0 0.0
        %6646 = vmatpush2.msra.mxu0 0.0
        %6647 = vmatprep.subr.mxu0 0.0
        %6648 = vmatpush2.msra.mxu0 0.0
        %6649 = vmatprep.subr.mxu0 0.0
        %6650 = vmatpush2.msra.mxu0 0.0
        %6651 = vmatprep.subr.mxu0 0.0
        %6652 = vmatpush2.msra.mxu0 0.0
        %6653 = vmatprep.subr.mxu0 0.0
        %6654 = vmatpush2.msra.mxu0 0.0
        %6655 = vmatprep.subr.mxu0 0.0
        %6656 = vmatpush2.msra.mxu0 0.0
        %6657 = vmatprep.subr.mxu0 0.0
        %6658 = vmatpush2.msra.mxu0 0.0
        %6659 = vmatprep.subr.mxu0 0.0
        %6660 = vmatpush2.msra.mxu0 0.0
        %6661 = vmatprep.subr.mxu0 0.0
        %6662 = vmatpush2.msra.mxu0 0.0
        %6663 = vmatprep.subr.mxu0 0.0
        %6664 = vmatpush2.msra.mxu0 0.0
        %6665 = vmatprep.mubr.f32.mxu0 0.0
        %v6666 = vand.u32 %v5414, 4294901760
        %v6667 = vsub.f32 %v5414, %v6666
        %6668 = vmatmul.mubr.f32.gmra.mxu0 %v6667
        %v6669 = vpop.f32.mrf.mxu0
        %v6670 = vadd.f32 %v6588, %v6669
        %v6671 = vpop.f32.mrf.mxu0
        %6672 = vmatprep.mubr.f32.mxu0 0.0
        %v6673 = vand.u32 %v5417, 4294901760
        %v6674 = vsub.f32 %v5417, %v6673
        %6675 = vmatmul.mubr.f32.gmra.mxu0 %v6674
        %v6676 = vpop.f32.mrf.mxu0
        %v6677 = vadd.f32 %v6594, %v6676
        %v6678 = vpop.f32.mrf.mxu0
        %6679 = vdwg.mxu0
        %6680 = vmatprep.subr.mxu0 0.0
        %6681 = vmatpush1.msra.mxu0 0.0
        %6682 = vmatprep.subr.mxu0 0.0
        %6683 = vmatpush1.msra.mxu0 0.0
        %6684 = vmatprep.subr.mxu0 0.0
        %6685 = vmatpush1.msra.mxu0 0.0
        %6686 = vmatprep.subr.mxu0 0.0
        %6687 = vmatpush1.msra.mxu0 0.0
        %6688 = vmatprep.subr.mxu0 0.0
        %6689 = vmatpush1.msra.mxu0 0.0
        %6690 = vmatprep.subr.mxu0 0.0
        %6691 = vmatpush1.msra.mxu0 0.0
        %6692 = vmatprep.subr.mxu0 0.0
        %6693 = vmatpush1.msra.mxu0 0.0
        %6694 = vmatprep.subr.mxu0 0.0
        %6695 = vmatpush1.msra.mxu0 0.0
        %6696 = vmatprep.subr.mxu0 0.0
        %6697 = vmatpush1.msra.mxu0 0.0
        %6698 = vmatprep.subr.mxu0 0.0
        %6699 = vmatpush1.msra.mxu0 0.0
        %6700 = vmatprep.subr.mxu0 0.0
        %6701 = vmatpush1.msra.mxu0 0.0
        %6702 = vmatprep.subr.mxu0 0.0
        %6703 = vmatpush1.msra.mxu0 0.0
        %6704 = vmatprep.subr.mxu0 0.0
        %6705 = vmatpush1.msra.mxu0 0.0
        %6706 = vmatprep.subr.mxu0 0.0
        %6707 = vmatpush1.msra.mxu0 0.0
        %6708 = vmatprep.subr.mxu0 0.0
        %v6709 = vand.u32 %v1854, 4294901760
        %6710 = vmatpush1.msra.mxu0 %v6709
        %6711 = vmatprep.subr.mxu0 0.0
        %v6712 = vand.u32 %v1848, 4294901760
        %6713 = vmatpush1.msra.mxu0 %v6712
        %6714 = vmatprep.subr.mxu0 0.0
        %6715 = vmatpush2.msra.mxu0 0.0
        %6716 = vmatprep.subr.mxu0 0.0
        %6717 = vmatpush2.msra.mxu0 0.0
        %6718 = vmatprep.subr.mxu0 0.0
        %6719 = vmatpush2.msra.mxu0 0.0
        %6720 = vmatprep.subr.mxu0 0.0
        %6721 = vmatpush2.msra.mxu0 0.0
        %6722 = vmatprep.subr.mxu0 0.0
        %6723 = vmatpush2.msra.mxu0 0.0
        %6724 = vmatprep.subr.mxu0 0.0
        %6725 = vmatpush2.msra.mxu0 0.0
        %6726 = vmatprep.subr.mxu0 0.0
        %6727 = vmatpush2.msra.mxu0 0.0
        %6728 = vmatprep.subr.mxu0 0.0
        %6729 = vmatpush2.msra.mxu0 0.0
        %6730 = vmatprep.subr.mxu0 0.0
        %6731 = vmatpush2.msra.mxu0 0.0
        %6732 = vmatprep.subr.mxu0 0.0
        %6733 = vmatpush2.msra.mxu0 0.0
        %6734 = vmatprep.subr.mxu0 0.0
        %6735 = vmatpush2.msra.mxu0 0.0
        %6736 = vmatprep.subr.mxu0 0.0
        %6737 = vmatpush2.msra.mxu0 0.0
        %6738 = vmatprep.subr.mxu0 0.0
        %6739 = vmatpush2.msra.mxu0 0.0
        %6740 = vmatprep.subr.mxu0 0.0
        %6741 = vmatpush2.msra.mxu0 0.0
        %6742 = vmatprep.subr.mxu0 0.0
        %6743 = vmatpush2.msra.mxu0 0.0
        %6744 = vmatprep.subr.mxu0 0.0
        %6745 = vmatpush2.msra.mxu0 0.0
        %6746 = vmatprep.mubr.f32.mxu0 0.0
        %v6747 = vand.u32 %v5414, 4294901760
        %v6748 = vsub.f32 %v5414, %v6747
        %v6749 = vand.u32 %v6748, 4294901760
        %6750 = vmatmul.mubr.f32.gmra.mxu0 %v6749
        %v6751 = vpop.f32.mrf.mxu0
        %v6752 = vadd.f32 %v6670, %v6751
        %v6753 = vpop.f32.mrf.mxu0
        %6754 = vmatprep.mubr.f32.mxu0 0.0
        %v6755 = vand.u32 %v5417, 4294901760
        %v6756 = vsub.f32 %v5417, %v6755
        %v6757 = vand.u32 %v6756, 4294901760
        %6758 = vmatmul.mubr.f32.gmra.mxu0 %v6757
        %v6759 = vpop.f32.mrf.mxu0
        %v6760 = vadd.f32 %v6677, %v6759
        %v6761 = vpop.f32.mrf.mxu0
        %6762 = vdwg.mxu0
        %6763 = vmatprep.subr.mxu0 0.0
        %6764 = vmatpush1.msra.mxu0 0.0
        %6765 = vmatprep.subr.mxu0 0.0
        %6766 = vmatpush1.msra.mxu0 0.0
        %6767 = vmatprep.subr.mxu0 0.0
        %6768 = vmatpush1.msra.mxu0 0.0
        %6769 = vmatprep.subr.mxu0 0.0
        %6770 = vmatpush1.msra.mxu0 0.0
        %6771 = vmatprep.subr.mxu0 0.0
        %6772 = vmatpush1.msra.mxu0 0.0
        %6773 = vmatprep.subr.mxu0 0.0
        %6774 = vmatpush1.msra.mxu0 0.0
        %6775 = vmatprep.subr.mxu0 0.0
        %6776 = vmatpush1.msra.mxu0 0.0
        %6777 = vmatprep.subr.mxu0 0.0
        %6778 = vmatpush1.msra.mxu0 0.0
        %6779 = vmatprep.subr.mxu0 0.0
        %6780 = vmatpush1.msra.mxu0 0.0
        %6781 = vmatprep.subr.mxu0 0.0
        %6782 = vmatpush1.msra.mxu0 0.0
        %6783 = vmatprep.subr.mxu0 0.0
        %6784 = vmatpush1.msra.mxu0 0.0
        %6785 = vmatprep.subr.mxu0 0.0
        %6786 = vmatpush1.msra.mxu0 0.0
        %6787 = vmatprep.subr.mxu0 0.0
        %6788 = vmatpush1.msra.mxu0 0.0
        %6789 = vmatprep.subr.mxu0 0.0
        %6790 = vmatpush1.msra.mxu0 0.0
        %6791 = vmatprep.subr.mxu0 0.0
        %v6792 = vand.u32 %v1854, 4294901760
        %v6793 = vsub.f32 %v1854, %v6792
        %v6794 = vand.u32 %v6793, 4294901760
        %6795 = vmatpush1.msra.mxu0 %v6794
        %6796 = vmatprep.subr.mxu0 0.0
        %v6797 = vand.u32 %v1848, 4294901760
        %v6798 = vsub.f32 %v1848, %v6797
        %v6799 = vand.u32 %v6798, 4294901760
        %6800 = vmatpush1.msra.mxu0 %v6799
        %6801 = vmatprep.subr.mxu0 0.0
        %6802 = vmatpush2.msra.mxu0 0.0
        %6803 = vmatprep.subr.mxu0 0.0
        %6804 = vmatpush2.msra.mxu0 0.0
        %6805 = vmatprep.subr.mxu0 0.0
        %6806 = vmatpush2.msra.mxu0 0.0
        %6807 = vmatprep.subr.mxu0 0.0
        %6808 = vmatpush2.msra.mxu0 0.0
        %6809 = vmatprep.subr.mxu0 0.0
        %6810 = vmatpush2.msra.mxu0 0.0
        %6811 = vmatprep.subr.mxu0 0.0
        %6812 = vmatpush2.msra.mxu0 0.0
        %6813 = vmatprep.subr.mxu0 0.0
        %6814 = vmatpush2.msra.mxu0 0.0
        %6815 = vmatprep.subr.mxu0 0.0
        %6816 = vmatpush2.msra.mxu0 0.0
        %6817 = vmatprep.subr.mxu0 0.0
        %6818 = vmatpush2.msra.mxu0 0.0
        %6819 = vmatprep.subr.mxu0 0.0
        %6820 = vmatpush2.msra.mxu0 0.0
        %6821 = vmatprep.subr.mxu0 0.0
        %6822 = vmatpush2.msra.mxu0 0.0
        %6823 = vmatprep.subr.mxu0 0.0
        %6824 = vmatpush2.msra.mxu0 0.0
        %6825 = vmatprep.subr.mxu0 0.0
        %6826 = vmatpush2.msra.mxu0 0.0
        %6827 = vmatprep.subr.mxu0 0.0
        %6828 = vmatpush2.msra.mxu0 0.0
        %6829 = vmatprep.subr.mxu0 0.0
        %6830 = vmatpush2.msra.mxu0 0.0
        %6831 = vmatprep.subr.mxu0 0.0
        %6832 = vmatpush2.msra.mxu0 0.0
        %6833 = vmatprep.mubr.f32.mxu0 0.0
        %v6834 = vand.u32 %v5414, 4294901760
        %6835 = vmatmul.mubr.f32.gmra.mxu0 %v6834
        %v6836 = vpop.f32.mrf.mxu0
        %v6837 = vadd.f32 %v6752, %v6836
        %v6838 = vpop.f32.mrf.mxu0
        %6839 = vmatprep.mubr.f32.mxu0 0.0
        %v6840 = vand.u32 %v5417, 4294901760
        %6841 = vmatmul.mubr.f32.gmra.mxu0 %v6840
        %v6842 = vpop.f32.mrf.mxu0
        %v6843 = vadd.f32 %v6760, %v6842
        %v6844 = vpop.f32.mrf.mxu0
        %6845 = vdwg.mxu0
        %6846 = vmatprep.subr.mxu0 0.0
        %6847 = vmatpush1.msra.mxu0 0.0
        %6848 = vmatprep.subr.mxu0 0.0
        %6849 = vmatpush1.msra.mxu0 0.0
        %6850 = vmatprep.subr.mxu0 0.0
        %6851 = vmatpush1.msra.mxu0 0.0
        %6852 = vmatprep.subr.mxu0 0.0
        %6853 = vmatpush1.msra.mxu0 0.0
        %6854 = vmatprep.subr.mxu0 0.0
        %6855 = vmatpush1.msra.mxu0 0.0
        %6856 = vmatprep.subr.mxu0 0.0
        %6857 = vmatpush1.msra.mxu0 0.0
        %6858 = vmatprep.subr.mxu0 0.0
        %6859 = vmatpush1.msra.mxu0 0.0
        %6860 = vmatprep.subr.mxu0 0.0
        %6861 = vmatpush1.msra.mxu0 0.0
        %6862 = vmatprep.subr.mxu0 0.0
        %6863 = vmatpush1.msra.mxu0 0.0
        %6864 = vmatprep.subr.mxu0 0.0
        %6865 = vmatpush1.msra.mxu0 0.0
        %6866 = vmatprep.subr.mxu0 0.0
        %6867 = vmatpush1.msra.mxu0 0.0
        %6868 = vmatprep.subr.mxu0 0.0
        %6869 = vmatpush1.msra.mxu0 0.0
        %6870 = vmatprep.subr.mxu0 0.0
        %6871 = vmatpush1.msra.mxu0 0.0
        %6872 = vmatprep.subr.mxu0 0.0
        %6873 = vmatpush1.msra.mxu0 0.0
        %6874 = vmatprep.subr.mxu0 0.0
        %v6875 = vand.u32 %v1854, 4294901760
        %6876 = vmatpush1.msra.mxu0 %v6875
        %6877 = vmatprep.subr.mxu0 0.0
        %v6878 = vand.u32 %v1848, 4294901760
        %6879 = vmatpush1.msra.mxu0 %v6878
        %6880 = vmatprep.subr.mxu0 0.0
        %6881 = vmatpush2.msra.mxu0 0.0
        %6882 = vmatprep.subr.mxu0 0.0
        %6883 = vmatpush2.msra.mxu0 0.0
        %6884 = vmatprep.subr.mxu0 0.0
        %6885 = vmatpush2.msra.mxu0 0.0
        %6886 = vmatprep.subr.mxu0 0.0
        %6887 = vmatpush2.msra.mxu0 0.0
        %6888 = vmatprep.subr.mxu0 0.0
        %6889 = vmatpush2.msra.mxu0 0.0
        %6890 = vmatprep.subr.mxu0 0.0
        %6891 = vmatpush2.msra.mxu0 0.0
        %6892 = vmatprep.subr.mxu0 0.0
        %6893 = vmatpush2.msra.mxu0 0.0
        %6894 = vmatprep.subr.mxu0 0.0
        %6895 = vmatpush2.msra.mxu0 0.0
        %6896 = vmatprep.subr.mxu0 0.0
        %6897 = vmatpush2.msra.mxu0 0.0
        %6898 = vmatprep.subr.mxu0 0.0
        %6899 = vmatpush2.msra.mxu0 0.0
        %6900 = vmatprep.subr.mxu0 0.0
        %6901 = vmatpush2.msra.mxu0 0.0
        %6902 = vmatprep.subr.mxu0 0.0
        %6903 = vmatpush2.msra.mxu0 0.0
        %6904 = vmatprep.subr.mxu0 0.0
        %6905 = vmatpush2.msra.mxu0 0.0
        %6906 = vmatprep.subr.mxu0 0.0
        %6907 = vmatpush2.msra.mxu0 0.0
        %6908 = vmatprep.subr.mxu0 0.0
        %6909 = vmatpush2.msra.mxu0 0.0
        %6910 = vmatprep.subr.mxu0 0.0
        %6911 = vmatpush2.msra.mxu0 0.0
        %6912 = vmatprep.mubr.f32.mxu0 0.0
        %v6913 = vand.u32 %v5414, 4294901760
        %6914 = vmatmul.mubr.f32.gmra.mxu0 %v6913
        %v6915 = vpop.f32.mrf.mxu0
        %v6916 = vadd.f32 %v6837, %v6915
        %v6917 = vpop.f32.mrf.mxu0
        %6918 = vmatprep.mubr.f32.mxu0 0.0
        %v6919 = vand.u32 %v5417, 4294901760
        %6920 = vmatmul.mubr.f32.gmra.mxu0 %v6919
        %v6921 = vpop.f32.mrf.mxu0
        %v6922 = vadd.f32 %v6843, %v6921
        %v6923 = vpop.f32.mrf.mxu0
        %6924 = vdwg.mxu0
        %6925 = vmatprep.subr.mxu0 0.0
        %6926 = vmatpush1.msra.mxu0 0.0
        %6927 = vmatprep.subr.mxu0 0.0
        %6928 = vmatpush1.msra.mxu0 0.0
        %6929 = vmatprep.subr.mxu0 0.0
        %6930 = vmatpush1.msra.mxu0 0.0
        %6931 = vmatprep.subr.mxu0 0.0
        %6932 = vmatpush1.msra.mxu0 0.0
        %6933 = vmatprep.subr.mxu0 0.0
        %6934 = vmatpush1.msra.mxu0 0.0
        %6935 = vmatprep.subr.mxu0 0.0
        %6936 = vmatpush1.msra.mxu0 0.0
        %6937 = vmatprep.subr.mxu0 0.0
        %6938 = vmatpush1.msra.mxu0 0.0
        %6939 = vmatprep.subr.mxu0 0.0
        %6940 = vmatpush1.msra.mxu0 0.0
        %6941 = vmatprep.subr.mxu0 0.0
        %6942 = vmatpush1.msra.mxu0 0.0
        %6943 = vmatprep.subr.mxu0 0.0
        %6944 = vmatpush1.msra.mxu0 0.0
        %6945 = vmatprep.subr.mxu0 0.0
        %6946 = vmatpush1.msra.mxu0 0.0
        %6947 = vmatprep.subr.mxu0 0.0
        %6948 = vmatpush1.msra.mxu0 0.0
        %6949 = vmatprep.subr.mxu0 0.0
        %6950 = vmatpush1.msra.mxu0 0.0
        %6951 = vmatprep.subr.mxu0 0.0
        %6952 = vmatpush1.msra.mxu0 0.0
        %6953 = vmatprep.subr.mxu0 0.0
        %v6954 = vand.u32 %v2362, 4294901760
        %6955 = vmatpush1.msra.mxu0 %v6954
        %6956 = vmatprep.subr.mxu0 0.0
        %v6957 = vand.u32 %v2356, 4294901760
        %6958 = vmatpush1.msra.mxu0 %v6957
        %6959 = vmatprep.subr.mxu0 0.0
        %6960 = vmatpush2.msra.mxu0 0.0
        %6961 = vmatprep.subr.mxu0 0.0
        %6962 = vmatpush2.msra.mxu0 0.0
        %6963 = vmatprep.subr.mxu0 0.0
        %6964 = vmatpush2.msra.mxu0 0.0
        %6965 = vmatprep.subr.mxu0 0.0
        %6966 = vmatpush2.msra.mxu0 0.0
        %6967 = vmatprep.subr.mxu0 0.0
        %6968 = vmatpush2.msra.mxu0 0.0
        %6969 = vmatprep.subr.mxu0 0.0
        %6970 = vmatpush2.msra.mxu0 0.0
        %6971 = vmatprep.subr.mxu0 0.0
        %6972 = vmatpush2.msra.mxu0 0.0
        %6973 = vmatprep.subr.mxu0 0.0
        %6974 = vmatpush2.msra.mxu0 0.0
        %6975 = vmatprep.subr.mxu0 0.0
        %6976 = vmatpush2.msra.mxu0 0.0
        %6977 = vmatprep.subr.mxu0 0.0
        %6978 = vmatpush2.msra.mxu0 0.0
        %6979 = vmatprep.subr.mxu0 0.0
        %6980 = vmatpush2.msra.mxu0 0.0
        %6981 = vmatprep.subr.mxu0 0.0
        %6982 = vmatpush2.msra.mxu0 0.0
        %6983 = vmatprep.subr.mxu0 0.0
        %6984 = vmatpush2.msra.mxu0 0.0
        %6985 = vmatprep.subr.mxu0 0.0
        %6986 = vmatpush2.msra.mxu0 0.0
        %6987 = vmatprep.subr.mxu0 0.0
        %6988 = vmatpush2.msra.mxu0 0.0
        %6989 = vmatprep.subr.mxu0 0.0
        %6990 = vmatpush2.msra.mxu0 0.0
        %6991 = vmatprep.mubr.f32.mxu0 0.0
        %v6992 = vand.u32 %v5414, 4294901760
        %v6993 = vsub.f32 %v5414, %v6992
        %v6994 = vand.u32 %v6993, 4294901760
        %v6995 = vsub.f32 %v6993, %v6994
        %v6996 = vand.u32 %v6995, 4294901760
        %6997 = vmatmul.mubr.f32.gmra.mxu0 %v6996
        %v6998 = vpop.f32.mrf.mxu0
        %v6999 = vadd.f32 0.0, %v6998
        %v7000 = vpop.f32.mrf.mxu0
        %7001 = vmatprep.mubr.f32.mxu0 0.0
        %v7002 = vand.u32 %v5417, 4294901760
        %v7003 = vsub.f32 %v5417, %v7002
        %v7004 = vand.u32 %v7003, 4294901760
        %v7005 = vsub.f32 %v7003, %v7004
        %v7006 = vand.u32 %v7005, 4294901760
        %7007 = vmatmul.mubr.f32.gmra.mxu0 %v7006
        %v7008 = vpop.f32.mrf.mxu0
        %v7009 = vadd.f32 0.0, %v7008
        %v7010 = vpop.f32.mrf.mxu0
        %7011 = vdwg.mxu0
        %7012 = vmatprep.subr.mxu0 0.0
        %7013 = vmatpush1.msra.mxu0 0.0
        %7014 = vmatprep.subr.mxu0 0.0
        %7015 = vmatpush1.msra.mxu0 0.0
        %7016 = vmatprep.subr.mxu0 0.0
        %7017 = vmatpush1.msra.mxu0 0.0
        %7018 = vmatprep.subr.mxu0 0.0
        %7019 = vmatpush1.msra.mxu0 0.0
        %7020 = vmatprep.subr.mxu0 0.0
        %7021 = vmatpush1.msra.mxu0 0.0
        %7022 = vmatprep.subr.mxu0 0.0
        %7023 = vmatpush1.msra.mxu0 0.0
        %7024 = vmatprep.subr.mxu0 0.0
        %7025 = vmatpush1.msra.mxu0 0.0
        %7026 = vmatprep.subr.mxu0 0.0
        %7027 = vmatpush1.msra.mxu0 0.0
        %7028 = vmatprep.subr.mxu0 0.0
        %7029 = vmatpush1.msra.mxu0 0.0
        %7030 = vmatprep.subr.mxu0 0.0
        %7031 = vmatpush1.msra.mxu0 0.0
        %7032 = vmatprep.subr.mxu0 0.0
        %7033 = vmatpush1.msra.mxu0 0.0
        %7034 = vmatprep.subr.mxu0 0.0
        %7035 = vmatpush1.msra.mxu0 0.0
        %7036 = vmatprep.subr.mxu0 0.0
        %7037 = vmatpush1.msra.mxu0 0.0
        %7038 = vmatprep.subr.mxu0 0.0
        %7039 = vmatpush1.msra.mxu0 0.0
        %7040 = vmatprep.subr.mxu0 0.0
        %v7041 = vand.u32 %v2362, 4294901760
        %v7042 = vsub.f32 %v2362, %v7041
        %v7043 = vand.u32 %v7042, 4294901760
        %v7044 = vsub.f32 %v7042, %v7043
        %v7045 = vand.u32 %v7044, 4294901760
        %7046 = vmatpush1.msra.mxu0 %v7045
        %7047 = vmatprep.subr.mxu0 0.0
        %v7048 = vand.u32 %v2356, 4294901760
        %v7049 = vsub.f32 %v2356, %v7048
        %v7050 = vand.u32 %v7049, 4294901760
        %v7051 = vsub.f32 %v7049, %v7050
        %v7052 = vand.u32 %v7051, 4294901760
        %7053 = vmatpush1.msra.mxu0 %v7052
        %7054 = vmatprep.subr.mxu0 0.0
        %7055 = vmatpush2.msra.mxu0 0.0
        %7056 = vmatprep.subr.mxu0 0.0
        %7057 = vmatpush2.msra.mxu0 0.0
        %7058 = vmatprep.subr.mxu0 0.0
        %7059 = vmatpush2.msra.mxu0 0.0
        %7060 = vmatprep.subr.mxu0 0.0
        %7061 = vmatpush2.msra.mxu0 0.0
        %7062 = vmatprep.subr.mxu0 0.0
        %7063 = vmatpush2.msra.mxu0 0.0
        %7064 = vmatprep.subr.mxu0 0.0
        %7065 = vmatpush2.msra.mxu0 0.0
        %7066 = vmatprep.subr.mxu0 0.0
        %7067 = vmatpush2.msra.mxu0 0.0
        %7068 = vmatprep.subr.mxu0 0.0
        %7069 = vmatpush2.msra.mxu0 0.0
        %7070 = vmatprep.subr.mxu0 0.0
        %7071 = vmatpush2.msra.mxu0 0.0
        %7072 = vmatprep.subr.mxu0 0.0
        %7073 = vmatpush2.msra.mxu0 0.0
        %7074 = vmatprep.subr.mxu0 0.0
        %7075 = vmatpush2.msra.mxu0 0.0
        %7076 = vmatprep.subr.mxu0 0.0
        %7077 = vmatpush2.msra.mxu0 0.0
        %7078 = vmatprep.subr.mxu0 0.0
        %7079 = vmatpush2.msra.mxu0 0.0
        %7080 = vmatprep.subr.mxu0 0.0
        %7081 = vmatpush2.msra.mxu0 0.0
        %7082 = vmatprep.subr.mxu0 0.0
        %7083 = vmatpush2.msra.mxu0 0.0
        %7084 = vmatprep.subr.mxu0 0.0
        %7085 = vmatpush2.msra.mxu0 0.0
        %7086 = vmatprep.mubr.f32.mxu0 0.0
        %v7087 = vand.u32 %v5414, 4294901760
        %7088 = vmatmul.mubr.f32.gmra.mxu0 %v7087
        %v7089 = vpop.f32.mrf.mxu0
        %v7090 = vadd.f32 %v6999, %v7089
        %v7091 = vpop.f32.mrf.mxu0
        %7092 = vmatprep.mubr.f32.mxu0 0.0
        %v7093 = vand.u32 %v5417, 4294901760
        %7094 = vmatmul.mubr.f32.gmra.mxu0 %v7093
        %v7095 = vpop.f32.mrf.mxu0
        %v7096 = vadd.f32 %v7009, %v7095
        %v7097 = vpop.f32.mrf.mxu0
        %7098 = vdwg.mxu0
        %7099 = vmatprep.subr.mxu0 0.0
        %7100 = vmatpush1.msra.mxu0 0.0
        %7101 = vmatprep.subr.mxu0 0.0
        %7102 = vmatpush1.msra.mxu0 0.0
        %7103 = vmatprep.subr.mxu0 0.0
        %7104 = vmatpush1.msra.mxu0 0.0
        %7105 = vmatprep.subr.mxu0 0.0
        %7106 = vmatpush1.msra.mxu0 0.0
        %7107 = vmatprep.subr.mxu0 0.0
        %7108 = vmatpush1.msra.mxu0 0.0
        %7109 = vmatprep.subr.mxu0 0.0
        %7110 = vmatpush1.msra.mxu0 0.0
        %7111 = vmatprep.subr.mxu0 0.0
        %7112 = vmatpush1.msra.mxu0 0.0
        %7113 = vmatprep.subr.mxu0 0.0
        %7114 = vmatpush1.msra.mxu0 0.0
        %7115 = vmatprep.subr.mxu0 0.0
        %7116 = vmatpush1.msra.mxu0 0.0
        %7117 = vmatprep.subr.mxu0 0.0
        %7118 = vmatpush1.msra.mxu0 0.0
        %7119 = vmatprep.subr.mxu0 0.0
        %7120 = vmatpush1.msra.mxu0 0.0
        %7121 = vmatprep.subr.mxu0 0.0
        %7122 = vmatpush1.msra.mxu0 0.0
        %7123 = vmatprep.subr.mxu0 0.0
        %7124 = vmatpush1.msra.mxu0 0.0
        %7125 = vmatprep.subr.mxu0 0.0
        %7126 = vmatpush1.msra.mxu0 0.0
        %7127 = vmatprep.subr.mxu0 0.0
        %v7128 = vand.u32 %v2362, 4294901760
        %v7129 = vsub.f32 %v2362, %v7128
        %7130 = vmatpush1.msra.mxu0 %v7129
        %7131 = vmatprep.subr.mxu0 0.0
        %v7132 = vand.u32 %v2356, 4294901760
        %v7133 = vsub.f32 %v2356, %v7132
        %7134 = vmatpush1.msra.mxu0 %v7133
        %7135 = vmatprep.subr.mxu0 0.0
        %7136 = vmatpush2.msra.mxu0 0.0
        %7137 = vmatprep.subr.mxu0 0.0
        %7138 = vmatpush2.msra.mxu0 0.0
        %7139 = vmatprep.subr.mxu0 0.0
        %7140 = vmatpush2.msra.mxu0 0.0
        %7141 = vmatprep.subr.mxu0 0.0
        %7142 = vmatpush2.msra.mxu0 0.0
        %7143 = vmatprep.subr.mxu0 0.0
        %7144 = vmatpush2.msra.mxu0 0.0
        %7145 = vmatprep.subr.mxu0 0.0
        %7146 = vmatpush2.msra.mxu0 0.0
        %7147 = vmatprep.subr.mxu0 0.0
        %7148 = vmatpush2.msra.mxu0 0.0
        %7149 = vmatprep.subr.mxu0 0.0
        %7150 = vmatpush2.msra.mxu0 0.0
        %7151 = vmatprep.subr.mxu0 0.0
        %7152 = vmatpush2.msra.mxu0 0.0
        %7153 = vmatprep.subr.mxu0 0.0
        %7154 = vmatpush2.msra.mxu0 0.0
        %7155 = vmatprep.subr.mxu0 0.0
        %7156 = vmatpush2.msra.mxu0 0.0
        %7157 = vmatprep.subr.mxu0 0.0
        %7158 = vmatpush2.msra.mxu0 0.0
        %7159 = vmatprep.subr.mxu0 0.0
        %7160 = vmatpush2.msra.mxu0 0.0
        %7161 = vmatprep.subr.mxu0 0.0
        %7162 = vmatpush2.msra.mxu0 0.0
        %7163 = vmatprep.subr.mxu0 0.0
        %7164 = vmatpush2.msra.mxu0 0.0
        %7165 = vmatprep.subr.mxu0 0.0
        %7166 = vmatpush2.msra.mxu0 0.0
        %7167 = vmatprep.mubr.f32.mxu0 0.0
        %v7168 = vand.u32 %v5414, 4294901760
        %v7169 = vsub.f32 %v5414, %v7168
        %7170 = vmatmul.mubr.f32.gmra.mxu0 %v7169
        %v7171 = vpop.f32.mrf.mxu0
        %v7172 = vadd.f32 %v7090, %v7171
        %v7173 = vpop.f32.mrf.mxu0
        %7174 = vmatprep.mubr.f32.mxu0 0.0
        %v7175 = vand.u32 %v5417, 4294901760
        %v7176 = vsub.f32 %v5417, %v7175
        %7177 = vmatmul.mubr.f32.gmra.mxu0 %v7176
        %v7178 = vpop.f32.mrf.mxu0
        %v7179 = vadd.f32 %v7096, %v7178
        %v7180 = vpop.f32.mrf.mxu0
        %7181 = vdwg.mxu0
        %7182 = vmatprep.subr.mxu0 0.0
        %7183 = vmatpush1.msra.mxu0 0.0
        %7184 = vmatprep.subr.mxu0 0.0
        %7185 = vmatpush1.msra.mxu0 0.0
        %7186 = vmatprep.subr.mxu0 0.0
        %7187 = vmatpush1.msra.mxu0 0.0
        %7188 = vmatprep.subr.mxu0 0.0
        %7189 = vmatpush1.msra.mxu0 0.0
        %7190 = vmatprep.subr.mxu0 0.0
        %7191 = vmatpush1.msra.mxu0 0.0
        %7192 = vmatprep.subr.mxu0 0.0
        %7193 = vmatpush1.msra.mxu0 0.0
        %7194 = vmatprep.subr.mxu0 0.0
        %7195 = vmatpush1.msra.mxu0 0.0
        %7196 = vmatprep.subr.mxu0 0.0
        %7197 = vmatpush1.msra.mxu0 0.0
        %7198 = vmatprep.subr.mxu0 0.0
        %7199 = vmatpush1.msra.mxu0 0.0
        %7200 = vmatprep.subr.mxu0 0.0
        %7201 = vmatpush1.msra.mxu0 0.0
        %7202 = vmatprep.subr.mxu0 0.0
        %7203 = vmatpush1.msra.mxu0 0.0
        %7204 = vmatprep.subr.mxu0 0.0
        %7205 = vmatpush1.msra.mxu0 0.0
        %7206 = vmatprep.subr.mxu0 0.0
        %7207 = vmatpush1.msra.mxu0 0.0
        %7208 = vmatprep.subr.mxu0 0.0
        %7209 = vmatpush1.msra.mxu0 0.0
        %7210 = vmatprep.subr.mxu0 0.0
        %v7211 = vand.u32 %v2362, 4294901760
        %7212 = vmatpush1.msra.mxu0 %v7211
        %7213 = vmatprep.subr.mxu0 0.0
        %v7214 = vand.u32 %v2356, 4294901760
        %7215 = vmatpush1.msra.mxu0 %v7214
        %7216 = vmatprep.subr.mxu0 0.0
        %7217 = vmatpush2.msra.mxu0 0.0
        %7218 = vmatprep.subr.mxu0 0.0
        %7219 = vmatpush2.msra.mxu0 0.0
        %7220 = vmatprep.subr.mxu0 0.0
        %7221 = vmatpush2.msra.mxu0 0.0
        %7222 = vmatprep.subr.mxu0 0.0
        %7223 = vmatpush2.msra.mxu0 0.0
        %7224 = vmatprep.subr.mxu0 0.0
        %7225 = vmatpush2.msra.mxu0 0.0
        %7226 = vmatprep.subr.mxu0 0.0
        %7227 = vmatpush2.msra.mxu0 0.0
        %7228 = vmatprep.subr.mxu0 0.0
        %7229 = vmatpush2.msra.mxu0 0.0
        %7230 = vmatprep.subr.mxu0 0.0
        %7231 = vmatpush2.msra.mxu0 0.0
        %7232 = vmatprep.subr.mxu0 0.0
        %7233 = vmatpush2.msra.mxu0 0.0
        %7234 = vmatprep.subr.mxu0 0.0
        %7235 = vmatpush2.msra.mxu0 0.0
        %7236 = vmatprep.subr.mxu0 0.0
        %7237 = vmatpush2.msra.mxu0 0.0
        %7238 = vmatprep.subr.mxu0 0.0
        %7239 = vmatpush2.msra.mxu0 0.0
        %7240 = vmatprep.subr.mxu0 0.0
        %7241 = vmatpush2.msra.mxu0 0.0
        %7242 = vmatprep.subr.mxu0 0.0
        %7243 = vmatpush2.msra.mxu0 0.0
        %7244 = vmatprep.subr.mxu0 0.0
        %7245 = vmatpush2.msra.mxu0 0.0
        %7246 = vmatprep.subr.mxu0 0.0
        %7247 = vmatpush2.msra.mxu0 0.0
        %7248 = vmatprep.mubr.f32.mxu0 0.0
        %v7249 = vand.u32 %v5414, 4294901760
        %v7250 = vsub.f32 %v5414, %v7249
        %v7251 = vand.u32 %v7250, 4294901760
        %7252 = vmatmul.mubr.f32.gmra.mxu0 %v7251
        %v7253 = vpop.f32.mrf.mxu0
        %v7254 = vadd.f32 %v7172, %v7253
        %v7255 = vpop.f32.mrf.mxu0
        %7256 = vmatprep.mubr.f32.mxu0 0.0
        %v7257 = vand.u32 %v5417, 4294901760
        %v7258 = vsub.f32 %v5417, %v7257
        %v7259 = vand.u32 %v7258, 4294901760
        %7260 = vmatmul.mubr.f32.gmra.mxu0 %v7259
        %v7261 = vpop.f32.mrf.mxu0
        %v7262 = vadd.f32 %v7179, %v7261
        %v7263 = vpop.f32.mrf.mxu0
        %7264 = vdwg.mxu0
        %7265 = vmatprep.subr.mxu0 0.0
        %7266 = vmatpush1.msra.mxu0 0.0
        %7267 = vmatprep.subr.mxu0 0.0
        %7268 = vmatpush1.msra.mxu0 0.0
        %7269 = vmatprep.subr.mxu0 0.0
        %7270 = vmatpush1.msra.mxu0 0.0
        %7271 = vmatprep.subr.mxu0 0.0
        %7272 = vmatpush1.msra.mxu0 0.0
        %7273 = vmatprep.subr.mxu0 0.0
        %7274 = vmatpush1.msra.mxu0 0.0
        %7275 = vmatprep.subr.mxu0 0.0
        %7276 = vmatpush1.msra.mxu0 0.0
        %7277 = vmatprep.subr.mxu0 0.0
        %7278 = vmatpush1.msra.mxu0 0.0
        %7279 = vmatprep.subr.mxu0 0.0
        %7280 = vmatpush1.msra.mxu0 0.0
        %7281 = vmatprep.subr.mxu0 0.0
        %7282 = vmatpush1.msra.mxu0 0.0
        %7283 = vmatprep.subr.mxu0 0.0
        %7284 = vmatpush1.msra.mxu0 0.0
        %7285 = vmatprep.subr.mxu0 0.0
        %7286 = vmatpush1.msra.mxu0 0.0
        %7287 = vmatprep.subr.mxu0 0.0
        %7288 = vmatpush1.msra.mxu0 0.0
        %7289 = vmatprep.subr.mxu0 0.0
        %7290 = vmatpush1.msra.mxu0 0.0
        %7291 = vmatprep.subr.mxu0 0.0
        %7292 = vmatpush1.msra.mxu0 0.0
        %7293 = vmatprep.subr.mxu0 0.0
        %v7294 = vand.u32 %v2362, 4294901760
        %v7295 = vsub.f32 %v2362, %v7294
        %v7296 = vand.u32 %v7295, 4294901760
        %7297 = vmatpush1.msra.mxu0 %v7296
        %7298 = vmatprep.subr.mxu0 0.0
        %v7299 = vand.u32 %v2356, 4294901760
        %v7300 = vsub.f32 %v2356, %v7299
        %v7301 = vand.u32 %v7300, 4294901760
        %7302 = vmatpush1.msra.mxu0 %v7301
        %7303 = vmatprep.subr.mxu0 0.0
        %7304 = vmatpush2.msra.mxu0 0.0
        %7305 = vmatprep.subr.mxu0 0.0
        %7306 = vmatpush2.msra.mxu0 0.0
        %7307 = vmatprep.subr.mxu0 0.0
        %7308 = vmatpush2.msra.mxu0 0.0
        %7309 = vmatprep.subr.mxu0 0.0
        %7310 = vmatpush2.msra.mxu0 0.0
        %7311 = vmatprep.subr.mxu0 0.0
        %7312 = vmatpush2.msra.mxu0 0.0
        %7313 = vmatprep.subr.mxu0 0.0
        %7314 = vmatpush2.msra.mxu0 0.0
        %7315 = vmatprep.subr.mxu0 0.0
        %7316 = vmatpush2.msra.mxu0 0.0
        %7317 = vmatprep.subr.mxu0 0.0
        %7318 = vmatpush2.msra.mxu0 0.0
        %7319 = vmatprep.subr.mxu0 0.0
        %7320 = vmatpush2.msra.mxu0 0.0
        %7321 = vmatprep.subr.mxu0 0.0
        %7322 = vmatpush2.msra.mxu0 0.0
        %7323 = vmatprep.subr.mxu0 0.0
        %7324 = vmatpush2.msra.mxu0 0.0
        %7325 = vmatprep.subr.mxu0 0.0
        %7326 = vmatpush2.msra.mxu0 0.0
        %7327 = vmatprep.subr.mxu0 0.0
        %7328 = vmatpush2.msra.mxu0 0.0
        %7329 = vmatprep.subr.mxu0 0.0
        %7330 = vmatpush2.msra.mxu0 0.0
        %7331 = vmatprep.subr.mxu0 0.0
        %7332 = vmatpush2.msra.mxu0 0.0
        %7333 = vmatprep.subr.mxu0 0.0
        %7334 = vmatpush2.msra.mxu0 0.0
        %7335 = vmatprep.mubr.f32.mxu0 0.0
        %v7336 = vand.u32 %v5414, 4294901760
        %7337 = vmatmul.mubr.f32.gmra.mxu0 %v7336
        %v7338 = vpop.f32.mrf.mxu0
        %v7339 = vadd.f32 %v7254, %v7338
        %v7340 = vpop.f32.mrf.mxu0
        %7341 = vmatprep.mubr.f32.mxu0 0.0
        %v7342 = vand.u32 %v5417, 4294901760
        %7343 = vmatmul.mubr.f32.gmra.mxu0 %v7342
        %v7344 = vpop.f32.mrf.mxu0
        %v7345 = vadd.f32 %v7262, %v7344
        %v7346 = vpop.f32.mrf.mxu0
        %7347 = vdwg.mxu0
        %7348 = vmatprep.subr.mxu0 0.0
        %7349 = vmatpush1.msra.mxu0 0.0
        %7350 = vmatprep.subr.mxu0 0.0
        %7351 = vmatpush1.msra.mxu0 0.0
        %7352 = vmatprep.subr.mxu0 0.0
        %7353 = vmatpush1.msra.mxu0 0.0
        %7354 = vmatprep.subr.mxu0 0.0
        %7355 = vmatpush1.msra.mxu0 0.0
        %7356 = vmatprep.subr.mxu0 0.0
        %7357 = vmatpush1.msra.mxu0 0.0
        %7358 = vmatprep.subr.mxu0 0.0
        %7359 = vmatpush1.msra.mxu0 0.0
        %7360 = vmatprep.subr.mxu0 0.0
        %7361 = vmatpush1.msra.mxu0 0.0
        %7362 = vmatprep.subr.mxu0 0.0
        %7363 = vmatpush1.msra.mxu0 0.0
        %7364 = vmatprep.subr.mxu0 0.0
        %7365 = vmatpush1.msra.mxu0 0.0
        %7366 = vmatprep.subr.mxu0 0.0
        %7367 = vmatpush1.msra.mxu0 0.0
        %7368 = vmatprep.subr.mxu0 0.0
        %7369 = vmatpush1.msra.mxu0 0.0
        %7370 = vmatprep.subr.mxu0 0.0
        %7371 = vmatpush1.msra.mxu0 0.0
        %7372 = vmatprep.subr.mxu0 0.0
        %7373 = vmatpush1.msra.mxu0 0.0
        %7374 = vmatprep.subr.mxu0 0.0
        %7375 = vmatpush1.msra.mxu0 0.0
        %7376 = vmatprep.subr.mxu0 0.0
        %v7377 = vand.u32 %v2362, 4294901760
        %7378 = vmatpush1.msra.mxu0 %v7377
        %7379 = vmatprep.subr.mxu0 0.0
        %v7380 = vand.u32 %v2356, 4294901760
        %7381 = vmatpush1.msra.mxu0 %v7380
        %7382 = vmatprep.subr.mxu0 0.0
        %7383 = vmatpush2.msra.mxu0 0.0
        %7384 = vmatprep.subr.mxu0 0.0
        %7385 = vmatpush2.msra.mxu0 0.0
        %7386 = vmatprep.subr.mxu0 0.0
        %7387 = vmatpush2.msra.mxu0 0.0
        %7388 = vmatprep.subr.mxu0 0.0
        %7389 = vmatpush2.msra.mxu0 0.0
        %7390 = vmatprep.subr.mxu0 0.0
        %7391 = vmatpush2.msra.mxu0 0.0
        %7392 = vmatprep.subr.mxu0 0.0
        %7393 = vmatpush2.msra.mxu0 0.0
        %7394 = vmatprep.subr.mxu0 0.0
        %7395 = vmatpush2.msra.mxu0 0.0
        %7396 = vmatprep.subr.mxu0 0.0
        %7397 = vmatpush2.msra.mxu0 0.0
        %7398 = vmatprep.subr.mxu0 0.0
        %7399 = vmatpush2.msra.mxu0 0.0
        %7400 = vmatprep.subr.mxu0 0.0
        %7401 = vmatpush2.msra.mxu0 0.0
        %7402 = vmatprep.subr.mxu0 0.0
        %7403 = vmatpush2.msra.mxu0 0.0
        %7404 = vmatprep.subr.mxu0 0.0
        %7405 = vmatpush2.msra.mxu0 0.0
        %7406 = vmatprep.subr.mxu0 0.0
        %7407 = vmatpush2.msra.mxu0 0.0
        %7408 = vmatprep.subr.mxu0 0.0
        %7409 = vmatpush2.msra.mxu0 0.0
        %7410 = vmatprep.subr.mxu0 0.0
        %7411 = vmatpush2.msra.mxu0 0.0
        %7412 = vmatprep.subr.mxu0 0.0
        %7413 = vmatpush2.msra.mxu0 0.0
        %7414 = vmatprep.mubr.f32.mxu0 0.0
        %v7415 = vand.u32 %v5414, 4294901760
        %7416 = vmatmul.mubr.f32.gmra.mxu0 %v7415
        %v7417 = vpop.f32.mrf.mxu0
        %v7418 = vadd.f32 %v7339, %v7417
        %v7419 = vpop.f32.mrf.mxu0
        %7420 = vmatprep.mubr.f32.mxu0 0.0
        %v7421 = vand.u32 %v5417, 4294901760
        %7422 = vmatmul.mubr.f32.gmra.mxu0 %v7421
        %v7423 = vpop.f32.mrf.mxu0
        %v7424 = vadd.f32 %v7345, %v7423
        %v7425 = vpop.f32.mrf.mxu0
        %7426 = vdwg.mxu0
        %7427 = vmatprep.subr.mxu0 0.0
        %7428 = vmatpush1.msra.mxu0 0.0
        %7429 = vmatprep.subr.mxu0 0.0
        %7430 = vmatpush1.msra.mxu0 0.0
        %7431 = vmatprep.subr.mxu0 0.0
        %7432 = vmatpush1.msra.mxu0 0.0
        %7433 = vmatprep.subr.mxu0 0.0
        %7434 = vmatpush1.msra.mxu0 0.0
        %7435 = vmatprep.subr.mxu0 0.0
        %7436 = vmatpush1.msra.mxu0 0.0
        %7437 = vmatprep.subr.mxu0 0.0
        %7438 = vmatpush1.msra.mxu0 0.0
        %7439 = vmatprep.subr.mxu0 0.0
        %7440 = vmatpush1.msra.mxu0 0.0
        %7441 = vmatprep.subr.mxu0 0.0
        %7442 = vmatpush1.msra.mxu0 0.0
        %7443 = vmatprep.subr.mxu0 0.0
        %7444 = vmatpush1.msra.mxu0 0.0
        %7445 = vmatprep.subr.mxu0 0.0
        %7446 = vmatpush1.msra.mxu0 0.0
        %7447 = vmatprep.subr.mxu0 0.0
        %7448 = vmatpush1.msra.mxu0 0.0
        %7449 = vmatprep.subr.mxu0 0.0
        %7450 = vmatpush1.msra.mxu0 0.0
        %7451 = vmatprep.subr.mxu0 0.0
        %7452 = vmatpush1.msra.mxu0 0.0
        %7453 = vmatprep.subr.mxu0 0.0
        %7454 = vmatpush1.msra.mxu0 0.0
        %7455 = vmatprep.subr.mxu0 0.0
        %v7456 = vand.u32 %v2870, 4294901760
        %7457 = vmatpush1.msra.mxu0 %v7456
        %7458 = vmatprep.subr.mxu0 0.0
        %v7459 = vand.u32 %v2864, 4294901760
        %7460 = vmatpush1.msra.mxu0 %v7459
        %7461 = vmatprep.subr.mxu0 0.0
        %7462 = vmatpush2.msra.mxu0 0.0
        %7463 = vmatprep.subr.mxu0 0.0
        %7464 = vmatpush2.msra.mxu0 0.0
        %7465 = vmatprep.subr.mxu0 0.0
        %7466 = vmatpush2.msra.mxu0 0.0
        %7467 = vmatprep.subr.mxu0 0.0
        %7468 = vmatpush2.msra.mxu0 0.0
        %7469 = vmatprep.subr.mxu0 0.0
        %7470 = vmatpush2.msra.mxu0 0.0
        %7471 = vmatprep.subr.mxu0 0.0
        %7472 = vmatpush2.msra.mxu0 0.0
        %7473 = vmatprep.subr.mxu0 0.0
        %7474 = vmatpush2.msra.mxu0 0.0
        %7475 = vmatprep.subr.mxu0 0.0
        %7476 = vmatpush2.msra.mxu0 0.0
        %7477 = vmatprep.subr.mxu0 0.0
        %7478 = vmatpush2.msra.mxu0 0.0
        %7479 = vmatprep.subr.mxu0 0.0
        %7480 = vmatpush2.msra.mxu0 0.0
        %7481 = vmatprep.subr.mxu0 0.0
        %7482 = vmatpush2.msra.mxu0 0.0
        %7483 = vmatprep.subr.mxu0 0.0
        %7484 = vmatpush2.msra.mxu0 0.0
        %7485 = vmatprep.subr.mxu0 0.0
        %7486 = vmatpush2.msra.mxu0 0.0
        %7487 = vmatprep.subr.mxu0 0.0
        %7488 = vmatpush2.msra.mxu0 0.0
        %7489 = vmatprep.subr.mxu0 0.0
        %7490 = vmatpush2.msra.mxu0 0.0
        %7491 = vmatprep.subr.mxu0 0.0
        %7492 = vmatpush2.msra.mxu0 0.0
        %7493 = vmatprep.mubr.f32.mxu0 0.0
        %v7494 = vand.u32 %v5414, 4294901760
        %v7495 = vsub.f32 %v5414, %v7494
        %v7496 = vand.u32 %v7495, 4294901760
        %v7497 = vsub.f32 %v7495, %v7496
        %v7498 = vand.u32 %v7497, 4294901760
        %7499 = vmatmul.mubr.f32.gmra.mxu0 %v7498
        %v7500 = vpop.f32.mrf.mxu0
        %v7501 = vadd.f32 0.0, %v7500
        %v7502 = vpop.f32.mrf.mxu0
        %7503 = vmatprep.mubr.f32.mxu0 0.0
        %v7504 = vand.u32 %v5417, 4294901760
        %v7505 = vsub.f32 %v5417, %v7504
        %v7506 = vand.u32 %v7505, 4294901760
        %v7507 = vsub.f32 %v7505, %v7506
        %v7508 = vand.u32 %v7507, 4294901760
        %7509 = vmatmul.mubr.f32.gmra.mxu0 %v7508
        %v7510 = vpop.f32.mrf.mxu0
        %v7511 = vadd.f32 0.0, %v7510
        %v7512 = vpop.f32.mrf.mxu0
        %7513 = vdwg.mxu0
        %7514 = vmatprep.subr.mxu0 0.0
        %7515 = vmatpush1.msra.mxu0 0.0
        %7516 = vmatprep.subr.mxu0 0.0
        %7517 = vmatpush1.msra.mxu0 0.0
        %7518 = vmatprep.subr.mxu0 0.0
        %7519 = vmatpush1.msra.mxu0 0.0
        %7520 = vmatprep.subr.mxu0 0.0
        %7521 = vmatpush1.msra.mxu0 0.0
        %7522 = vmatprep.subr.mxu0 0.0
        %7523 = vmatpush1.msra.mxu0 0.0
        %7524 = vmatprep.subr.mxu0 0.0
        %7525 = vmatpush1.msra.mxu0 0.0
        %7526 = vmatprep.subr.mxu0 0.0
        %7527 = vmatpush1.msra.mxu0 0.0
        %7528 = vmatprep.subr.mxu0 0.0
        %7529 = vmatpush1.msra.mxu0 0.0
        %7530 = vmatprep.subr.mxu0 0.0
        %7531 = vmatpush1.msra.mxu0 0.0
        %7532 = vmatprep.subr.mxu0 0.0
        %7533 = vmatpush1.msra.mxu0 0.0
        %7534 = vmatprep.subr.mxu0 0.0
        %7535 = vmatpush1.msra.mxu0 0.0
        %7536 = vmatprep.subr.mxu0 0.0
        %7537 = vmatpush1.msra.mxu0 0.0
        %7538 = vmatprep.subr.mxu0 0.0
        %7539 = vmatpush1.msra.mxu0 0.0
        %7540 = vmatprep.subr.mxu0 0.0
        %7541 = vmatpush1.msra.mxu0 0.0
        %7542 = vmatprep.subr.mxu0 0.0
        %v7543 = vand.u32 %v2870, 4294901760
        %v7544 = vsub.f32 %v2870, %v7543
        %v7545 = vand.u32 %v7544, 4294901760
        %v7546 = vsub.f32 %v7544, %v7545
        %v7547 = vand.u32 %v7546, 4294901760
        %7548 = vmatpush1.msra.mxu0 %v7547
        %7549 = vmatprep.subr.mxu0 0.0
        %v7550 = vand.u32 %v2864, 4294901760
        %v7551 = vsub.f32 %v2864, %v7550
        %v7552 = vand.u32 %v7551, 4294901760
        %v7553 = vsub.f32 %v7551, %v7552
        %v7554 = vand.u32 %v7553, 4294901760
        %7555 = vmatpush1.msra.mxu0 %v7554
        %7556 = vmatprep.subr.mxu0 0.0
        %7557 = vmatpush2.msra.mxu0 0.0
        %7558 = vmatprep.subr.mxu0 0.0
        %7559 = vmatpush2.msra.mxu0 0.0
        %7560 = vmatprep.subr.mxu0 0.0
        %7561 = vmatpush2.msra.mxu0 0.0
        %7562 = vmatprep.subr.mxu0 0.0
        %7563 = vmatpush2.msra.mxu0 0.0
        %7564 = vmatprep.subr.mxu0 0.0
        %7565 = vmatpush2.msra.mxu0 0.0
        %7566 = vmatprep.subr.mxu0 0.0
        %7567 = vmatpush2.msra.mxu0 0.0
        %7568 = vmatprep.subr.mxu0 0.0
        %7569 = vmatpush2.msra.mxu0 0.0
        %7570 = vmatprep.subr.mxu0 0.0
        %7571 = vmatpush2.msra.mxu0 0.0
        %7572 = vmatprep.subr.mxu0 0.0
        %7573 = vmatpush2.msra.mxu0 0.0
        %7574 = vmatprep.subr.mxu0 0.0
        %7575 = vmatpush2.msra.mxu0 0.0
        %7576 = vmatprep.subr.mxu0 0.0
        %7577 = vmatpush2.msra.mxu0 0.0
        %7578 = vmatprep.subr.mxu0 0.0
        %7579 = vmatpush2.msra.mxu0 0.0
        %7580 = vmatprep.subr.mxu0 0.0
        %7581 = vmatpush2.msra.mxu0 0.0
        %7582 = vmatprep.subr.mxu0 0.0
        %7583 = vmatpush2.msra.mxu0 0.0
        %7584 = vmatprep.subr.mxu0 0.0
        %7585 = vmatpush2.msra.mxu0 0.0
        %7586 = vmatprep.subr.mxu0 0.0
        %7587 = vmatpush2.msra.mxu0 0.0
        %7588 = vmatprep.mubr.f32.mxu0 0.0
        %v7589 = vand.u32 %v5414, 4294901760
        %7590 = vmatmul.mubr.f32.gmra.mxu0 %v7589
        %v7591 = vpop.f32.mrf.mxu0
        %v7592 = vadd.f32 %v7501, %v7591
        %v7593 = vpop.f32.mrf.mxu0
        %7594 = vmatprep.mubr.f32.mxu0 0.0
        %v7595 = vand.u32 %v5417, 4294901760
        %7596 = vmatmul.mubr.f32.gmra.mxu0 %v7595
        %v7597 = vpop.f32.mrf.mxu0
        %v7598 = vadd.f32 %v7511, %v7597
        %v7599 = vpop.f32.mrf.mxu0
        %7600 = vdwg.mxu0
        %7601 = vmatprep.subr.mxu0 0.0
        %7602 = vmatpush1.msra.mxu0 0.0
        %7603 = vmatprep.subr.mxu0 0.0
        %7604 = vmatpush1.msra.mxu0 0.0
        %7605 = vmatprep.subr.mxu0 0.0
        %7606 = vmatpush1.msra.mxu0 0.0
        %7607 = vmatprep.subr.mxu0 0.0
        %7608 = vmatpush1.msra.mxu0 0.0
        %7609 = vmatprep.subr.mxu0 0.0
        %7610 = vmatpush1.msra.mxu0 0.0
        %7611 = vmatprep.subr.mxu0 0.0
        %7612 = vmatpush1.msra.mxu0 0.0
        %7613 = vmatprep.subr.mxu0 0.0
        %7614 = vmatpush1.msra.mxu0 0.0
        %7615 = vmatprep.subr.mxu0 0.0
        %7616 = vmatpush1.msra.mxu0 0.0
        %7617 = vmatprep.subr.mxu0 0.0
        %7618 = vmatpush1.msra.mxu0 0.0
        %7619 = vmatprep.subr.mxu0 0.0
        %7620 = vmatpush1.msra.mxu0 0.0
        %7621 = vmatprep.subr.mxu0 0.0
        %7622 = vmatpush1.msra.mxu0 0.0
        %7623 = vmatprep.subr.mxu0 0.0
        %7624 = vmatpush1.msra.mxu0 0.0
        %7625 = vmatprep.subr.mxu0 0.0
        %7626 = vmatpush1.msra.mxu0 0.0
        %7627 = vmatprep.subr.mxu0 0.0
        %7628 = vmatpush1.msra.mxu0 0.0
        %7629 = vmatprep.subr.mxu0 0.0
        %v7630 = vand.u32 %v2870, 4294901760
        %v7631 = vsub.f32 %v2870, %v7630
        %7632 = vmatpush1.msra.mxu0 %v7631
        %7633 = vmatprep.subr.mxu0 0.0
        %v7634 = vand.u32 %v2864, 4294901760
        %v7635 = vsub.f32 %v2864, %v7634
        %7636 = vmatpush1.msra.mxu0 %v7635
        %7637 = vmatprep.subr.mxu0 0.0
        %7638 = vmatpush2.msra.mxu0 0.0
        %7639 = vmatprep.subr.mxu0 0.0
        %7640 = vmatpush2.msra.mxu0 0.0
        %7641 = vmatprep.subr.mxu0 0.0
        %7642 = vmatpush2.msra.mxu0 0.0
        %7643 = vmatprep.subr.mxu0 0.0
        %7644 = vmatpush2.msra.mxu0 0.0
        %7645 = vmatprep.subr.mxu0 0.0
        %7646 = vmatpush2.msra.mxu0 0.0
        %7647 = vmatprep.subr.mxu0 0.0
        %7648 = vmatpush2.msra.mxu0 0.0
        %7649 = vmatprep.subr.mxu0 0.0
        %7650 = vmatpush2.msra.mxu0 0.0
        %7651 = vmatprep.subr.mxu0 0.0
        %7652 = vmatpush2.msra.mxu0 0.0
        %7653 = vmatprep.subr.mxu0 0.0
        %7654 = vmatpush2.msra.mxu0 0.0
        %7655 = vmatprep.subr.mxu0 0.0
        %7656 = vmatpush2.msra.mxu0 0.0
        %7657 = vmatprep.subr.mxu0 0.0
        %7658 = vmatpush2.msra.mxu0 0.0
        %7659 = vmatprep.subr.mxu0 0.0
        %7660 = vmatpush2.msra.mxu0 0.0
        %7661 = vmatprep.subr.mxu0 0.0
        %7662 = vmatpush2.msra.mxu0 0.0
        %7663 = vmatprep.subr.mxu0 0.0
        %7664 = vmatpush2.msra.mxu0 0.0
        %7665 = vmatprep.subr.mxu0 0.0
        %7666 = vmatpush2.msra.mxu0 0.0
        %7667 = vmatprep.subr.mxu0 0.0
        %7668 = vmatpush2.msra.mxu0 0.0
        %7669 = vmatprep.mubr.f32.mxu0 0.0
        %v7670 = vand.u32 %v5414, 4294901760
        %v7671 = vsub.f32 %v5414, %v7670
        %7672 = vmatmul.mubr.f32.gmra.mxu0 %v7671
        %v7673 = vpop.f32.mrf.mxu0
        %v7674 = vadd.f32 %v7592, %v7673
        %v7675 = vpop.f32.mrf.mxu0
        %7676 = vmatprep.mubr.f32.mxu0 0.0
        %v7677 = vand.u32 %v5417, 4294901760
        %v7678 = vsub.f32 %v5417, %v7677
        %7679 = vmatmul.mubr.f32.gmra.mxu0 %v7678
        %v7680 = vpop.f32.mrf.mxu0
        %v7681 = vadd.f32 %v7598, %v7680
        %v7682 = vpop.f32.mrf.mxu0
        %7683 = vdwg.mxu0
        %7684 = vmatprep.subr.mxu0 0.0
        %7685 = vmatpush1.msra.mxu0 0.0
        %7686 = vmatprep.subr.mxu0 0.0
        %7687 = vmatpush1.msra.mxu0 0.0
        %7688 = vmatprep.subr.mxu0 0.0
        %7689 = vmatpush1.msra.mxu0 0.0
        %7690 = vmatprep.subr.mxu0 0.0
        %7691 = vmatpush1.msra.mxu0 0.0
        %7692 = vmatprep.subr.mxu0 0.0
        %7693 = vmatpush1.msra.mxu0 0.0
        %7694 = vmatprep.subr.mxu0 0.0
        %7695 = vmatpush1.msra.mxu0 0.0
        %7696 = vmatprep.subr.mxu0 0.0
        %7697 = vmatpush1.msra.mxu0 0.0
        %7698 = vmatprep.subr.mxu0 0.0
        %7699 = vmatpush1.msra.mxu0 0.0
        %7700 = vmatprep.subr.mxu0 0.0
        %7701 = vmatpush1.msra.mxu0 0.0
        %7702 = vmatprep.subr.mxu0 0.0
        %7703 = vmatpush1.msra.mxu0 0.0
        %7704 = vmatprep.subr.mxu0 0.0
        %7705 = vmatpush1.msra.mxu0 0.0
        %7706 = vmatprep.subr.mxu0 0.0
        %7707 = vmatpush1.msra.mxu0 0.0
        %7708 = vmatprep.subr.mxu0 0.0
        %7709 = vmatpush1.msra.mxu0 0.0
        %7710 = vmatprep.subr.mxu0 0.0
        %7711 = vmatpush1.msra.mxu0 0.0
        %7712 = vmatprep.subr.mxu0 0.0
        %v7713 = vand.u32 %v2870, 4294901760
        %7714 = vmatpush1.msra.mxu0 %v7713
        %7715 = vmatprep.subr.mxu0 0.0
        %v7716 = vand.u32 %v2864, 4294901760
        %7717 = vmatpush1.msra.mxu0 %v7716
        %7718 = vmatprep.subr.mxu0 0.0
        %7719 = vmatpush2.msra.mxu0 0.0
        %7720 = vmatprep.subr.mxu0 0.0
        %7721 = vmatpush2.msra.mxu0 0.0
        %7722 = vmatprep.subr.mxu0 0.0
        %7723 = vmatpush2.msra.mxu0 0.0
        %7724 = vmatprep.subr.mxu0 0.0
        %7725 = vmatpush2.msra.mxu0 0.0
        %7726 = vmatprep.subr.mxu0 0.0
        %7727 = vmatpush2.msra.mxu0 0.0
        %7728 = vmatprep.subr.mxu0 0.0
        %7729 = vmatpush2.msra.mxu0 0.0
        %7730 = vmatprep.subr.mxu0 0.0
        %7731 = vmatpush2.msra.mxu0 0.0
        %7732 = vmatprep.subr.mxu0 0.0
        %7733 = vmatpush2.msra.mxu0 0.0
        %7734 = vmatprep.subr.mxu0 0.0
        %7735 = vmatpush2.msra.mxu0 0.0
        %7736 = vmatprep.subr.mxu0 0.0
        %7737 = vmatpush2.msra.mxu0 0.0
        %7738 = vmatprep.subr.mxu0 0.0
        %7739 = vmatpush2.msra.mxu0 0.0
        %7740 = vmatprep.subr.mxu0 0.0
        %7741 = vmatpush2.msra.mxu0 0.0
        %7742 = vmatprep.subr.mxu0 0.0
        %7743 = vmatpush2.msra.mxu0 0.0
        %7744 = vmatprep.subr.mxu0 0.0
        %7745 = vmatpush2.msra.mxu0 0.0
        %7746 = vmatprep.subr.mxu0 0.0
        %7747 = vmatpush2.msra.mxu0 0.0
        %7748 = vmatprep.subr.mxu0 0.0
        %7749 = vmatpush2.msra.mxu0 0.0
        %7750 = vmatprep.mubr.f32.mxu0 0.0
        %v7751 = vand.u32 %v5414, 4294901760
        %v7752 = vsub.f32 %v5414, %v7751
        %v7753 = vand.u32 %v7752, 4294901760
        %7754 = vmatmul.mubr.f32.gmra.mxu0 %v7753
        %v7755 = vpop.f32.mrf.mxu0
        %v7756 = vadd.f32 %v7674, %v7755
        %v7757 = vpop.f32.mrf.mxu0
        %7758 = vmatprep.mubr.f32.mxu0 0.0
        %v7759 = vand.u32 %v5417, 4294901760
        %v7760 = vsub.f32 %v5417, %v7759
        %v7761 = vand.u32 %v7760, 4294901760
        %7762 = vmatmul.mubr.f32.gmra.mxu0 %v7761
        %v7763 = vpop.f32.mrf.mxu0
        %v7764 = vadd.f32 %v7681, %v7763
        %v7765 = vpop.f32.mrf.mxu0
        %7766 = vdwg.mxu0
        %7767 = vmatprep.subr.mxu0 0.0
        %7768 = vmatpush1.msra.mxu0 0.0
        %7769 = vmatprep.subr.mxu0 0.0
        %7770 = vmatpush1.msra.mxu0 0.0
        %7771 = vmatprep.subr.mxu0 0.0
        %7772 = vmatpush1.msra.mxu0 0.0
        %7773 = vmatprep.subr.mxu0 0.0
        %7774 = vmatpush1.msra.mxu0 0.0
        %7775 = vmatprep.subr.mxu0 0.0
        %7776 = vmatpush1.msra.mxu0 0.0
        %7777 = vmatprep.subr.mxu0 0.0
        %7778 = vmatpush1.msra.mxu0 0.0
        %7779 = vmatprep.subr.mxu0 0.0
        %7780 = vmatpush1.msra.mxu0 0.0
        %7781 = vmatprep.subr.mxu0 0.0
        %7782 = vmatpush1.msra.mxu0 0.0
        %7783 = vmatprep.subr.mxu0 0.0
        %7784 = vmatpush1.msra.mxu0 0.0
        %7785 = vmatprep.subr.mxu0 0.0
        %7786 = vmatpush1.msra.mxu0 0.0
        %7787 = vmatprep.subr.mxu0 0.0
        %7788 = vmatpush1.msra.mxu0 0.0
        %7789 = vmatprep.subr.mxu0 0.0
        %7790 = vmatpush1.msra.mxu0 0.0
        %7791 = vmatprep.subr.mxu0 0.0
        %7792 = vmatpush1.msra.mxu0 0.0
        %7793 = vmatprep.subr.mxu0 0.0
        %7794 = vmatpush1.msra.mxu0 0.0
        %7795 = vmatprep.subr.mxu0 0.0
        %v7796 = vand.u32 %v2870, 4294901760
        %v7797 = vsub.f32 %v2870, %v7796
        %v7798 = vand.u32 %v7797, 4294901760
        %7799 = vmatpush1.msra.mxu0 %v7798
        %7800 = vmatprep.subr.mxu0 0.0
        %v7801 = vand.u32 %v2864, 4294901760
        %v7802 = vsub.f32 %v2864, %v7801
        %v7803 = vand.u32 %v7802, 4294901760
        %7804 = vmatpush1.msra.mxu0 %v7803
        %7805 = vmatprep.subr.mxu0 0.0
        %7806 = vmatpush2.msra.mxu0 0.0
        %7807 = vmatprep.subr.mxu0 0.0
        %7808 = vmatpush2.msra.mxu0 0.0
        %7809 = vmatprep.subr.mxu0 0.0
        %7810 = vmatpush2.msra.mxu0 0.0
        %7811 = vmatprep.subr.mxu0 0.0
        %7812 = vmatpush2.msra.mxu0 0.0
        %7813 = vmatprep.subr.mxu0 0.0
        %7814 = vmatpush2.msra.mxu0 0.0
        %7815 = vmatprep.subr.mxu0 0.0
        %7816 = vmatpush2.msra.mxu0 0.0
        %7817 = vmatprep.subr.mxu0 0.0
        %7818 = vmatpush2.msra.mxu0 0.0
        %7819 = vmatprep.subr.mxu0 0.0
        %7820 = vmatpush2.msra.mxu0 0.0
        %7821 = vmatprep.subr.mxu0 0.0
        %7822 = vmatpush2.msra.mxu0 0.0
        %7823 = vmatprep.subr.mxu0 0.0
        %7824 = vmatpush2.msra.mxu0 0.0
        %7825 = vmatprep.subr.mxu0 0.0
        %7826 = vmatpush2.msra.mxu0 0.0
        %7827 = vmatprep.subr.mxu0 0.0
        %7828 = vmatpush2.msra.mxu0 0.0
        %7829 = vmatprep.subr.mxu0 0.0
        %7830 = vmatpush2.msra.mxu0 0.0
        %7831 = vmatprep.subr.mxu0 0.0
        %7832 = vmatpush2.msra.mxu0 0.0
        %7833 = vmatprep.subr.mxu0 0.0
        %7834 = vmatpush2.msra.mxu0 0.0
        %7835 = vmatprep.subr.mxu0 0.0
        %7836 = vmatpush2.msra.mxu0 0.0
        %7837 = vmatprep.mubr.f32.mxu0 0.0
        %v7838 = vand.u32 %v5414, 4294901760
        %7839 = vmatmul.mubr.f32.gmra.mxu0 %v7838
        %v7840 = vpop.f32.mrf.mxu0
        %v7841 = vadd.f32 %v7756, %v7840
        %v7842 = vpop.f32.mrf.mxu0
        %7843 = vmatprep.mubr.f32.mxu0 0.0
        %v7844 = vand.u32 %v5417, 4294901760
        %7845 = vmatmul.mubr.f32.gmra.mxu0 %v7844
        %v7846 = vpop.f32.mrf.mxu0
        %v7847 = vadd.f32 %v7764, %v7846
        %v7848 = vpop.f32.mrf.mxu0
        %7849 = vdwg.mxu0
        %7850 = vmatprep.subr.mxu0 0.0
        %7851 = vmatpush1.msra.mxu0 0.0
        %7852 = vmatprep.subr.mxu0 0.0
        %7853 = vmatpush1.msra.mxu0 0.0
        %7854 = vmatprep.subr.mxu0 0.0
        %7855 = vmatpush1.msra.mxu0 0.0
        %7856 = vmatprep.subr.mxu0 0.0
        %7857 = vmatpush1.msra.mxu0 0.0
        %7858 = vmatprep.subr.mxu0 0.0
        %7859 = vmatpush1.msra.mxu0 0.0
        %7860 = vmatprep.subr.mxu0 0.0
        %7861 = vmatpush1.msra.mxu0 0.0
        %7862 = vmatprep.subr.mxu0 0.0
        %7863 = vmatpush1.msra.mxu0 0.0
        %7864 = vmatprep.subr.mxu0 0.0
        %7865 = vmatpush1.msra.mxu0 0.0
        %7866 = vmatprep.subr.mxu0 0.0
        %7867 = vmatpush1.msra.mxu0 0.0
        %7868 = vmatprep.subr.mxu0 0.0
        %7869 = vmatpush1.msra.mxu0 0.0
        %7870 = vmatprep.subr.mxu0 0.0
        %7871 = vmatpush1.msra.mxu0 0.0
        %7872 = vmatprep.subr.mxu0 0.0
        %7873 = vmatpush1.msra.mxu0 0.0
        %7874 = vmatprep.subr.mxu0 0.0
        %7875 = vmatpush1.msra.mxu0 0.0
        %7876 = vmatprep.subr.mxu0 0.0
        %7877 = vmatpush1.msra.mxu0 0.0
        %7878 = vmatprep.subr.mxu0 0.0
        %v7879 = vand.u32 %v2870, 4294901760
        %7880 = vmatpush1.msra.mxu0 %v7879
        %7881 = vmatprep.subr.mxu0 0.0
        %v7882 = vand.u32 %v2864, 4294901760
        %7883 = vmatpush1.msra.mxu0 %v7882
        %7884 = vmatprep.subr.mxu0 0.0
        %7885 = vmatpush2.msra.mxu0 0.0
        %7886 = vmatprep.subr.mxu0 0.0
        %7887 = vmatpush2.msra.mxu0 0.0
        %7888 = vmatprep.subr.mxu0 0.0
        %7889 = vmatpush2.msra.mxu0 0.0
        %7890 = vmatprep.subr.mxu0 0.0
        %7891 = vmatpush2.msra.mxu0 0.0
        %7892 = vmatprep.subr.mxu0 0.0
        %7893 = vmatpush2.msra.mxu0 0.0
        %7894 = vmatprep.subr.mxu0 0.0
        %7895 = vmatpush2.msra.mxu0 0.0
        %7896 = vmatprep.subr.mxu0 0.0
        %7897 = vmatpush2.msra.mxu0 0.0
        %7898 = vmatprep.subr.mxu0 0.0
        %7899 = vmatpush2.msra.mxu0 0.0
        %7900 = vmatprep.subr.mxu0 0.0
        %7901 = vmatpush2.msra.mxu0 0.0
        %7902 = vmatprep.subr.mxu0 0.0
        %7903 = vmatpush2.msra.mxu0 0.0
        %7904 = vmatprep.subr.mxu0 0.0
        %7905 = vmatpush2.msra.mxu0 0.0
        %7906 = vmatprep.subr.mxu0 0.0
        %7907 = vmatpush2.msra.mxu0 0.0
        %7908 = vmatprep.subr.mxu0 0.0
        %7909 = vmatpush2.msra.mxu0 0.0
        %7910 = vmatprep.subr.mxu0 0.0
        %7911 = vmatpush2.msra.mxu0 0.0
        %7912 = vmatprep.subr.mxu0 0.0
        %7913 = vmatpush2.msra.mxu0 0.0
        %7914 = vmatprep.subr.mxu0 0.0
        %7915 = vmatpush2.msra.mxu0 0.0
        %7916 = vmatprep.mubr.f32.mxu0 0.0
        %v7917 = vand.u32 %v5414, 4294901760
        %7918 = vmatmul.mubr.f32.gmra.mxu0 %v7917
        %v7919 = vpop.f32.mrf.mxu0
        %v7920 = vadd.f32 %v7841, %v7919
        %v7921 = vpop.f32.mrf.mxu0
        %7922 = vmatprep.mubr.f32.mxu0 0.0
        %v7923 = vand.u32 %v5417, 4294901760
        %7924 = vmatmul.mubr.f32.gmra.mxu0 %v7923
        %v7925 = vpop.f32.mrf.mxu0
        %v7926 = vadd.f32 %v7847, %v7925
        %v7927 = vpop.f32.mrf.mxu0
        %7928 = vdwg.mxu0
        %7929 = vmatprep.subr.mxu0 0.0
        %7930 = vmatpush1.msra.mxu0 0.0
        %7931 = vmatprep.subr.mxu0 0.0
        %7932 = vmatpush1.msra.mxu0 0.0
        %7933 = vmatprep.subr.mxu0 0.0
        %7934 = vmatpush1.msra.mxu0 0.0
        %7935 = vmatprep.subr.mxu0 0.0
        %7936 = vmatpush1.msra.mxu0 0.0
        %7937 = vmatprep.subr.mxu0 0.0
        %7938 = vmatpush1.msra.mxu0 0.0
        %7939 = vmatprep.subr.mxu0 0.0
        %7940 = vmatpush1.msra.mxu0 0.0
        %7941 = vmatprep.subr.mxu0 0.0
        %7942 = vmatpush1.msra.mxu0 0.0
        %7943 = vmatprep.subr.mxu0 0.0
        %7944 = vmatpush1.msra.mxu0 0.0
        %7945 = vmatprep.subr.mxu0 0.0
        %7946 = vmatpush1.msra.mxu0 0.0
        %7947 = vmatprep.subr.mxu0 0.0
        %7948 = vmatpush1.msra.mxu0 0.0
        %7949 = vmatprep.subr.mxu0 0.0
        %7950 = vmatpush1.msra.mxu0 0.0
        %7951 = vmatprep.subr.mxu0 0.0
        %7952 = vmatpush1.msra.mxu0 0.0
        %7953 = vmatprep.subr.mxu0 0.0
        %7954 = vmatpush1.msra.mxu0 0.0
        %7955 = vmatprep.subr.mxu0 0.0
        %7956 = vmatpush1.msra.mxu0 0.0
        %7957 = vmatprep.subr.mxu0 0.0
        %v7958 = vand.u32 %v3378, 4294901760
        %7959 = vmatpush1.msra.mxu0 %v7958
        %7960 = vmatprep.subr.mxu0 0.0
        %v7961 = vand.u32 %v3372, 4294901760
        %7962 = vmatpush1.msra.mxu0 %v7961
        %7963 = vmatprep.subr.mxu0 0.0
        %7964 = vmatpush2.msra.mxu0 0.0
        %7965 = vmatprep.subr.mxu0 0.0
        %7966 = vmatpush2.msra.mxu0 0.0
        %7967 = vmatprep.subr.mxu0 0.0
        %7968 = vmatpush2.msra.mxu0 0.0
        %7969 = vmatprep.subr.mxu0 0.0
        %7970 = vmatpush2.msra.mxu0 0.0
        %7971 = vmatprep.subr.mxu0 0.0
        %7972 = vmatpush2.msra.mxu0 0.0
        %7973 = vmatprep.subr.mxu0 0.0
        %7974 = vmatpush2.msra.mxu0 0.0
        %7975 = vmatprep.subr.mxu0 0.0
        %7976 = vmatpush2.msra.mxu0 0.0
        %7977 = vmatprep.subr.mxu0 0.0
        %7978 = vmatpush2.msra.mxu0 0.0
        %7979 = vmatprep.subr.mxu0 0.0
        %7980 = vmatpush2.msra.mxu0 0.0
        %7981 = vmatprep.subr.mxu0 0.0
        %7982 = vmatpush2.msra.mxu0 0.0
        %7983 = vmatprep.subr.mxu0 0.0
        %7984 = vmatpush2.msra.mxu0 0.0
        %7985 = vmatprep.subr.mxu0 0.0
        %7986 = vmatpush2.msra.mxu0 0.0
        %7987 = vmatprep.subr.mxu0 0.0
        %7988 = vmatpush2.msra.mxu0 0.0
        %7989 = vmatprep.subr.mxu0 0.0
        %7990 = vmatpush2.msra.mxu0 0.0
        %7991 = vmatprep.subr.mxu0 0.0
        %7992 = vmatpush2.msra.mxu0 0.0
        %7993 = vmatprep.subr.mxu0 0.0
        %7994 = vmatpush2.msra.mxu0 0.0
        %7995 = vmatprep.mubr.f32.mxu0 0.0
        %v7996 = vand.u32 %v5414, 4294901760
        %v7997 = vsub.f32 %v5414, %v7996
        %v7998 = vand.u32 %v7997, 4294901760
        %v7999 = vsub.f32 %v7997, %v7998
        %v8000 = vand.u32 %v7999, 4294901760
        %8001 = vmatmul.mubr.f32.gmra.mxu0 %v8000
        %v8002 = vpop.f32.mrf.mxu0
        %v8003 = vadd.f32 0.0, %v8002
        %v8004 = vpop.f32.mrf.mxu0
        %8005 = vmatprep.mubr.f32.mxu0 0.0
        %v8006 = vand.u32 %v5417, 4294901760
        %v8007 = vsub.f32 %v5417, %v8006
        %v8008 = vand.u32 %v8007, 4294901760
        %v8009 = vsub.f32 %v8007, %v8008
        %v8010 = vand.u32 %v8009, 4294901760
        %8011 = vmatmul.mubr.f32.gmra.mxu0 %v8010
        %v8012 = vpop.f32.mrf.mxu0
        %v8013 = vadd.f32 0.0, %v8012
        %v8014 = vpop.f32.mrf.mxu0
        %8015 = vdwg.mxu0
        %8016 = vmatprep.subr.mxu0 0.0
        %8017 = vmatpush1.msra.mxu0 0.0
        %8018 = vmatprep.subr.mxu0 0.0
        %8019 = vmatpush1.msra.mxu0 0.0
        %8020 = vmatprep.subr.mxu0 0.0
        %8021 = vmatpush1.msra.mxu0 0.0
        %8022 = vmatprep.subr.mxu0 0.0
        %8023 = vmatpush1.msra.mxu0 0.0
        %8024 = vmatprep.subr.mxu0 0.0
        %8025 = vmatpush1.msra.mxu0 0.0
        %8026 = vmatprep.subr.mxu0 0.0
        %8027 = vmatpush1.msra.mxu0 0.0
        %8028 = vmatprep.subr.mxu0 0.0
        %8029 = vmatpush1.msra.mxu0 0.0
        %8030 = vmatprep.subr.mxu0 0.0
        %8031 = vmatpush1.msra.mxu0 0.0
        %8032 = vmatprep.subr.mxu0 0.0
        %8033 = vmatpush1.msra.mxu0 0.0
        %8034 = vmatprep.subr.mxu0 0.0
        %8035 = vmatpush1.msra.mxu0 0.0
        %8036 = vmatprep.subr.mxu0 0.0
        %8037 = vmatpush1.msra.mxu0 0.0
        %8038 = vmatprep.subr.mxu0 0.0
        %8039 = vmatpush1.msra.mxu0 0.0
        %8040 = vmatprep.subr.mxu0 0.0
        %8041 = vmatpush1.msra.mxu0 0.0
        %8042 = vmatprep.subr.mxu0 0.0
        %8043 = vmatpush1.msra.mxu0 0.0
        %8044 = vmatprep.subr.mxu0 0.0
        %v8045 = vand.u32 %v3378, 4294901760
        %v8046 = vsub.f32 %v3378, %v8045
        %v8047 = vand.u32 %v8046, 4294901760
        %v8048 = vsub.f32 %v8046, %v8047
        %v8049 = vand.u32 %v8048, 4294901760
        %8050 = vmatpush1.msra.mxu0 %v8049
        %8051 = vmatprep.subr.mxu0 0.0
        %v8052 = vand.u32 %v3372, 4294901760
        %v8053 = vsub.f32 %v3372, %v8052
        %v8054 = vand.u32 %v8053, 4294901760
        %v8055 = vsub.f32 %v8053, %v8054
        %v8056 = vand.u32 %v8055, 4294901760
        %8057 = vmatpush1.msra.mxu0 %v8056
        %8058 = vmatprep.subr.mxu0 0.0
        %8059 = vmatpush2.msra.mxu0 0.0
        %8060 = vmatprep.subr.mxu0 0.0
        %8061 = vmatpush2.msra.mxu0 0.0
        %8062 = vmatprep.subr.mxu0 0.0
        %8063 = vmatpush2.msra.mxu0 0.0
        %8064 = vmatprep.subr.mxu0 0.0
        %8065 = vmatpush2.msra.mxu0 0.0
        %8066 = vmatprep.subr.mxu0 0.0
        %8067 = vmatpush2.msra.mxu0 0.0
        %8068 = vmatprep.subr.mxu0 0.0
        %8069 = vmatpush2.msra.mxu0 0.0
        %8070 = vmatprep.subr.mxu0 0.0
        %8071 = vmatpush2.msra.mxu0 0.0
        %8072 = vmatprep.subr.mxu0 0.0
        %8073 = vmatpush2.msra.mxu0 0.0
        %8074 = vmatprep.subr.mxu0 0.0
        %8075 = vmatpush2.msra.mxu0 0.0
        %8076 = vmatprep.subr.mxu0 0.0
        %8077 = vmatpush2.msra.mxu0 0.0
        %8078 = vmatprep.subr.mxu0 0.0
        %8079 = vmatpush2.msra.mxu0 0.0
        %8080 = vmatprep.subr.mxu0 0.0
        %8081 = vmatpush2.msra.mxu0 0.0
        %8082 = vmatprep.subr.mxu0 0.0
        %8083 = vmatpush2.msra.mxu0 0.0
        %8084 = vmatprep.subr.mxu0 0.0
        %8085 = vmatpush2.msra.mxu0 0.0
        %8086 = vmatprep.subr.mxu0 0.0
        %8087 = vmatpush2.msra.mxu0 0.0
        %8088 = vmatprep.subr.mxu0 0.0
        %8089 = vmatpush2.msra.mxu0 0.0
        %8090 = vmatprep.mubr.f32.mxu0 0.0
        %v8091 = vand.u32 %v5414, 4294901760
        %8092 = vmatmul.mubr.f32.gmra.mxu0 %v8091
        %v8093 = vpop.f32.mrf.mxu0
        %v8094 = vadd.f32 %v8003, %v8093
        %v8095 = vpop.f32.mrf.mxu0
        %8096 = vmatprep.mubr.f32.mxu0 0.0
        %v8097 = vand.u32 %v5417, 4294901760
        %8098 = vmatmul.mubr.f32.gmra.mxu0 %v8097
        %v8099 = vpop.f32.mrf.mxu0
        %v8100 = vadd.f32 %v8013, %v8099
        %v8101 = vpop.f32.mrf.mxu0
        %8102 = vdwg.mxu0
        %8103 = vmatprep.subr.mxu0 0.0
        %8104 = vmatpush1.msra.mxu0 0.0
        %8105 = vmatprep.subr.mxu0 0.0
        %8106 = vmatpush1.msra.mxu0 0.0
        %8107 = vmatprep.subr.mxu0 0.0
        %8108 = vmatpush1.msra.mxu0 0.0
        %8109 = vmatprep.subr.mxu0 0.0
        %8110 = vmatpush1.msra.mxu0 0.0
        %8111 = vmatprep.subr.mxu0 0.0
        %8112 = vmatpush1.msra.mxu0 0.0
        %8113 = vmatprep.subr.mxu0 0.0
        %8114 = vmatpush1.msra.mxu0 0.0
        %8115 = vmatprep.subr.mxu0 0.0
        %8116 = vmatpush1.msra.mxu0 0.0
        %8117 = vmatprep.subr.mxu0 0.0
        %8118 = vmatpush1.msra.mxu0 0.0
        %8119 = vmatprep.subr.mxu0 0.0
        %8120 = vmatpush1.msra.mxu0 0.0
        %8121 = vmatprep.subr.mxu0 0.0
        %8122 = vmatpush1.msra.mxu0 0.0
        %8123 = vmatprep.subr.mxu0 0.0
        %8124 = vmatpush1.msra.mxu0 0.0
        %8125 = vmatprep.subr.mxu0 0.0
        %8126 = vmatpush1.msra.mxu0 0.0
        %8127 = vmatprep.subr.mxu0 0.0
        %8128 = vmatpush1.msra.mxu0 0.0
        %8129 = vmatprep.subr.mxu0 0.0
        %8130 = vmatpush1.msra.mxu0 0.0
        %8131 = vmatprep.subr.mxu0 0.0
        %v8132 = vand.u32 %v3378, 4294901760
        %v8133 = vsub.f32 %v3378, %v8132
        %8134 = vmatpush1.msra.mxu0 %v8133
        %8135 = vmatprep.subr.mxu0 0.0
        %v8136 = vand.u32 %v3372, 4294901760
        %v8137 = vsub.f32 %v3372, %v8136
        %8138 = vmatpush1.msra.mxu0 %v8137
        %8139 = vmatprep.subr.mxu0 0.0
        %8140 = vmatpush2.msra.mxu0 0.0
        %8141 = vmatprep.subr.mxu0 0.0
        %8142 = vmatpush2.msra.mxu0 0.0
        %8143 = vmatprep.subr.mxu0 0.0
        %8144 = vmatpush2.msra.mxu0 0.0
        %8145 = vmatprep.subr.mxu0 0.0
        %8146 = vmatpush2.msra.mxu0 0.0
        %8147 = vmatprep.subr.mxu0 0.0
        %8148 = vmatpush2.msra.mxu0 0.0
        %8149 = vmatprep.subr.mxu0 0.0
        %8150 = vmatpush2.msra.mxu0 0.0
        %8151 = vmatprep.subr.mxu0 0.0
        %8152 = vmatpush2.msra.mxu0 0.0
        %8153 = vmatprep.subr.mxu0 0.0
        %8154 = vmatpush2.msra.mxu0 0.0
        %8155 = vmatprep.subr.mxu0 0.0
        %8156 = vmatpush2.msra.mxu0 0.0
        %8157 = vmatprep.subr.mxu0 0.0
        %8158 = vmatpush2.msra.mxu0 0.0
        %8159 = vmatprep.subr.mxu0 0.0
        %8160 = vmatpush2.msra.mxu0 0.0
        %8161 = vmatprep.subr.mxu0 0.0
        %8162 = vmatpush2.msra.mxu0 0.0
        %8163 = vmatprep.subr.mxu0 0.0
        %8164 = vmatpush2.msra.mxu0 0.0
        %8165 = vmatprep.subr.mxu0 0.0
        %8166 = vmatpush2.msra.mxu0 0.0
        %8167 = vmatprep.subr.mxu0 0.0
        %8168 = vmatpush2.msra.mxu0 0.0
        %8169 = vmatprep.subr.mxu0 0.0
        %8170 = vmatpush2.msra.mxu0 0.0
        %8171 = vmatprep.mubr.f32.mxu0 0.0
        %v8172 = vand.u32 %v5414, 4294901760
        %v8173 = vsub.f32 %v5414, %v8172
        %8174 = vmatmul.mubr.f32.gmra.mxu0 %v8173
        %v8175 = vpop.f32.mrf.mxu0
        %v8176 = vadd.f32 %v8094, %v8175
        %v8177 = vpop.f32.mrf.mxu0
        %8178 = vmatprep.mubr.f32.mxu0 0.0
        %v8179 = vand.u32 %v5417, 4294901760
        %v8180 = vsub.f32 %v5417, %v8179
        %8181 = vmatmul.mubr.f32.gmra.mxu0 %v8180
        %v8182 = vpop.f32.mrf.mxu0
        %v8183 = vadd.f32 %v8100, %v8182
        %v8184 = vpop.f32.mrf.mxu0
        %8185 = vdwg.mxu0
        %8186 = vmatprep.subr.mxu0 0.0
        %8187 = vmatpush1.msra.mxu0 0.0
        %8188 = vmatprep.subr.mxu0 0.0
        %8189 = vmatpush1.msra.mxu0 0.0
        %8190 = vmatprep.subr.mxu0 0.0
        %8191 = vmatpush1.msra.mxu0 0.0
        %8192 = vmatprep.subr.mxu0 0.0
        %8193 = vmatpush1.msra.mxu0 0.0
        %8194 = vmatprep.subr.mxu0 0.0
        %8195 = vmatpush1.msra.mxu0 0.0
        %8196 = vmatprep.subr.mxu0 0.0
        %8197 = vmatpush1.msra.mxu0 0.0
        %8198 = vmatprep.subr.mxu0 0.0
        %8199 = vmatpush1.msra.mxu0 0.0
        %8200 = vmatprep.subr.mxu0 0.0
        %8201 = vmatpush1.msra.mxu0 0.0
        %8202 = vmatprep.subr.mxu0 0.0
        %8203 = vmatpush1.msra.mxu0 0.0
        %8204 = vmatprep.subr.mxu0 0.0
        %8205 = vmatpush1.msra.mxu0 0.0
        %8206 = vmatprep.subr.mxu0 0.0
        %8207 = vmatpush1.msra.mxu0 0.0
        %8208 = vmatprep.subr.mxu0 0.0
        %8209 = vmatpush1.msra.mxu0 0.0
        %8210 = vmatprep.subr.mxu0 0.0
        %8211 = vmatpush1.msra.mxu0 0.0
        %8212 = vmatprep.subr.mxu0 0.0
        %8213 = vmatpush1.msra.mxu0 0.0
        %8214 = vmatprep.subr.mxu0 0.0
        %v8215 = vand.u32 %v3378, 4294901760
        %8216 = vmatpush1.msra.mxu0 %v8215
        %8217 = vmatprep.subr.mxu0 0.0
        %v8218 = vand.u32 %v3372, 4294901760
        %8219 = vmatpush1.msra.mxu0 %v8218
        %8220 = vmatprep.subr.mxu0 0.0
        %8221 = vmatpush2.msra.mxu0 0.0
        %8222 = vmatprep.subr.mxu0 0.0
        %8223 = vmatpush2.msra.mxu0 0.0
        %8224 = vmatprep.subr.mxu0 0.0
        %8225 = vmatpush2.msra.mxu0 0.0
        %8226 = vmatprep.subr.mxu0 0.0
        %8227 = vmatpush2.msra.mxu0 0.0
        %8228 = vmatprep.subr.mxu0 0.0
        %8229 = vmatpush2.msra.mxu0 0.0
        %8230 = vmatprep.subr.mxu0 0.0
        %8231 = vmatpush2.msra.mxu0 0.0
        %8232 = vmatprep.subr.mxu0 0.0
        %8233 = vmatpush2.msra.mxu0 0.0
        %8234 = vmatprep.subr.mxu0 0.0
        %8235 = vmatpush2.msra.mxu0 0.0
        %8236 = vmatprep.subr.mxu0 0.0
        %8237 = vmatpush2.msra.mxu0 0.0
        %8238 = vmatprep.subr.mxu0 0.0
        %8239 = vmatpush2.msra.mxu0 0.0
        %8240 = vmatprep.subr.mxu0 0.0
        %8241 = vmatpush2.msra.mxu0 0.0
        %8242 = vmatprep.subr.mxu0 0.0
        %8243 = vmatpush2.msra.mxu0 0.0
        %8244 = vmatprep.subr.mxu0 0.0
        %8245 = vmatpush2.msra.mxu0 0.0
        %8246 = vmatprep.subr.mxu0 0.0
        %8247 = vmatpush2.msra.mxu0 0.0
        %8248 = vmatprep.subr.mxu0 0.0
        %8249 = vmatpush2.msra.mxu0 0.0
        %8250 = vmatprep.subr.mxu0 0.0
        %8251 = vmatpush2.msra.mxu0 0.0
        %8252 = vmatprep.mubr.f32.mxu0 0.0
        %v8253 = vand.u32 %v5414, 4294901760
        %v8254 = vsub.f32 %v5414, %v8253
        %v8255 = vand.u32 %v8254, 4294901760
        %8256 = vmatmul.mubr.f32.gmra.mxu0 %v8255
        %v8257 = vpop.f32.mrf.mxu0
        %v8258 = vadd.f32 %v8176, %v8257
        %v8259 = vpop.f32.mrf.mxu0
        %8260 = vmatprep.mubr.f32.mxu0 0.0
        %v8261 = vand.u32 %v5417, 4294901760
        %v8262 = vsub.f32 %v5417, %v8261
        %v8263 = vand.u32 %v8262, 4294901760
        %8264 = vmatmul.mubr.f32.gmra.mxu0 %v8263
        %v8265 = vpop.f32.mrf.mxu0
        %v8266 = vadd.f32 %v8183, %v8265
        %v8267 = vpop.f32.mrf.mxu0
        %8268 = vdwg.mxu0
        %8269 = vmatprep.subr.mxu0 0.0
        %8270 = vmatpush1.msra.mxu0 0.0
        %8271 = vmatprep.subr.mxu0 0.0
        %8272 = vmatpush1.msra.mxu0 0.0
        %8273 = vmatprep.subr.mxu0 0.0
        %8274 = vmatpush1.msra.mxu0 0.0
        %8275 = vmatprep.subr.mxu0 0.0
        %8276 = vmatpush1.msra.mxu0 0.0
        %8277 = vmatprep.subr.mxu0 0.0
        %8278 = vmatpush1.msra.mxu0 0.0
        %8279 = vmatprep.subr.mxu0 0.0
        %8280 = vmatpush1.msra.mxu0 0.0
        %8281 = vmatprep.subr.mxu0 0.0
        %8282 = vmatpush1.msra.mxu0 0.0
        %8283 = vmatprep.subr.mxu0 0.0
        %8284 = vmatpush1.msra.mxu0 0.0
        %8285 = vmatprep.subr.mxu0 0.0
        %8286 = vmatpush1.msra.mxu0 0.0
        %8287 = vmatprep.subr.mxu0 0.0
        %8288 = vmatpush1.msra.mxu0 0.0
        %8289 = vmatprep.subr.mxu0 0.0
        %8290 = vmatpush1.msra.mxu0 0.0
        %8291 = vmatprep.subr.mxu0 0.0
        %8292 = vmatpush1.msra.mxu0 0.0
        %8293 = vmatprep.subr.mxu0 0.0
        %8294 = vmatpush1.msra.mxu0 0.0
        %8295 = vmatprep.subr.mxu0 0.0
        %8296 = vmatpush1.msra.mxu0 0.0
        %8297 = vmatprep.subr.mxu0 0.0
        %v8298 = vand.u32 %v3378, 4294901760
        %v8299 = vsub.f32 %v3378, %v8298
        %v8300 = vand.u32 %v8299, 4294901760
        %8301 = vmatpush1.msra.mxu0 %v8300
        %8302 = vmatprep.subr.mxu0 0.0
        %v8303 = vand.u32 %v3372, 4294901760
        %v8304 = vsub.f32 %v3372, %v8303
        %v8305 = vand.u32 %v8304, 4294901760
        %8306 = vmatpush1.msra.mxu0 %v8305
        %8307 = vmatprep.subr.mxu0 0.0
        %8308 = vmatpush2.msra.mxu0 0.0
        %8309 = vmatprep.subr.mxu0 0.0
        %8310 = vmatpush2.msra.mxu0 0.0
        %8311 = vmatprep.subr.mxu0 0.0
        %8312 = vmatpush2.msra.mxu0 0.0
        %8313 = vmatprep.subr.mxu0 0.0
        %8314 = vmatpush2.msra.mxu0 0.0
        %8315 = vmatprep.subr.mxu0 0.0
        %8316 = vmatpush2.msra.mxu0 0.0
        %8317 = vmatprep.subr.mxu0 0.0
        %8318 = vmatpush2.msra.mxu0 0.0
        %8319 = vmatprep.subr.mxu0 0.0
        %8320 = vmatpush2.msra.mxu0 0.0
        %8321 = vmatprep.subr.mxu0 0.0
        %8322 = vmatpush2.msra.mxu0 0.0
        %8323 = vmatprep.subr.mxu0 0.0
        %8324 = vmatpush2.msra.mxu0 0.0
        %8325 = vmatprep.subr.mxu0 0.0
        %8326 = vmatpush2.msra.mxu0 0.0
        %8327 = vmatprep.subr.mxu0 0.0
        %8328 = vmatpush2.msra.mxu0 0.0
        %8329 = vmatprep.subr.mxu0 0.0
        %8330 = vmatpush2.msra.mxu0 0.0
        %8331 = vmatprep.subr.mxu0 0.0
        %8332 = vmatpush2.msra.mxu0 0.0
        %8333 = vmatprep.subr.mxu0 0.0
        %8334 = vmatpush2.msra.mxu0 0.0
        %8335 = vmatprep.subr.mxu0 0.0
        %8336 = vmatpush2.msra.mxu0 0.0
        %8337 = vmatprep.subr.mxu0 0.0
        %8338 = vmatpush2.msra.mxu0 0.0
        %8339 = vmatprep.mubr.f32.mxu0 0.0
        %v8340 = vand.u32 %v5414, 4294901760
        %8341 = vmatmul.mubr.f32.gmra.mxu0 %v8340
        %v8342 = vpop.f32.mrf.mxu0
        %v8343 = vadd.f32 %v8258, %v8342
        %v8344 = vpop.f32.mrf.mxu0
        %8345 = vmatprep.mubr.f32.mxu0 0.0
        %v8346 = vand.u32 %v5417, 4294901760
        %8347 = vmatmul.mubr.f32.gmra.mxu0 %v8346
        %v8348 = vpop.f32.mrf.mxu0
        %v8349 = vadd.f32 %v8266, %v8348
        %v8350 = vpop.f32.mrf.mxu0
        %8351 = vdwg.mxu0
        %8352 = vmatprep.subr.mxu0 0.0
        %8353 = vmatpush1.msra.mxu0 0.0
        %8354 = vmatprep.subr.mxu0 0.0
        %8355 = vmatpush1.msra.mxu0 0.0
        %8356 = vmatprep.subr.mxu0 0.0
        %8357 = vmatpush1.msra.mxu0 0.0
        %8358 = vmatprep.subr.mxu0 0.0
        %8359 = vmatpush1.msra.mxu0 0.0
        %8360 = vmatprep.subr.mxu0 0.0
        %8361 = vmatpush1.msra.mxu0 0.0
        %8362 = vmatprep.subr.mxu0 0.0
        %8363 = vmatpush1.msra.mxu0 0.0
        %8364 = vmatprep.subr.mxu0 0.0
        %8365 = vmatpush1.msra.mxu0 0.0
        %8366 = vmatprep.subr.mxu0 0.0
        %8367 = vmatpush1.msra.mxu0 0.0
        %8368 = vmatprep.subr.mxu0 0.0
        %8369 = vmatpush1.msra.mxu0 0.0
        %8370 = vmatprep.subr.mxu0 0.0
        %8371 = vmatpush1.msra.mxu0 0.0
        %8372 = vmatprep.subr.mxu0 0.0
        %8373 = vmatpush1.msra.mxu0 0.0
        %8374 = vmatprep.subr.mxu0 0.0
        %8375 = vmatpush1.msra.mxu0 0.0
        %8376 = vmatprep.subr.mxu0 0.0
        %8377 = vmatpush1.msra.mxu0 0.0
        %8378 = vmatprep.subr.mxu0 0.0
        %8379 = vmatpush1.msra.mxu0 0.0
        %8380 = vmatprep.subr.mxu0 0.0
        %v8381 = vand.u32 %v3378, 4294901760
        %8382 = vmatpush1.msra.mxu0 %v8381
        %8383 = vmatprep.subr.mxu0 0.0
        %v8384 = vand.u32 %v3372, 4294901760
        %8385 = vmatpush1.msra.mxu0 %v8384
        %8386 = vmatprep.subr.mxu0 0.0
        %8387 = vmatpush2.msra.mxu0 0.0
        %8388 = vmatprep.subr.mxu0 0.0
        %8389 = vmatpush2.msra.mxu0 0.0
        %8390 = vmatprep.subr.mxu0 0.0
        %8391 = vmatpush2.msra.mxu0 0.0
        %8392 = vmatprep.subr.mxu0 0.0
        %8393 = vmatpush2.msra.mxu0 0.0
        %8394 = vmatprep.subr.mxu0 0.0
        %8395 = vmatpush2.msra.mxu0 0.0
        %8396 = vmatprep.subr.mxu0 0.0
        %8397 = vmatpush2.msra.mxu0 0.0
        %8398 = vmatprep.subr.mxu0 0.0
        %8399 = vmatpush2.msra.mxu0 0.0
        %8400 = vmatprep.subr.mxu0 0.0
        %8401 = vmatpush2.msra.mxu0 0.0
        %8402 = vmatprep.subr.mxu0 0.0
        %8403 = vmatpush2.msra.mxu0 0.0
        %8404 = vmatprep.subr.mxu0 0.0
        %8405 = vmatpush2.msra.mxu0 0.0
        %8406 = vmatprep.subr.mxu0 0.0
        %8407 = vmatpush2.msra.mxu0 0.0
        %8408 = vmatprep.subr.mxu0 0.0
        %8409 = vmatpush2.msra.mxu0 0.0
        %8410 = vmatprep.subr.mxu0 0.0
        %8411 = vmatpush2.msra.mxu0 0.0
        %8412 = vmatprep.subr.mxu0 0.0
        %8413 = vmatpush2.msra.mxu0 0.0
        %8414 = vmatprep.subr.mxu0 0.0
        %8415 = vmatpush2.msra.mxu0 0.0
        %8416 = vmatprep.subr.mxu0 0.0
        %8417 = vmatpush2.msra.mxu0 0.0
        %8418 = vmatprep.mubr.f32.mxu0 0.0
        %v8419 = vand.u32 %v5414, 4294901760
        %8420 = vmatmul.mubr.f32.gmra.mxu0 %v8419
        %v8421 = vpop.f32.mrf.mxu0
        %v8422 = vadd.f32 %v8343, %v8421
        %v8423 = vpop.f32.mrf.mxu0
        %8424 = vmatprep.mubr.f32.mxu0 0.0
        %v8425 = vand.u32 %v5417, 4294901760
        %8426 = vmatmul.mubr.f32.gmra.mxu0 %v8425
        %v8427 = vpop.f32.mrf.mxu0
        %v8428 = vadd.f32 %v8349, %v8427
        %v8429 = vpop.f32.mrf.mxu0
        %8430 = vdwg.mxu0
        %8431 = vmatprep.subr.mxu0 0.0
        %8432 = vmatpush1.msra.mxu0 0.0
        %8433 = vmatprep.subr.mxu0 0.0
        %8434 = vmatpush1.msra.mxu0 0.0
        %8435 = vmatprep.subr.mxu0 0.0
        %8436 = vmatpush1.msra.mxu0 0.0
        %8437 = vmatprep.subr.mxu0 0.0
        %8438 = vmatpush1.msra.mxu0 0.0
        %8439 = vmatprep.subr.mxu0 0.0
        %8440 = vmatpush1.msra.mxu0 0.0
        %8441 = vmatprep.subr.mxu0 0.0
        %8442 = vmatpush1.msra.mxu0 0.0
        %8443 = vmatprep.subr.mxu0 0.0
        %8444 = vmatpush1.msra.mxu0 0.0
        %8445 = vmatprep.subr.mxu0 0.0
        %8446 = vmatpush1.msra.mxu0 0.0
        %8447 = vmatprep.subr.mxu0 0.0
        %8448 = vmatpush1.msra.mxu0 0.0
        %8449 = vmatprep.subr.mxu0 0.0
        %8450 = vmatpush1.msra.mxu0 0.0
        %8451 = vmatprep.subr.mxu0 0.0
        %8452 = vmatpush1.msra.mxu0 0.0
        %8453 = vmatprep.subr.mxu0 0.0
        %8454 = vmatpush1.msra.mxu0 0.0
        %8455 = vmatprep.subr.mxu0 0.0
        %8456 = vmatpush1.msra.mxu0 0.0
        %8457 = vmatprep.subr.mxu0 0.0
        %8458 = vmatpush1.msra.mxu0 0.0
        %8459 = vmatprep.subr.mxu0 0.0
        %v8460 = vand.u32 %v3886, 4294901760
        %8461 = vmatpush1.msra.mxu0 %v8460
        %8462 = vmatprep.subr.mxu0 0.0
        %v8463 = vand.u32 %v3880, 4294901760
        %8464 = vmatpush1.msra.mxu0 %v8463
        %8465 = vmatprep.subr.mxu0 0.0
        %8466 = vmatpush2.msra.mxu0 0.0
        %8467 = vmatprep.subr.mxu0 0.0
        %8468 = vmatpush2.msra.mxu0 0.0
        %8469 = vmatprep.subr.mxu0 0.0
        %8470 = vmatpush2.msra.mxu0 0.0
        %8471 = vmatprep.subr.mxu0 0.0
        %8472 = vmatpush2.msra.mxu0 0.0
        %8473 = vmatprep.subr.mxu0 0.0
        %8474 = vmatpush2.msra.mxu0 0.0
        %8475 = vmatprep.subr.mxu0 0.0
        %8476 = vmatpush2.msra.mxu0 0.0
        %8477 = vmatprep.subr.mxu0 0.0
        %8478 = vmatpush2.msra.mxu0 0.0
        %8479 = vmatprep.subr.mxu0 0.0
        %8480 = vmatpush2.msra.mxu0 0.0
        %8481 = vmatprep.subr.mxu0 0.0
        %8482 = vmatpush2.msra.mxu0 0.0
        %8483 = vmatprep.subr.mxu0 0.0
        %8484 = vmatpush2.msra.mxu0 0.0
        %8485 = vmatprep.subr.mxu0 0.0
        %8486 = vmatpush2.msra.mxu0 0.0
        %8487 = vmatprep.subr.mxu0 0.0
        %8488 = vmatpush2.msra.mxu0 0.0
        %8489 = vmatprep.subr.mxu0 0.0
        %8490 = vmatpush2.msra.mxu0 0.0
        %8491 = vmatprep.subr.mxu0 0.0
        %8492 = vmatpush2.msra.mxu0 0.0
        %8493 = vmatprep.subr.mxu0 0.0
        %8494 = vmatpush2.msra.mxu0 0.0
        %8495 = vmatprep.subr.mxu0 0.0
        %8496 = vmatpush2.msra.mxu0 0.0
        %8497 = vmatprep.mubr.f32.mxu0 0.0
        %v8498 = vand.u32 %v5414, 4294901760
        %v8499 = vsub.f32 %v5414, %v8498
        %v8500 = vand.u32 %v8499, 4294901760
        %v8501 = vsub.f32 %v8499, %v8500
        %v8502 = vand.u32 %v8501, 4294901760
        %8503 = vmatmul.mubr.f32.gmra.mxu0 %v8502
        %v8504 = vpop.f32.mrf.mxu0
        %v8505 = vadd.f32 0.0, %v8504
        %v8506 = vpop.f32.mrf.mxu0
        %8507 = vmatprep.mubr.f32.mxu0 0.0
        %v8508 = vand.u32 %v5417, 4294901760
        %v8509 = vsub.f32 %v5417, %v8508
        %v8510 = vand.u32 %v8509, 4294901760
        %v8511 = vsub.f32 %v8509, %v8510
        %v8512 = vand.u32 %v8511, 4294901760
        %8513 = vmatmul.mubr.f32.gmra.mxu0 %v8512
        %v8514 = vpop.f32.mrf.mxu0
        %v8515 = vadd.f32 0.0, %v8514
        %v8516 = vpop.f32.mrf.mxu0
        %8517 = vdwg.mxu0
        %8518 = vmatprep.subr.mxu0 0.0
        %8519 = vmatpush1.msra.mxu0 0.0
        %8520 = vmatprep.subr.mxu0 0.0
        %8521 = vmatpush1.msra.mxu0 0.0
        %8522 = vmatprep.subr.mxu0 0.0
        %8523 = vmatpush1.msra.mxu0 0.0
        %8524 = vmatprep.subr.mxu0 0.0
        %8525 = vmatpush1.msra.mxu0 0.0
        %8526 = vmatprep.subr.mxu0 0.0
        %8527 = vmatpush1.msra.mxu0 0.0
        %8528 = vmatprep.subr.mxu0 0.0
        %8529 = vmatpush1.msra.mxu0 0.0
        %8530 = vmatprep.subr.mxu0 0.0
        %8531 = vmatpush1.msra.mxu0 0.0
        %8532 = vmatprep.subr.mxu0 0.0
        %8533 = vmatpush1.msra.mxu0 0.0
        %8534 = vmatprep.subr.mxu0 0.0
        %8535 = vmatpush1.msra.mxu0 0.0
        %8536 = vmatprep.subr.mxu0 0.0
        %8537 = vmatpush1.msra.mxu0 0.0
        %8538 = vmatprep.subr.mxu0 0.0
        %8539 = vmatpush1.msra.mxu0 0.0
        %8540 = vmatprep.subr.mxu0 0.0
        %8541 = vmatpush1.msra.mxu0 0.0
        %8542 = vmatprep.subr.mxu0 0.0
        %8543 = vmatpush1.msra.mxu0 0.0
        %8544 = vmatprep.subr.mxu0 0.0
        %8545 = vmatpush1.msra.mxu0 0.0
        %8546 = vmatprep.subr.mxu0 0.0
        %v8547 = vand.u32 %v3886, 4294901760
        %v8548 = vsub.f32 %v3886, %v8547
        %v8549 = vand.u32 %v8548, 4294901760
        %v8550 = vsub.f32 %v8548, %v8549
        %v8551 = vand.u32 %v8550, 4294901760
        %8552 = vmatpush1.msra.mxu0 %v8551
        %8553 = vmatprep.subr.mxu0 0.0
        %v8554 = vand.u32 %v3880, 4294901760
        %v8555 = vsub.f32 %v3880, %v8554
        %v8556 = vand.u32 %v8555, 4294901760
        %v8557 = vsub.f32 %v8555, %v8556
        %v8558 = vand.u32 %v8557, 4294901760
        %8559 = vmatpush1.msra.mxu0 %v8558
        %8560 = vmatprep.subr.mxu0 0.0
        %8561 = vmatpush2.msra.mxu0 0.0
        %8562 = vmatprep.subr.mxu0 0.0
        %8563 = vmatpush2.msra.mxu0 0.0
        %8564 = vmatprep.subr.mxu0 0.0
        %8565 = vmatpush2.msra.mxu0 0.0
        %8566 = vmatprep.subr.mxu0 0.0
        %8567 = vmatpush2.msra.mxu0 0.0
        %8568 = vmatprep.subr.mxu0 0.0
        %8569 = vmatpush2.msra.mxu0 0.0
        %8570 = vmatprep.subr.mxu0 0.0
        %8571 = vmatpush2.msra.mxu0 0.0
        %8572 = vmatprep.subr.mxu0 0.0
        %8573 = vmatpush2.msra.mxu0 0.0
        %8574 = vmatprep.subr.mxu0 0.0
        %8575 = vmatpush2.msra.mxu0 0.0
        %8576 = vmatprep.subr.mxu0 0.0
        %8577 = vmatpush2.msra.mxu0 0.0
        %8578 = vmatprep.subr.mxu0 0.0
        %8579 = vmatpush2.msra.mxu0 0.0
        %8580 = vmatprep.subr.mxu0 0.0
        %8581 = vmatpush2.msra.mxu0 0.0
        %8582 = vmatprep.subr.mxu0 0.0
        %8583 = vmatpush2.msra.mxu0 0.0
        %8584 = vmatprep.subr.mxu0 0.0
        %8585 = vmatpush2.msra.mxu0 0.0
        %8586 = vmatprep.subr.mxu0 0.0
        %8587 = vmatpush2.msra.mxu0 0.0
        %8588 = vmatprep.subr.mxu0 0.0
        %8589 = vmatpush2.msra.mxu0 0.0
        %8590 = vmatprep.subr.mxu0 0.0
        %8591 = vmatpush2.msra.mxu0 0.0
        %8592 = vmatprep.mubr.f32.mxu0 0.0
        %v8593 = vand.u32 %v5414, 4294901760
        %8594 = vmatmul.mubr.f32.gmra.mxu0 %v8593
        %v8595 = vpop.f32.mrf.mxu0
        %v8596 = vadd.f32 %v8505, %v8595
        %v8597 = vpop.f32.mrf.mxu0
        %8598 = vmatprep.mubr.f32.mxu0 0.0
        %v8599 = vand.u32 %v5417, 4294901760
        %8600 = vmatmul.mubr.f32.gmra.mxu0 %v8599
        %v8601 = vpop.f32.mrf.mxu0
        %v8602 = vadd.f32 %v8515, %v8601
        %v8603 = vpop.f32.mrf.mxu0
        %8604 = vdwg.mxu0
        %8605 = vmatprep.subr.mxu0 0.0
        %8606 = vmatpush1.msra.mxu0 0.0
        %8607 = vmatprep.subr.mxu0 0.0
        %8608 = vmatpush1.msra.mxu0 0.0
        %8609 = vmatprep.subr.mxu0 0.0
        %8610 = vmatpush1.msra.mxu0 0.0
        %8611 = vmatprep.subr.mxu0 0.0
        %8612 = vmatpush1.msra.mxu0 0.0
        %8613 = vmatprep.subr.mxu0 0.0
        %8614 = vmatpush1.msra.mxu0 0.0
        %8615 = vmatprep.subr.mxu0 0.0
        %8616 = vmatpush1.msra.mxu0 0.0
        %8617 = vmatprep.subr.mxu0 0.0
        %8618 = vmatpush1.msra.mxu0 0.0
        %8619 = vmatprep.subr.mxu0 0.0
        %8620 = vmatpush1.msra.mxu0 0.0
        %8621 = vmatprep.subr.mxu0 0.0
        %8622 = vmatpush1.msra.mxu0 0.0
        %8623 = vmatprep.subr.mxu0 0.0
        %8624 = vmatpush1.msra.mxu0 0.0
        %8625 = vmatprep.subr.mxu0 0.0
        %8626 = vmatpush1.msra.mxu0 0.0
        %8627 = vmatprep.subr.mxu0 0.0
        %8628 = vmatpush1.msra.mxu0 0.0
        %8629 = vmatprep.subr.mxu0 0.0
        %8630 = vmatpush1.msra.mxu0 0.0
        %8631 = vmatprep.subr.mxu0 0.0
        %8632 = vmatpush1.msra.mxu0 0.0
        %8633 = vmatprep.subr.mxu0 0.0
        %v8634 = vand.u32 %v3886, 4294901760
        %v8635 = vsub.f32 %v3886, %v8634
        %8636 = vmatpush1.msra.mxu0 %v8635
        %8637 = vmatprep.subr.mxu0 0.0
        %v8638 = vand.u32 %v3880, 4294901760
        %v8639 = vsub.f32 %v3880, %v8638
        %8640 = vmatpush1.msra.mxu0 %v8639
        %8641 = vmatprep.subr.mxu0 0.0
        %8642 = vmatpush2.msra.mxu0 0.0
        %8643 = vmatprep.subr.mxu0 0.0
        %8644 = vmatpush2.msra.mxu0 0.0
        %8645 = vmatprep.subr.mxu0 0.0
        %8646 = vmatpush2.msra.mxu0 0.0
        %8647 = vmatprep.subr.mxu0 0.0
        %8648 = vmatpush2.msra.mxu0 0.0
        %8649 = vmatprep.subr.mxu0 0.0
        %8650 = vmatpush2.msra.mxu0 0.0
        %8651 = vmatprep.subr.mxu0 0.0
        %8652 = vmatpush2.msra.mxu0 0.0
        %8653 = vmatprep.subr.mxu0 0.0
        %8654 = vmatpush2.msra.mxu0 0.0
        %8655 = vmatprep.subr.mxu0 0.0
        %8656 = vmatpush2.msra.mxu0 0.0
        %8657 = vmatprep.subr.mxu0 0.0
        %8658 = vmatpush2.msra.mxu0 0.0
        %8659 = vmatprep.subr.mxu0 0.0
        %8660 = vmatpush2.msra.mxu0 0.0
        %8661 = vmatprep.subr.mxu0 0.0
        %8662 = vmatpush2.msra.mxu0 0.0
        %8663 = vmatprep.subr.mxu0 0.0
        %8664 = vmatpush2.msra.mxu0 0.0
        %8665 = vmatprep.subr.mxu0 0.0
        %8666 = vmatpush2.msra.mxu0 0.0
        %8667 = vmatprep.subr.mxu0 0.0
        %8668 = vmatpush2.msra.mxu0 0.0
        %8669 = vmatprep.subr.mxu0 0.0
        %8670 = vmatpush2.msra.mxu0 0.0
        %8671 = vmatprep.subr.mxu0 0.0
        %8672 = vmatpush2.msra.mxu0 0.0
        %8673 = vmatprep.mubr.f32.mxu0 0.0
        %v8674 = vand.u32 %v5414, 4294901760
        %v8675 = vsub.f32 %v5414, %v8674
        %8676 = vmatmul.mubr.f32.gmra.mxu0 %v8675
        %v8677 = vpop.f32.mrf.mxu0
        %v8678 = vadd.f32 %v8596, %v8677
        %v8679 = vpop.f32.mrf.mxu0
        %8680 = vmatprep.mubr.f32.mxu0 0.0
        %v8681 = vand.u32 %v5417, 4294901760
        %v8682 = vsub.f32 %v5417, %v8681
        %8683 = vmatmul.mubr.f32.gmra.mxu0 %v8682
        %v8684 = vpop.f32.mrf.mxu0
        %v8685 = vadd.f32 %v8602, %v8684
        %v8686 = vpop.f32.mrf.mxu0
        %8687 = vdwg.mxu0
        %8688 = vmatprep.subr.mxu0 0.0
        %8689 = vmatpush1.msra.mxu0 0.0
        %8690 = vmatprep.subr.mxu0 0.0
        %8691 = vmatpush1.msra.mxu0 0.0
        %8692 = vmatprep.subr.mxu0 0.0
        %8693 = vmatpush1.msra.mxu0 0.0
        %8694 = vmatprep.subr.mxu0 0.0
        %8695 = vmatpush1.msra.mxu0 0.0
        %8696 = vmatprep.subr.mxu0 0.0
        %8697 = vmatpush1.msra.mxu0 0.0
        %8698 = vmatprep.subr.mxu0 0.0
        %8699 = vmatpush1.msra.mxu0 0.0
        %8700 = vmatprep.subr.mxu0 0.0
        %8701 = vmatpush1.msra.mxu0 0.0
        %8702 = vmatprep.subr.mxu0 0.0
        %8703 = vmatpush1.msra.mxu0 0.0
        %8704 = vmatprep.subr.mxu0 0.0
        %8705 = vmatpush1.msra.mxu0 0.0
        %8706 = vmatprep.subr.mxu0 0.0
        %8707 = vmatpush1.msra.mxu0 0.0
        %8708 = vmatprep.subr.mxu0 0.0
        %8709 = vmatpush1.msra.mxu0 0.0
        %8710 = vmatprep.subr.mxu0 0.0
        %8711 = vmatpush1.msra.mxu0 0.0
        %8712 = vmatprep.subr.mxu0 0.0
        %8713 = vmatpush1.msra.mxu0 0.0
        %8714 = vmatprep.subr.mxu0 0.0
        %8715 = vmatpush1.msra.mxu0 0.0
        %8716 = vmatprep.subr.mxu0 0.0
        %v8717 = vand.u32 %v3886, 4294901760
        %8718 = vmatpush1.msra.mxu0 %v8717
        %8719 = vmatprep.subr.mxu0 0.0
        %v8720 = vand.u32 %v3880, 4294901760
        %8721 = vmatpush1.msra.mxu0 %v8720
        %8722 = vmatprep.subr.mxu0 0.0
        %8723 = vmatpush2.msra.mxu0 0.0
        %8724 = vmatprep.subr.mxu0 0.0
        %8725 = vmatpush2.msra.mxu0 0.0
        %8726 = vmatprep.subr.mxu0 0.0
        %8727 = vmatpush2.msra.mxu0 0.0
        %8728 = vmatprep.subr.mxu0 0.0
        %8729 = vmatpush2.msra.mxu0 0.0
        %8730 = vmatprep.subr.mxu0 0.0
        %8731 = vmatpush2.msra.mxu0 0.0
        %8732 = vmatprep.subr.mxu0 0.0
        %8733 = vmatpush2.msra.mxu0 0.0
        %8734 = vmatprep.subr.mxu0 0.0
        %8735 = vmatpush2.msra.mxu0 0.0
        %8736 = vmatprep.subr.mxu0 0.0
        %8737 = vmatpush2.msra.mxu0 0.0
        %8738 = vmatprep.subr.mxu0 0.0
        %8739 = vmatpush2.msra.mxu0 0.0
        %8740 = vmatprep.subr.mxu0 0.0
        %8741 = vmatpush2.msra.mxu0 0.0
        %8742 = vmatprep.subr.mxu0 0.0
        %8743 = vmatpush2.msra.mxu0 0.0
        %8744 = vmatprep.subr.mxu0 0.0
        %8745 = vmatpush2.msra.mxu0 0.0
        %8746 = vmatprep.subr.mxu0 0.0
        %8747 = vmatpush2.msra.mxu0 0.0
        %8748 = vmatprep.subr.mxu0 0.0
        %8749 = vmatpush2.msra.mxu0 0.0
        %8750 = vmatprep.subr.mxu0 0.0
        %8751 = vmatpush2.msra.mxu0 0.0
        %8752 = vmatprep.subr.mxu0 0.0
        %8753 = vmatpush2.msra.mxu0 0.0
        %8754 = vmatprep.mubr.f32.mxu0 0.0
        %v8755 = vand.u32 %v5414, 4294901760
        %v8756 = vsub.f32 %v5414, %v8755
        %v8757 = vand.u32 %v8756, 4294901760
        %8758 = vmatmul.mubr.f32.gmra.mxu0 %v8757
        %v8759 = vpop.f32.mrf.mxu0
        %v8760 = vadd.f32 %v8678, %v8759
        %v8761 = vpop.f32.mrf.mxu0
        %8762 = vmatprep.mubr.f32.mxu0 0.0
        %v8763 = vand.u32 %v5417, 4294901760
        %v8764 = vsub.f32 %v5417, %v8763
        %v8765 = vand.u32 %v8764, 4294901760
        %8766 = vmatmul.mubr.f32.gmra.mxu0 %v8765
        %v8767 = vpop.f32.mrf.mxu0
        %v8768 = vadd.f32 %v8685, %v8767
        %v8769 = vpop.f32.mrf.mxu0
        %8770 = vdwg.mxu0
        %8771 = vmatprep.subr.mxu0 0.0
        %8772 = vmatpush1.msra.mxu0 0.0
        %8773 = vmatprep.subr.mxu0 0.0
        %8774 = vmatpush1.msra.mxu0 0.0
        %8775 = vmatprep.subr.mxu0 0.0
        %8776 = vmatpush1.msra.mxu0 0.0
        %8777 = vmatprep.subr.mxu0 0.0
        %8778 = vmatpush1.msra.mxu0 0.0
        %8779 = vmatprep.subr.mxu0 0.0
        %8780 = vmatpush1.msra.mxu0 0.0
        %8781 = vmatprep.subr.mxu0 0.0
        %8782 = vmatpush1.msra.mxu0 0.0
        %8783 = vmatprep.subr.mxu0 0.0
        %8784 = vmatpush1.msra.mxu0 0.0
        %8785 = vmatprep.subr.mxu0 0.0
        %8786 = vmatpush1.msra.mxu0 0.0
        %8787 = vmatprep.subr.mxu0 0.0
        %8788 = vmatpush1.msra.mxu0 0.0
        %8789 = vmatprep.subr.mxu0 0.0
        %8790 = vmatpush1.msra.mxu0 0.0
        %8791 = vmatprep.subr.mxu0 0.0
        %8792 = vmatpush1.msra.mxu0 0.0
        %8793 = vmatprep.subr.mxu0 0.0
        %8794 = vmatpush1.msra.mxu0 0.0
        %8795 = vmatprep.subr.mxu0 0.0
        %8796 = vmatpush1.msra.mxu0 0.0
        %8797 = vmatprep.subr.mxu0 0.0
        %8798 = vmatpush1.msra.mxu0 0.0
        %8799 = vmatprep.subr.mxu0 0.0
        %v8800 = vand.u32 %v3886, 4294901760
        %v8801 = vsub.f32 %v3886, %v8800
        %v8802 = vand.u32 %v8801, 4294901760
        %8803 = vmatpush1.msra.mxu0 %v8802
        %8804 = vmatprep.subr.mxu0 0.0
        %v8805 = vand.u32 %v3880, 4294901760
        %v8806 = vsub.f32 %v3880, %v8805
        %v8807 = vand.u32 %v8806, 4294901760
        %8808 = vmatpush1.msra.mxu0 %v8807
        %8809 = vmatprep.subr.mxu0 0.0
        %8810 = vmatpush2.msra.mxu0 0.0
        %8811 = vmatprep.subr.mxu0 0.0
        %8812 = vmatpush2.msra.mxu0 0.0
        %8813 = vmatprep.subr.mxu0 0.0
        %8814 = vmatpush2.msra.mxu0 0.0
        %8815 = vmatprep.subr.mxu0 0.0
        %8816 = vmatpush2.msra.mxu0 0.0
        %8817 = vmatprep.subr.mxu0 0.0
        %8818 = vmatpush2.msra.mxu0 0.0
        %8819 = vmatprep.subr.mxu0 0.0
        %8820 = vmatpush2.msra.mxu0 0.0
        %8821 = vmatprep.subr.mxu0 0.0
        %8822 = vmatpush2.msra.mxu0 0.0
        %8823 = vmatprep.subr.mxu0 0.0
        %8824 = vmatpush2.msra.mxu0 0.0
        %8825 = vmatprep.subr.mxu0 0.0
        %8826 = vmatpush2.msra.mxu0 0.0
        %8827 = vmatprep.subr.mxu0 0.0
        %8828 = vmatpush2.msra.mxu0 0.0
        %8829 = vmatprep.subr.mxu0 0.0
        %8830 = vmatpush2.msra.mxu0 0.0
        %8831 = vmatprep.subr.mxu0 0.0
        %8832 = vmatpush2.msra.mxu0 0.0
        %8833 = vmatprep.subr.mxu0 0.0
        %8834 = vmatpush2.msra.mxu0 0.0
        %8835 = vmatprep.subr.mxu0 0.0
        %8836 = vmatpush2.msra.mxu0 0.0
        %8837 = vmatprep.subr.mxu0 0.0
        %8838 = vmatpush2.msra.mxu0 0.0
        %8839 = vmatprep.subr.mxu0 0.0
        %8840 = vmatpush2.msra.mxu0 0.0
        %8841 = vmatprep.mubr.f32.mxu0 0.0
        %v8842 = vand.u32 %v5414, 4294901760
        %8843 = vmatmul.mubr.f32.gmra.mxu0 %v8842
        %v8844 = vpop.f32.mrf.mxu0
        %v8845 = vadd.f32 %v8760, %v8844
        %v8846 = vpop.f32.mrf.mxu0
        %8847 = vmatprep.mubr.f32.mxu0 0.0
        %v8848 = vand.u32 %v5417, 4294901760
        %8849 = vmatmul.mubr.f32.gmra.mxu0 %v8848
        %v8850 = vpop.f32.mrf.mxu0
        %v8851 = vadd.f32 %v8768, %v8850
        %v8852 = vpop.f32.mrf.mxu0
        %8853 = vdwg.mxu0
        %8854 = vmatprep.subr.mxu0 0.0
        %8855 = vmatpush1.msra.mxu0 0.0
        %8856 = vmatprep.subr.mxu0 0.0
        %8857 = vmatpush1.msra.mxu0 0.0
        %8858 = vmatprep.subr.mxu0 0.0
        %8859 = vmatpush1.msra.mxu0 0.0
        %8860 = vmatprep.subr.mxu0 0.0
        %8861 = vmatpush1.msra.mxu0 0.0
        %8862 = vmatprep.subr.mxu0 0.0
        %8863 = vmatpush1.msra.mxu0 0.0
        %8864 = vmatprep.subr.mxu0 0.0
        %8865 = vmatpush1.msra.mxu0 0.0
        %8866 = vmatprep.subr.mxu0 0.0
        %8867 = vmatpush1.msra.mxu0 0.0
        %8868 = vmatprep.subr.mxu0 0.0
        %8869 = vmatpush1.msra.mxu0 0.0
        %8870 = vmatprep.subr.mxu0 0.0
        %8871 = vmatpush1.msra.mxu0 0.0
        %8872 = vmatprep.subr.mxu0 0.0
        %8873 = vmatpush1.msra.mxu0 0.0
        %8874 = vmatprep.subr.mxu0 0.0
        %8875 = vmatpush1.msra.mxu0 0.0
        %8876 = vmatprep.subr.mxu0 0.0
        %8877 = vmatpush1.msra.mxu0 0.0
        %8878 = vmatprep.subr.mxu0 0.0
        %8879 = vmatpush1.msra.mxu0 0.0
        %8880 = vmatprep.subr.mxu0 0.0
        %8881 = vmatpush1.msra.mxu0 0.0
        %8882 = vmatprep.subr.mxu0 0.0
        %v8883 = vand.u32 %v3886, 4294901760
        %8884 = vmatpush1.msra.mxu0 %v8883
        %8885 = vmatprep.subr.mxu0 0.0
        %v8886 = vand.u32 %v3880, 4294901760
        %8887 = vmatpush1.msra.mxu0 %v8886
        %8888 = vmatprep.subr.mxu0 0.0
        %8889 = vmatpush2.msra.mxu0 0.0
        %8890 = vmatprep.subr.mxu0 0.0
        %8891 = vmatpush2.msra.mxu0 0.0
        %8892 = vmatprep.subr.mxu0 0.0
        %8893 = vmatpush2.msra.mxu0 0.0
        %8894 = vmatprep.subr.mxu0 0.0
        %8895 = vmatpush2.msra.mxu0 0.0
        %8896 = vmatprep.subr.mxu0 0.0
        %8897 = vmatpush2.msra.mxu0 0.0
        %8898 = vmatprep.subr.mxu0 0.0
        %8899 = vmatpush2.msra.mxu0 0.0
        %8900 = vmatprep.subr.mxu0 0.0
        %8901 = vmatpush2.msra.mxu0 0.0
        %8902 = vmatprep.subr.mxu0 0.0
        %8903 = vmatpush2.msra.mxu0 0.0
        %8904 = vmatprep.subr.mxu0 0.0
        %8905 = vmatpush2.msra.mxu0 0.0
        %8906 = vmatprep.subr.mxu0 0.0
        %8907 = vmatpush2.msra.mxu0 0.0
        %8908 = vmatprep.subr.mxu0 0.0
        %8909 = vmatpush2.msra.mxu0 0.0
        %8910 = vmatprep.subr.mxu0 0.0
        %8911 = vmatpush2.msra.mxu0 0.0
        %8912 = vmatprep.subr.mxu0 0.0
        %8913 = vmatpush2.msra.mxu0 0.0
        %8914 = vmatprep.subr.mxu0 0.0
        %8915 = vmatpush2.msra.mxu0 0.0
        %8916 = vmatprep.subr.mxu0 0.0
        %8917 = vmatpush2.msra.mxu0 0.0
        %8918 = vmatprep.subr.mxu0 0.0
        %8919 = vmatpush2.msra.mxu0 0.0
        %8920 = vmatprep.mubr.f32.mxu0 0.0
        %v8921 = vand.u32 %v5414, 4294901760
        %8922 = vmatmul.mubr.f32.gmra.mxu0 %v8921
        %v8923 = vpop.f32.mrf.mxu0
        %v8924 = vadd.f32 %v8845, %v8923
        %v8925 = vpop.f32.mrf.mxu0
        %8926 = vmatprep.mubr.f32.mxu0 0.0
        %v8927 = vand.u32 %v5417, 4294901760
        %8928 = vmatmul.mubr.f32.gmra.mxu0 %v8927
        %v8929 = vpop.f32.mrf.mxu0
        %v8930 = vadd.f32 %v8851, %v8929
        %v8931 = vpop.f32.mrf.mxu0
        %8932 = vdwg.mxu0
        %8933 = vmatprep.subr.mxu0 0.0
        %8934 = vmatpush1.msra.mxu0 0.0
        %8935 = vmatprep.subr.mxu0 0.0
        %8936 = vmatpush1.msra.mxu0 0.0
        %8937 = vmatprep.subr.mxu0 0.0
        %8938 = vmatpush1.msra.mxu0 0.0
        %8939 = vmatprep.subr.mxu0 0.0
        %8940 = vmatpush1.msra.mxu0 0.0
        %8941 = vmatprep.subr.mxu0 0.0
        %8942 = vmatpush1.msra.mxu0 0.0
        %8943 = vmatprep.subr.mxu0 0.0
        %8944 = vmatpush1.msra.mxu0 0.0
        %8945 = vmatprep.subr.mxu0 0.0
        %8946 = vmatpush1.msra.mxu0 0.0
        %8947 = vmatprep.subr.mxu0 0.0
        %8948 = vmatpush1.msra.mxu0 0.0
        %8949 = vmatprep.subr.mxu0 0.0
        %8950 = vmatpush1.msra.mxu0 0.0
        %8951 = vmatprep.subr.mxu0 0.0
        %8952 = vmatpush1.msra.mxu0 0.0
        %8953 = vmatprep.subr.mxu0 0.0
        %8954 = vmatpush1.msra.mxu0 0.0
        %8955 = vmatprep.subr.mxu0 0.0
        %8956 = vmatpush1.msra.mxu0 0.0
        %8957 = vmatprep.subr.mxu0 0.0
        %8958 = vmatpush1.msra.mxu0 0.0
        %8959 = vmatprep.subr.mxu0 0.0
        %8960 = vmatpush1.msra.mxu0 0.0
        %8961 = vmatprep.subr.mxu0 0.0
        %v8962 = vand.u32 %v4394, 4294901760
        %8963 = vmatpush1.msra.mxu0 %v8962
        %8964 = vmatprep.subr.mxu0 0.0
        %v8965 = vand.u32 %v4388, 4294901760
        %8966 = vmatpush1.msra.mxu0 %v8965
        %8967 = vmatprep.subr.mxu0 0.0
        %8968 = vmatpush2.msra.mxu0 0.0
        %8969 = vmatprep.subr.mxu0 0.0
        %8970 = vmatpush2.msra.mxu0 0.0
        %8971 = vmatprep.subr.mxu0 0.0
        %8972 = vmatpush2.msra.mxu0 0.0
        %8973 = vmatprep.subr.mxu0 0.0
        %8974 = vmatpush2.msra.mxu0 0.0
        %8975 = vmatprep.subr.mxu0 0.0
        %8976 = vmatpush2.msra.mxu0 0.0
        %8977 = vmatprep.subr.mxu0 0.0
        %8978 = vmatpush2.msra.mxu0 0.0
        %8979 = vmatprep.subr.mxu0 0.0
        %8980 = vmatpush2.msra.mxu0 0.0
        %8981 = vmatprep.subr.mxu0 0.0
        %8982 = vmatpush2.msra.mxu0 0.0
        %8983 = vmatprep.subr.mxu0 0.0
        %8984 = vmatpush2.msra.mxu0 0.0
        %8985 = vmatprep.subr.mxu0 0.0
        %8986 = vmatpush2.msra.mxu0 0.0
        %8987 = vmatprep.subr.mxu0 0.0
        %8988 = vmatpush2.msra.mxu0 0.0
        %8989 = vmatprep.subr.mxu0 0.0
        %8990 = vmatpush2.msra.mxu0 0.0
        %8991 = vmatprep.subr.mxu0 0.0
        %8992 = vmatpush2.msra.mxu0 0.0
        %8993 = vmatprep.subr.mxu0 0.0
        %8994 = vmatpush2.msra.mxu0 0.0
        %8995 = vmatprep.subr.mxu0 0.0
        %8996 = vmatpush2.msra.mxu0 0.0
        %8997 = vmatprep.subr.mxu0 0.0
        %8998 = vmatpush2.msra.mxu0 0.0
        %8999 = vmatprep.mubr.f32.mxu0 0.0
        %v9000 = vand.u32 %v5414, 4294901760
        %v9001 = vsub.f32 %v5414, %v9000
        %v9002 = vand.u32 %v9001, 4294901760
        %v9003 = vsub.f32 %v9001, %v9002
        %v9004 = vand.u32 %v9003, 4294901760
        %9005 = vmatmul.mubr.f32.gmra.mxu0 %v9004
        %v9006 = vpop.f32.mrf.mxu0
        %v9007 = vadd.f32 0.0, %v9006
        %v9008 = vpop.f32.mrf.mxu0
        %9009 = vmatprep.mubr.f32.mxu0 0.0
        %v9010 = vand.u32 %v5417, 4294901760
        %v9011 = vsub.f32 %v5417, %v9010
        %v9012 = vand.u32 %v9011, 4294901760
        %v9013 = vsub.f32 %v9011, %v9012
        %v9014 = vand.u32 %v9013, 4294901760
        %9015 = vmatmul.mubr.f32.gmra.mxu0 %v9014
        %v9016 = vpop.f32.mrf.mxu0
        %v9017 = vadd.f32 0.0, %v9016
        %v9018 = vpop.f32.mrf.mxu0
        %9019 = vdwg.mxu0
        %9020 = vmatprep.subr.mxu0 0.0
        %9021 = vmatpush1.msra.mxu0 0.0
        %9022 = vmatprep.subr.mxu0 0.0
        %9023 = vmatpush1.msra.mxu0 0.0
        %9024 = vmatprep.subr.mxu0 0.0
        %9025 = vmatpush1.msra.mxu0 0.0
        %9026 = vmatprep.subr.mxu0 0.0
        %9027 = vmatpush1.msra.mxu0 0.0
        %9028 = vmatprep.subr.mxu0 0.0
        %9029 = vmatpush1.msra.mxu0 0.0
        %9030 = vmatprep.subr.mxu0 0.0
        %9031 = vmatpush1.msra.mxu0 0.0
        %9032 = vmatprep.subr.mxu0 0.0
        %9033 = vmatpush1.msra.mxu0 0.0
        %9034 = vmatprep.subr.mxu0 0.0
        %9035 = vmatpush1.msra.mxu0 0.0
        %9036 = vmatprep.subr.mxu0 0.0
        %9037 = vmatpush1.msra.mxu0 0.0
        %9038 = vmatprep.subr.mxu0 0.0
        %9039 = vmatpush1.msra.mxu0 0.0
        %9040 = vmatprep.subr.mxu0 0.0
        %9041 = vmatpush1.msra.mxu0 0.0
        %9042 = vmatprep.subr.mxu0 0.0
        %9043 = vmatpush1.msra.mxu0 0.0
        %9044 = vmatprep.subr.mxu0 0.0
        %9045 = vmatpush1.msra.mxu0 0.0
        %9046 = vmatprep.subr.mxu0 0.0
        %9047 = vmatpush1.msra.mxu0 0.0
        %9048 = vmatprep.subr.mxu0 0.0
        %v9049 = vand.u32 %v4394, 4294901760
        %v9050 = vsub.f32 %v4394, %v9049
        %v9051 = vand.u32 %v9050, 4294901760
        %v9052 = vsub.f32 %v9050, %v9051
        %v9053 = vand.u32 %v9052, 4294901760
        %9054 = vmatpush1.msra.mxu0 %v9053
        %9055 = vmatprep.subr.mxu0 0.0
        %v9056 = vand.u32 %v4388, 4294901760
        %v9057 = vsub.f32 %v4388, %v9056
        %v9058 = vand.u32 %v9057, 4294901760
        %v9059 = vsub.f32 %v9057, %v9058
        %v9060 = vand.u32 %v9059, 4294901760
        %9061 = vmatpush1.msra.mxu0 %v9060
        %9062 = vmatprep.subr.mxu0 0.0
        %9063 = vmatpush2.msra.mxu0 0.0
        %9064 = vmatprep.subr.mxu0 0.0
        %9065 = vmatpush2.msra.mxu0 0.0
        %9066 = vmatprep.subr.mxu0 0.0
        %9067 = vmatpush2.msra.mxu0 0.0
        %9068 = vmatprep.subr.mxu0 0.0
        %9069 = vmatpush2.msra.mxu0 0.0
        %9070 = vmatprep.subr.mxu0 0.0
        %9071 = vmatpush2.msra.mxu0 0.0
        %9072 = vmatprep.subr.mxu0 0.0
        %9073 = vmatpush2.msra.mxu0 0.0
        %9074 = vmatprep.subr.mxu0 0.0
        %9075 = vmatpush2.msra.mxu0 0.0
        %9076 = vmatprep.subr.mxu0 0.0
        %9077 = vmatpush2.msra.mxu0 0.0
        %9078 = vmatprep.subr.mxu0 0.0
        %9079 = vmatpush2.msra.mxu0 0.0
        %9080 = vmatprep.subr.mxu0 0.0
        %9081 = vmatpush2.msra.mxu0 0.0
        %9082 = vmatprep.subr.mxu0 0.0
        %9083 = vmatpush2.msra.mxu0 0.0
        %9084 = vmatprep.subr.mxu0 0.0
        %9085 = vmatpush2.msra.mxu0 0.0
        %9086 = vmatprep.subr.mxu0 0.0
        %9087 = vmatpush2.msra.mxu0 0.0
        %9088 = vmatprep.subr.mxu0 0.0
        %9089 = vmatpush2.msra.mxu0 0.0
        %9090 = vmatprep.subr.mxu0 0.0
        %9091 = vmatpush2.msra.mxu0 0.0
        %9092 = vmatprep.subr.mxu0 0.0
        %9093 = vmatpush2.msra.mxu0 0.0
        %9094 = vmatprep.mubr.f32.mxu0 0.0
        %v9095 = vand.u32 %v5414, 4294901760
        %9096 = vmatmul.mubr.f32.gmra.mxu0 %v9095
        %v9097 = vpop.f32.mrf.mxu0
        %v9098 = vadd.f32 %v9007, %v9097
        %v9099 = vpop.f32.mrf.mxu0
        %9100 = vmatprep.mubr.f32.mxu0 0.0
        %v9101 = vand.u32 %v5417, 4294901760
        %9102 = vmatmul.mubr.f32.gmra.mxu0 %v9101
        %v9103 = vpop.f32.mrf.mxu0
        %v9104 = vadd.f32 %v9017, %v9103
        %v9105 = vpop.f32.mrf.mxu0
        %9106 = vdwg.mxu0
        %9107 = vmatprep.subr.mxu0 0.0
        %9108 = vmatpush1.msra.mxu0 0.0
        %9109 = vmatprep.subr.mxu0 0.0
        %9110 = vmatpush1.msra.mxu0 0.0
        %9111 = vmatprep.subr.mxu0 0.0
        %9112 = vmatpush1.msra.mxu0 0.0
        %9113 = vmatprep.subr.mxu0 0.0
        %9114 = vmatpush1.msra.mxu0 0.0
        %9115 = vmatprep.subr.mxu0 0.0
        %9116 = vmatpush1.msra.mxu0 0.0
        %9117 = vmatprep.subr.mxu0 0.0
        %9118 = vmatpush1.msra.mxu0 0.0
        %9119 = vmatprep.subr.mxu0 0.0
        %9120 = vmatpush1.msra.mxu0 0.0
        %9121 = vmatprep.subr.mxu0 0.0
        %9122 = vmatpush1.msra.mxu0 0.0
        %9123 = vmatprep.subr.mxu0 0.0
        %9124 = vmatpush1.msra.mxu0 0.0
        %9125 = vmatprep.subr.mxu0 0.0
        %9126 = vmatpush1.msra.mxu0 0.0
        %9127 = vmatprep.subr.mxu0 0.0
        %9128 = vmatpush1.msra.mxu0 0.0
        %9129 = vmatprep.subr.mxu0 0.0
        %9130 = vmatpush1.msra.mxu0 0.0
        %9131 = vmatprep.subr.mxu0 0.0
        %9132 = vmatpush1.msra.mxu0 0.0
        %9133 = vmatprep.subr.mxu0 0.0
        %9134 = vmatpush1.msra.mxu0 0.0
        %9135 = vmatprep.subr.mxu0 0.0
        %v9136 = vand.u32 %v4394, 4294901760
        %v9137 = vsub.f32 %v4394, %v9136
        %9138 = vmatpush1.msra.mxu0 %v9137
        %9139 = vmatprep.subr.mxu0 0.0
        %v9140 = vand.u32 %v4388, 4294901760
        %v9141 = vsub.f32 %v4388, %v9140
        %9142 = vmatpush1.msra.mxu0 %v9141
        %9143 = vmatprep.subr.mxu0 0.0
        %9144 = vmatpush2.msra.mxu0 0.0
        %9145 = vmatprep.subr.mxu0 0.0
        %9146 = vmatpush2.msra.mxu0 0.0
        %9147 = vmatprep.subr.mxu0 0.0
        %9148 = vmatpush2.msra.mxu0 0.0
        %9149 = vmatprep.subr.mxu0 0.0
        %9150 = vmatpush2.msra.mxu0 0.0
        %9151 = vmatprep.subr.mxu0 0.0
        %9152 = vmatpush2.msra.mxu0 0.0
        %9153 = vmatprep.subr.mxu0 0.0
        %9154 = vmatpush2.msra.mxu0 0.0
        %9155 = vmatprep.subr.mxu0 0.0
        %9156 = vmatpush2.msra.mxu0 0.0
        %9157 = vmatprep.subr.mxu0 0.0
        %9158 = vmatpush2.msra.mxu0 0.0
        %9159 = vmatprep.subr.mxu0 0.0
        %9160 = vmatpush2.msra.mxu0 0.0
        %9161 = vmatprep.subr.mxu0 0.0
        %9162 = vmatpush2.msra.mxu0 0.0
        %9163 = vmatprep.subr.mxu0 0.0
        %9164 = vmatpush2.msra.mxu0 0.0
        %9165 = vmatprep.subr.mxu0 0.0
        %9166 = vmatpush2.msra.mxu0 0.0
        %9167 = vmatprep.subr.mxu0 0.0
        %9168 = vmatpush2.msra.mxu0 0.0
        %9169 = vmatprep.subr.mxu0 0.0
        %9170 = vmatpush2.msra.mxu0 0.0
        %9171 = vmatprep.subr.mxu0 0.0
        %9172 = vmatpush2.msra.mxu0 0.0
        %9173 = vmatprep.subr.mxu0 0.0
        %9174 = vmatpush2.msra.mxu0 0.0
        %9175 = vmatprep.mubr.f32.mxu0 0.0
        %v9176 = vand.u32 %v5414, 4294901760
        %v9177 = vsub.f32 %v5414, %v9176
        %9178 = vmatmul.mubr.f32.gmra.mxu0 %v9177
        %v9179 = vpop.f32.mrf.mxu0
        %v9180 = vadd.f32 %v9098, %v9179
        %v9181 = vpop.f32.mrf.mxu0
        %9182 = vmatprep.mubr.f32.mxu0 0.0
        %v9183 = vand.u32 %v5417, 4294901760
        %v9184 = vsub.f32 %v5417, %v9183
        %9185 = vmatmul.mubr.f32.gmra.mxu0 %v9184
        %v9186 = vpop.f32.mrf.mxu0
        %v9187 = vadd.f32 %v9104, %v9186
        %v9188 = vpop.f32.mrf.mxu0
        %9189 = vdwg.mxu0
        %9190 = vmatprep.subr.mxu0 0.0
        %9191 = vmatpush1.msra.mxu0 0.0
        %9192 = vmatprep.subr.mxu0 0.0
        %9193 = vmatpush1.msra.mxu0 0.0
        %9194 = vmatprep.subr.mxu0 0.0
        %9195 = vmatpush1.msra.mxu0 0.0
        %9196 = vmatprep.subr.mxu0 0.0
        %9197 = vmatpush1.msra.mxu0 0.0
        %9198 = vmatprep.subr.mxu0 0.0
        %9199 = vmatpush1.msra.mxu0 0.0
        %9200 = vmatprep.subr.mxu0 0.0
        %9201 = vmatpush1.msra.mxu0 0.0
        %9202 = vmatprep.subr.mxu0 0.0
        %9203 = vmatpush1.msra.mxu0 0.0
        %9204 = vmatprep.subr.mxu0 0.0
        %9205 = vmatpush1.msra.mxu0 0.0
        %9206 = vmatprep.subr.mxu0 0.0
        %9207 = vmatpush1.msra.mxu0 0.0
        %9208 = vmatprep.subr.mxu0 0.0
        %9209 = vmatpush1.msra.mxu0 0.0
        %9210 = vmatprep.subr.mxu0 0.0
        %9211 = vmatpush1.msra.mxu0 0.0
        %9212 = vmatprep.subr.mxu0 0.0
        %9213 = vmatpush1.msra.mxu0 0.0
        %9214 = vmatprep.subr.mxu0 0.0
        %9215 = vmatpush1.msra.mxu0 0.0
        %9216 = vmatprep.subr.mxu0 0.0
        %9217 = vmatpush1.msra.mxu0 0.0
        %9218 = vmatprep.subr.mxu0 0.0
        %v9219 = vand.u32 %v4394, 4294901760
        %9220 = vmatpush1.msra.mxu0 %v9219
        %9221 = vmatprep.subr.mxu0 0.0
        %v9222 = vand.u32 %v4388, 4294901760
        %9223 = vmatpush1.msra.mxu0 %v9222
        %9224 = vmatprep.subr.mxu0 0.0
        %9225 = vmatpush2.msra.mxu0 0.0
        %9226 = vmatprep.subr.mxu0 0.0
        %9227 = vmatpush2.msra.mxu0 0.0
        %9228 = vmatprep.subr.mxu0 0.0
        %9229 = vmatpush2.msra.mxu0 0.0
        %9230 = vmatprep.subr.mxu0 0.0
        %9231 = vmatpush2.msra.mxu0 0.0
        %9232 = vmatprep.subr.mxu0 0.0
        %9233 = vmatpush2.msra.mxu0 0.0
        %9234 = vmatprep.subr.mxu0 0.0
        %9235 = vmatpush2.msra.mxu0 0.0
        %9236 = vmatprep.subr.mxu0 0.0
        %9237 = vmatpush2.msra.mxu0 0.0
        %9238 = vmatprep.subr.mxu0 0.0
        %9239 = vmatpush2.msra.mxu0 0.0
        %9240 = vmatprep.subr.mxu0 0.0
        %9241 = vmatpush2.msra.mxu0 0.0
        %9242 = vmatprep.subr.mxu0 0.0
        %9243 = vmatpush2.msra.mxu0 0.0
        %9244 = vmatprep.subr.mxu0 0.0
        %9245 = vmatpush2.msra.mxu0 0.0
        %9246 = vmatprep.subr.mxu0 0.0
        %9247 = vmatpush2.msra.mxu0 0.0
        %9248 = vmatprep.subr.mxu0 0.0
        %9249 = vmatpush2.msra.mxu0 0.0
        %9250 = vmatprep.subr.mxu0 0.0
        %9251 = vmatpush2.msra.mxu0 0.0
        %9252 = vmatprep.subr.mxu0 0.0
        %9253 = vmatpush2.msra.mxu0 0.0
        %9254 = vmatprep.subr.mxu0 0.0
        %9255 = vmatpush2.msra.mxu0 0.0
        %9256 = vmatprep.mubr.f32.mxu0 0.0
        %v9257 = vand.u32 %v5414, 4294901760
        %v9258 = vsub.f32 %v5414, %v9257
        %v9259 = vand.u32 %v9258, 4294901760
        %9260 = vmatmul.mubr.f32.gmra.mxu0 %v9259
        %v9261 = vpop.f32.mrf.mxu0
        %v9262 = vadd.f32 %v9180, %v9261
        %v9263 = vpop.f32.mrf.mxu0
        %9264 = vmatprep.mubr.f32.mxu0 0.0
        %v9265 = vand.u32 %v5417, 4294901760
        %v9266 = vsub.f32 %v5417, %v9265
        %v9267 = vand.u32 %v9266, 4294901760
        %9268 = vmatmul.mubr.f32.gmra.mxu0 %v9267
        %v9269 = vpop.f32.mrf.mxu0
        %v9270 = vadd.f32 %v9187, %v9269
        %v9271 = vpop.f32.mrf.mxu0
        %9272 = vdwg.mxu0
        %9273 = vmatprep.subr.mxu0 0.0
        %9274 = vmatpush1.msra.mxu0 0.0
        %9275 = vmatprep.subr.mxu0 0.0
        %9276 = vmatpush1.msra.mxu0 0.0
        %9277 = vmatprep.subr.mxu0 0.0
        %9278 = vmatpush1.msra.mxu0 0.0
        %9279 = vmatprep.subr.mxu0 0.0
        %9280 = vmatpush1.msra.mxu0 0.0
        %9281 = vmatprep.subr.mxu0 0.0
        %9282 = vmatpush1.msra.mxu0 0.0
        %9283 = vmatprep.subr.mxu0 0.0
        %9284 = vmatpush1.msra.mxu0 0.0
        %9285 = vmatprep.subr.mxu0 0.0
        %9286 = vmatpush1.msra.mxu0 0.0
        %9287 = vmatprep.subr.mxu0 0.0
        %9288 = vmatpush1.msra.mxu0 0.0
        %9289 = vmatprep.subr.mxu0 0.0
        %9290 = vmatpush1.msra.mxu0 0.0
        %9291 = vmatprep.subr.mxu0 0.0
        %9292 = vmatpush1.msra.mxu0 0.0
        %9293 = vmatprep.subr.mxu0 0.0
        %9294 = vmatpush1.msra.mxu0 0.0
        %9295 = vmatprep.subr.mxu0 0.0
        %9296 = vmatpush1.msra.mxu0 0.0
        %9297 = vmatprep.subr.mxu0 0.0
        %9298 = vmatpush1.msra.mxu0 0.0
        %9299 = vmatprep.subr.mxu0 0.0
        %9300 = vmatpush1.msra.mxu0 0.0
        %9301 = vmatprep.subr.mxu0 0.0
        %v9302 = vand.u32 %v4394, 4294901760
        %v9303 = vsub.f32 %v4394, %v9302
        %v9304 = vand.u32 %v9303, 4294901760
        %9305 = vmatpush1.msra.mxu0 %v9304
        %9306 = vmatprep.subr.mxu0 0.0
        %v9307 = vand.u32 %v4388, 4294901760
        %v9308 = vsub.f32 %v4388, %v9307
        %v9309 = vand.u32 %v9308, 4294901760
        %9310 = vmatpush1.msra.mxu0 %v9309
        %9311 = vmatprep.subr.mxu0 0.0
        %9312 = vmatpush2.msra.mxu0 0.0
        %9313 = vmatprep.subr.mxu0 0.0
        %9314 = vmatpush2.msra.mxu0 0.0
        %9315 = vmatprep.subr.mxu0 0.0
        %9316 = vmatpush2.msra.mxu0 0.0
        %9317 = vmatprep.subr.mxu0 0.0
        %9318 = vmatpush2.msra.mxu0 0.0
        %9319 = vmatprep.subr.mxu0 0.0
        %9320 = vmatpush2.msra.mxu0 0.0
        %9321 = vmatprep.subr.mxu0 0.0
        %9322 = vmatpush2.msra.mxu0 0.0
        %9323 = vmatprep.subr.mxu0 0.0
        %9324 = vmatpush2.msra.mxu0 0.0
        %9325 = vmatprep.subr.mxu0 0.0
        %9326 = vmatpush2.msra.mxu0 0.0
        %9327 = vmatprep.subr.mxu0 0.0
        %9328 = vmatpush2.msra.mxu0 0.0
        %9329 = vmatprep.subr.mxu0 0.0
        %9330 = vmatpush2.msra.mxu0 0.0
        %9331 = vmatprep.subr.mxu0 0.0
        %9332 = vmatpush2.msra.mxu0 0.0
        %9333 = vmatprep.subr.mxu0 0.0
        %9334 = vmatpush2.msra.mxu0 0.0
        %9335 = vmatprep.subr.mxu0 0.0
        %9336 = vmatpush2.msra.mxu0 0.0
        %9337 = vmatprep.subr.mxu0 0.0
        %9338 = vmatpush2.msra.mxu0 0.0
        %9339 = vmatprep.subr.mxu0 0.0
        %9340 = vmatpush2.msra.mxu0 0.0
        %9341 = vmatprep.subr.mxu0 0.0
        %9342 = vmatpush2.msra.mxu0 0.0
        %9343 = vmatprep.mubr.f32.mxu0 0.0
        %v9344 = vand.u32 %v5414, 4294901760
        %9345 = vmatmul.mubr.f32.gmra.mxu0 %v9344
        %v9346 = vpop.f32.mrf.mxu0
        %v9347 = vadd.f32 %v9262, %v9346
        %v9348 = vpop.f32.mrf.mxu0
        %9349 = vmatprep.mubr.f32.mxu0 0.0
        %v9350 = vand.u32 %v5417, 4294901760
        %9351 = vmatmul.mubr.f32.gmra.mxu0 %v9350
        %v9352 = vpop.f32.mrf.mxu0
        %v9353 = vadd.f32 %v9270, %v9352
        %v9354 = vpop.f32.mrf.mxu0
        %9355 = vdwg.mxu0
        %9356 = vmatprep.subr.mxu0 0.0
        %9357 = vmatpush1.msra.mxu0 0.0
        %9358 = vmatprep.subr.mxu0 0.0
        %9359 = vmatpush1.msra.mxu0 0.0
        %9360 = vmatprep.subr.mxu0 0.0
        %9361 = vmatpush1.msra.mxu0 0.0
        %9362 = vmatprep.subr.mxu0 0.0
        %9363 = vmatpush1.msra.mxu0 0.0
        %9364 = vmatprep.subr.mxu0 0.0
        %9365 = vmatpush1.msra.mxu0 0.0
        %9366 = vmatprep.subr.mxu0 0.0
        %9367 = vmatpush1.msra.mxu0 0.0
        %9368 = vmatprep.subr.mxu0 0.0
        %9369 = vmatpush1.msra.mxu0 0.0
        %9370 = vmatprep.subr.mxu0 0.0
        %9371 = vmatpush1.msra.mxu0 0.0
        %9372 = vmatprep.subr.mxu0 0.0
        %9373 = vmatpush1.msra.mxu0 0.0
        %9374 = vmatprep.subr.mxu0 0.0
        %9375 = vmatpush1.msra.mxu0 0.0
        %9376 = vmatprep.subr.mxu0 0.0
        %9377 = vmatpush1.msra.mxu0 0.0
        %9378 = vmatprep.subr.mxu0 0.0
        %9379 = vmatpush1.msra.mxu0 0.0
        %9380 = vmatprep.subr.mxu0 0.0
        %9381 = vmatpush1.msra.mxu0 0.0
        %9382 = vmatprep.subr.mxu0 0.0
        %9383 = vmatpush1.msra.mxu0 0.0
        %9384 = vmatprep.subr.mxu0 0.0
        %v9385 = vand.u32 %v4394, 4294901760
        %9386 = vmatpush1.msra.mxu0 %v9385
        %9387 = vmatprep.subr.mxu0 0.0
        %v9388 = vand.u32 %v4388, 4294901760
        %9389 = vmatpush1.msra.mxu0 %v9388
        %9390 = vmatprep.subr.mxu0 0.0
        %9391 = vmatpush2.msra.mxu0 0.0
        %9392 = vmatprep.subr.mxu0 0.0
        %9393 = vmatpush2.msra.mxu0 0.0
        %9394 = vmatprep.subr.mxu0 0.0
        %9395 = vmatpush2.msra.mxu0 0.0
        %9396 = vmatprep.subr.mxu0 0.0
        %9397 = vmatpush2.msra.mxu0 0.0
        %9398 = vmatprep.subr.mxu0 0.0
        %9399 = vmatpush2.msra.mxu0 0.0
        %9400 = vmatprep.subr.mxu0 0.0
        %9401 = vmatpush2.msra.mxu0 0.0
        %9402 = vmatprep.subr.mxu0 0.0
        %9403 = vmatpush2.msra.mxu0 0.0
        %9404 = vmatprep.subr.mxu0 0.0
        %9405 = vmatpush2.msra.mxu0 0.0
        %9406 = vmatprep.subr.mxu0 0.0
        %9407 = vmatpush2.msra.mxu0 0.0
        %9408 = vmatprep.subr.mxu0 0.0
        %9409 = vmatpush2.msra.mxu0 0.0
        %9410 = vmatprep.subr.mxu0 0.0
        %9411 = vmatpush2.msra.mxu0 0.0
        %9412 = vmatprep.subr.mxu0 0.0
        %9413 = vmatpush2.msra.mxu0 0.0
        %9414 = vmatprep.subr.mxu0 0.0
        %9415 = vmatpush2.msra.mxu0 0.0
        %9416 = vmatprep.subr.mxu0 0.0
        %9417 = vmatpush2.msra.mxu0 0.0
        %9418 = vmatprep.subr.mxu0 0.0
        %9419 = vmatpush2.msra.mxu0 0.0
        %9420 = vmatprep.subr.mxu0 0.0
        %9421 = vmatpush2.msra.mxu0 0.0
        %9422 = vmatprep.mubr.f32.mxu0 0.0
        %v9423 = vand.u32 %v5414, 4294901760
        %9424 = vmatmul.mubr.f32.gmra.mxu0 %v9423
        %v9425 = vpop.f32.mrf.mxu0
        %v9426 = vadd.f32 %v9347, %v9425
        %v9427 = vpop.f32.mrf.mxu0
        %9428 = vmatprep.mubr.f32.mxu0 0.0
        %v9429 = vand.u32 %v5417, 4294901760
        %9430 = vmatmul.mubr.f32.gmra.mxu0 %v9429
        %v9431 = vpop.f32.mrf.mxu0
        %v9432 = vadd.f32 %v9353, %v9431
        %v9433 = vpop.f32.mrf.mxu0
        %9434 = vdwg.mxu0
        %9435 = vmatprep.subr.mxu0 0.0
        %9436 = vmatpush1.msra.mxu0 0.0
        %9437 = vmatprep.subr.mxu0 0.0
        %9438 = vmatpush1.msra.mxu0 0.0
        %9439 = vmatprep.subr.mxu0 0.0
        %9440 = vmatpush1.msra.mxu0 0.0
        %9441 = vmatprep.subr.mxu0 0.0
        %9442 = vmatpush1.msra.mxu0 0.0
        %9443 = vmatprep.subr.mxu0 0.0
        %9444 = vmatpush1.msra.mxu0 0.0
        %9445 = vmatprep.subr.mxu0 0.0
        %9446 = vmatpush1.msra.mxu0 0.0
        %9447 = vmatprep.subr.mxu0 0.0
        %9448 = vmatpush1.msra.mxu0 0.0
        %9449 = vmatprep.subr.mxu0 0.0
        %9450 = vmatpush1.msra.mxu0 0.0
        %9451 = vmatprep.subr.mxu0 0.0
        %9452 = vmatpush1.msra.mxu0 0.0
        %9453 = vmatprep.subr.mxu0 0.0
        %9454 = vmatpush1.msra.mxu0 0.0
        %9455 = vmatprep.subr.mxu0 0.0
        %9456 = vmatpush1.msra.mxu0 0.0
        %9457 = vmatprep.subr.mxu0 0.0
        %9458 = vmatpush1.msra.mxu0 0.0
        %9459 = vmatprep.subr.mxu0 0.0
        %9460 = vmatpush1.msra.mxu0 0.0
        %9461 = vmatprep.subr.mxu0 0.0
        %9462 = vmatpush1.msra.mxu0 0.0
        %9463 = vmatprep.subr.mxu0 0.0
        %v9464 = vand.u32 %v4902, 4294901760
        %9465 = vmatpush1.msra.mxu0 %v9464
        %9466 = vmatprep.subr.mxu0 0.0
        %v9467 = vand.u32 %v4896, 4294901760
        %9468 = vmatpush1.msra.mxu0 %v9467
        %9469 = vmatprep.subr.mxu0 0.0
        %9470 = vmatpush2.msra.mxu0 0.0
        %9471 = vmatprep.subr.mxu0 0.0
        %9472 = vmatpush2.msra.mxu0 0.0
        %9473 = vmatprep.subr.mxu0 0.0
        %9474 = vmatpush2.msra.mxu0 0.0
        %9475 = vmatprep.subr.mxu0 0.0
        %9476 = vmatpush2.msra.mxu0 0.0
        %9477 = vmatprep.subr.mxu0 0.0
        %9478 = vmatpush2.msra.mxu0 0.0
        %9479 = vmatprep.subr.mxu0 0.0
        %9480 = vmatpush2.msra.mxu0 0.0
        %9481 = vmatprep.subr.mxu0 0.0
        %9482 = vmatpush2.msra.mxu0 0.0
        %9483 = vmatprep.subr.mxu0 0.0
        %9484 = vmatpush2.msra.mxu0 0.0
        %9485 = vmatprep.subr.mxu0 0.0
        %9486 = vmatpush2.msra.mxu0 0.0
        %9487 = vmatprep.subr.mxu0 0.0
        %9488 = vmatpush2.msra.mxu0 0.0
        %9489 = vmatprep.subr.mxu0 0.0
        %9490 = vmatpush2.msra.mxu0 0.0
        %9491 = vmatprep.subr.mxu0 0.0
        %9492 = vmatpush2.msra.mxu0 0.0
        %9493 = vmatprep.subr.mxu0 0.0
        %9494 = vmatpush2.msra.mxu0 0.0
        %9495 = vmatprep.subr.mxu0 0.0
        %9496 = vmatpush2.msra.mxu0 0.0
        %9497 = vmatprep.subr.mxu0 0.0
        %9498 = vmatpush2.msra.mxu0 0.0
        %9499 = vmatprep.subr.mxu0 0.0
        %9500 = vmatpush2.msra.mxu0 0.0
        %9501 = vmatprep.mubr.f32.mxu0 0.0
        %v9502 = vand.u32 %v5414, 4294901760
        %v9503 = vsub.f32 %v5414, %v9502
        %v9504 = vand.u32 %v9503, 4294901760
        %v9505 = vsub.f32 %v9503, %v9504
        %v9506 = vand.u32 %v9505, 4294901760
        %9507 = vmatmul.mubr.f32.gmra.mxu0 %v9506
        %v9508 = vpop.f32.mrf.mxu0
        %v9509 = vadd.f32 0.0, %v9508
        %v9510 = vpop.f32.mrf.mxu0
        %9511 = vmatprep.mubr.f32.mxu0 0.0
        %v9512 = vand.u32 %v5417, 4294901760
        %v9513 = vsub.f32 %v5417, %v9512
        %v9514 = vand.u32 %v9513, 4294901760
        %v9515 = vsub.f32 %v9513, %v9514
        %v9516 = vand.u32 %v9515, 4294901760
        %9517 = vmatmul.mubr.f32.gmra.mxu0 %v9516
        %v9518 = vpop.f32.mrf.mxu0
        %v9519 = vadd.f32 0.0, %v9518
        %v9520 = vpop.f32.mrf.mxu0
        %9521 = vdwg.mxu0
        %9522 = vmatprep.subr.mxu0 0.0
        %9523 = vmatpush1.msra.mxu0 0.0
        %9524 = vmatprep.subr.mxu0 0.0
        %9525 = vmatpush1.msra.mxu0 0.0
        %9526 = vmatprep.subr.mxu0 0.0
        %9527 = vmatpush1.msra.mxu0 0.0
        %9528 = vmatprep.subr.mxu0 0.0
        %9529 = vmatpush1.msra.mxu0 0.0
        %9530 = vmatprep.subr.mxu0 0.0
        %9531 = vmatpush1.msra.mxu0 0.0
        %9532 = vmatprep.subr.mxu0 0.0
        %9533 = vmatpush1.msra.mxu0 0.0
        %9534 = vmatprep.subr.mxu0 0.0
        %9535 = vmatpush1.msra.mxu0 0.0
        %9536 = vmatprep.subr.mxu0 0.0
        %9537 = vmatpush1.msra.mxu0 0.0
        %9538 = vmatprep.subr.mxu0 0.0
        %9539 = vmatpush1.msra.mxu0 0.0
        %9540 = vmatprep.subr.mxu0 0.0
        %9541 = vmatpush1.msra.mxu0 0.0
        %9542 = vmatprep.subr.mxu0 0.0
        %9543 = vmatpush1.msra.mxu0 0.0
        %9544 = vmatprep.subr.mxu0 0.0
        %9545 = vmatpush1.msra.mxu0 0.0
        %9546 = vmatprep.subr.mxu0 0.0
        %9547 = vmatpush1.msra.mxu0 0.0
        %9548 = vmatprep.subr.mxu0 0.0
        %9549 = vmatpush1.msra.mxu0 0.0
        %9550 = vmatprep.subr.mxu0 0.0
        %v9551 = vand.u32 %v4902, 4294901760
        %v9552 = vsub.f32 %v4902, %v9551
        %v9553 = vand.u32 %v9552, 4294901760
        %v9554 = vsub.f32 %v9552, %v9553
        %v9555 = vand.u32 %v9554, 4294901760
        %9556 = vmatpush1.msra.mxu0 %v9555
        %9557 = vmatprep.subr.mxu0 0.0
        %v9558 = vand.u32 %v4896, 4294901760
        %v9559 = vsub.f32 %v4896, %v9558
        %v9560 = vand.u32 %v9559, 4294901760
        %v9561 = vsub.f32 %v9559, %v9560
        %v9562 = vand.u32 %v9561, 4294901760
        %9563 = vmatpush1.msra.mxu0 %v9562
        %9564 = vmatprep.subr.mxu0 0.0
        %9565 = vmatpush2.msra.mxu0 0.0
        %9566 = vmatprep.subr.mxu0 0.0
        %9567 = vmatpush2.msra.mxu0 0.0
        %9568 = vmatprep.subr.mxu0 0.0
        %9569 = vmatpush2.msra.mxu0 0.0
        %9570 = vmatprep.subr.mxu0 0.0
        %9571 = vmatpush2.msra.mxu0 0.0
        %9572 = vmatprep.subr.mxu0 0.0
        %9573 = vmatpush2.msra.mxu0 0.0
        %9574 = vmatprep.subr.mxu0 0.0
        %9575 = vmatpush2.msra.mxu0 0.0
        %9576 = vmatprep.subr.mxu0 0.0
        %9577 = vmatpush2.msra.mxu0 0.0
        %9578 = vmatprep.subr.mxu0 0.0
        %9579 = vmatpush2.msra.mxu0 0.0
        %9580 = vmatprep.subr.mxu0 0.0
        %9581 = vmatpush2.msra.mxu0 0.0
        %9582 = vmatprep.subr.mxu0 0.0
        %9583 = vmatpush2.msra.mxu0 0.0
        %9584 = vmatprep.subr.mxu0 0.0
        %9585 = vmatpush2.msra.mxu0 0.0
        %9586 = vmatprep.subr.mxu0 0.0
        %9587 = vmatpush2.msra.mxu0 0.0
        %9588 = vmatprep.subr.mxu0 0.0
        %9589 = vmatpush2.msra.mxu0 0.0
        %9590 = vmatprep.subr.mxu0 0.0
        %9591 = vmatpush2.msra.mxu0 0.0
        %9592 = vmatprep.subr.mxu0 0.0
        %9593 = vmatpush2.msra.mxu0 0.0
        %9594 = vmatprep.subr.mxu0 0.0
        %9595 = vmatpush2.msra.mxu0 0.0
        %9596 = vmatprep.mubr.f32.mxu0 0.0
        %v9597 = vand.u32 %v5414, 4294901760
        %9598 = vmatmul.mubr.f32.gmra.mxu0 %v9597
        %v9599 = vpop.f32.mrf.mxu0
        %v9600 = vadd.f32 %v9509, %v9599
        %v9601 = vpop.f32.mrf.mxu0
        %9602 = vmatprep.mubr.f32.mxu0 0.0
        %v9603 = vand.u32 %v5417, 4294901760
        %9604 = vmatmul.mubr.f32.gmra.mxu0 %v9603
        %v9605 = vpop.f32.mrf.mxu0
        %v9606 = vadd.f32 %v9519, %v9605
        %v9607 = vpop.f32.mrf.mxu0
        %9608 = vdwg.mxu0
        %9609 = vmatprep.subr.mxu0 0.0
        %9610 = vmatpush1.msra.mxu0 0.0
        %9611 = vmatprep.subr.mxu0 0.0
        %9612 = vmatpush1.msra.mxu0 0.0
        %9613 = vmatprep.subr.mxu0 0.0
        %9614 = vmatpush1.msra.mxu0 0.0
        %9615 = vmatprep.subr.mxu0 0.0
        %9616 = vmatpush1.msra.mxu0 0.0
        %9617 = vmatprep.subr.mxu0 0.0
        %9618 = vmatpush1.msra.mxu0 0.0
        %9619 = vmatprep.subr.mxu0 0.0
        %9620 = vmatpush1.msra.mxu0 0.0
        %9621 = vmatprep.subr.mxu0 0.0
        %9622 = vmatpush1.msra.mxu0 0.0
        %9623 = vmatprep.subr.mxu0 0.0
        %9624 = vmatpush1.msra.mxu0 0.0
        %9625 = vmatprep.subr.mxu0 0.0
        %9626 = vmatpush1.msra.mxu0 0.0
        %9627 = vmatprep.subr.mxu0 0.0
        %9628 = vmatpush1.msra.mxu0 0.0
        %9629 = vmatprep.subr.mxu0 0.0
        %9630 = vmatpush1.msra.mxu0 0.0
        %9631 = vmatprep.subr.mxu0 0.0
        %9632 = vmatpush1.msra.mxu0 0.0
        %9633 = vmatprep.subr.mxu0 0.0
        %9634 = vmatpush1.msra.mxu0 0.0
        %9635 = vmatprep.subr.mxu0 0.0
        %9636 = vmatpush1.msra.mxu0 0.0
        %9637 = vmatprep.subr.mxu0 0.0
        %v9638 = vand.u32 %v4902, 4294901760
        %v9639 = vsub.f32 %v4902, %v9638
        %9640 = vmatpush1.msra.mxu0 %v9639
        %9641 = vmatprep.subr.mxu0 0.0
        %v9642 = vand.u32 %v4896, 4294901760
        %v9643 = vsub.f32 %v4896, %v9642
        %9644 = vmatpush1.msra.mxu0 %v9643
        %9645 = vmatprep.subr.mxu0 0.0
        %9646 = vmatpush2.msra.mxu0 0.0
        %9647 = vmatprep.subr.mxu0 0.0
        %9648 = vmatpush2.msra.mxu0 0.0
        %9649 = vmatprep.subr.mxu0 0.0
        %9650 = vmatpush2.msra.mxu0 0.0
        %9651 = vmatprep.subr.mxu0 0.0
        %9652 = vmatpush2.msra.mxu0 0.0
        %9653 = vmatprep.subr.mxu0 0.0
        %9654 = vmatpush2.msra.mxu0 0.0
        %9655 = vmatprep.subr.mxu0 0.0
        %9656 = vmatpush2.msra.mxu0 0.0
        %9657 = vmatprep.subr.mxu0 0.0
        %9658 = vmatpush2.msra.mxu0 0.0
        %9659 = vmatprep.subr.mxu0 0.0
        %9660 = vmatpush2.msra.mxu0 0.0
        %9661 = vmatprep.subr.mxu0 0.0
        %9662 = vmatpush2.msra.mxu0 0.0
        %9663 = vmatprep.subr.mxu0 0.0
        %9664 = vmatpush2.msra.mxu0 0.0
        %9665 = vmatprep.subr.mxu0 0.0
        %9666 = vmatpush2.msra.mxu0 0.0
        %9667 = vmatprep.subr.mxu0 0.0
        %9668 = vmatpush2.msra.mxu0 0.0
        %9669 = vmatprep.subr.mxu0 0.0
        %9670 = vmatpush2.msra.mxu0 0.0
        %9671 = vmatprep.subr.mxu0 0.0
        %9672 = vmatpush2.msra.mxu0 0.0
        %9673 = vmatprep.subr.mxu0 0.0
        %9674 = vmatpush2.msra.mxu0 0.0
        %9675 = vmatprep.subr.mxu0 0.0
        %9676 = vmatpush2.msra.mxu0 0.0
        %9677 = vmatprep.mubr.f32.mxu0 0.0
        %v9678 = vand.u32 %v5414, 4294901760
        %v9679 = vsub.f32 %v5414, %v9678
        %9680 = vmatmul.mubr.f32.gmra.mxu0 %v9679
        %v9681 = vpop.f32.mrf.mxu0
        %v9682 = vadd.f32 %v9600, %v9681
        %v9683 = vpop.f32.mrf.mxu0
        %9684 = vmatprep.mubr.f32.mxu0 0.0
        %v9685 = vand.u32 %v5417, 4294901760
        %v9686 = vsub.f32 %v5417, %v9685
        %9687 = vmatmul.mubr.f32.gmra.mxu0 %v9686
        %v9688 = vpop.f32.mrf.mxu0
        %v9689 = vadd.f32 %v9606, %v9688
        %v9690 = vpop.f32.mrf.mxu0
        %9691 = vdwg.mxu0
        %9692 = vmatprep.subr.mxu0 0.0
        %9693 = vmatpush1.msra.mxu0 0.0
        %9694 = vmatprep.subr.mxu0 0.0
        %9695 = vmatpush1.msra.mxu0 0.0
        %9696 = vmatprep.subr.mxu0 0.0
        %9697 = vmatpush1.msra.mxu0 0.0
        %9698 = vmatprep.subr.mxu0 0.0
        %9699 = vmatpush1.msra.mxu0 0.0
        %9700 = vmatprep.subr.mxu0 0.0
        %9701 = vmatpush1.msra.mxu0 0.0
        %9702 = vmatprep.subr.mxu0 0.0
        %9703 = vmatpush1.msra.mxu0 0.0
        %9704 = vmatprep.subr.mxu0 0.0
        %9705 = vmatpush1.msra.mxu0 0.0
        %9706 = vmatprep.subr.mxu0 0.0
        %9707 = vmatpush1.msra.mxu0 0.0
        %9708 = vmatprep.subr.mxu0 0.0
        %9709 = vmatpush1.msra.mxu0 0.0
        %9710 = vmatprep.subr.mxu0 0.0
        %9711 = vmatpush1.msra.mxu0 0.0
        %9712 = vmatprep.subr.mxu0 0.0
        %9713 = vmatpush1.msra.mxu0 0.0
        %9714 = vmatprep.subr.mxu0 0.0
        %9715 = vmatpush1.msra.mxu0 0.0
        %9716 = vmatprep.subr.mxu0 0.0
        %9717 = vmatpush1.msra.mxu0 0.0
        %9718 = vmatprep.subr.mxu0 0.0
        %9719 = vmatpush1.msra.mxu0 0.0
        %9720 = vmatprep.subr.mxu0 0.0
        %v9721 = vand.u32 %v4902, 4294901760
        %9722 = vmatpush1.msra.mxu0 %v9721
        %9723 = vmatprep.subr.mxu0 0.0
        %v9724 = vand.u32 %v4896, 4294901760
        %9725 = vmatpush1.msra.mxu0 %v9724
        %9726 = vmatprep.subr.mxu0 0.0
        %9727 = vmatpush2.msra.mxu0 0.0
        %9728 = vmatprep.subr.mxu0 0.0
        %9729 = vmatpush2.msra.mxu0 0.0
        %9730 = vmatprep.subr.mxu0 0.0
        %9731 = vmatpush2.msra.mxu0 0.0
        %9732 = vmatprep.subr.mxu0 0.0
        %9733 = vmatpush2.msra.mxu0 0.0
        %9734 = vmatprep.subr.mxu0 0.0
        %9735 = vmatpush2.msra.mxu0 0.0
        %9736 = vmatprep.subr.mxu0 0.0
        %9737 = vmatpush2.msra.mxu0 0.0
        %9738 = vmatprep.subr.mxu0 0.0
        %9739 = vmatpush2.msra.mxu0 0.0
        %9740 = vmatprep.subr.mxu0 0.0
        %9741 = vmatpush2.msra.mxu0 0.0
        %9742 = vmatprep.subr.mxu0 0.0
        %9743 = vmatpush2.msra.mxu0 0.0
        %9744 = vmatprep.subr.mxu0 0.0
        %9745 = vmatpush2.msra.mxu0 0.0
        %9746 = vmatprep.subr.mxu0 0.0
        %9747 = vmatpush2.msra.mxu0 0.0
        %9748 = vmatprep.subr.mxu0 0.0
        %9749 = vmatpush2.msra.mxu0 0.0
        %9750 = vmatprep.subr.mxu0 0.0
        %9751 = vmatpush2.msra.mxu0 0.0
        %9752 = vmatprep.subr.mxu0 0.0
        %9753 = vmatpush2.msra.mxu0 0.0
        %9754 = vmatprep.subr.mxu0 0.0
        %9755 = vmatpush2.msra.mxu0 0.0
        %9756 = vmatprep.subr.mxu0 0.0
        %9757 = vmatpush2.msra.mxu0 0.0
        %9758 = vmatprep.mubr.f32.mxu0 0.0
        %v9759 = vand.u32 %v5414, 4294901760
        %v9760 = vsub.f32 %v5414, %v9759
        %v9761 = vand.u32 %v9760, 4294901760
        %9762 = vmatmul.mubr.f32.gmra.mxu0 %v9761
        %v9763 = vpop.f32.mrf.mxu0
        %v9764 = vadd.f32 %v9682, %v9763
        %v9765 = vpop.f32.mrf.mxu0
        %9766 = vmatprep.mubr.f32.mxu0 0.0
        %v9767 = vand.u32 %v5417, 4294901760
        %v9768 = vsub.f32 %v5417, %v9767
        %v9769 = vand.u32 %v9768, 4294901760
        %9770 = vmatmul.mubr.f32.gmra.mxu0 %v9769
        %v9771 = vpop.f32.mrf.mxu0
        %v9772 = vadd.f32 %v9689, %v9771
        %v9773 = vpop.f32.mrf.mxu0
        %9774 = vdwg.mxu0
        %9775 = vmatprep.subr.mxu0 0.0
        %9776 = vmatpush1.msra.mxu0 0.0
        %9777 = vmatprep.subr.mxu0 0.0
        %9778 = vmatpush1.msra.mxu0 0.0
        %9779 = vmatprep.subr.mxu0 0.0
        %9780 = vmatpush1.msra.mxu0 0.0
        %9781 = vmatprep.subr.mxu0 0.0
        %9782 = vmatpush1.msra.mxu0 0.0
        %9783 = vmatprep.subr.mxu0 0.0
        %9784 = vmatpush1.msra.mxu0 0.0
        %9785 = vmatprep.subr.mxu0 0.0
        %9786 = vmatpush1.msra.mxu0 0.0
        %9787 = vmatprep.subr.mxu0 0.0
        %9788 = vmatpush1.msra.mxu0 0.0
        %9789 = vmatprep.subr.mxu0 0.0
        %9790 = vmatpush1.msra.mxu0 0.0
        %9791 = vmatprep.subr.mxu0 0.0
        %9792 = vmatpush1.msra.mxu0 0.0
        %9793 = vmatprep.subr.mxu0 0.0
        %9794 = vmatpush1.msra.mxu0 0.0
        %9795 = vmatprep.subr.mxu0 0.0
        %9796 = vmatpush1.msra.mxu0 0.0
        %9797 = vmatprep.subr.mxu0 0.0
        %9798 = vmatpush1.msra.mxu0 0.0
        %9799 = vmatprep.subr.mxu0 0.0
        %9800 = vmatpush1.msra.mxu0 0.0
        %9801 = vmatprep.subr.mxu0 0.0
        %9802 = vmatpush1.msra.mxu0 0.0
        %9803 = vmatprep.subr.mxu0 0.0
        %v9804 = vand.u32 %v4902, 4294901760
        %v9805 = vsub.f32 %v4902, %v9804
        %v9806 = vand.u32 %v9805, 4294901760
        %9807 = vmatpush1.msra.mxu0 %v9806
        %9808 = vmatprep.subr.mxu0 0.0
        %v9809 = vand.u32 %v4896, 4294901760
        %v9810 = vsub.f32 %v4896, %v9809
        %v9811 = vand.u32 %v9810, 4294901760
        %9812 = vmatpush1.msra.mxu0 %v9811
        %9813 = vmatprep.subr.mxu0 0.0
        %9814 = vmatpush2.msra.mxu0 0.0
        %9815 = vmatprep.subr.mxu0 0.0
        %9816 = vmatpush2.msra.mxu0 0.0
        %9817 = vmatprep.subr.mxu0 0.0
        %9818 = vmatpush2.msra.mxu0 0.0
        %9819 = vmatprep.subr.mxu0 0.0
        %9820 = vmatpush2.msra.mxu0 0.0
        %9821 = vmatprep.subr.mxu0 0.0
        %9822 = vmatpush2.msra.mxu0 0.0
        %9823 = vmatprep.subr.mxu0 0.0
        %9824 = vmatpush2.msra.mxu0 0.0
        %9825 = vmatprep.subr.mxu0 0.0
        %9826 = vmatpush2.msra.mxu0 0.0
        %9827 = vmatprep.subr.mxu0 0.0
        %9828 = vmatpush2.msra.mxu0 0.0
        %9829 = vmatprep.subr.mxu0 0.0
        %9830 = vmatpush2.msra.mxu0 0.0
        %9831 = vmatprep.subr.mxu0 0.0
        %9832 = vmatpush2.msra.mxu0 0.0
        %9833 = vmatprep.subr.mxu0 0.0
        %9834 = vmatpush2.msra.mxu0 0.0
        %9835 = vmatprep.subr.mxu0 0.0
        %9836 = vmatpush2.msra.mxu0 0.0
        %9837 = vmatprep.subr.mxu0 0.0
        %9838 = vmatpush2.msra.mxu0 0.0
        %9839 = vmatprep.subr.mxu0 0.0
        %9840 = vmatpush2.msra.mxu0 0.0
        %9841 = vmatprep.subr.mxu0 0.0
        %9842 = vmatpush2.msra.mxu0 0.0
        %9843 = vmatprep.subr.mxu0 0.0
        %9844 = vmatpush2.msra.mxu0 0.0
        %9845 = vmatprep.mubr.f32.mxu0 0.0
        %v9846 = vand.u32 %v5414, 4294901760
        %9847 = vmatmul.mubr.f32.gmra.mxu0 %v9846
        %v9848 = vpop.f32.mrf.mxu0
        %v9849 = vadd.f32 %v9764, %v9848
        %v9850 = vpop.f32.mrf.mxu0
        %9851 = vmatprep.mubr.f32.mxu0 0.0
        %v9852 = vand.u32 %v5417, 4294901760
        %9853 = vmatmul.mubr.f32.gmra.mxu0 %v9852
        %v9854 = vpop.f32.mrf.mxu0
        %v9855 = vadd.f32 %v9772, %v9854
        %v9856 = vpop.f32.mrf.mxu0
        %9857 = vdwg.mxu0
        %9858 = vmatprep.subr.mxu0 0.0
        %9859 = vmatpush1.msra.mxu0 0.0
        %9860 = vmatprep.subr.mxu0 0.0
        %9861 = vmatpush1.msra.mxu0 0.0
        %9862 = vmatprep.subr.mxu0 0.0
        %9863 = vmatpush1.msra.mxu0 0.0
        %9864 = vmatprep.subr.mxu0 0.0
        %9865 = vmatpush1.msra.mxu0 0.0
        %9866 = vmatprep.subr.mxu0 0.0
        %9867 = vmatpush1.msra.mxu0 0.0
        %9868 = vmatprep.subr.mxu0 0.0
        %9869 = vmatpush1.msra.mxu0 0.0
        %9870 = vmatprep.subr.mxu0 0.0
        %9871 = vmatpush1.msra.mxu0 0.0
        %9872 = vmatprep.subr.mxu0 0.0
        %9873 = vmatpush1.msra.mxu0 0.0
        %9874 = vmatprep.subr.mxu0 0.0
        %9875 = vmatpush1.msra.mxu0 0.0
        %9876 = vmatprep.subr.mxu0 0.0
        %9877 = vmatpush1.msra.mxu0 0.0
        %9878 = vmatprep.subr.mxu0 0.0
        %9879 = vmatpush1.msra.mxu0 0.0
        %9880 = vmatprep.subr.mxu0 0.0
        %9881 = vmatpush1.msra.mxu0 0.0
        %9882 = vmatprep.subr.mxu0 0.0
        %9883 = vmatpush1.msra.mxu0 0.0
        %9884 = vmatprep.subr.mxu0 0.0
        %9885 = vmatpush1.msra.mxu0 0.0
        %9886 = vmatprep.subr.mxu0 0.0
        %v9887 = vand.u32 %v4902, 4294901760
        %9888 = vmatpush1.msra.mxu0 %v9887
        %9889 = vmatprep.subr.mxu0 0.0
        %v9890 = vand.u32 %v4896, 4294901760
        %9891 = vmatpush1.msra.mxu0 %v9890
        %9892 = vmatprep.subr.mxu0 0.0
        %9893 = vmatpush2.msra.mxu0 0.0
        %9894 = vmatprep.subr.mxu0 0.0
        %9895 = vmatpush2.msra.mxu0 0.0
        %9896 = vmatprep.subr.mxu0 0.0
        %9897 = vmatpush2.msra.mxu0 0.0
        %9898 = vmatprep.subr.mxu0 0.0
        %9899 = vmatpush2.msra.mxu0 0.0
        %9900 = vmatprep.subr.mxu0 0.0
        %9901 = vmatpush2.msra.mxu0 0.0
        %9902 = vmatprep.subr.mxu0 0.0
        %9903 = vmatpush2.msra.mxu0 0.0
        %9904 = vmatprep.subr.mxu0 0.0
        %9905 = vmatpush2.msra.mxu0 0.0
        %9906 = vmatprep.subr.mxu0 0.0
        %9907 = vmatpush2.msra.mxu0 0.0
        %9908 = vmatprep.subr.mxu0 0.0
        %9909 = vmatpush2.msra.mxu0 0.0
        %9910 = vmatprep.subr.mxu0 0.0
        %9911 = vmatpush2.msra.mxu0 0.0
        %9912 = vmatprep.subr.mxu0 0.0
        %9913 = vmatpush2.msra.mxu0 0.0
        %9914 = vmatprep.subr.mxu0 0.0
        %9915 = vmatpush2.msra.mxu0 0.0
        %9916 = vmatprep.subr.mxu0 0.0
        %9917 = vmatpush2.msra.mxu0 0.0
        %9918 = vmatprep.subr.mxu0 0.0
        %9919 = vmatpush2.msra.mxu0 0.0
        %9920 = vmatprep.subr.mxu0 0.0
        %9921 = vmatpush2.msra.mxu0 0.0
        %9922 = vmatprep.subr.mxu0 0.0
        %9923 = vmatpush2.msra.mxu0 0.0
        %9924 = vmatprep.mubr.f32.mxu0 0.0
        %v9925 = vand.u32 %v5414, 4294901760
        %9926 = vmatmul.mubr.f32.gmra.mxu0 %v9925
        %v9927 = vpop.f32.mrf.mxu0
        %v9928 = vadd.f32 %v9849, %v9927
        %v9929 = vpop.f32.mrf.mxu0
        %9930 = vmatprep.mubr.f32.mxu0 0.0
        %v9931 = vand.u32 %v5417, 4294901760
        %9932 = vmatmul.mubr.f32.gmra.mxu0 %v9931
        %v9933 = vpop.f32.mrf.mxu0
        %v9934 = vadd.f32 %v9855, %v9933
        %v9935 = vpop.f32.mrf.mxu0
        %9936 = vdwg.mxu0
        %9937 = vmatprep.subr.mxu0 0.0
        %9938 = vmatpush1.msra.mxu0 0.0
        %9939 = vmatprep.subr.mxu0 0.0
        %9940 = vmatpush1.msra.mxu0 0.0
        %9941 = vmatprep.subr.mxu0 0.0
        %9942 = vmatpush1.msra.mxu0 0.0
        %9943 = vmatprep.subr.mxu0 0.0
        %9944 = vmatpush1.msra.mxu0 0.0
        %9945 = vmatprep.subr.mxu0 0.0
        %9946 = vmatpush1.msra.mxu0 0.0
        %9947 = vmatprep.subr.mxu0 0.0
        %9948 = vmatpush1.msra.mxu0 0.0
        %9949 = vmatprep.subr.mxu0 0.0
        %9950 = vmatpush1.msra.mxu0 0.0
        %9951 = vmatprep.subr.mxu0 0.0
        %9952 = vmatpush1.msra.mxu0 0.0
        %9953 = vmatprep.subr.mxu0 0.0
        %9954 = vmatpush1.msra.mxu0 0.0
        %9955 = vmatprep.subr.mxu0 0.0
        %9956 = vmatpush1.msra.mxu0 0.0
        %9957 = vmatprep.subr.mxu0 0.0
        %9958 = vmatpush1.msra.mxu0 0.0
        %9959 = vmatprep.subr.mxu0 0.0
        %9960 = vmatpush1.msra.mxu0 0.0
        %9961 = vmatprep.subr.mxu0 0.0
        %9962 = vmatpush1.msra.mxu0 0.0
        %9963 = vmatprep.subr.mxu0 0.0
        %9964 = vmatpush1.msra.mxu0 0.0
        %9965 = vmatprep.subr.mxu0 0.0
        %v9966 = vand.u32 %v5410, 4294901760
        %9967 = vmatpush1.msra.mxu0 %v9966
        %9968 = vmatprep.subr.mxu0 0.0
        %v9969 = vand.u32 %v5404, 4294901760
        %9970 = vmatpush1.msra.mxu0 %v9969
        %9971 = vmatprep.subr.mxu0 0.0
        %9972 = vmatpush2.msra.mxu0 0.0
        %9973 = vmatprep.subr.mxu0 0.0
        %9974 = vmatpush2.msra.mxu0 0.0
        %9975 = vmatprep.subr.mxu0 0.0
        %9976 = vmatpush2.msra.mxu0 0.0
        %9977 = vmatprep.subr.mxu0 0.0
        %9978 = vmatpush2.msra.mxu0 0.0
        %9979 = vmatprep.subr.mxu0 0.0
        %9980 = vmatpush2.msra.mxu0 0.0
        %9981 = vmatprep.subr.mxu0 0.0
        %9982 = vmatpush2.msra.mxu0 0.0
        %9983 = vmatprep.subr.mxu0 0.0
        %9984 = vmatpush2.msra.mxu0 0.0
        %9985 = vmatprep.subr.mxu0 0.0
        %9986 = vmatpush2.msra.mxu0 0.0
        %9987 = vmatprep.subr.mxu0 0.0
        %9988 = vmatpush2.msra.mxu0 0.0
        %9989 = vmatprep.subr.mxu0 0.0
        %9990 = vmatpush2.msra.mxu0 0.0
        %9991 = vmatprep.subr.mxu0 0.0
        %9992 = vmatpush2.msra.mxu0 0.0
        %9993 = vmatprep.subr.mxu0 0.0
        %9994 = vmatpush2.msra.mxu0 0.0
        %9995 = vmatprep.subr.mxu0 0.0
        %9996 = vmatpush2.msra.mxu0 0.0
        %9997 = vmatprep.subr.mxu0 0.0
        %9998 = vmatpush2.msra.mxu0 0.0
        %9999 = vmatprep.subr.mxu0 0.0
        %10000 = vmatpush2.msra.mxu0 0.0
        %10001 = vmatprep.subr.mxu0 0.0
        %10002 = vmatpush2.msra.mxu0 0.0
        %10003 = vmatprep.mubr.f32.mxu0 0.0
        %v10004 = vand.u32 %v5414, 4294901760
        %v10005 = vsub.f32 %v5414, %v10004
        %v10006 = vand.u32 %v10005, 4294901760
        %v10007 = vsub.f32 %v10005, %v10006
        %v10008 = vand.u32 %v10007, 4294901760
        %10009 = vmatmul.mubr.f32.gmra.mxu0 %v10008
        %v10010 = vpop.f32.mrf.mxu0
        %v10011 = vadd.f32 0.0, %v10010
        %v10012 = vpop.f32.mrf.mxu0
        %10013 = vmatprep.mubr.f32.mxu0 0.0
        %v10014 = vand.u32 %v5417, 4294901760
        %v10015 = vsub.f32 %v5417, %v10014
        %v10016 = vand.u32 %v10015, 4294901760
        %v10017 = vsub.f32 %v10015, %v10016
        %v10018 = vand.u32 %v10017, 4294901760
        %10019 = vmatmul.mubr.f32.gmra.mxu0 %v10018
        %v10020 = vpop.f32.mrf.mxu0
        %v10021 = vadd.f32 0.0, %v10020
        %v10022 = vpop.f32.mrf.mxu0
        %10023 = vdwg.mxu0
        %10024 = vmatprep.subr.mxu0 0.0
        %10025 = vmatpush1.msra.mxu0 0.0
        %10026 = vmatprep.subr.mxu0 0.0
        %10027 = vmatpush1.msra.mxu0 0.0
        %10028 = vmatprep.subr.mxu0 0.0
        %10029 = vmatpush1.msra.mxu0 0.0
        %10030 = vmatprep.subr.mxu0 0.0
        %10031 = vmatpush1.msra.mxu0 0.0
        %10032 = vmatprep.subr.mxu0 0.0
        %10033 = vmatpush1.msra.mxu0 0.0
        %10034 = vmatprep.subr.mxu0 0.0
        %10035 = vmatpush1.msra.mxu0 0.0
        %10036 = vmatprep.subr.mxu0 0.0
        %10037 = vmatpush1.msra.mxu0 0.0
        %10038 = vmatprep.subr.mxu0 0.0
        %10039 = vmatpush1.msra.mxu0 0.0
        %10040 = vmatprep.subr.mxu0 0.0
        %10041 = vmatpush1.msra.mxu0 0.0
        %10042 = vmatprep.subr.mxu0 0.0
        %10043 = vmatpush1.msra.mxu0 0.0
        %10044 = vmatprep.subr.mxu0 0.0
        %10045 = vmatpush1.msra.mxu0 0.0
        %10046 = vmatprep.subr.mxu0 0.0
        %10047 = vmatpush1.msra.mxu0 0.0
        %10048 = vmatprep.subr.mxu0 0.0
        %10049 = vmatpush1.msra.mxu0 0.0
        %10050 = vmatprep.subr.mxu0 0.0
        %10051 = vmatpush1.msra.mxu0 0.0
        %10052 = vmatprep.subr.mxu0 0.0
        %v10053 = vand.u32 %v5410, 4294901760
        %v10054 = vsub.f32 %v5410, %v10053
        %v10055 = vand.u32 %v10054, 4294901760
        %v10056 = vsub.f32 %v10054, %v10055
        %v10057 = vand.u32 %v10056, 4294901760
        %10058 = vmatpush1.msra.mxu0 %v10057
        %10059 = vmatprep.subr.mxu0 0.0
        %v10060 = vand.u32 %v5404, 4294901760
        %v10061 = vsub.f32 %v5404, %v10060
        %v10062 = vand.u32 %v10061, 4294901760
        %v10063 = vsub.f32 %v10061, %v10062
        %v10064 = vand.u32 %v10063, 4294901760
        %10065 = vmatpush1.msra.mxu0 %v10064
        %10066 = vmatprep.subr.mxu0 0.0
        %10067 = vmatpush2.msra.mxu0 0.0
        %10068 = vmatprep.subr.mxu0 0.0
        %10069 = vmatpush2.msra.mxu0 0.0
        %10070 = vmatprep.subr.mxu0 0.0
        %10071 = vmatpush2.msra.mxu0 0.0
        %10072 = vmatprep.subr.mxu0 0.0
        %10073 = vmatpush2.msra.mxu0 0.0
        %10074 = vmatprep.subr.mxu0 0.0
        %10075 = vmatpush2.msra.mxu0 0.0
        %10076 = vmatprep.subr.mxu0 0.0
        %10077 = vmatpush2.msra.mxu0 0.0
        %10078 = vmatprep.subr.mxu0 0.0
        %10079 = vmatpush2.msra.mxu0 0.0
        %10080 = vmatprep.subr.mxu0 0.0
        %10081 = vmatpush2.msra.mxu0 0.0
        %10082 = vmatprep.subr.mxu0 0.0
        %10083 = vmatpush2.msra.mxu0 0.0
        %10084 = vmatprep.subr.mxu0 0.0
        %10085 = vmatpush2.msra.mxu0 0.0
        %10086 = vmatprep.subr.mxu0 0.0
        %10087 = vmatpush2.msra.mxu0 0.0
        %10088 = vmatprep.subr.mxu0 0.0
        %10089 = vmatpush2.msra.mxu0 0.0
        %10090 = vmatprep.subr.mxu0 0.0
        %10091 = vmatpush2.msra.mxu0 0.0
        %10092 = vmatprep.subr.mxu0 0.0
        %10093 = vmatpush2.msra.mxu0 0.0
        %10094 = vmatprep.subr.mxu0 0.0
        %10095 = vmatpush2.msra.mxu0 0.0
        %10096 = vmatprep.subr.mxu0 0.0
        %10097 = vmatpush2.msra.mxu0 0.0
        %10098 = vmatprep.mubr.f32.mxu0 0.0
        %v10099 = vand.u32 %v5414, 4294901760
        %10100 = vmatmul.mubr.f32.gmra.mxu0 %v10099
        %v10101 = vpop.f32.mrf.mxu0
        %v10102 = vadd.f32 %v10011, %v10101
        %v10103 = vpop.f32.mrf.mxu0
        %10104 = vmatprep.mubr.f32.mxu0 0.0
        %v10105 = vand.u32 %v5417, 4294901760
        %10106 = vmatmul.mubr.f32.gmra.mxu0 %v10105
        %v10107 = vpop.f32.mrf.mxu0
        %v10108 = vadd.f32 %v10021, %v10107
        %v10109 = vpop.f32.mrf.mxu0
        %10110 = vdwg.mxu0
        %10111 = vmatprep.subr.mxu0 0.0
        %10112 = vmatpush1.msra.mxu0 0.0
        %10113 = vmatprep.subr.mxu0 0.0
        %10114 = vmatpush1.msra.mxu0 0.0
        %10115 = vmatprep.subr.mxu0 0.0
        %10116 = vmatpush1.msra.mxu0 0.0
        %10117 = vmatprep.subr.mxu0 0.0
        %10118 = vmatpush1.msra.mxu0 0.0
        %10119 = vmatprep.subr.mxu0 0.0
        %10120 = vmatpush1.msra.mxu0 0.0
        %10121 = vmatprep.subr.mxu0 0.0
        %10122 = vmatpush1.msra.mxu0 0.0
        %10123 = vmatprep.subr.mxu0 0.0
        %10124 = vmatpush1.msra.mxu0 0.0
        %10125 = vmatprep.subr.mxu0 0.0
        %10126 = vmatpush1.msra.mxu0 0.0
        %10127 = vmatprep.subr.mxu0 0.0
        %10128 = vmatpush1.msra.mxu0 0.0
        %10129 = vmatprep.subr.mxu0 0.0
        %10130 = vmatpush1.msra.mxu0 0.0
        %10131 = vmatprep.subr.mxu0 0.0
        %10132 = vmatpush1.msra.mxu0 0.0
        %10133 = vmatprep.subr.mxu0 0.0
        %10134 = vmatpush1.msra.mxu0 0.0
        %10135 = vmatprep.subr.mxu0 0.0
        %10136 = vmatpush1.msra.mxu0 0.0
        %10137 = vmatprep.subr.mxu0 0.0
        %10138 = vmatpush1.msra.mxu0 0.0
        %10139 = vmatprep.subr.mxu0 0.0
        %v10140 = vand.u32 %v5410, 4294901760
        %v10141 = vsub.f32 %v5410, %v10140
        %10142 = vmatpush1.msra.mxu0 %v10141
        %10143 = vmatprep.subr.mxu0 0.0
        %v10144 = vand.u32 %v5404, 4294901760
        %v10145 = vsub.f32 %v5404, %v10144
        %10146 = vmatpush1.msra.mxu0 %v10145
        %10147 = vmatprep.subr.mxu0 0.0
        %10148 = vmatpush2.msra.mxu0 0.0
        %10149 = vmatprep.subr.mxu0 0.0
        %10150 = vmatpush2.msra.mxu0 0.0
        %10151 = vmatprep.subr.mxu0 0.0
        %10152 = vmatpush2.msra.mxu0 0.0
        %10153 = vmatprep.subr.mxu0 0.0
        %10154 = vmatpush2.msra.mxu0 0.0
        %10155 = vmatprep.subr.mxu0 0.0
        %10156 = vmatpush2.msra.mxu0 0.0
        %10157 = vmatprep.subr.mxu0 0.0
        %10158 = vmatpush2.msra.mxu0 0.0
        %10159 = vmatprep.subr.mxu0 0.0
        %10160 = vmatpush2.msra.mxu0 0.0
        %10161 = vmatprep.subr.mxu0 0.0
        %10162 = vmatpush2.msra.mxu0 0.0
        %10163 = vmatprep.subr.mxu0 0.0
        %10164 = vmatpush2.msra.mxu0 0.0
        %10165 = vmatprep.subr.mxu0 0.0
        %10166 = vmatpush2.msra.mxu0 0.0
        %10167 = vmatprep.subr.mxu0 0.0
        %10168 = vmatpush2.msra.mxu0 0.0
        %10169 = vmatprep.subr.mxu0 0.0
        %10170 = vmatpush2.msra.mxu0 0.0
        %10171 = vmatprep.subr.mxu0 0.0
        %10172 = vmatpush2.msra.mxu0 0.0
        %10173 = vmatprep.subr.mxu0 0.0
        %10174 = vmatpush2.msra.mxu0 0.0
        %10175 = vmatprep.subr.mxu0 0.0
        %10176 = vmatpush2.msra.mxu0 0.0
        %10177 = vmatprep.subr.mxu0 0.0
        %10178 = vmatpush2.msra.mxu0 0.0
        %10179 = vmatprep.mubr.f32.mxu0 0.0
        %v10180 = vand.u32 %v5414, 4294901760
        %v10181 = vsub.f32 %v5414, %v10180
        %10182 = vmatmul.mubr.f32.gmra.mxu0 %v10181
        %v10183 = vpop.f32.mrf.mxu0
        %v10184 = vadd.f32 %v10102, %v10183
        %v10185 = vpop.f32.mrf.mxu0
        %10186 = vmatprep.mubr.f32.mxu0 0.0
        %v10187 = vand.u32 %v5417, 4294901760
        %v10188 = vsub.f32 %v5417, %v10187
        %10189 = vmatmul.mubr.f32.gmra.mxu0 %v10188
        %v10190 = vpop.f32.mrf.mxu0
        %v10191 = vadd.f32 %v10108, %v10190
        %v10192 = vpop.f32.mrf.mxu0
        %10193 = vdwg.mxu0
        %10194 = vmatprep.subr.mxu0 0.0
        %10195 = vmatpush1.msra.mxu0 0.0
        %10196 = vmatprep.subr.mxu0 0.0
        %10197 = vmatpush1.msra.mxu0 0.0
        %10198 = vmatprep.subr.mxu0 0.0
        %10199 = vmatpush1.msra.mxu0 0.0
        %10200 = vmatprep.subr.mxu0 0.0
        %10201 = vmatpush1.msra.mxu0 0.0
        %10202 = vmatprep.subr.mxu0 0.0
        %10203 = vmatpush1.msra.mxu0 0.0
        %10204 = vmatprep.subr.mxu0 0.0
        %10205 = vmatpush1.msra.mxu0 0.0
        %10206 = vmatprep.subr.mxu0 0.0
        %10207 = vmatpush1.msra.mxu0 0.0
        %10208 = vmatprep.subr.mxu0 0.0
        %10209 = vmatpush1.msra.mxu0 0.0
        %10210 = vmatprep.subr.mxu0 0.0
        %10211 = vmatpush1.msra.mxu0 0.0
        %10212 = vmatprep.subr.mxu0 0.0
        %10213 = vmatpush1.msra.mxu0 0.0
        %10214 = vmatprep.subr.mxu0 0.0
        %10215 = vmatpush1.msra.mxu0 0.0
        %10216 = vmatprep.subr.mxu0 0.0
        %10217 = vmatpush1.msra.mxu0 0.0
        %10218 = vmatprep.subr.mxu0 0.0
        %10219 = vmatpush1.msra.mxu0 0.0
        %10220 = vmatprep.subr.mxu0 0.0
        %10221 = vmatpush1.msra.mxu0 0.0
        %10222 = vmatprep.subr.mxu0 0.0
        %v10223 = vand.u32 %v5410, 4294901760
        %10224 = vmatpush1.msra.mxu0 %v10223
        %10225 = vmatprep.subr.mxu0 0.0
        %v10226 = vand.u32 %v5404, 4294901760
        %10227 = vmatpush1.msra.mxu0 %v10226
        %10228 = vmatprep.subr.mxu0 0.0
        %10229 = vmatpush2.msra.mxu0 0.0
        %10230 = vmatprep.subr.mxu0 0.0
        %10231 = vmatpush2.msra.mxu0 0.0
        %10232 = vmatprep.subr.mxu0 0.0
        %10233 = vmatpush2.msra.mxu0 0.0
        %10234 = vmatprep.subr.mxu0 0.0
        %10235 = vmatpush2.msra.mxu0 0.0
        %10236 = vmatprep.subr.mxu0 0.0
        %10237 = vmatpush2.msra.mxu0 0.0
        %10238 = vmatprep.subr.mxu0 0.0
        %10239 = vmatpush2.msra.mxu0 0.0
        %10240 = vmatprep.subr.mxu0 0.0
        %10241 = vmatpush2.msra.mxu0 0.0
        %10242 = vmatprep.subr.mxu0 0.0
        %10243 = vmatpush2.msra.mxu0 0.0
        %10244 = vmatprep.subr.mxu0 0.0
        %10245 = vmatpush2.msra.mxu0 0.0
        %10246 = vmatprep.subr.mxu0 0.0
        %10247 = vmatpush2.msra.mxu0 0.0
        %10248 = vmatprep.subr.mxu0 0.0
        %10249 = vmatpush2.msra.mxu0 0.0
        %10250 = vmatprep.subr.mxu0 0.0
        %10251 = vmatpush2.msra.mxu0 0.0
        %10252 = vmatprep.subr.mxu0 0.0
        %10253 = vmatpush2.msra.mxu0 0.0
        %10254 = vmatprep.subr.mxu0 0.0
        %10255 = vmatpush2.msra.mxu0 0.0
        %10256 = vmatprep.subr.mxu0 0.0
        %10257 = vmatpush2.msra.mxu0 0.0
        %10258 = vmatprep.subr.mxu0 0.0
        %10259 = vmatpush2.msra.mxu0 0.0
        %10260 = vmatprep.mubr.f32.mxu0 0.0
        %v10261 = vand.u32 %v5414, 4294901760
        %v10262 = vsub.f32 %v5414, %v10261
        %v10263 = vand.u32 %v10262, 4294901760
        %10264 = vmatmul.mubr.f32.gmra.mxu0 %v10263
        %v10265 = vpop.f32.mrf.mxu0
        %v10266 = vadd.f32 %v10184, %v10265
        %v10267 = vpop.f32.mrf.mxu0
        %10268 = vmatprep.mubr.f32.mxu0 0.0
        %v10269 = vand.u32 %v5417, 4294901760
        %v10270 = vsub.f32 %v5417, %v10269
        %v10271 = vand.u32 %v10270, 4294901760
        %10272 = vmatmul.mubr.f32.gmra.mxu0 %v10271
        %v10273 = vpop.f32.mrf.mxu0
        %v10274 = vadd.f32 %v10191, %v10273
        %v10275 = vpop.f32.mrf.mxu0
        %10276 = vdwg.mxu0
        %10277 = vmatprep.subr.mxu0 0.0
        %10278 = vmatpush1.msra.mxu0 0.0
        %10279 = vmatprep.subr.mxu0 0.0
        %10280 = vmatpush1.msra.mxu0 0.0
        %10281 = vmatprep.subr.mxu0 0.0
        %10282 = vmatpush1.msra.mxu0 0.0
        %10283 = vmatprep.subr.mxu0 0.0
        %10284 = vmatpush1.msra.mxu0 0.0
        %10285 = vmatprep.subr.mxu0 0.0
        %10286 = vmatpush1.msra.mxu0 0.0
        %10287 = vmatprep.subr.mxu0 0.0
        %10288 = vmatpush1.msra.mxu0 0.0
        %10289 = vmatprep.subr.mxu0 0.0
        %10290 = vmatpush1.msra.mxu0 0.0
        %10291 = vmatprep.subr.mxu0 0.0
        %10292 = vmatpush1.msra.mxu0 0.0
        %10293 = vmatprep.subr.mxu0 0.0
        %10294 = vmatpush1.msra.mxu0 0.0
        %10295 = vmatprep.subr.mxu0 0.0
        %10296 = vmatpush1.msra.mxu0 0.0
        %10297 = vmatprep.subr.mxu0 0.0
        %10298 = vmatpush1.msra.mxu0 0.0
        %10299 = vmatprep.subr.mxu0 0.0
        %10300 = vmatpush1.msra.mxu0 0.0
        %10301 = vmatprep.subr.mxu0 0.0
        %10302 = vmatpush1.msra.mxu0 0.0
        %10303 = vmatprep.subr.mxu0 0.0
        %10304 = vmatpush1.msra.mxu0 0.0
        %10305 = vmatprep.subr.mxu0 0.0
        %v10306 = vand.u32 %v5410, 4294901760
        %v10307 = vsub.f32 %v5410, %v10306
        %v10308 = vand.u32 %v10307, 4294901760
        %10309 = vmatpush1.msra.mxu0 %v10308
        %10310 = vmatprep.subr.mxu0 0.0
        %v10311 = vand.u32 %v5404, 4294901760
        %v10312 = vsub.f32 %v5404, %v10311
        %v10313 = vand.u32 %v10312, 4294901760
        %10314 = vmatpush1.msra.mxu0 %v10313
        %10315 = vmatprep.subr.mxu0 0.0
        %10316 = vmatpush2.msra.mxu0 0.0
        %10317 = vmatprep.subr.mxu0 0.0
        %10318 = vmatpush2.msra.mxu0 0.0
        %10319 = vmatprep.subr.mxu0 0.0
        %10320 = vmatpush2.msra.mxu0 0.0
        %10321 = vmatprep.subr.mxu0 0.0
        %10322 = vmatpush2.msra.mxu0 0.0
        %10323 = vmatprep.subr.mxu0 0.0
        %10324 = vmatpush2.msra.mxu0 0.0
        %10325 = vmatprep.subr.mxu0 0.0
        %10326 = vmatpush2.msra.mxu0 0.0
        %10327 = vmatprep.subr.mxu0 0.0
        %10328 = vmatpush2.msra.mxu0 0.0
        %10329 = vmatprep.subr.mxu0 0.0
        %10330 = vmatpush2.msra.mxu0 0.0
        %10331 = vmatprep.subr.mxu0 0.0
        %10332 = vmatpush2.msra.mxu0 0.0
        %10333 = vmatprep.subr.mxu0 0.0
        %10334 = vmatpush2.msra.mxu0 0.0
        %10335 = vmatprep.subr.mxu0 0.0
        %10336 = vmatpush2.msra.mxu0 0.0
        %10337 = vmatprep.subr.mxu0 0.0
        %10338 = vmatpush2.msra.mxu0 0.0
        %10339 = vmatprep.subr.mxu0 0.0
        %10340 = vmatpush2.msra.mxu0 0.0
        %10341 = vmatprep.subr.mxu0 0.0
        %10342 = vmatpush2.msra.mxu0 0.0
        %10343 = vmatprep.subr.mxu0 0.0
        %10344 = vmatpush2.msra.mxu0 0.0
        %10345 = vmatprep.subr.mxu0 0.0
        %10346 = vmatpush2.msra.mxu0 0.0
        %10347 = vmatprep.mubr.f32.mxu0 0.0
        %v10348 = vand.u32 %v5414, 4294901760
        %10349 = vmatmul.mubr.f32.gmra.mxu0 %v10348
        %v10350 = vpop.f32.mrf.mxu0
        %v10351 = vadd.f32 %v10266, %v10350
        %v10352 = vpop.f32.mrf.mxu0
        %10353 = vmatprep.mubr.f32.mxu0 0.0
        %v10354 = vand.u32 %v5417, 4294901760
        %10355 = vmatmul.mubr.f32.gmra.mxu0 %v10354
        %v10356 = vpop.f32.mrf.mxu0
        %v10357 = vadd.f32 %v10274, %v10356
        %v10358 = vpop.f32.mrf.mxu0
        %10359 = vdwg.mxu0
        %10360 = vmatprep.subr.mxu0 0.0
        %10361 = vmatpush1.msra.mxu0 0.0
        %10362 = vmatprep.subr.mxu0 0.0
        %10363 = vmatpush1.msra.mxu0 0.0
        %10364 = vmatprep.subr.mxu0 0.0
        %10365 = vmatpush1.msra.mxu0 0.0
        %10366 = vmatprep.subr.mxu0 0.0
        %10367 = vmatpush1.msra.mxu0 0.0
        %10368 = vmatprep.subr.mxu0 0.0
        %10369 = vmatpush1.msra.mxu0 0.0
        %10370 = vmatprep.subr.mxu0 0.0
        %10371 = vmatpush1.msra.mxu0 0.0
        %10372 = vmatprep.subr.mxu0 0.0
        %10373 = vmatpush1.msra.mxu0 0.0
        %10374 = vmatprep.subr.mxu0 0.0
        %10375 = vmatpush1.msra.mxu0 0.0
        %10376 = vmatprep.subr.mxu0 0.0
        %10377 = vmatpush1.msra.mxu0 0.0
        %10378 = vmatprep.subr.mxu0 0.0
        %10379 = vmatpush1.msra.mxu0 0.0
        %10380 = vmatprep.subr.mxu0 0.0
        %10381 = vmatpush1.msra.mxu0 0.0
        %10382 = vmatprep.subr.mxu0 0.0
        %10383 = vmatpush1.msra.mxu0 0.0
        %10384 = vmatprep.subr.mxu0 0.0
        %10385 = vmatpush1.msra.mxu0 0.0
        %10386 = vmatprep.subr.mxu0 0.0
        %10387 = vmatpush1.msra.mxu0 0.0
        %10388 = vmatprep.subr.mxu0 0.0
        %v10389 = vand.u32 %v5410, 4294901760
        %10390 = vmatpush1.msra.mxu0 %v10389
        %10391 = vmatprep.subr.mxu0 0.0
        %v10392 = vand.u32 %v5404, 4294901760
        %10393 = vmatpush1.msra.mxu0 %v10392
        %10394 = vmatprep.subr.mxu0 0.0
        %10395 = vmatpush2.msra.mxu0 0.0
        %10396 = vmatprep.subr.mxu0 0.0
        %10397 = vmatpush2.msra.mxu0 0.0
        %10398 = vmatprep.subr.mxu0 0.0
        %10399 = vmatpush2.msra.mxu0 0.0
        %10400 = vmatprep.subr.mxu0 0.0
        %10401 = vmatpush2.msra.mxu0 0.0
        %10402 = vmatprep.subr.mxu0 0.0
        %10403 = vmatpush2.msra.mxu0 0.0
        %10404 = vmatprep.subr.mxu0 0.0
        %10405 = vmatpush2.msra.mxu0 0.0
        %10406 = vmatprep.subr.mxu0 0.0
        %10407 = vmatpush2.msra.mxu0 0.0
        %10408 = vmatprep.subr.mxu0 0.0
        %10409 = vmatpush2.msra.mxu0 0.0
        %10410 = vmatprep.subr.mxu0 0.0
        %10411 = vmatpush2.msra.mxu0 0.0
        %10412 = vmatprep.subr.mxu0 0.0
        %10413 = vmatpush2.msra.mxu0 0.0
        %10414 = vmatprep.subr.mxu0 0.0
        %10415 = vmatpush2.msra.mxu0 0.0
        %10416 = vmatprep.subr.mxu0 0.0
        %10417 = vmatpush2.msra.mxu0 0.0
        %10418 = vmatprep.subr.mxu0 0.0
        %10419 = vmatpush2.msra.mxu0 0.0
        %10420 = vmatprep.subr.mxu0 0.0
        %10421 = vmatpush2.msra.mxu0 0.0
        %10422 = vmatprep.subr.mxu0 0.0
        %10423 = vmatpush2.msra.mxu0 0.0
        %10424 = vmatprep.subr.mxu0 0.0
        %10425 = vmatpush2.msra.mxu0 0.0
        %10426 = vmatprep.mubr.f32.mxu0 0.0
        %v10427 = vand.u32 %v5414, 4294901760
        %10428 = vmatmul.mubr.f32.gmra.mxu0 %v10427
        %v10429 = vpop.f32.mrf.mxu0
        %v10430 = vadd.f32 %v10351, %v10429
        %v10431 = vpop.f32.mrf.mxu0
        %10432 = vmatprep.mubr.f32.mxu0 0.0
        %v10433 = vand.u32 %v5417, 4294901760
        %10434 = vmatmul.mubr.f32.gmra.mxu0 %v10433
        %v10435 = vpop.f32.mrf.mxu0
        %v10436 = vadd.f32 %v10357, %v10435
        %v10437 = vpop.f32.mrf.mxu0
        %10438 = vdwg.mxu0
        %v10439 = vmul.f32 %v5912, %v6916
        %v10440 = vmul.f32 %v5918, %v6922
        %v10441 = vmul.f32 %v6414, %v7418
        %v10442 = vmul.f32 %v6420, %v7424
        %v10443 = vmul.f32 %v5912, %v5912
        %v10444 = vmul.f32 %v5918, %v5918
        %v10445 = vmul.f32 %v6414, %v6414
        %v10446 = vmul.f32 %v6420, %v6420
        %v10447 = vmul.f32 %v6916, %v6916
        %v10448 = vmul.f32 %v6922, %v6922
        %v10449 = vmul.f32 %v7418, %v7418
        %v10450 = vmul.f32 %v7424, %v7424
        %v10451 = vsub.f32 %v7920, %v10443
        %v10452 = vsub.f32 %v7926, %v10444
        %v10453 = vsub.f32 %v8422, %v10445
        %v10454 = vsub.f32 %v8428, %v10446
        %v10455 = vsub.f32 %v8924, %v10447
        %v10456 = vsub.f32 %v8930, %v10448
        %v10457 = vsub.f32 %v9426, %v10449
        %v10458 = vsub.f32 %v9432, %v10450
        %v10459 = vsub.f32 %v9928, %v10439
        %v10460 = vsub.f32 %v9934, %v10440
        %v10461 = vsub.f32 %v10430, %v10441
        %v10462 = vsub.f32 %v10436, %v10442
        %v10463 = vmul.f32 %v10439, 2.0
        %v10464 = vmul.f32 %v10440, 2.0
        %v10465 = vmul.f32 %v10441, 2.0
        %v10466 = vmul.f32 %v10442, 2.0
        %v10467 = vadd.f32 %v10463, 0.0001
        %v10468 = vadd.f32 %v10464, 0.0001
        %v10469 = vadd.f32 %v10465, 0.0001
        %v10470 = vadd.f32 %v10466, 0.0001
        %v10471 = vmul.f32 %v10459, 2.0
        %v10472 = vmul.f32 %v10460, 2.0
        %v10473 = vmul.f32 %v10461, 2.0
        %v10474 = vmul.f32 %v10462, 2.0
        %v10475 = vadd.f32 %v10471, 0.0009
        %v10476 = vadd.f32 %v10472, 0.0009
        %v10477 = vadd.f32 %v10473, 0.0009
        %v10478 = vadd.f32 %v10474, 0.0009
        %v10479 = vmul.f32 %v10467, %v10475
        %v10480 = vmul.f32 %v10468, %v10476
        %v10481 = vmul.f32 %v10469, %v10477
        %v10482 = vmul.f32 %v10470, %v10478
        %v10483 = vadd.f32 %v10443, %v10447
        %v10484 = vadd.f32 %v10444, %v10448
        %v10485 = vadd.f32 %v10445, %v10449
        %v10486 = vadd.f32 %v10446, %v10450
        %v10487 = vadd.f32 %v10483, 0.0001
        %v10488 = vadd.f32 %v10484, 0.0001
        %v10489 = vadd.f32 %v10485, 0.0001
        %v10490 = vadd.f32 %v10486, 0.0001
        %v10491 = vadd.f32 %v10451, %v10455
        %v10492 = vadd.f32 %v10452, %v10456
        %v10493 = vadd.f32 %v10453, %v10457
        %v10494 = vadd.f32 %v10454, %v10458
        %v10495 = vadd.f32 %v10491, 0.0009
        %v10496 = vadd.f32 %v10492, 0.0009
        %v10497 = vadd.f32 %v10493, 0.0009
        %v10498 = vadd.f32 %v10494, 0.0009
        %v10499 = vmul.f32 %v10487, %v10495
        %v10500 = vmul.f32 %v10488, %v10496
        %v10501 = vmul.f32 %v10489, %v10497
        %v10502 = vmul.f32 %v10490, %v10498
        %v10503 = vrcp.pop %v10499
        %v10504 = vrcp.pop %v10500
        %v10505 = vrcp.pop %v10501
        %v10506 = vrcp.pop %v10502
        %v10507 = vmul.f32 %v10499, %v10503
        %v10508 = vmul.f32 %v10500, %v10504
        %v10509 = vmul.f32 %v10501, %v10505
        %v10510 = vmul.f32 %v10502, %v10506
        %v10511 = vsub.f32 2.0, %v10507
        %v10512 = vsub.f32 2.0, %v10508
        %v10513 = vsub.f32 2.0, %v10509
        %v10514 = vsub.f32 2.0, %v10510
        %v10515 = vmul.f32 %v10503, %v10511
        %v10516 = vmul.f32 %v10504, %v10512
        %v10517 = vmul.f32 %v10505, %v10513
        %v10518 = vmul.f32 %v10506, %v10514
        %v10519 = vmul.f32 %v10479, %v10515
        %v10520 = vmul.f32 %v10480, %v10516
        %v10521 = vmul.f32 %v10481, %v10517
        %v10522 = vmul.f32 %v10482, %v10518
        %v10523 = vsel %vm300, %v10519, 0.0
        %v10524 = vsel %vm300, %v10520, 0.0
        %v10525 = vadd.f32 %v10523, %v10524
        %v10526 = vsel %vm300, %v10521, 0.0
        %v10527 = vadd.f32 %v10525, %v10526
        %v10528 = vsel %vm300, %v10522, 0.0
        %v10529 = vadd.f32 %v10527, %v10528
        %10530 = vadd.xlane.f32.xlu0 %v10529
        %v10531 = vpop.xlane.xlu0 %10530
        %v10532 = vrot.slane %v10531, 4
        %v10533 = vadd.f32 %v10531, %v10532
        %v10534 = vrot.slane %v10533, 2
        %v10535 = vadd.f32 %v10533, %v10534
        %v10536 = vrot.slane %v10535, 1
        %v10537 = vadd.f32 %v10535, %v10536
        %s10538 = vtos %v10537
        %v10539 = vlaneseq
        %v10540 = vshrl.u32 %v10539, 7
        %vm10541 = vcmp.eq.s32.totalorder %v10540, 0
        %vm10542 = vcmp.eq.s32.totalorder %v10540, 1
        %v10543 = vstv %s10538
        %v10544 = vsel %vm10542, %v10543, 0.0
        %v10545 = vstv %s316
        %v10546 = vsel %vm10541, %v10545, %v10544
        %10547 = vst [vmem:[%s281] sm:$0xff] %v10546
        %s10548 = sand.u32 %s122, 1
        %s10549 = scalar_lea.sflag [#allocation4], %s10548
        %s10550 = sand.u32 %s122, 1
        %s10551 = smul.addr %s10550, 8
        %s10552 = scalar_lea.vmem [#allocation9], %s10551
        // Predicated region
        $region53: #{tpu_custom_call.1} parent=35 // pred_check
          %p10553 = pneg %p132
        $region54: #{tpu_custom_call.1} parent=35 // pred_check_branch
          %10555 = sbr.rel (%p10553) target = $region56
        $region55: #{tpu_custom_call.1} parent=35 // pred_region
          %s10557 = ssub.s32 128, 128
          %10558 = vsyncadd %s10549, %s10557
          %s10559 = smul.addr %s20, 128
          %s10560 = scalar_lea.hbm %s4, %s10559
          %s10562 = sshll.u32 %s10552, 4
          %s10563 = int_to_ptr.vmem [resolvable:$true] %s10562
          %10565 = dma.vmem_to_hbm [thread:$0]  %s10563, 128, %s10560, %s10549
        $region56: #{tpu_custom_call.1} parent=35 // pred_fallthru
          _
      $region36: #{tpu_custom_call.1} parent=5 // pred_fallthru
        _
      %p10566 = scmp.le.s32.totalorder 2, %s15
      // Predicated region
      $region57: #{tpu_custom_call.1} parent=5 // pred_check
        %p10567 = pneg %p10566
      $region58: #{tpu_custom_call.1} parent=5 // pred_check_branch
        %10569 = sbr.rel (%p10567) target = $region60
      $region59: #{tpu_custom_call.1} parent=5 // pred_region
        %s10570 = ssub.s32 %s15, 2
        // Predicated region
        $region61: #{tpu_custom_call.1} parent=59 // pred_check
          %p10571 = pneg %p138
        $region62: #{tpu_custom_call.1} parent=59 // pred_check_branch
          %10573 = sbr.rel (%p10571) target = $region64
        $region63: #{tpu_custom_call.1} parent=59 // pred_region
          %s10574 = sand.u32 %s123, 1
          %s10575 = scalar_lea.sflag [#allocation4], %s10574
          %s10576 = sand.u32 %s123, 1
          %s10577 = smul.addr %s10576, 8
          %s10578 = scalar_lea.vmem [#allocation9], %s10577
          %10579 = dma.done %s10575, 128
        $region64: #{tpu_custom_call.1} parent=59 // pred_fallthru
          _
      $region60: #{tpu_custom_call.1} parent=5 // pred_fallthru
        _
    $region6: #{tpu_custom_call.1} parent=1 // loop_footer
      %s19 = sadd.s32 1, %s15
    $region7: #{tpu_custom_call.1} parent=1 // loop_footer_branch
      %14 = sbr.rel target = $region3
    $region8: #{tpu_custom_call.1} parent=1 // loop_exit
      _
    %10580 = vsyncpa [#allocation3], 1
    %s10581 = scalar_lea.sflag [#allocation3], 1
    %10582 = vsyncpa %s10581, 1
    %10583 = vsyncpa [#allocation6], 1
    %10584 = vsyncpa [#allocation4], 1
    %s10585 = scalar_lea.sflag [#allocation4], 1
    %10586 = vsyncpa %s10585, 1

</llo_original>
